<compile_context>
chip_gen: v7x
topology: tpu7x:2x2x1
jax: 0.10.0
libtpu: 0.0.40
codegen_flags: <defaults>
</compile_context>

<pallas_src>
import jax
import jax.numpy as jnp
import numpy as np
from jax.experimental import pallas as pl
from jax.experimental.pallas import tpu as pltpu  # noqa: F401  (TPU backend import)


def _fused_proj_mean_norm_kernel(
    vfeat_ref, sfeat_ref, vw_ref, vb_ref, sw_ref, sb_ref,
    vt_ref, vm_ref, st_ref, sm_ref):
    """Single invocation: both modalities, all batch elements.

    vfeat_ref : (B, C, Tv)  video features, channel-major (encoder layout)
    sfeat_ref : (B, C, Ts)  spec features, channel-major
    vw_ref/sw_ref : (C, E)  projection weights;  vb_ref/sb_ref : (1, E) biases
    vt_ref : (B, Tv, E), vm_ref : (B, 1, E)   normalized temporal / mean (video)
    st_ref : (B, Ts, E), sm_ref : (B, 1, E)   normalized temporal / mean (spec)
    """

    def branch(feat_ref, w_ref, b_ref, t_ref, m_ref):
        w = w_ref[...]                     # (C, E) — loaded once, reused for all batches
        b = b_ref[...]                     # (1, E)
        n_batch = feat_ref.shape[0]
        for bi in range(n_batch):          # static unroll; B is small
            feat_ct = feat_ref[bi]         # (C, T), channel-major (no wrapper transpose)
            # proj[t, e] = sum_c feat[c, t] * w[c, e]   (contract LHS dim 0 == trans_a)
            proj = jax.lax.dot_general(
                feat_ct, w,
                dimension_numbers=(((0,), (0,)), ((), ())),
                preferred_element_type=jnp.float32,
            ) + b                                                   # (T, E)
            # Temporal mean of the *unnormalized* projection (matches module order).
            mean = jnp.mean(proj, axis=0, keepdims=True)            # (1, E)
            # F.normalize: x / max(||x||, 1e-12) == x * rsqrt(max(||x||^2, 1e-24))
            t_ss = jnp.sum(proj * proj, axis=-1, keepdims=True)     # (T, 1)
            m_ss = jnp.sum(mean * mean, axis=-1, keepdims=True)     # (1, 1)
            t_ref[bi] = proj * jax.lax.rsqrt(jnp.maximum(t_ss, 1e-24))   # (T, E)
            m_ref[bi] = mean * jax.lax.rsqrt(jnp.maximum(m_ss, 1e-24))   # (1, E)

    branch(vfeat_ref, vw_ref, vb_ref, vt_ref, vm_ref)
    branch(sfeat_ref, sw_ref, sb_ref, st_ref, sm_ref)


def fused_project_mean_normalize(video_feat, spec_feat, vw, vb, sw, sb):
    """video_feat: (B, C, Tv), spec_feat: (B, C, Ts), w: (C, E), b: (E,)."""
    B, C, Tv = video_feat.shape
    _, _, Ts = spec_feat.shape
    E = vw.shape[1]

    flops = 2 * B * (Tv + Ts) * C * E
    transcendentals = B * (Tv + Ts + 2)                   # one rsqrt per row / per mean
    bytes_accessed = 4 * (B * C * (Tv + Ts)               # features
                          + 2 * C * E + 2 * E             # weights + biases
                          + B * (Tv + Ts) * E             # temporal outputs
                          + 2 * B * E)                    # mean outputs

    # No grid / no BlockSpecs: the whole problem fits trivially in VMEM
    # (~6 MiB incl. lane padding), so a single invocation with full-array
    # operands minimizes launch + pipeline-prologue overhead.
    # TODO(synk): for large B, add a batch-tiled grid with "parallel" semantics
    # sized against v7x's 64 MiB VMEM.
    vt, vm, st, sm = pl.pallas_call(
        _fused_proj_mean_norm_kernel,
        out_shape=(
            jax.ShapeDtypeStruct((B, Tv, E), jnp.float32),
            jax.ShapeDtypeStruct((B, 1, E), jnp.float32),
            jax.ShapeDtypeStruct((B, Ts, E), jnp.float32),
            jax.ShapeDtypeStruct((B, 1, E), jnp.float32),
        ),
        cost_estimate=pl.CostEstimate(
            flops=flops,
            transcendentals=transcendentals,
            bytes_accessed=bytes_accessed),
    )(video_feat, spec_feat, vw, vb.reshape(1, E), sw, sb.reshape(1, E))

    return vt, vm[:, 0, :], st, sm[:, 0, :]


@jax.jit
def clip_video_spec_temporal_forward(video_encoder_out, spec_encoder_out, params):
    """Forward of CLIP_Video_Spec_Temporal ('Slowonly' / 'resnet50' branch).

    video_encoder_out: (B, 2048, T_v, 1, 1)  -- ResNet3dSlowOnly output
    spec_encoder_out : (B, 2048, T_s)        -- resnet50 spec encoder output
    Returns dict matching the module's output_dict=True return.
    """
    bs, c, t = video_encoder_out.shape[:3]
    # (B, C, T, 1, 1) -> (B, C, T): metadata-only squeeze; no transpose / HBM pass.
    video_feat = video_encoder_out.reshape(bs, c, t)
    spec_feat = spec_encoder_out                       # already (B, C, T)

    vt, vm, st, sm = fused_project_mean_normalize(
        video_feat, spec_feat,
        params["video_w"], params["video_b"],
        params["spec_w"], params["spec_b"])

    return {
        "video_temporal_features": vt,
        "video_mean_features": vm,
        "spec_temporal_features": st,
        "spec_mean_features": sm,
        "logit_scale": jnp.exp(params["logit_scale"]),
    }


def _reference(video_encoder_out, spec_encoder_out, params):
    """Plain-JAX reference (module semantics) for correctness check."""
    def branch(feat_bct, w, b):
        feat = jnp.transpose(feat_bct, (0, 2, 1))                    # (B, T, C)
        temporal = jnp.einsum("btc,ce->bte", feat, w,
                              precision=jax.lax.Precision.HIGHEST) + b
        mean = temporal.mean(axis=1)
        tn = temporal / jnp.maximum(
            jnp.linalg.norm(temporal, axis=-1, keepdims=True), 1e-12)
        mn = mean / jnp.maximum(
            jnp.linalg.norm(mean, axis=-1, keepdims=True), 1e-12)
        return tn, mn

    bs, c, t = video_encoder_out.shape[:3]
    vt, vm = branch(video_encoder_out.reshape(bs, c, t),
                    params["video_w"], params["video_b"])
    st, sm = branch(spec_encoder_out, params["spec_w"], params["spec_b"])
    return vt, vm, st, sm, jnp.exp(params["logit_scale"])


if __name__ == "__main__":
    key = jax.random.PRNGKey(0)
    k1, k2, k3, k4, k5, k6 = jax.random.split(key, 6)

    B = 2          # batch
    C = 2048       # encoder channels (module hard-codes Linear(2048, embed_dim))
    T_V = 8        # temporal length of video features
    T_S = 16       # temporal length of spec features (different from video on purpose)
    EMBED = 128    # embed_dim (lane-aligned)

    # Synthetic encoder outputs with the module's shape conventions.
    video_encoder_out = jax.random.normal(k1, (B, C, T_V, 1, 1), jnp.float32)
    spec_encoder_out = jax.random.normal(k2, (B, C, T_S), jnp.float32)

    # Deterministic parameter init (nn.Linear-like scale).
    lim = 1.0 / np.sqrt(C)
    params = {
        "video_w": jax.random.uniform(k3, (C, EMBED), jnp.float32, -lim, lim),
        "video_b": jax.random.uniform(k4, (EMBED,), jnp.float32, -lim, lim),
        "spec_w": jax.random.uniform(k5, (C, EMBED), jnp.float32, -lim, lim),
        "spec_b": jax.random.uniform(k6, (EMBED,), jnp.float32, -lim, lim),
        "logit_scale": jnp.asarray(np.log(1.0 / 0.07), jnp.float32),
    }

    out = clip_video_spec_temporal_forward(video_encoder_out, spec_encoder_out, params)
    out = jax.tree_util.tree_map(jax.block_until_ready, out)

    # Sanity check against a plain-JAX reference.  Tolerance accounts for TPU
    # matmul input-rounding differences between the XLA reference path and the
    # kernel's MXU path (f32 operands may be handled at different precisions).
    vt, vm, st, sm, ls = _reference(video_encoder_out, spec_encoder_out, params)
    tol = dict(rtol=2e-3, atol=2e-3)
    np.testing.assert_allclose(out["video_temporal_features"], vt, **tol)
    np.testing.assert_allclose(out["video_mean_features"], vm, **tol)
    np.testing.assert_allclose(out["spec_temporal_features"], st, **tol)
    np.testing.assert_allclose(out["spec_mean_features"], sm, **tol)
    np.testing.assert_allclose(out["logit_scale"], ls, rtol=1e-6)

    print("KERNEL_OK")
</pallas_src>

<mosaic_0001>
module attributes {stable_mosaic.version = 11 : i64} {
  func.func @_fused_proj_mean_norm_kernel(%arg0: memref<2x2048x8xf32, #tpu.memory_space<vmem>>, %arg1: memref<2x2048x16xf32, #tpu.memory_space<vmem>>, %arg2: memref<2048x128xf32, #tpu.memory_space<vmem>>, %arg3: memref<1x128xf32, #tpu.memory_space<vmem>>, %arg4: memref<2048x128xf32, #tpu.memory_space<vmem>>, %arg5: memref<1x128xf32, #tpu.memory_space<vmem>>, %arg6: memref<2x8x128xf32, #tpu.memory_space<vmem>>, %arg7: memref<2x1x128xf32, #tpu.memory_space<vmem>>, %arg8: memref<2x16x128xf32, #tpu.memory_space<vmem>>, %arg9: memref<2x1x128xf32, #tpu.memory_space<vmem>>) attributes {dimension_semantics = [], scalar_prefetch = 0 : i64, scratch_operands = 0 : i64, tpu.core_type = #tpu.core_type<tc>} {
    %c0 = arith.constant 0 : index
    %c0_0 = arith.constant 0 : index
    %0 = vector.load %arg2[%c0, %c0_0] : memref<2048x128xf32, #tpu.memory_space<vmem>>, vector<2048x128xf32>
    %c0_1 = arith.constant 0 : index
    %c0_2 = arith.constant 0 : index
    %1 = vector.load %arg3[%c0_1, %c0_2] : memref<1x128xf32, #tpu.memory_space<vmem>>, vector<1x128xf32>
    %c0_3 = arith.constant 0 : index
    %c0_4 = arith.constant 0 : index
    %c0_5 = arith.constant 0 : index
    %2 = vector.load %arg0[%c0_3, %c0_4, %c0_5] : memref<2x2048x8xf32, #tpu.memory_space<vmem>>, vector<1x2048x8xf32>
    %3 = vector.shape_cast %2 : vector<1x2048x8xf32> to vector<2048x8xf32>
    %cst = arith.constant dense<0.000000e+00> : vector<8x128xf32>
    %4 = tpu.matmul %3, %0, %cst {dimension_numbers = #tpu.dot_dimension_numbers<[0], [0], [1], [1], [0, 1, 1, 1], [], []>} : vector<2048x8xf32>, vector<2048x128xf32>, vector<8x128xf32> -> vector<8x128xf32>
    %5 = vector.broadcast %1 : vector<1x128xf32> to vector<8x128xf32>
    %6 = arith.addf %4, %5 : vector<8x128xf32>
    %cst_6 = arith.constant dense<0.000000e+00> : vector<128xf32>
    %7 = vector.multi_reduction <add>, %6, %cst_6 [0] : vector<8x128xf32> to vector<128xf32>
    %8 = vector.shape_cast %7 : vector<128xf32> to vector<1x128xf32>
    %cst_7 = arith.constant 8.000000e+00 : f32
    %9 = vector.broadcast %cst_7 : f32 to vector<1x128xf32>
    %10 = arith.divf %8, %9 : vector<1x128xf32>
    %11 = arith.mulf %6, %6 : vector<8x128xf32>
    %cst_8 = arith.constant dense<0.000000e+00> : vector<8xf32>
    %12 = vector.multi_reduction <add>, %11, %cst_8 [1] : vector<8x128xf32> to vector<8xf32>
    %13 = vector.shape_cast %12 : vector<8xf32> to vector<8x1xf32>
    %14 = arith.mulf %10, %10 : vector<1x128xf32>
    %cst_9 = arith.constant dense<0.000000e+00> : vector<1xf32>
    %15 = vector.multi_reduction <add>, %14, %cst_9 [1] : vector<1x128xf32> to vector<1xf32>
    %16 = vector.shape_cast %15 : vector<1xf32> to vector<1x1xf32>
    %cst_10 = arith.constant 1.000000e-24 : f32
    %17 = vector.broadcast %cst_10 : f32 to vector<8x1xf32>
    %18 = arith.maximumf %13, %17 : vector<8x1xf32>
    %19 = math.rsqrt %18 : vector<8x1xf32>
    %20 = vector.broadcast %19 : vector<8x1xf32> to vector<8x128xf32>
    %21 = arith.mulf %6, %20 : vector<8x128xf32>
    %c0_11 = arith.constant 0 : index
    %c0_12 = arith.constant 0 : index
    %c0_13 = arith.constant 0 : index
    %22 = vector.load %arg6[%c0_11, %c0_12, %c0_13] : memref<2x8x128xf32, #tpu.memory_space<vmem>>, vector<1x8x128xf32>
    %23 = vector.shape_cast %22 : vector<1x8x128xf32> to vector<8x128xf32>
    %24 = vector.shape_cast %21 : vector<8x128xf32> to vector<1x8x128xf32>
    tpu.vector_store %arg6[%c0_11, %c0_12, %c0_13], %24 {strides = array<i32>} : memref<2x8x128xf32, #tpu.memory_space<vmem>>, vector<1x8x128xf32>,
    %cst_14 = arith.constant 1.000000e-24 : f32
    %25 = vector.broadcast %cst_14 : f32 to vector<1x1xf32>
    %26 = arith.maximumf %16, %25 : vector<1x1xf32>
    %27 = math.rsqrt %26 : vector<1x1xf32>
    %28 = vector.broadcast %27 : vector<1x1xf32> to vector<1x128xf32>
    %29 = arith.mulf %10, %28 : vector<1x128xf32>
    %c0_15 = arith.constant 0 : index
    %c0_16 = arith.constant 0 : index
    %c0_17 = arith.constant 0 : index
    %30 = vector.load %arg7[%c0_15, %c0_16, %c0_17] : memref<2x1x128xf32, #tpu.memory_space<vmem>>, vector<1x1x128xf32>
    %31 = vector.shape_cast %30 : vector<1x1x128xf32> to vector<1x128xf32>
    %32 = vector.shape_cast %29 : vector<1x128xf32> to vector<1x1x128xf32>
    tpu.vector_store %arg7[%c0_15, %c0_16, %c0_17], %32 {strides = array<i32>} : memref<2x1x128xf32, #tpu.memory_space<vmem>>, vector<1x1x128xf32>,
    %c1 = arith.constant 1 : index
    %c0_18 = arith.constant 0 : index
    %c0_19 = arith.constant 0 : index
    %33 = vector.load %arg0[%c1, %c0_18, %c0_19] : memref<2x2048x8xf32, #tpu.memory_space<vmem>>, vector<1x2048x8xf32>
    %34 = vector.shape_cast %33 : vector<1x2048x8xf32> to vector<2048x8xf32>
    %cst_20 = arith.constant dense<0.000000e+00> : vector<8x128xf32>
    %35 = tpu.matmul %34, %0, %cst_20 {dimension_numbers = #tpu.dot_dimension_numbers<[0], [0], [1], [1], [0, 1, 1, 1], [], []>} : vector<2048x8xf32>, vector<2048x128xf32>, vector<8x128xf32> -> vector<8x128xf32>
    %36 = vector.broadcast %1 : vector<1x128xf32> to vector<8x128xf32>
    %37 = arith.addf %35, %36 : vector<8x128xf32>
    %cst_21 = arith.constant dense<0.000000e+00> : vector<128xf32>
    %38 = vector.multi_reduction <add>, %37, %cst_21 [0] : vector<8x128xf32> to vector<128xf32>
    %39 = vector.shape_cast %38 : vector<128xf32> to vector<1x128xf32>
    %cst_22 = arith.constant 8.000000e+00 : f32
    %40 = vector.broadcast %cst_22 : f32 to vector<1x128xf32>
    %41 = arith.divf %39, %40 : vector<1x128xf32>
    %42 = arith.mulf %37, %37 : vector<8x128xf32>
    %cst_23 = arith.constant dense<0.000000e+00> : vector<8xf32>
    %43 = vector.multi_reduction <add>, %42, %cst_23 [1] : vector<8x128xf32> to vector<8xf32>
    %44 = vector.shape_cast %43 : vector<8xf32> to vector<8x1xf32>
    %45 = arith.mulf %41, %41 : vector<1x128xf32>
    %cst_24 = arith.constant dense<0.000000e+00> : vector<1xf32>
    %46 = vector.multi_reduction <add>, %45, %cst_24 [1] : vector<1x128xf32> to vector<1xf32>
    %47 = vector.shape_cast %46 : vector<1xf32> to vector<1x1xf32>
    %cst_25 = arith.constant 1.000000e-24 : f32
    %48 = vector.broadcast %cst_25 : f32 to vector<8x1xf32>
    %49 = arith.maximumf %44, %48 : vector<8x1xf32>
    %50 = math.rsqrt %49 : vector<8x1xf32>
    %51 = vector.broadcast %50 : vector<8x1xf32> to vector<8x128xf32>
    %52 = arith.mulf %37, %51 : vector<8x128xf32>
    %c1_26 = arith.constant 1 : index
    %c0_27 = arith.constant 0 : index
    %c0_28 = arith.constant 0 : index
    %53 = vector.load %arg6[%c1_26, %c0_27, %c0_28] : memref<2x8x128xf32, #tpu.memory_space<vmem>>, vector<1x8x128xf32>
    %54 = vector.shape_cast %53 : vector<1x8x128xf32> to vector<8x128xf32>
    %55 = vector.shape_cast %52 : vector<8x128xf32> to vector<1x8x128xf32>
    tpu.vector_store %arg6[%c1_26, %c0_27, %c0_28], %55 {strides = array<i32>} : memref<2x8x128xf32, #tpu.memory_space<vmem>>, vector<1x8x128xf32>,
    %cst_29 = arith.constant 1.000000e-24 : f32
    %56 = vector.broadcast %cst_29 : f32 to vector<1x1xf32>
    %57 = arith.maximumf %47, %56 : vector<1x1xf32>
    %58 = math.rsqrt %57 : vector<1x1xf32>
    %59 = vector.broadcast %58 : vector<1x1xf32> to vector<1x128xf32>
    %60 = arith.mulf %41, %59 : vector<1x128xf32>
    %c1_30 = arith.constant 1 : index
    %c0_31 = arith.constant 0 : index
    %c0_32 = arith.constant 0 : index
    %61 = vector.load %arg7[%c1_30, %c0_31, %c0_32] : memref<2x1x128xf32, #tpu.memory_space<vmem>>, vector<1x1x128xf32>
    %62 = vector.shape_cast %61 : vector<1x1x128xf32> to vector<1x128xf32>
    %63 = vector.shape_cast %60 : vector<1x128xf32> to vector<1x1x128xf32>
    tpu.vector_store %arg7[%c1_30, %c0_31, %c0_32], %63 {strides = array<i32>} : memref<2x1x128xf32, #tpu.memory_space<vmem>>, vector<1x1x128xf32>,
    %c0_33 = arith.constant 0 : index
    %c0_34 = arith.constant 0 : index
    %64 = vector.load %arg4[%c0_33, %c0_34] : memref<2048x128xf32, #tpu.memory_space<vmem>>, vector<2048x128xf32>
    %c0_35 = arith.constant 0 : index
    %c0_36 = arith.constant 0 : index
    %65 = vector.load %arg5[%c0_35, %c0_36] : memref<1x128xf32, #tpu.memory_space<vmem>>, vector<1x128xf32>
    %c0_37 = arith.constant 0 : index
    %c0_38 = arith.constant 0 : index
    %c0_39 = arith.constant 0 : index
    %66 = vector.load %arg1[%c0_37, %c0_38, %c0_39] : memref<2x2048x16xf32, #tpu.memory_space<vmem>>, vector<1x2048x16xf32>
    %67 = vector.shape_cast %66 : vector<1x2048x16xf32> to vector<2048x16xf32>
    %cst_40 = arith.constant dense<0.000000e+00> : vector<16x128xf32>
    %68 = tpu.matmul %67, %64, %cst_40 {dimension_numbers = #tpu.dot_dimension_numbers<[0], [0], [1], [1], [0, 1, 1, 1], [], []>} : vector<2048x16xf32>, vector<2048x128xf32>, vector<16x128xf32> -> vector<16x128xf32>
    %69 = vector.broadcast %65 : vector<1x128xf32> to vector<16x128xf32>
    %70 = arith.addf %68, %69 : vector<16x128xf32>
    %cst_41 = arith.constant dense<0.000000e+00> : vector<128xf32>
    %71 = vector.multi_reduction <add>, %70, %cst_41 [0] : vector<16x128xf32> to vector<128xf32>
    %72 = vector.shape_cast %71 : vector<128xf32> to vector<1x128xf32>
    %cst_42 = arith.constant 1.600000e+01 : f32
    %73 = vector.broadcast %cst_42 : f32 to vector<1x128xf32>
    %74 = arith.divf %72, %73 : vector<1x128xf32>
    %75 = arith.mulf %70, %70 : vector<16x128xf32>
    %cst_43 = arith.constant dense<0.000000e+00> : vector<16xf32>
    %76 = vector.multi_reduction <add>, %75, %cst_43 [1] : vector<16x128xf32> to vector<16xf32>
    %77 = vector.shape_cast %76 : vector<16xf32> to vector<16x1xf32>
    %78 = arith.mulf %74, %74 : vector<1x128xf32>
    %cst_44 = arith.constant dense<0.000000e+00> : vector<1xf32>
    %79 = vector.multi_reduction <add>, %78, %cst_44 [1] : vector<1x128xf32> to vector<1xf32>
    %80 = vector.shape_cast %79 : vector<1xf32> to vector<1x1xf32>
    %cst_45 = arith.constant 1.000000e-24 : f32
    %81 = vector.broadcast %cst_45 : f32 to vector<16x1xf32>
    %82 = arith.maximumf %77, %81 : vector<16x1xf32>
    %83 = math.rsqrt %82 : vector<16x1xf32>
    %84 = vector.broadcast %83 : vector<16x1xf32> to vector<16x128xf32>
    %85 = arith.mulf %70, %84 : vector<16x128xf32>
    %c0_46 = arith.constant 0 : index
    %c0_47 = arith.constant 0 : index
    %c0_48 = arith.constant 0 : index
    %86 = vector.load %arg8[%c0_46, %c0_47, %c0_48] : memref<2x16x128xf32, #tpu.memory_space<vmem>>, vector<1x16x128xf32>
    %87 = vector.shape_cast %86 : vector<1x16x128xf32> to vector<16x128xf32>
    %88 = vector.shape_cast %85 : vector<16x128xf32> to vector<1x16x128xf32>
    tpu.vector_store %arg8[%c0_46, %c0_47, %c0_48], %88 {strides = array<i32>} : memref<2x16x128xf32, #tpu.memory_space<vmem>>, vector<1x16x128xf32>,
    %cst_49 = arith.constant 1.000000e-24 : f32
    %89 = vector.broadcast %cst_49 : f32 to vector<1x1xf32>
    %90 = arith.maximumf %80, %89 : vector<1x1xf32>
    %91 = math.rsqrt %90 : vector<1x1xf32>
    %92 = vector.broadcast %91 : vector<1x1xf32> to vector<1x128xf32>
    %93 = arith.mulf %74, %92 : vector<1x128xf32>
    %c0_50 = arith.constant 0 : index
    %c0_51 = arith.constant 0 : index
    %c0_52 = arith.constant 0 : index
    %94 = vector.load %arg9[%c0_50, %c0_51, %c0_52] : memref<2x1x128xf32, #tpu.memory_space<vmem>>, vector<1x1x128xf32>
    %95 = vector.shape_cast %94 : vector<1x1x128xf32> to vector<1x128xf32>
    %96 = vector.shape_cast %93 : vector<1x128xf32> to vector<1x1x128xf32>
    tpu.vector_store %arg9[%c0_50, %c0_51, %c0_52], %96 {strides = array<i32>} : memref<2x1x128xf32, #tpu.memory_space<vmem>>, vector<1x1x128xf32>,
    %c1_53 = arith.constant 1 : index
    %c0_54 = arith.constant 0 : index
    %c0_55 = arith.constant 0 : index
    %97 = vector.load %arg1[%c1_53, %c0_54, %c0_55] : memref<2x2048x16xf32, #tpu.memory_space<vmem>>, vector<1x2048x16xf32>
    %98 = vector.shape_cast %97 : vector<1x2048x16xf32> to vector<2048x16xf32>
    %cst_56 = arith.constant dense<0.000000e+00> : vector<16x128xf32>
    %99 = tpu.matmul %98, %64, %cst_56 {dimension_numbers = #tpu.dot_dimension_numbers<[0], [0], [1], [1], [0, 1, 1, 1], [], []>} : vector<2048x16xf32>, vector<2048x128xf32>, vector<16x128xf32> -> vector<16x128xf32>
    %100 = vector.broadcast %65 : vector<1x128xf32> to vector<16x128xf32>
    %101 = arith.addf %99, %100 : vector<16x128xf32>
    %cst_57 = arith.constant dense<0.000000e+00> : vector<128xf32>
    %102 = vector.multi_reduction <add>, %101, %cst_57 [0] : vector<16x128xf32> to vector<128xf32>
    %103 = vector.shape_cast %102 : vector<128xf32> to vector<1x128xf32>
    %cst_58 = arith.constant 1.600000e+01 : f32
    %104 = vector.broadcast %cst_58 : f32 to vector<1x128xf32>
    %105 = arith.divf %103, %104 : vector<1x128xf32>
    %106 = arith.mulf %101, %101 : vector<16x128xf32>
    %cst_59 = arith.constant dense<0.000000e+00> : vector<16xf32>
    %107 = vector.multi_reduction <add>, %106, %cst_59 [1] : vector<16x128xf32> to vector<16xf32>
    %108 = vector.shape_cast %107 : vector<16xf32> to vector<16x1xf32>
    %109 = arith.mulf %105, %105 : vector<1x128xf32>
    %cst_60 = arith.constant dense<0.000000e+00> : vector<1xf32>
    %110 = vector.multi_reduction <add>, %109, %cst_60 [1] : vector<1x128xf32> to vector<1xf32>
    %111 = vector.shape_cast %110 : vector<1xf32> to vector<1x1xf32>
    %cst_61 = arith.constant 1.000000e-24 : f32
    %112 = vector.broadcast %cst_61 : f32 to vector<16x1xf32>
    %113 = arith.maximumf %108, %112 : vector<16x1xf32>
    %114 = math.rsqrt %113 : vector<16x1xf32>
    %115 = vector.broadcast %114 : vector<16x1xf32> to vector<16x128xf32>
    %116 = arith.mulf %101, %115 : vector<16x128xf32>
    %c1_62 = arith.constant 1 : index
    %c0_63 = arith.constant 0 : index
    %c0_64 = arith.constant 0 : index
    %117 = vector.load %arg8[%c1_62, %c0_63, %c0_64] : memref<2x16x128xf32, #tpu.memory_space<vmem>>, vector<1x16x128xf32>
    %118 = vector.shape_cast %117 : vector<1x16x128xf32> to vector<16x128xf32>
    %119 = vector.shape_cast %116 : vector<16x128xf32> to vector<1x16x128xf32>
    tpu.vector_store %arg8[%c1_62, %c0_63, %c0_64], %119 {strides = array<i32>} : memref<2x16x128xf32, #tpu.memory_space<vmem>>, vector<1x16x128xf32>,
    %cst_65 = arith.constant 1.000000e-24 : f32
    %120 = vector.broadcast %cst_65 : f32 to vector<1x1xf32>
    %121 = arith.maximumf %111, %120 : vector<1x1xf32>
    %122 = math.rsqrt %121 : vector<1x1xf32>
    %123 = vector.broadcast %122 : vector<1x1xf32> to vector<1x128xf32>
    %124 = arith.mulf %105, %123 : vector<1x128xf32>
    %c1_66 = arith.constant 1 : index
    %c0_67 = arith.constant 0 : index
    %c0_68 = arith.constant 0 : index
    %125 = vector.load %arg9[%c1_66, %c0_67, %c0_68] : memref<2x1x128xf32, #tpu.memory_space<vmem>>, vector<1x1x128xf32>
    %126 = vector.shape_cast %125 : vector<1x1x128xf32> to vector<1x128xf32>
    %127 = vector.shape_cast %124 : vector<1x128xf32> to vector<1x1x128xf32>
    tpu.vector_store %arg9[%c1_66, %c0_67, %c0_68], %127 {strides = array<i32>} : memref<2x1x128xf32, #tpu.memory_space<vmem>>, vector<1x1x128xf32>,
    return
  }
}

</mosaic_0001>

<llo_original>
// kernel: clip_video_spec_temporal_forward.1
$region0: #{clip_video_spec_temporal_forward.1}
  #allocation0 [shape = 'u32[]', space=smem, size = 0x4, offset = 0x4, fixed_abs, tag = 'smem constant byte address 0x4 - core index']
  #allocation1 [shape = 'u32[144,128]{1,0:T(1,128)}', space=vmem, size = 0x12000, scoped, tag = 'internal scratch']
  %s0 = inlined_call_operand.vmem [shape: f32[2,2048,8], index: 0, kind: input, shape index: {}]
  %s1 = inlined_call_operand.vmem [shape: f32[2,2048,16], index: 1, kind: input, shape index: {}]
  %s2 = inlined_call_operand.vmem [shape: f32[2048,128], index: 2, kind: input, shape index: {}]
  %s3 = inlined_call_operand.vmem [shape: f32[1,128], index: 3, kind: input, shape index: {}]
  %s4 = inlined_call_operand.vmem [shape: f32[2048,128], index: 4, kind: input, shape index: {}]
  %s5 = inlined_call_operand.vmem [shape: f32[1,128], index: 5, kind: input, shape index: {}]
  %s6 = inlined_call_operand.hbm [shape: f32[2,8,128], index: 6, kind: output, shape index: {0}]
  %s7 = inlined_call_operand.hbm [shape: f32[2,1,128], index: 7, kind: output, shape index: {1}]
  %s8 = inlined_call_operand.hbm [shape: f32[2,16,128], index: 8, kind: output, shape index: {2}]
  %s9 = inlined_call_operand.hbm [shape: f32[2,1,128], index: 9, kind: output, shape index: {3}]
  %10 = xla_tuple %s6, %s7, %s8, %s9
  %s11 = sld [smem:[#allocation0]]
  $region58: #{clip_video_spec_temporal_forward.1} parent=0
    _
  %s13 = ssub.s32 1, %s11
  %s14 = scalar_select 0, %s13, %s11
  $region1: #{clip_video_spec_temporal_forward.1} parent=0
    #allocation2 [shape = 'u8[8192]{0}', space=vmem, size = 0x2000, scoped, tag = 'output window, operand 0, single buffered']
    #allocation3 [shape = 's32[1]{0}', space=sflag, size = 0x4, scoped, tag = 'scoped memory for clip_video_spec_temporal_forward.1']
    #allocation4 [shape = 'u8[1024]{0}', space=vmem, size = 0x400, scoped, tag = 'output window, operand 1, single buffered']
    #allocation5 [shape = 's32[1]{0}', space=sflag, size = 0x4, scoped, tag = 'scoped memory for clip_video_spec_temporal_forward.1']
    #allocation6 [shape = 'u8[16384]{0}', space=vmem, size = 0x4000, scoped, tag = 'output window, operand 2, single buffered']
    #allocation7 [shape = 'u8[1024]{0}', space=vmem, size = 0x400, scoped, tag = 'output window, operand 3, single buffered']
    #allocation8 [shape = 's32[1]{0}', space=sflag, size = 0x4, scoped, tag = 'scoped memory for clip_video_spec_temporal_forward.1']
    %15 = vsyncpa [#allocation3], 0
    %16 = vsyncpa [#allocation5], 0
    %17 = vsyncpa [#allocation8], 0
    // Predicated region
    $region2: #{clip_video_spec_temporal_forward.1} parent=1 // pred_check
      _
    $region3: #{clip_video_spec_temporal_forward.1} parent=1 // pred_check_branch
      %19 = sbr.rel (0) target = $region5
    $region4: #{clip_video_spec_temporal_forward.1} parent=1 // pred_region
      _
    $region5: #{clip_video_spec_temporal_forward.1} parent=1 // pred_fallthru
      _
    // Predicated region
    $region6: #{clip_video_spec_temporal_forward.1} parent=1 // pred_check
      _
    $region7: #{clip_video_spec_temporal_forward.1} parent=1 // pred_check_branch
      %21 = sbr.rel (0) target = $region9
    $region8: #{clip_video_spec_temporal_forward.1} parent=1 // pred_region
      _
    $region9: #{clip_video_spec_temporal_forward.1} parent=1 // pred_fallthru
      _
    // Predicated region
    $region10: #{clip_video_spec_temporal_forward.1} parent=1 // pred_check
      _
    $region11: #{clip_video_spec_temporal_forward.1} parent=1 // pred_check_branch
      %23 = sbr.rel (0) target = $region13
    $region12: #{clip_video_spec_temporal_forward.1} parent=1 // pred_region
      _
    $region13: #{clip_video_spec_temporal_forward.1} parent=1 // pred_fallthru
      _
    // Predicated region
    $region14: #{clip_video_spec_temporal_forward.1} parent=1 // pred_check
      _
    $region15: #{clip_video_spec_temporal_forward.1} parent=1 // pred_check_branch
      %25 = sbr.rel (0) target = $region17
    $region16: #{clip_video_spec_temporal_forward.1} parent=1 // pred_region
      _
    $region17: #{clip_video_spec_temporal_forward.1} parent=1 // pred_fallthru
      _
    // Predicated region
    $region18: #{clip_video_spec_temporal_forward.1} parent=1 // pred_check
      _
    $region19: #{clip_video_spec_temporal_forward.1} parent=1 // pred_check_branch
      %27 = sbr.rel (0) target = $region21
    $region20: #{clip_video_spec_temporal_forward.1} parent=1 // pred_region
      _
    $region21: #{clip_video_spec_temporal_forward.1} parent=1 // pred_fallthru
      _
    // Predicated region
    $region22: #{clip_video_spec_temporal_forward.1} parent=1 // pred_check
      _
    $region23: #{clip_video_spec_temporal_forward.1} parent=1 // pred_check_branch
      %29 = sbr.rel (0) target = $region25
    $region24: #{clip_video_spec_temporal_forward.1} parent=1 // pred_region
      _
    $region25: #{clip_video_spec_temporal_forward.1} parent=1 // pred_fallthru
      _
    %v30 = vld [vmem:[%s2] sm:$0xff]
    %v31 = vld [vmem:[%s2 + $0x8] sm:$0xff]
    %v32 = vld [vmem:[%s2 + $0x10] sm:$0xff]
    %v33 = vld [vmem:[%s2 + $0x18] sm:$0xff]
    %v34 = vld [vmem:[%s2 + $0x20] sm:$0xff]
    %v35 = vld [vmem:[%s2 + $0x28] sm:$0xff]
    %v36 = vld [vmem:[%s2 + $0x30] sm:$0xff]
    %v37 = vld [vmem:[%s2 + $0x38] sm:$0xff]
    %v38 = vld [vmem:[%s2 + $0x40] sm:$0xff]
    %v39 = vld [vmem:[%s2 + $0x48] sm:$0xff]
    %v40 = vld [vmem:[%s2 + $0x50] sm:$0xff]
    %v41 = vld [vmem:[%s2 + $0x58] sm:$0xff]
    %v42 = vld [vmem:[%s2 + $0x60] sm:$0xff]
    %v43 = vld [vmem:[%s2 + $0x68] sm:$0xff]
    %v44 = vld [vmem:[%s2 + $0x70] sm:$0xff]
    %v45 = vld [vmem:[%s2 + $0x78] sm:$0xff]
    %v46 = vld [vmem:[%s2 + $0x80] sm:$0xff]
    %v47 = vld [vmem:[%s2 + $0x88] sm:$0xff]
    %v48 = vld [vmem:[%s2 + $0x90] sm:$0xff]
    %v49 = vld [vmem:[%s2 + $0x98] sm:$0xff]
    %v50 = vld [vmem:[%s2 + $0xa0] sm:$0xff]
    %v51 = vld [vmem:[%s2 + $0xa8] sm:$0xff]
    %v52 = vld [vmem:[%s2 + $0xb0] sm:$0xff]
    %v53 = vld [vmem:[%s2 + $0xb8] sm:$0xff]
    %v54 = vld [vmem:[%s2 + $0xc0] sm:$0xff]
    %v55 = vld [vmem:[%s2 + $0xc8] sm:$0xff]
    %v56 = vld [vmem:[%s2 + $0xd0] sm:$0xff]
    %v57 = vld [vmem:[%s2 + $0xd8] sm:$0xff]
    %v58 = vld [vmem:[%s2 + $0xe0] sm:$0xff]
    %v59 = vld [vmem:[%s2 + $0xe8] sm:$0xff]
    %v60 = vld [vmem:[%s2 + $0xf0] sm:$0xff]
    %v61 = vld [vmem:[%s2 + $0xf8] sm:$0xff]
    %v62 = vld [vmem:[%s2 + $0x100] sm:$0xff]
    %v63 = vld [vmem:[%s2 + $0x108] sm:$0xff]
    %v64 = vld [vmem:[%s2 + $0x110] sm:$0xff]
    %v65 = vld [vmem:[%s2 + $0x118] sm:$0xff]
    %v66 = vld [vmem:[%s2 + $0x120] sm:$0xff]
    %v67 = vld [vmem:[%s2 + $0x128] sm:$0xff]
    %v68 = vld [vmem:[%s2 + $0x130] sm:$0xff]
    %v69 = vld [vmem:[%s2 + $0x138] sm:$0xff]
    %v70 = vld [vmem:[%s2 + $0x140] sm:$0xff]
    %v71 = vld [vmem:[%s2 + $0x148] sm:$0xff]
    %v72 = vld [vmem:[%s2 + $0x150] sm:$0xff]
    %v73 = vld [vmem:[%s2 + $0x158] sm:$0xff]
    %v74 = vld [vmem:[%s2 + $0x160] sm:$0xff]
    %v75 = vld [vmem:[%s2 + $0x168] sm:$0xff]
    %v76 = vld [vmem:[%s2 + $0x170] sm:$0xff]
    %v77 = vld [vmem:[%s2 + $0x178] sm:$0xff]
    %v78 = vld [vmem:[%s2 + $0x180] sm:$0xff]
    %v79 = vld [vmem:[%s2 + $0x188] sm:$0xff]
    %v80 = vld [vmem:[%s2 + $0x190] sm:$0xff]
    %v81 = vld [vmem:[%s2 + $0x198] sm:$0xff]
    %v82 = vld [vmem:[%s2 + $0x1a0] sm:$0xff]
    %v83 = vld [vmem:[%s2 + $0x1a8] sm:$0xff]
    %v84 = vld [vmem:[%s2 + $0x1b0] sm:$0xff]
    %v85 = vld [vmem:[%s2 + $0x1b8] sm:$0xff]
    %v86 = vld [vmem:[%s2 + $0x1c0] sm:$0xff]
    %v87 = vld [vmem:[%s2 + $0x1c8] sm:$0xff]
    %v88 = vld [vmem:[%s2 + $0x1d0] sm:$0xff]
    %v89 = vld [vmem:[%s2 + $0x1d8] sm:$0xff]
    %v90 = vld [vmem:[%s2 + $0x1e0] sm:$0xff]
    %v91 = vld [vmem:[%s2 + $0x1e8] sm:$0xff]
    %v92 = vld [vmem:[%s2 + $0x1f0] sm:$0xff]
    %v93 = vld [vmem:[%s2 + $0x1f8] sm:$0xff]
    %v94 = vld [vmem:[%s2 + $0x200] sm:$0xff]
    %v95 = vld [vmem:[%s2 + $0x208] sm:$0xff]
    %v96 = vld [vmem:[%s2 + $0x210] sm:$0xff]
    %v97 = vld [vmem:[%s2 + $0x218] sm:$0xff]
    %v98 = vld [vmem:[%s2 + $0x220] sm:$0xff]
    %v99 = vld [vmem:[%s2 + $0x228] sm:$0xff]
    %v100 = vld [vmem:[%s2 + $0x230] sm:$0xff]
    %v101 = vld [vmem:[%s2 + $0x238] sm:$0xff]
    %v102 = vld [vmem:[%s2 + $0x240] sm:$0xff]
    %v103 = vld [vmem:[%s2 + $0x248] sm:$0xff]
    %v104 = vld [vmem:[%s2 + $0x250] sm:$0xff]
    %v105 = vld [vmem:[%s2 + $0x258] sm:$0xff]
    %v106 = vld [vmem:[%s2 + $0x260] sm:$0xff]
    %v107 = vld [vmem:[%s2 + $0x268] sm:$0xff]
    %v108 = vld [vmem:[%s2 + $0x270] sm:$0xff]
    %v109 = vld [vmem:[%s2 + $0x278] sm:$0xff]
    %v110 = vld [vmem:[%s2 + $0x280] sm:$0xff]
    %v111 = vld [vmem:[%s2 + $0x288] sm:$0xff]
    %v112 = vld [vmem:[%s2 + $0x290] sm:$0xff]
    %v113 = vld [vmem:[%s2 + $0x298] sm:$0xff]
    %v114 = vld [vmem:[%s2 + $0x2a0] sm:$0xff]
    %v115 = vld [vmem:[%s2 + $0x2a8] sm:$0xff]
    %v116 = vld [vmem:[%s2 + $0x2b0] sm:$0xff]
    %v117 = vld [vmem:[%s2 + $0x2b8] sm:$0xff]
    %v118 = vld [vmem:[%s2 + $0x2c0] sm:$0xff]
    %v119 = vld [vmem:[%s2 + $0x2c8] sm:$0xff]
    %v120 = vld [vmem:[%s2 + $0x2d0] sm:$0xff]
    %v121 = vld [vmem:[%s2 + $0x2d8] sm:$0xff]
    %v122 = vld [vmem:[%s2 + $0x2e0] sm:$0xff]
    %v123 = vld [vmem:[%s2 + $0x2e8] sm:$0xff]
    %v124 = vld [vmem:[%s2 + $0x2f0] sm:$0xff]
    %v125 = vld [vmem:[%s2 + $0x2f8] sm:$0xff]
    %v126 = vld [vmem:[%s2 + $0x300] sm:$0xff]
    %v127 = vld [vmem:[%s2 + $0x308] sm:$0xff]
    %v128 = vld [vmem:[%s2 + $0x310] sm:$0xff]
    %v129 = vld [vmem:[%s2 + $0x318] sm:$0xff]
    %v130 = vld [vmem:[%s2 + $0x320] sm:$0xff]
    %v131 = vld [vmem:[%s2 + $0x328] sm:$0xff]
    %v132 = vld [vmem:[%s2 + $0x330] sm:$0xff]
    %v133 = vld [vmem:[%s2 + $0x338] sm:$0xff]
    %v134 = vld [vmem:[%s2 + $0x340] sm:$0xff]
    %v135 = vld [vmem:[%s2 + $0x348] sm:$0xff]
    %v136 = vld [vmem:[%s2 + $0x350] sm:$0xff]
    %v137 = vld [vmem:[%s2 + $0x358] sm:$0xff]
    %v138 = vld [vmem:[%s2 + $0x360] sm:$0xff]
    %v139 = vld [vmem:[%s2 + $0x368] sm:$0xff]
    %v140 = vld [vmem:[%s2 + $0x370] sm:$0xff]
    %v141 = vld [vmem:[%s2 + $0x378] sm:$0xff]
    %v142 = vld [vmem:[%s2 + $0x380] sm:$0xff]
    %v143 = vld [vmem:[%s2 + $0x388] sm:$0xff]
    %v144 = vld [vmem:[%s2 + $0x390] sm:$0xff]
    %v145 = vld [vmem:[%s2 + $0x398] sm:$0xff]
    %v146 = vld [vmem:[%s2 + $0x3a0] sm:$0xff]
    %v147 = vld [vmem:[%s2 + $0x3a8] sm:$0xff]
    %v148 = vld [vmem:[%s2 + $0x3b0] sm:$0xff]
    %v149 = vld [vmem:[%s2 + $0x3b8] sm:$0xff]
    %v150 = vld [vmem:[%s2 + $0x3c0] sm:$0xff]
    %v151 = vld [vmem:[%s2 + $0x3c8] sm:$0xff]
    %v152 = vld [vmem:[%s2 + $0x3d0] sm:$0xff]
    %v153 = vld [vmem:[%s2 + $0x3d8] sm:$0xff]
    %v154 = vld [vmem:[%s2 + $0x3e0] sm:$0xff]
    %v155 = vld [vmem:[%s2 + $0x3e8] sm:$0xff]
    %v156 = vld [vmem:[%s2 + $0x3f0] sm:$0xff]
    %v157 = vld [vmem:[%s2 + $0x3f8] sm:$0xff]
    %v158 = vld [vmem:[%s2 + $0x400] sm:$0xff]
    %v159 = vld [vmem:[%s2 + $0x408] sm:$0xff]
    %v160 = vld [vmem:[%s2 + $0x410] sm:$0xff]
    %v161 = vld [vmem:[%s2 + $0x418] sm:$0xff]
    %v162 = vld [vmem:[%s2 + $0x420] sm:$0xff]
    %v163 = vld [vmem:[%s2 + $0x428] sm:$0xff]
    %v164 = vld [vmem:[%s2 + $0x430] sm:$0xff]
    %v165 = vld [vmem:[%s2 + $0x438] sm:$0xff]
    %v166 = vld [vmem:[%s2 + $0x440] sm:$0xff]
    %v167 = vld [vmem:[%s2 + $0x448] sm:$0xff]
    %v168 = vld [vmem:[%s2 + $0x450] sm:$0xff]
    %v169 = vld [vmem:[%s2 + $0x458] sm:$0xff]
    %v170 = vld [vmem:[%s2 + $0x460] sm:$0xff]
    %v171 = vld [vmem:[%s2 + $0x468] sm:$0xff]
    %v172 = vld [vmem:[%s2 + $0x470] sm:$0xff]
    %v173 = vld [vmem:[%s2 + $0x478] sm:$0xff]
    %v174 = vld [vmem:[%s2 + $0x480] sm:$0xff]
    %v175 = vld [vmem:[%s2 + $0x488] sm:$0xff]
    %v176 = vld [vmem:[%s2 + $0x490] sm:$0xff]
    %v177 = vld [vmem:[%s2 + $0x498] sm:$0xff]
    %v178 = vld [vmem:[%s2 + $0x4a0] sm:$0xff]
    %v179 = vld [vmem:[%s2 + $0x4a8] sm:$0xff]
    %v180 = vld [vmem:[%s2 + $0x4b0] sm:$0xff]
    %v181 = vld [vmem:[%s2 + $0x4b8] sm:$0xff]
    %v182 = vld [vmem:[%s2 + $0x4c0] sm:$0xff]
    %v183 = vld [vmem:[%s2 + $0x4c8] sm:$0xff]
    %v184 = vld [vmem:[%s2 + $0x4d0] sm:$0xff]
    %v185 = vld [vmem:[%s2 + $0x4d8] sm:$0xff]
    %v186 = vld [vmem:[%s2 + $0x4e0] sm:$0xff]
    %v187 = vld [vmem:[%s2 + $0x4e8] sm:$0xff]
    %v188 = vld [vmem:[%s2 + $0x4f0] sm:$0xff]
    %v189 = vld [vmem:[%s2 + $0x4f8] sm:$0xff]
    %v190 = vld [vmem:[%s2 + $0x500] sm:$0xff]
    %v191 = vld [vmem:[%s2 + $0x508] sm:$0xff]
    %v192 = vld [vmem:[%s2 + $0x510] sm:$0xff]
    %v193 = vld [vmem:[%s2 + $0x518] sm:$0xff]
    %v194 = vld [vmem:[%s2 + $0x520] sm:$0xff]
    %v195 = vld [vmem:[%s2 + $0x528] sm:$0xff]
    %v196 = vld [vmem:[%s2 + $0x530] sm:$0xff]
    %v197 = vld [vmem:[%s2 + $0x538] sm:$0xff]
    %v198 = vld [vmem:[%s2 + $0x540] sm:$0xff]
    %v199 = vld [vmem:[%s2 + $0x548] sm:$0xff]
    %v200 = vld [vmem:[%s2 + $0x550] sm:$0xff]
    %v201 = vld [vmem:[%s2 + $0x558] sm:$0xff]
    %v202 = vld [vmem:[%s2 + $0x560] sm:$0xff]
    %v203 = vld [vmem:[%s2 + $0x568] sm:$0xff]
    %v204 = vld [vmem:[%s2 + $0x570] sm:$0xff]
    %v205 = vld [vmem:[%s2 + $0x578] sm:$0xff]
    %v206 = vld [vmem:[%s2 + $0x580] sm:$0xff]
    %v207 = vld [vmem:[%s2 + $0x588] sm:$0xff]
    %v208 = vld [vmem:[%s2 + $0x590] sm:$0xff]
    %v209 = vld [vmem:[%s2 + $0x598] sm:$0xff]
    %v210 = vld [vmem:[%s2 + $0x5a0] sm:$0xff]
    %v211 = vld [vmem:[%s2 + $0x5a8] sm:$0xff]
    %v212 = vld [vmem:[%s2 + $0x5b0] sm:$0xff]
    %v213 = vld [vmem:[%s2 + $0x5b8] sm:$0xff]
    %v214 = vld [vmem:[%s2 + $0x5c0] sm:$0xff]
    %v215 = vld [vmem:[%s2 + $0x5c8] sm:$0xff]
    %v216 = vld [vmem:[%s2 + $0x5d0] sm:$0xff]
    %v217 = vld [vmem:[%s2 + $0x5d8] sm:$0xff]
    %v218 = vld [vmem:[%s2 + $0x5e0] sm:$0xff]
    %v219 = vld [vmem:[%s2 + $0x5e8] sm:$0xff]
    %v220 = vld [vmem:[%s2 + $0x5f0] sm:$0xff]
    %v221 = vld [vmem:[%s2 + $0x5f8] sm:$0xff]
    %v222 = vld [vmem:[%s2 + $0x600] sm:$0xff]
    %v223 = vld [vmem:[%s2 + $0x608] sm:$0xff]
    %v224 = vld [vmem:[%s2 + $0x610] sm:$0xff]
    %v225 = vld [vmem:[%s2 + $0x618] sm:$0xff]
    %v226 = vld [vmem:[%s2 + $0x620] sm:$0xff]
    %v227 = vld [vmem:[%s2 + $0x628] sm:$0xff]
    %v228 = vld [vmem:[%s2 + $0x630] sm:$0xff]
    %v229 = vld [vmem:[%s2 + $0x638] sm:$0xff]
    %v230 = vld [vmem:[%s2 + $0x640] sm:$0xff]
    %v231 = vld [vmem:[%s2 + $0x648] sm:$0xff]
    %v232 = vld [vmem:[%s2 + $0x650] sm:$0xff]
    %v233 = vld [vmem:[%s2 + $0x658] sm:$0xff]
    %v234 = vld [vmem:[%s2 + $0x660] sm:$0xff]
    %v235 = vld [vmem:[%s2 + $0x668] sm:$0xff]
    %v236 = vld [vmem:[%s2 + $0x670] sm:$0xff]
    %v237 = vld [vmem:[%s2 + $0x678] sm:$0xff]
    %v238 = vld [vmem:[%s2 + $0x680] sm:$0xff]
    %v239 = vld [vmem:[%s2 + $0x688] sm:$0xff]
    %v240 = vld [vmem:[%s2 + $0x690] sm:$0xff]
    %v241 = vld [vmem:[%s2 + $0x698] sm:$0xff]
    %v242 = vld [vmem:[%s2 + $0x6a0] sm:$0xff]
    %v243 = vld [vmem:[%s2 + $0x6a8] sm:$0xff]
    %v244 = vld [vmem:[%s2 + $0x6b0] sm:$0xff]
    %v245 = vld [vmem:[%s2 + $0x6b8] sm:$0xff]
    %v246 = vld [vmem:[%s2 + $0x6c0] sm:$0xff]
    %v247 = vld [vmem:[%s2 + $0x6c8] sm:$0xff]
    %v248 = vld [vmem:[%s2 + $0x6d0] sm:$0xff]
    %v249 = vld [vmem:[%s2 + $0x6d8] sm:$0xff]
    %v250 = vld [vmem:[%s2 + $0x6e0] sm:$0xff]
    %v251 = vld [vmem:[%s2 + $0x6e8] sm:$0xff]
    %v252 = vld [vmem:[%s2 + $0x6f0] sm:$0xff]
    %v253 = vld [vmem:[%s2 + $0x6f8] sm:$0xff]
    %v254 = vld [vmem:[%s2 + $0x700] sm:$0xff]
    %v255 = vld [vmem:[%s2 + $0x708] sm:$0xff]
    %v256 = vld [vmem:[%s2 + $0x710] sm:$0xff]
    %v257 = vld [vmem:[%s2 + $0x718] sm:$0xff]
    %v258 = vld [vmem:[%s2 + $0x720] sm:$0xff]
    %v259 = vld [vmem:[%s2 + $0x728] sm:$0xff]
    %v260 = vld [vmem:[%s2 + $0x730] sm:$0xff]
    %v261 = vld [vmem:[%s2 + $0x738] sm:$0xff]
    %v262 = vld [vmem:[%s2 + $0x740] sm:$0xff]
    %v263 = vld [vmem:[%s2 + $0x748] sm:$0xff]
    %v264 = vld [vmem:[%s2 + $0x750] sm:$0xff]
    %v265 = vld [vmem:[%s2 + $0x758] sm:$0xff]
    %v266 = vld [vmem:[%s2 + $0x760] sm:$0xff]
    %v267 = vld [vmem:[%s2 + $0x768] sm:$0xff]
    %v268 = vld [vmem:[%s2 + $0x770] sm:$0xff]
    %v269 = vld [vmem:[%s2 + $0x778] sm:$0xff]
    %v270 = vld [vmem:[%s2 + $0x780] sm:$0xff]
    %v271 = vld [vmem:[%s2 + $0x788] sm:$0xff]
    %v272 = vld [vmem:[%s2 + $0x790] sm:$0xff]
    %v273 = vld [vmem:[%s2 + $0x798] sm:$0xff]
    %v274 = vld [vmem:[%s2 + $0x7a0] sm:$0xff]
    %v275 = vld [vmem:[%s2 + $0x7a8] sm:$0xff]
    %v276 = vld [vmem:[%s2 + $0x7b0] sm:$0xff]
    %v277 = vld [vmem:[%s2 + $0x7b8] sm:$0xff]
    %v278 = vld [vmem:[%s2 + $0x7c0] sm:$0xff]
    %v279 = vld [vmem:[%s2 + $0x7c8] sm:$0xff]
    %v280 = vld [vmem:[%s2 + $0x7d0] sm:$0xff]
    %v281 = vld [vmem:[%s2 + $0x7d8] sm:$0xff]
    %v282 = vld [vmem:[%s2 + $0x7e0] sm:$0xff]
    %v283 = vld [vmem:[%s2 + $0x7e8] sm:$0xff]
    %v284 = vld [vmem:[%s2 + $0x7f0] sm:$0xff]
    %v285 = vld [vmem:[%s2 + $0x7f8] sm:$0xff]
    %v286 = vld [vmem:[%s3] sm:$0x1]
    %v287 = vld [vmem:[%s0] sm:$0xff]
    %v288 = vld [vmem:[%s0 + $0x8] sm:$0xff]
    %v289 = vld [vmem:[%s0 + $0x10] sm:$0xff]
    %v290 = vld [vmem:[%s0 + $0x18] sm:$0xff]
    %v291 = vld [vmem:[%s0 + $0x20] sm:$0xff]
    %v292 = vld [vmem:[%s0 + $0x28] sm:$0xff]
    %v293 = vld [vmem:[%s0 + $0x30] sm:$0xff]
    %v294 = vld [vmem:[%s0 + $0x38] sm:$0xff]
    %v295 = vld [vmem:[%s0 + $0x40] sm:$0xff]
    %v296 = vld [vmem:[%s0 + $0x48] sm:$0xff]
    %v297 = vld [vmem:[%s0 + $0x50] sm:$0xff]
    %v298 = vld [vmem:[%s0 + $0x58] sm:$0xff]
    %v299 = vld [vmem:[%s0 + $0x60] sm:$0xff]
    %v300 = vld [vmem:[%s0 + $0x68] sm:$0xff]
    %v301 = vld [vmem:[%s0 + $0x70] sm:$0xff]
    %v302 = vld [vmem:[%s0 + $0x78] sm:$0xff]
    %v303 = vld [vmem:[%s0 + $0x80] sm:$0xff]
    %v304 = vld [vmem:[%s0 + $0x88] sm:$0xff]
    %v305 = vld [vmem:[%s0 + $0x90] sm:$0xff]
    %v306 = vld [vmem:[%s0 + $0x98] sm:$0xff]
    %v307 = vld [vmem:[%s0 + $0xa0] sm:$0xff]
    %v308 = vld [vmem:[%s0 + $0xa8] sm:$0xff]
    %v309 = vld [vmem:[%s0 + $0xb0] sm:$0xff]
    %v310 = vld [vmem:[%s0 + $0xb8] sm:$0xff]
    %v311 = vld [vmem:[%s0 + $0xc0] sm:$0xff]
    %v312 = vld [vmem:[%s0 + $0xc8] sm:$0xff]
    %v313 = vld [vmem:[%s0 + $0xd0] sm:$0xff]
    %v314 = vld [vmem:[%s0 + $0xd8] sm:$0xff]
    %v315 = vld [vmem:[%s0 + $0xe0] sm:$0xff]
    %v316 = vld [vmem:[%s0 + $0xe8] sm:$0xff]
    %v317 = vld [vmem:[%s0 + $0xf0] sm:$0xff]
    %v318 = vld [vmem:[%s0 + $0xf8] sm:$0xff]
    %v319 = vld [vmem:[%s0 + $0x100] sm:$0xff]
    %v320 = vld [vmem:[%s0 + $0x108] sm:$0xff]
    %v321 = vld [vmem:[%s0 + $0x110] sm:$0xff]
    %v322 = vld [vmem:[%s0 + $0x118] sm:$0xff]
    %v323 = vld [vmem:[%s0 + $0x120] sm:$0xff]
    %v324 = vld [vmem:[%s0 + $0x128] sm:$0xff]
    %v325 = vld [vmem:[%s0 + $0x130] sm:$0xff]
    %v326 = vld [vmem:[%s0 + $0x138] sm:$0xff]
    %v327 = vld [vmem:[%s0 + $0x140] sm:$0xff]
    %v328 = vld [vmem:[%s0 + $0x148] sm:$0xff]
    %v329 = vld [vmem:[%s0 + $0x150] sm:$0xff]
    %v330 = vld [vmem:[%s0 + $0x158] sm:$0xff]
    %v331 = vld [vmem:[%s0 + $0x160] sm:$0xff]
    %v332 = vld [vmem:[%s0 + $0x168] sm:$0xff]
    %v333 = vld [vmem:[%s0 + $0x170] sm:$0xff]
    %v334 = vld [vmem:[%s0 + $0x178] sm:$0xff]
    %v335 = vld [vmem:[%s0 + $0x180] sm:$0xff]
    %v336 = vld [vmem:[%s0 + $0x188] sm:$0xff]
    %v337 = vld [vmem:[%s0 + $0x190] sm:$0xff]
    %v338 = vld [vmem:[%s0 + $0x198] sm:$0xff]
    %v339 = vld [vmem:[%s0 + $0x1a0] sm:$0xff]
    %v340 = vld [vmem:[%s0 + $0x1a8] sm:$0xff]
    %v341 = vld [vmem:[%s0 + $0x1b0] sm:$0xff]
    %v342 = vld [vmem:[%s0 + $0x1b8] sm:$0xff]
    %v343 = vld [vmem:[%s0 + $0x1c0] sm:$0xff]
    %v344 = vld [vmem:[%s0 + $0x1c8] sm:$0xff]
    %v345 = vld [vmem:[%s0 + $0x1d0] sm:$0xff]
    %v346 = vld [vmem:[%s0 + $0x1d8] sm:$0xff]
    %v347 = vld [vmem:[%s0 + $0x1e0] sm:$0xff]
    %v348 = vld [vmem:[%s0 + $0x1e8] sm:$0xff]
    %v349 = vld [vmem:[%s0 + $0x1f0] sm:$0xff]
    %v350 = vld [vmem:[%s0 + $0x1f8] sm:$0xff]
    %v351 = vld [vmem:[%s0 + $0x200] sm:$0xff]
    %v352 = vld [vmem:[%s0 + $0x208] sm:$0xff]
    %v353 = vld [vmem:[%s0 + $0x210] sm:$0xff]
    %v354 = vld [vmem:[%s0 + $0x218] sm:$0xff]
    %v355 = vld [vmem:[%s0 + $0x220] sm:$0xff]
    %v356 = vld [vmem:[%s0 + $0x228] sm:$0xff]
    %v357 = vld [vmem:[%s0 + $0x230] sm:$0xff]
    %v358 = vld [vmem:[%s0 + $0x238] sm:$0xff]
    %v359 = vld [vmem:[%s0 + $0x240] sm:$0xff]
    %v360 = vld [vmem:[%s0 + $0x248] sm:$0xff]
    %v361 = vld [vmem:[%s0 + $0x250] sm:$0xff]
    %v362 = vld [vmem:[%s0 + $0x258] sm:$0xff]
    %v363 = vld [vmem:[%s0 + $0x260] sm:$0xff]
    %v364 = vld [vmem:[%s0 + $0x268] sm:$0xff]
    %v365 = vld [vmem:[%s0 + $0x270] sm:$0xff]
    %v366 = vld [vmem:[%s0 + $0x278] sm:$0xff]
    %v367 = vld [vmem:[%s0 + $0x280] sm:$0xff]
    %v368 = vld [vmem:[%s0 + $0x288] sm:$0xff]
    %v369 = vld [vmem:[%s0 + $0x290] sm:$0xff]
    %v370 = vld [vmem:[%s0 + $0x298] sm:$0xff]
    %v371 = vld [vmem:[%s0 + $0x2a0] sm:$0xff]
    %v372 = vld [vmem:[%s0 + $0x2a8] sm:$0xff]
    %v373 = vld [vmem:[%s0 + $0x2b0] sm:$0xff]
    %v374 = vld [vmem:[%s0 + $0x2b8] sm:$0xff]
    %v375 = vld [vmem:[%s0 + $0x2c0] sm:$0xff]
    %v376 = vld [vmem:[%s0 + $0x2c8] sm:$0xff]
    %v377 = vld [vmem:[%s0 + $0x2d0] sm:$0xff]
    %v378 = vld [vmem:[%s0 + $0x2d8] sm:$0xff]
    %v379 = vld [vmem:[%s0 + $0x2e0] sm:$0xff]
    %v380 = vld [vmem:[%s0 + $0x2e8] sm:$0xff]
    %v381 = vld [vmem:[%s0 + $0x2f0] sm:$0xff]
    %v382 = vld [vmem:[%s0 + $0x2f8] sm:$0xff]
    %v383 = vld [vmem:[%s0 + $0x300] sm:$0xff]
    %v384 = vld [vmem:[%s0 + $0x308] sm:$0xff]
    %v385 = vld [vmem:[%s0 + $0x310] sm:$0xff]
    %v386 = vld [vmem:[%s0 + $0x318] sm:$0xff]
    %v387 = vld [vmem:[%s0 + $0x320] sm:$0xff]
    %v388 = vld [vmem:[%s0 + $0x328] sm:$0xff]
    %v389 = vld [vmem:[%s0 + $0x330] sm:$0xff]
    %v390 = vld [vmem:[%s0 + $0x338] sm:$0xff]
    %v391 = vld [vmem:[%s0 + $0x340] sm:$0xff]
    %v392 = vld [vmem:[%s0 + $0x348] sm:$0xff]
    %v393 = vld [vmem:[%s0 + $0x350] sm:$0xff]
    %v394 = vld [vmem:[%s0 + $0x358] sm:$0xff]
    %v395 = vld [vmem:[%s0 + $0x360] sm:$0xff]
    %v396 = vld [vmem:[%s0 + $0x368] sm:$0xff]
    %v397 = vld [vmem:[%s0 + $0x370] sm:$0xff]
    %v398 = vld [vmem:[%s0 + $0x378] sm:$0xff]
    %v399 = vld [vmem:[%s0 + $0x380] sm:$0xff]
    %v400 = vld [vmem:[%s0 + $0x388] sm:$0xff]
    %v401 = vld [vmem:[%s0 + $0x390] sm:$0xff]
    %v402 = vld [vmem:[%s0 + $0x398] sm:$0xff]
    %v403 = vld [vmem:[%s0 + $0x3a0] sm:$0xff]
    %v404 = vld [vmem:[%s0 + $0x3a8] sm:$0xff]
    %v405 = vld [vmem:[%s0 + $0x3b0] sm:$0xff]
    %v406 = vld [vmem:[%s0 + $0x3b8] sm:$0xff]
    %v407 = vld [vmem:[%s0 + $0x3c0] sm:$0xff]
    %v408 = vld [vmem:[%s0 + $0x3c8] sm:$0xff]
    %v409 = vld [vmem:[%s0 + $0x3d0] sm:$0xff]
    %v410 = vld [vmem:[%s0 + $0x3d8] sm:$0xff]
    %v411 = vld [vmem:[%s0 + $0x3e0] sm:$0xff]
    %v412 = vld [vmem:[%s0 + $0x3e8] sm:$0xff]
    %v413 = vld [vmem:[%s0 + $0x3f0] sm:$0xff]
    %v414 = vld [vmem:[%s0 + $0x3f8] sm:$0xff]
    %v415 = vld [vmem:[%s0 + $0x400] sm:$0xff]
    %v416 = vld [vmem:[%s0 + $0x408] sm:$0xff]
    %v417 = vld [vmem:[%s0 + $0x410] sm:$0xff]
    %v418 = vld [vmem:[%s0 + $0x418] sm:$0xff]
    %v419 = vld [vmem:[%s0 + $0x420] sm:$0xff]
    %v420 = vld [vmem:[%s0 + $0x428] sm:$0xff]
    %v421 = vld [vmem:[%s0 + $0x430] sm:$0xff]
    %v422 = vld [vmem:[%s0 + $0x438] sm:$0xff]
    %v423 = vld [vmem:[%s0 + $0x440] sm:$0xff]
    %v424 = vld [vmem:[%s0 + $0x448] sm:$0xff]
    %v425 = vld [vmem:[%s0 + $0x450] sm:$0xff]
    %v426 = vld [vmem:[%s0 + $0x458] sm:$0xff]
    %v427 = vld [vmem:[%s0 + $0x460] sm:$0xff]
    %v428 = vld [vmem:[%s0 + $0x468] sm:$0xff]
    %v429 = vld [vmem:[%s0 + $0x470] sm:$0xff]
    %v430 = vld [vmem:[%s0 + $0x478] sm:$0xff]
    %v431 = vld [vmem:[%s0 + $0x480] sm:$0xff]
    %v432 = vld [vmem:[%s0 + $0x488] sm:$0xff]
    %v433 = vld [vmem:[%s0 + $0x490] sm:$0xff]
    %v434 = vld [vmem:[%s0 + $0x498] sm:$0xff]
    %v435 = vld [vmem:[%s0 + $0x4a0] sm:$0xff]
    %v436 = vld [vmem:[%s0 + $0x4a8] sm:$0xff]
    %v437 = vld [vmem:[%s0 + $0x4b0] sm:$0xff]
    %v438 = vld [vmem:[%s0 + $0x4b8] sm:$0xff]
    %v439 = vld [vmem:[%s0 + $0x4c0] sm:$0xff]
    %v440 = vld [vmem:[%s0 + $0x4c8] sm:$0xff]
    %v441 = vld [vmem:[%s0 + $0x4d0] sm:$0xff]
    %v442 = vld [vmem:[%s0 + $0x4d8] sm:$0xff]
    %v443 = vld [vmem:[%s0 + $0x4e0] sm:$0xff]
    %v444 = vld [vmem:[%s0 + $0x4e8] sm:$0xff]
    %v445 = vld [vmem:[%s0 + $0x4f0] sm:$0xff]
    %v446 = vld [vmem:[%s0 + $0x4f8] sm:$0xff]
    %v447 = vld [vmem:[%s0 + $0x500] sm:$0xff]
    %v448 = vld [vmem:[%s0 + $0x508] sm:$0xff]
    %v449 = vld [vmem:[%s0 + $0x510] sm:$0xff]
    %v450 = vld [vmem:[%s0 + $0x518] sm:$0xff]
    %v451 = vld [vmem:[%s0 + $0x520] sm:$0xff]
    %v452 = vld [vmem:[%s0 + $0x528] sm:$0xff]
    %v453 = vld [vmem:[%s0 + $0x530] sm:$0xff]
    %v454 = vld [vmem:[%s0 + $0x538] sm:$0xff]
    %v455 = vld [vmem:[%s0 + $0x540] sm:$0xff]
    %v456 = vld [vmem:[%s0 + $0x548] sm:$0xff]
    %v457 = vld [vmem:[%s0 + $0x550] sm:$0xff]
    %v458 = vld [vmem:[%s0 + $0x558] sm:$0xff]
    %v459 = vld [vmem:[%s0 + $0x560] sm:$0xff]
    %v460 = vld [vmem:[%s0 + $0x568] sm:$0xff]
    %v461 = vld [vmem:[%s0 + $0x570] sm:$0xff]
    %v462 = vld [vmem:[%s0 + $0x578] sm:$0xff]
    %v463 = vld [vmem:[%s0 + $0x580] sm:$0xff]
    %v464 = vld [vmem:[%s0 + $0x588] sm:$0xff]
    %v465 = vld [vmem:[%s0 + $0x590] sm:$0xff]
    %v466 = vld [vmem:[%s0 + $0x598] sm:$0xff]
    %v467 = vld [vmem:[%s0 + $0x5a0] sm:$0xff]
    %v468 = vld [vmem:[%s0 + $0x5a8] sm:$0xff]
    %v469 = vld [vmem:[%s0 + $0x5b0] sm:$0xff]
    %v470 = vld [vmem:[%s0 + $0x5b8] sm:$0xff]
    %v471 = vld [vmem:[%s0 + $0x5c0] sm:$0xff]
    %v472 = vld [vmem:[%s0 + $0x5c8] sm:$0xff]
    %v473 = vld [vmem:[%s0 + $0x5d0] sm:$0xff]
    %v474 = vld [vmem:[%s0 + $0x5d8] sm:$0xff]
    %v475 = vld [vmem:[%s0 + $0x5e0] sm:$0xff]
    %v476 = vld [vmem:[%s0 + $0x5e8] sm:$0xff]
    %v477 = vld [vmem:[%s0 + $0x5f0] sm:$0xff]
    %v478 = vld [vmem:[%s0 + $0x5f8] sm:$0xff]
    %v479 = vld [vmem:[%s0 + $0x600] sm:$0xff]
    %v480 = vld [vmem:[%s0 + $0x608] sm:$0xff]
    %v481 = vld [vmem:[%s0 + $0x610] sm:$0xff]
    %v482 = vld [vmem:[%s0 + $0x618] sm:$0xff]
    %v483 = vld [vmem:[%s0 + $0x620] sm:$0xff]
    %v484 = vld [vmem:[%s0 + $0x628] sm:$0xff]
    %v485 = vld [vmem:[%s0 + $0x630] sm:$0xff]
    %v486 = vld [vmem:[%s0 + $0x638] sm:$0xff]
    %v487 = vld [vmem:[%s0 + $0x640] sm:$0xff]
    %v488 = vld [vmem:[%s0 + $0x648] sm:$0xff]
    %v489 = vld [vmem:[%s0 + $0x650] sm:$0xff]
    %v490 = vld [vmem:[%s0 + $0x658] sm:$0xff]
    %v491 = vld [vmem:[%s0 + $0x660] sm:$0xff]
    %v492 = vld [vmem:[%s0 + $0x668] sm:$0xff]
    %v493 = vld [vmem:[%s0 + $0x670] sm:$0xff]
    %v494 = vld [vmem:[%s0 + $0x678] sm:$0xff]
    %v495 = vld [vmem:[%s0 + $0x680] sm:$0xff]
    %v496 = vld [vmem:[%s0 + $0x688] sm:$0xff]
    %v497 = vld [vmem:[%s0 + $0x690] sm:$0xff]
    %v498 = vld [vmem:[%s0 + $0x698] sm:$0xff]
    %v499 = vld [vmem:[%s0 + $0x6a0] sm:$0xff]
    %v500 = vld [vmem:[%s0 + $0x6a8] sm:$0xff]
    %v501 = vld [vmem:[%s0 + $0x6b0] sm:$0xff]
    %v502 = vld [vmem:[%s0 + $0x6b8] sm:$0xff]
    %v503 = vld [vmem:[%s0 + $0x6c0] sm:$0xff]
    %v504 = vld [vmem:[%s0 + $0x6c8] sm:$0xff]
    %v505 = vld [vmem:[%s0 + $0x6d0] sm:$0xff]
    %v506 = vld [vmem:[%s0 + $0x6d8] sm:$0xff]
    %v507 = vld [vmem:[%s0 + $0x6e0] sm:$0xff]
    %v508 = vld [vmem:[%s0 + $0x6e8] sm:$0xff]
    %v509 = vld [vmem:[%s0 + $0x6f0] sm:$0xff]
    %v510 = vld [vmem:[%s0 + $0x6f8] sm:$0xff]
    %v511 = vld [vmem:[%s0 + $0x700] sm:$0xff]
    %v512 = vld [vmem:[%s0 + $0x708] sm:$0xff]
    %v513 = vld [vmem:[%s0 + $0x710] sm:$0xff]
    %v514 = vld [vmem:[%s0 + $0x718] sm:$0xff]
    %v515 = vld [vmem:[%s0 + $0x720] sm:$0xff]
    %v516 = vld [vmem:[%s0 + $0x728] sm:$0xff]
    %v517 = vld [vmem:[%s0 + $0x730] sm:$0xff]
    %v518 = vld [vmem:[%s0 + $0x738] sm:$0xff]
    %v519 = vld [vmem:[%s0 + $0x740] sm:$0xff]
    %v520 = vld [vmem:[%s0 + $0x748] sm:$0xff]
    %v521 = vld [vmem:[%s0 + $0x750] sm:$0xff]
    %v522 = vld [vmem:[%s0 + $0x758] sm:$0xff]
    %v523 = vld [vmem:[%s0 + $0x760] sm:$0xff]
    %v524 = vld [vmem:[%s0 + $0x768] sm:$0xff]
    %v525 = vld [vmem:[%s0 + $0x770] sm:$0xff]
    %v526 = vld [vmem:[%s0 + $0x778] sm:$0xff]
    %v527 = vld [vmem:[%s0 + $0x780] sm:$0xff]
    %v528 = vld [vmem:[%s0 + $0x788] sm:$0xff]
    %v529 = vld [vmem:[%s0 + $0x790] sm:$0xff]
    %v530 = vld [vmem:[%s0 + $0x798] sm:$0xff]
    %v531 = vld [vmem:[%s0 + $0x7a0] sm:$0xff]
    %v532 = vld [vmem:[%s0 + $0x7a8] sm:$0xff]
    %v533 = vld [vmem:[%s0 + $0x7b0] sm:$0xff]
    %v534 = vld [vmem:[%s0 + $0x7b8] sm:$0xff]
    %v535 = vld [vmem:[%s0 + $0x7c0] sm:$0xff]
    %v536 = vld [vmem:[%s0 + $0x7c8] sm:$0xff]
    %v537 = vld [vmem:[%s0 + $0x7d0] sm:$0xff]
    %v538 = vld [vmem:[%s0 + $0x7d8] sm:$0xff]
    %v539 = vld [vmem:[%s0 + $0x7e0] sm:$0xff]
    %v540 = vld [vmem:[%s0 + $0x7e8] sm:$0xff]
    %v541 = vld [vmem:[%s0 + $0x7f0] sm:$0xff]
    %v542 = vld [vmem:[%s0 + $0x7f8] sm:$0xff]
    %v544 = vlaneseq
    %v545 = vshrl.u32 %v544, 7
    %v546 = vsub.s32 0, %v545
    %v547 = vrot.slane %v286, %v546
    %549 = vxpose.xlu0.b32.start [1/16] %v287, 128
    %550 = vxpose.xlu0.b32.cont [2/16] %v288, 128
    %551 = vxpose.xlu0.b32.cont [3/16] %v289, 128
    %552 = vxpose.xlu0.b32.cont [4/16] %v290, 128
    %553 = vxpose.xlu0.b32.cont [5/16] %v291, 128
    %554 = vxpose.xlu0.b32.cont [6/16] %v292, 128
    %555 = vxpose.xlu0.b32.cont [7/16] %v293, 128
    %556 = vxpose.xlu0.b32.cont [8/16] %v294, 128
    %557 = vxpose.xlu0.b32.cont [9/16] %v295, 128
    %558 = vxpose.xlu0.b32.cont [10/16] %v296, 128
    %559 = vxpose.xlu0.b32.cont [11/16] %v297, 128
    %560 = vxpose.xlu0.b32.cont [12/16] %v298, 128
    %561 = vxpose.xlu0.b32.cont [13/16] %v299, 128
    %562 = vxpose.xlu0.b32.cont [14/16] %v300, 128
    %563 = vxpose.xlu0.b32.cont [15/16] %v301, 128
    %564 = vxpose.xlu0.b32.end [16/16] %v302, 128
    %v565 = vpop.trf.xlu0
    %v566 = vpop.trf.xlu0
    %v567 = vpop.trf.xlu0
    %v568 = vpop.trf.xlu0
    %v569 = vpop.trf.xlu0
    %v570 = vpop.trf.xlu0
    %v571 = vpop.trf.xlu0
    %v572 = vpop.trf.xlu0
    %v573 = vpop.trf.xlu0
    %v574 = vpop.trf.xlu0
    %v575 = vpop.trf.xlu0
    %v576 = vpop.trf.xlu0
    %v577 = vpop.trf.xlu0
    %v578 = vpop.trf.xlu0
    %v579 = vpop.trf.xlu0
    %v580 = vpop.trf.xlu0
    %581 = vxpose.xlu0.b32.start [1/16] %v303, 128
    %582 = vxpose.xlu0.b32.cont [2/16] %v304, 128
    %583 = vxpose.xlu0.b32.cont [3/16] %v305, 128
    %584 = vxpose.xlu0.b32.cont [4/16] %v306, 128
    %585 = vxpose.xlu0.b32.cont [5/16] %v307, 128
    %586 = vxpose.xlu0.b32.cont [6/16] %v308, 128
    %587 = vxpose.xlu0.b32.cont [7/16] %v309, 128
    %588 = vxpose.xlu0.b32.cont [8/16] %v310, 128
    %589 = vxpose.xlu0.b32.cont [9/16] %v311, 128
    %590 = vxpose.xlu0.b32.cont [10/16] %v312, 128
    %591 = vxpose.xlu0.b32.cont [11/16] %v313, 128
    %592 = vxpose.xlu0.b32.cont [12/16] %v314, 128
    %593 = vxpose.xlu0.b32.cont [13/16] %v315, 128
    %594 = vxpose.xlu0.b32.cont [14/16] %v316, 128
    %595 = vxpose.xlu0.b32.cont [15/16] %v317, 128
    %596 = vxpose.xlu0.b32.end [16/16] %v318, 128
    %v597 = vpop.trf.xlu0
    %v598 = vpop.trf.xlu0
    %v599 = vpop.trf.xlu0
    %v600 = vpop.trf.xlu0
    %v601 = vpop.trf.xlu0
    %v602 = vpop.trf.xlu0
    %v603 = vpop.trf.xlu0
    %v604 = vpop.trf.xlu0
    %v605 = vpop.trf.xlu0
    %v606 = vpop.trf.xlu0
    %v607 = vpop.trf.xlu0
    %v608 = vpop.trf.xlu0
    %v609 = vpop.trf.xlu0
    %v610 = vpop.trf.xlu0
    %v611 = vpop.trf.xlu0
    %v612 = vpop.trf.xlu0
    %613 = vxpose.xlu0.b32.start [1/16] %v319, 128
    %614 = vxpose.xlu0.b32.cont [2/16] %v320, 128
    %615 = vxpose.xlu0.b32.cont [3/16] %v321, 128
    %616 = vxpose.xlu0.b32.cont [4/16] %v322, 128
    %617 = vxpose.xlu0.b32.cont [5/16] %v323, 128
    %618 = vxpose.xlu0.b32.cont [6/16] %v324, 128
    %619 = vxpose.xlu0.b32.cont [7/16] %v325, 128
    %620 = vxpose.xlu0.b32.cont [8/16] %v326, 128
    %621 = vxpose.xlu0.b32.cont [9/16] %v327, 128
    %622 = vxpose.xlu0.b32.cont [10/16] %v328, 128
    %623 = vxpose.xlu0.b32.cont [11/16] %v329, 128
    %624 = vxpose.xlu0.b32.cont [12/16] %v330, 128
    %625 = vxpose.xlu0.b32.cont [13/16] %v331, 128
    %626 = vxpose.xlu0.b32.cont [14/16] %v332, 128
    %627 = vxpose.xlu0.b32.cont [15/16] %v333, 128
    %628 = vxpose.xlu0.b32.end [16/16] %v334, 128
    %v629 = vpop.trf.xlu0
    %v630 = vpop.trf.xlu0
    %v631 = vpop.trf.xlu0
    %v632 = vpop.trf.xlu0
    %v633 = vpop.trf.xlu0
    %v634 = vpop.trf.xlu0
    %v635 = vpop.trf.xlu0
    %v636 = vpop.trf.xlu0
    %v637 = vpop.trf.xlu0
    %v638 = vpop.trf.xlu0
    %v639 = vpop.trf.xlu0
    %v640 = vpop.trf.xlu0
    %v641 = vpop.trf.xlu0
    %v642 = vpop.trf.xlu0
    %v643 = vpop.trf.xlu0
    %v644 = vpop.trf.xlu0
    %645 = vxpose.xlu0.b32.start [1/16] %v335, 128
    %646 = vxpose.xlu0.b32.cont [2/16] %v336, 128
    %647 = vxpose.xlu0.b32.cont [3/16] %v337, 128
    %648 = vxpose.xlu0.b32.cont [4/16] %v338, 128
    %649 = vxpose.xlu0.b32.cont [5/16] %v339, 128
    %650 = vxpose.xlu0.b32.cont [6/16] %v340, 128
    %651 = vxpose.xlu0.b32.cont [7/16] %v341, 128
    %652 = vxpose.xlu0.b32.cont [8/16] %v342, 128
    %653 = vxpose.xlu0.b32.cont [9/16] %v343, 128
    %654 = vxpose.xlu0.b32.cont [10/16] %v344, 128
    %655 = vxpose.xlu0.b32.cont [11/16] %v345, 128
    %656 = vxpose.xlu0.b32.cont [12/16] %v346, 128
    %657 = vxpose.xlu0.b32.cont [13/16] %v347, 128
    %658 = vxpose.xlu0.b32.cont [14/16] %v348, 128
    %659 = vxpose.xlu0.b32.cont [15/16] %v349, 128
    %660 = vxpose.xlu0.b32.end [16/16] %v350, 128
    %v661 = vpop.trf.xlu0
    %v662 = vpop.trf.xlu0
    %v663 = vpop.trf.xlu0
    %v664 = vpop.trf.xlu0
    %v665 = vpop.trf.xlu0
    %v666 = vpop.trf.xlu0
    %v667 = vpop.trf.xlu0
    %v668 = vpop.trf.xlu0
    %v669 = vpop.trf.xlu0
    %v670 = vpop.trf.xlu0
    %v671 = vpop.trf.xlu0
    %v672 = vpop.trf.xlu0
    %v673 = vpop.trf.xlu0
    %v674 = vpop.trf.xlu0
    %v675 = vpop.trf.xlu0
    %v676 = vpop.trf.xlu0
    %677 = vxpose.xlu0.b32.start [1/16] %v351, 128
    %678 = vxpose.xlu0.b32.cont [2/16] %v352, 128
    %679 = vxpose.xlu0.b32.cont [3/16] %v353, 128
    %680 = vxpose.xlu0.b32.cont [4/16] %v354, 128
    %681 = vxpose.xlu0.b32.cont [5/16] %v355, 128
    %682 = vxpose.xlu0.b32.cont [6/16] %v356, 128
    %683 = vxpose.xlu0.b32.cont [7/16] %v357, 128
    %684 = vxpose.xlu0.b32.cont [8/16] %v358, 128
    %685 = vxpose.xlu0.b32.cont [9/16] %v359, 128
    %686 = vxpose.xlu0.b32.cont [10/16] %v360, 128
    %687 = vxpose.xlu0.b32.cont [11/16] %v361, 128
    %688 = vxpose.xlu0.b32.cont [12/16] %v362, 128
    %689 = vxpose.xlu0.b32.cont [13/16] %v363, 128
    %690 = vxpose.xlu0.b32.cont [14/16] %v364, 128
    %691 = vxpose.xlu0.b32.cont [15/16] %v365, 128
    %692 = vxpose.xlu0.b32.end [16/16] %v366, 128
    %v693 = vpop.trf.xlu0
    %v694 = vpop.trf.xlu0
    %v695 = vpop.trf.xlu0
    %v696 = vpop.trf.xlu0
    %v697 = vpop.trf.xlu0
    %v698 = vpop.trf.xlu0
    %v699 = vpop.trf.xlu0
    %v700 = vpop.trf.xlu0
    %v701 = vpop.trf.xlu0
    %v702 = vpop.trf.xlu0
    %v703 = vpop.trf.xlu0
    %v704 = vpop.trf.xlu0
    %v705 = vpop.trf.xlu0
    %v706 = vpop.trf.xlu0
    %v707 = vpop.trf.xlu0
    %v708 = vpop.trf.xlu0
    %709 = vxpose.xlu0.b32.start [1/16] %v367, 128
    %710 = vxpose.xlu0.b32.cont [2/16] %v368, 128
    %711 = vxpose.xlu0.b32.cont [3/16] %v369, 128
    %712 = vxpose.xlu0.b32.cont [4/16] %v370, 128
    %713 = vxpose.xlu0.b32.cont [5/16] %v371, 128
    %714 = vxpose.xlu0.b32.cont [6/16] %v372, 128
    %715 = vxpose.xlu0.b32.cont [7/16] %v373, 128
    %716 = vxpose.xlu0.b32.cont [8/16] %v374, 128
    %717 = vxpose.xlu0.b32.cont [9/16] %v375, 128
    %718 = vxpose.xlu0.b32.cont [10/16] %v376, 128
    %719 = vxpose.xlu0.b32.cont [11/16] %v377, 128
    %720 = vxpose.xlu0.b32.cont [12/16] %v378, 128
    %721 = vxpose.xlu0.b32.cont [13/16] %v379, 128
    %722 = vxpose.xlu0.b32.cont [14/16] %v380, 128
    %723 = vxpose.xlu0.b32.cont [15/16] %v381, 128
    %724 = vxpose.xlu0.b32.end [16/16] %v382, 128
    %v725 = vpop.trf.xlu0
    %v726 = vpop.trf.xlu0
    %v727 = vpop.trf.xlu0
    %v728 = vpop.trf.xlu0
    %v729 = vpop.trf.xlu0
    %v730 = vpop.trf.xlu0
    %v731 = vpop.trf.xlu0
    %v732 = vpop.trf.xlu0
    %v733 = vpop.trf.xlu0
    %v734 = vpop.trf.xlu0
    %v735 = vpop.trf.xlu0
    %v736 = vpop.trf.xlu0
    %v737 = vpop.trf.xlu0
    %v738 = vpop.trf.xlu0
    %v739 = vpop.trf.xlu0
    %v740 = vpop.trf.xlu0
    %741 = vxpose.xlu0.b32.start [1/16] %v383, 128
    %742 = vxpose.xlu0.b32.cont [2/16] %v384, 128
    %743 = vxpose.xlu0.b32.cont [3/16] %v385, 128
    %744 = vxpose.xlu0.b32.cont [4/16] %v386, 128
    %745 = vxpose.xlu0.b32.cont [5/16] %v387, 128
    %746 = vxpose.xlu0.b32.cont [6/16] %v388, 128
    %747 = vxpose.xlu0.b32.cont [7/16] %v389, 128
    %748 = vxpose.xlu0.b32.cont [8/16] %v390, 128
    %749 = vxpose.xlu0.b32.cont [9/16] %v391, 128
    %750 = vxpose.xlu0.b32.cont [10/16] %v392, 128
    %751 = vxpose.xlu0.b32.cont [11/16] %v393, 128
    %752 = vxpose.xlu0.b32.cont [12/16] %v394, 128
    %753 = vxpose.xlu0.b32.cont [13/16] %v395, 128
    %754 = vxpose.xlu0.b32.cont [14/16] %v396, 128
    %755 = vxpose.xlu0.b32.cont [15/16] %v397, 128
    %756 = vxpose.xlu0.b32.end [16/16] %v398, 128
    %v757 = vpop.trf.xlu0
    %v758 = vpop.trf.xlu0
    %v759 = vpop.trf.xlu0
    %v760 = vpop.trf.xlu0
    %v761 = vpop.trf.xlu0
    %v762 = vpop.trf.xlu0
    %v763 = vpop.trf.xlu0
    %v764 = vpop.trf.xlu0
    %v765 = vpop.trf.xlu0
    %v766 = vpop.trf.xlu0
    %v767 = vpop.trf.xlu0
    %v768 = vpop.trf.xlu0
    %v769 = vpop.trf.xlu0
    %v770 = vpop.trf.xlu0
    %v771 = vpop.trf.xlu0
    %v772 = vpop.trf.xlu0
    %773 = vxpose.xlu0.b32.start [1/16] %v399, 128
    %774 = vxpose.xlu0.b32.cont [2/16] %v400, 128
    %775 = vxpose.xlu0.b32.cont [3/16] %v401, 128
    %776 = vxpose.xlu0.b32.cont [4/16] %v402, 128
    %777 = vxpose.xlu0.b32.cont [5/16] %v403, 128
    %778 = vxpose.xlu0.b32.cont [6/16] %v404, 128
    %779 = vxpose.xlu0.b32.cont [7/16] %v405, 128
    %780 = vxpose.xlu0.b32.cont [8/16] %v406, 128
    %781 = vxpose.xlu0.b32.cont [9/16] %v407, 128
    %782 = vxpose.xlu0.b32.cont [10/16] %v408, 128
    %783 = vxpose.xlu0.b32.cont [11/16] %v409, 128
    %784 = vxpose.xlu0.b32.cont [12/16] %v410, 128
    %785 = vxpose.xlu0.b32.cont [13/16] %v411, 128
    %786 = vxpose.xlu0.b32.cont [14/16] %v412, 128
    %787 = vxpose.xlu0.b32.cont [15/16] %v413, 128
    %788 = vxpose.xlu0.b32.end [16/16] %v414, 128
    %v789 = vpop.trf.xlu0
    %v790 = vpop.trf.xlu0
    %v791 = vpop.trf.xlu0
    %v792 = vpop.trf.xlu0
    %v793 = vpop.trf.xlu0
    %v794 = vpop.trf.xlu0
    %v795 = vpop.trf.xlu0
    %v796 = vpop.trf.xlu0
    %v797 = vpop.trf.xlu0
    %v798 = vpop.trf.xlu0
    %v799 = vpop.trf.xlu0
    %v800 = vpop.trf.xlu0
    %v801 = vpop.trf.xlu0
    %v802 = vpop.trf.xlu0
    %v803 = vpop.trf.xlu0
    %v804 = vpop.trf.xlu0
    %805 = vxpose.xlu0.b32.start [1/16] %v415, 128
    %806 = vxpose.xlu0.b32.cont [2/16] %v416, 128
    %807 = vxpose.xlu0.b32.cont [3/16] %v417, 128
    %808 = vxpose.xlu0.b32.cont [4/16] %v418, 128
    %809 = vxpose.xlu0.b32.cont [5/16] %v419, 128
    %810 = vxpose.xlu0.b32.cont [6/16] %v420, 128
    %811 = vxpose.xlu0.b32.cont [7/16] %v421, 128
    %812 = vxpose.xlu0.b32.cont [8/16] %v422, 128
    %813 = vxpose.xlu0.b32.cont [9/16] %v423, 128
    %814 = vxpose.xlu0.b32.cont [10/16] %v424, 128
    %815 = vxpose.xlu0.b32.cont [11/16] %v425, 128
    %816 = vxpose.xlu0.b32.cont [12/16] %v426, 128
    %817 = vxpose.xlu0.b32.cont [13/16] %v427, 128
    %818 = vxpose.xlu0.b32.cont [14/16] %v428, 128
    %819 = vxpose.xlu0.b32.cont [15/16] %v429, 128
    %820 = vxpose.xlu0.b32.end [16/16] %v430, 128
    %v821 = vpop.trf.xlu0
    %v822 = vpop.trf.xlu0
    %v823 = vpop.trf.xlu0
    %v824 = vpop.trf.xlu0
    %v825 = vpop.trf.xlu0
    %v826 = vpop.trf.xlu0
    %v827 = vpop.trf.xlu0
    %v828 = vpop.trf.xlu0
    %v829 = vpop.trf.xlu0
    %v830 = vpop.trf.xlu0
    %v831 = vpop.trf.xlu0
    %v832 = vpop.trf.xlu0
    %v833 = vpop.trf.xlu0
    %v834 = vpop.trf.xlu0
    %v835 = vpop.trf.xlu0
    %v836 = vpop.trf.xlu0
    %837 = vxpose.xlu0.b32.start [1/16] %v431, 128
    %838 = vxpose.xlu0.b32.cont [2/16] %v432, 128
    %839 = vxpose.xlu0.b32.cont [3/16] %v433, 128
    %840 = vxpose.xlu0.b32.cont [4/16] %v434, 128
    %841 = vxpose.xlu0.b32.cont [5/16] %v435, 128
    %842 = vxpose.xlu0.b32.cont [6/16] %v436, 128
    %843 = vxpose.xlu0.b32.cont [7/16] %v437, 128
    %844 = vxpose.xlu0.b32.cont [8/16] %v438, 128
    %845 = vxpose.xlu0.b32.cont [9/16] %v439, 128
    %846 = vxpose.xlu0.b32.cont [10/16] %v440, 128
    %847 = vxpose.xlu0.b32.cont [11/16] %v441, 128
    %848 = vxpose.xlu0.b32.cont [12/16] %v442, 128
    %849 = vxpose.xlu0.b32.cont [13/16] %v443, 128
    %850 = vxpose.xlu0.b32.cont [14/16] %v444, 128
    %851 = vxpose.xlu0.b32.cont [15/16] %v445, 128
    %852 = vxpose.xlu0.b32.end [16/16] %v446, 128
    %v853 = vpop.trf.xlu0
    %v854 = vpop.trf.xlu0
    %v855 = vpop.trf.xlu0
    %v856 = vpop.trf.xlu0
    %v857 = vpop.trf.xlu0
    %v858 = vpop.trf.xlu0
    %v859 = vpop.trf.xlu0
    %v860 = vpop.trf.xlu0
    %v861 = vpop.trf.xlu0
    %v862 = vpop.trf.xlu0
    %v863 = vpop.trf.xlu0
    %v864 = vpop.trf.xlu0
    %v865 = vpop.trf.xlu0
    %v866 = vpop.trf.xlu0
    %v867 = vpop.trf.xlu0
    %v868 = vpop.trf.xlu0
    %869 = vxpose.xlu0.b32.start [1/16] %v447, 128
    %870 = vxpose.xlu0.b32.cont [2/16] %v448, 128
    %871 = vxpose.xlu0.b32.cont [3/16] %v449, 128
    %872 = vxpose.xlu0.b32.cont [4/16] %v450, 128
    %873 = vxpose.xlu0.b32.cont [5/16] %v451, 128
    %874 = vxpose.xlu0.b32.cont [6/16] %v452, 128
    %875 = vxpose.xlu0.b32.cont [7/16] %v453, 128
    %876 = vxpose.xlu0.b32.cont [8/16] %v454, 128
    %877 = vxpose.xlu0.b32.cont [9/16] %v455, 128
    %878 = vxpose.xlu0.b32.cont [10/16] %v456, 128
    %879 = vxpose.xlu0.b32.cont [11/16] %v457, 128
    %880 = vxpose.xlu0.b32.cont [12/16] %v458, 128
    %881 = vxpose.xlu0.b32.cont [13/16] %v459, 128
    %882 = vxpose.xlu0.b32.cont [14/16] %v460, 128
    %883 = vxpose.xlu0.b32.cont [15/16] %v461, 128
    %884 = vxpose.xlu0.b32.end [16/16] %v462, 128
    %v885 = vpop.trf.xlu0
    %v886 = vpop.trf.xlu0
    %v887 = vpop.trf.xlu0
    %v888 = vpop.trf.xlu0
    %v889 = vpop.trf.xlu0
    %v890 = vpop.trf.xlu0
    %v891 = vpop.trf.xlu0
    %v892 = vpop.trf.xlu0
    %v893 = vpop.trf.xlu0
    %v894 = vpop.trf.xlu0
    %v895 = vpop.trf.xlu0
    %v896 = vpop.trf.xlu0
    %v897 = vpop.trf.xlu0
    %v898 = vpop.trf.xlu0
    %v899 = vpop.trf.xlu0
    %v900 = vpop.trf.xlu0
    %901 = vxpose.xlu0.b32.start [1/16] %v463, 128
    %902 = vxpose.xlu0.b32.cont [2/16] %v464, 128
    %903 = vxpose.xlu0.b32.cont [3/16] %v465, 128
    %904 = vxpose.xlu0.b32.cont [4/16] %v466, 128
    %905 = vxpose.xlu0.b32.cont [5/16] %v467, 128
    %906 = vxpose.xlu0.b32.cont [6/16] %v468, 128
    %907 = vxpose.xlu0.b32.cont [7/16] %v469, 128
    %908 = vxpose.xlu0.b32.cont [8/16] %v470, 128
    %909 = vxpose.xlu0.b32.cont [9/16] %v471, 128
    %910 = vxpose.xlu0.b32.cont [10/16] %v472, 128
    %911 = vxpose.xlu0.b32.cont [11/16] %v473, 128
    %912 = vxpose.xlu0.b32.cont [12/16] %v474, 128
    %913 = vxpose.xlu0.b32.cont [13/16] %v475, 128
    %914 = vxpose.xlu0.b32.cont [14/16] %v476, 128
    %915 = vxpose.xlu0.b32.cont [15/16] %v477, 128
    %916 = vxpose.xlu0.b32.end [16/16] %v478, 128
    %v917 = vpop.trf.xlu0
    %v918 = vpop.trf.xlu0
    %v919 = vpop.trf.xlu0
    %v920 = vpop.trf.xlu0
    %v921 = vpop.trf.xlu0
    %v922 = vpop.trf.xlu0
    %v923 = vpop.trf.xlu0
    %v924 = vpop.trf.xlu0
    %v925 = vpop.trf.xlu0
    %v926 = vpop.trf.xlu0
    %v927 = vpop.trf.xlu0
    %v928 = vpop.trf.xlu0
    %v929 = vpop.trf.xlu0
    %v930 = vpop.trf.xlu0
    %v931 = vpop.trf.xlu0
    %v932 = vpop.trf.xlu0
    %933 = vxpose.xlu0.b32.start [1/16] %v479, 128
    %934 = vxpose.xlu0.b32.cont [2/16] %v480, 128
    %935 = vxpose.xlu0.b32.cont [3/16] %v481, 128
    %936 = vxpose.xlu0.b32.cont [4/16] %v482, 128
    %937 = vxpose.xlu0.b32.cont [5/16] %v483, 128
    %938 = vxpose.xlu0.b32.cont [6/16] %v484, 128
    %939 = vxpose.xlu0.b32.cont [7/16] %v485, 128
    %940 = vxpose.xlu0.b32.cont [8/16] %v486, 128
    %941 = vxpose.xlu0.b32.cont [9/16] %v487, 128
    %942 = vxpose.xlu0.b32.cont [10/16] %v488, 128
    %943 = vxpose.xlu0.b32.cont [11/16] %v489, 128
    %944 = vxpose.xlu0.b32.cont [12/16] %v490, 128
    %945 = vxpose.xlu0.b32.cont [13/16] %v491, 128
    %946 = vxpose.xlu0.b32.cont [14/16] %v492, 128
    %947 = vxpose.xlu0.b32.cont [15/16] %v493, 128
    %948 = vxpose.xlu0.b32.end [16/16] %v494, 128
    %v949 = vpop.trf.xlu0
    %v950 = vpop.trf.xlu0
    %v951 = vpop.trf.xlu0
    %v952 = vpop.trf.xlu0
    %v953 = vpop.trf.xlu0
    %v954 = vpop.trf.xlu0
    %v955 = vpop.trf.xlu0
    %v956 = vpop.trf.xlu0
    %v957 = vpop.trf.xlu0
    %v958 = vpop.trf.xlu0
    %v959 = vpop.trf.xlu0
    %v960 = vpop.trf.xlu0
    %v961 = vpop.trf.xlu0
    %v962 = vpop.trf.xlu0
    %v963 = vpop.trf.xlu0
    %v964 = vpop.trf.xlu0
    %965 = vxpose.xlu0.b32.start [1/16] %v495, 128
    %966 = vxpose.xlu0.b32.cont [2/16] %v496, 128
    %967 = vxpose.xlu0.b32.cont [3/16] %v497, 128
    %968 = vxpose.xlu0.b32.cont [4/16] %v498, 128
    %969 = vxpose.xlu0.b32.cont [5/16] %v499, 128
    %970 = vxpose.xlu0.b32.cont [6/16] %v500, 128
    %971 = vxpose.xlu0.b32.cont [7/16] %v501, 128
    %972 = vxpose.xlu0.b32.cont [8/16] %v502, 128
    %973 = vxpose.xlu0.b32.cont [9/16] %v503, 128
    %974 = vxpose.xlu0.b32.cont [10/16] %v504, 128
    %975 = vxpose.xlu0.b32.cont [11/16] %v505, 128
    %976 = vxpose.xlu0.b32.cont [12/16] %v506, 128
    %977 = vxpose.xlu0.b32.cont [13/16] %v507, 128
    %978 = vxpose.xlu0.b32.cont [14/16] %v508, 128
    %979 = vxpose.xlu0.b32.cont [15/16] %v509, 128
    %980 = vxpose.xlu0.b32.end [16/16] %v510, 128
    %v981 = vpop.trf.xlu0
    %v982 = vpop.trf.xlu0
    %v983 = vpop.trf.xlu0
    %v984 = vpop.trf.xlu0
    %v985 = vpop.trf.xlu0
    %v986 = vpop.trf.xlu0
    %v987 = vpop.trf.xlu0
    %v988 = vpop.trf.xlu0
    %v989 = vpop.trf.xlu0
    %v990 = vpop.trf.xlu0
    %v991 = vpop.trf.xlu0
    %v992 = vpop.trf.xlu0
    %v993 = vpop.trf.xlu0
    %v994 = vpop.trf.xlu0
    %v995 = vpop.trf.xlu0
    %v996 = vpop.trf.xlu0
    %997 = vxpose.xlu0.b32.start [1/16] %v511, 128
    %998 = vxpose.xlu0.b32.cont [2/16] %v512, 128
    %999 = vxpose.xlu0.b32.cont [3/16] %v513, 128
    %1000 = vxpose.xlu0.b32.cont [4/16] %v514, 128
    %1001 = vxpose.xlu0.b32.cont [5/16] %v515, 128
    %1002 = vxpose.xlu0.b32.cont [6/16] %v516, 128
    %1003 = vxpose.xlu0.b32.cont [7/16] %v517, 128
    %1004 = vxpose.xlu0.b32.cont [8/16] %v518, 128
    %1005 = vxpose.xlu0.b32.cont [9/16] %v519, 128
    %1006 = vxpose.xlu0.b32.cont [10/16] %v520, 128
    %1007 = vxpose.xlu0.b32.cont [11/16] %v521, 128
    %1008 = vxpose.xlu0.b32.cont [12/16] %v522, 128
    %1009 = vxpose.xlu0.b32.cont [13/16] %v523, 128
    %1010 = vxpose.xlu0.b32.cont [14/16] %v524, 128
    %1011 = vxpose.xlu0.b32.cont [15/16] %v525, 128
    %1012 = vxpose.xlu0.b32.end [16/16] %v526, 128
    %v1013 = vpop.trf.xlu0
    %v1014 = vpop.trf.xlu0
    %v1015 = vpop.trf.xlu0
    %v1016 = vpop.trf.xlu0
    %v1017 = vpop.trf.xlu0
    %v1018 = vpop.trf.xlu0
    %v1019 = vpop.trf.xlu0
    %v1020 = vpop.trf.xlu0
    %v1021 = vpop.trf.xlu0
    %v1022 = vpop.trf.xlu0
    %v1023 = vpop.trf.xlu0
    %v1024 = vpop.trf.xlu0
    %v1025 = vpop.trf.xlu0
    %v1026 = vpop.trf.xlu0
    %v1027 = vpop.trf.xlu0
    %v1028 = vpop.trf.xlu0
    %1029 = vxpose.xlu0.b32.start [1/16] %v527, 128
    %1030 = vxpose.xlu0.b32.cont [2/16] %v528, 128
    %1031 = vxpose.xlu0.b32.cont [3/16] %v529, 128
    %1032 = vxpose.xlu0.b32.cont [4/16] %v530, 128
    %1033 = vxpose.xlu0.b32.cont [5/16] %v531, 128
    %1034 = vxpose.xlu0.b32.cont [6/16] %v532, 128
    %1035 = vxpose.xlu0.b32.cont [7/16] %v533, 128
    %1036 = vxpose.xlu0.b32.cont [8/16] %v534, 128
    %1037 = vxpose.xlu0.b32.cont [9/16] %v535, 128
    %1038 = vxpose.xlu0.b32.cont [10/16] %v536, 128
    %1039 = vxpose.xlu0.b32.cont [11/16] %v537, 128
    %1040 = vxpose.xlu0.b32.cont [12/16] %v538, 128
    %1041 = vxpose.xlu0.b32.cont [13/16] %v539, 128
    %1042 = vxpose.xlu0.b32.cont [14/16] %v540, 128
    %1043 = vxpose.xlu0.b32.cont [15/16] %v541, 128
    %1044 = vxpose.xlu0.b32.end [16/16] %v542, 128
    %v1045 = vpop.trf.xlu0
    %v1046 = vpop.trf.xlu0
    %v1047 = vpop.trf.xlu0
    %v1048 = vpop.trf.xlu0
    %v1049 = vpop.trf.xlu0
    %v1050 = vpop.trf.xlu0
    %v1051 = vpop.trf.xlu0
    %v1052 = vpop.trf.xlu0
    %v1053 = vpop.trf.xlu0
    %v1054 = vpop.trf.xlu0
    %v1055 = vpop.trf.xlu0
    %v1056 = vpop.trf.xlu0
    %v1057 = vpop.trf.xlu0
    %v1058 = vpop.trf.xlu0
    %v1059 = vpop.trf.xlu0
    %v1060 = vpop.trf.xlu0
    %1061 = vmatprep.subr.mxu0 0.0
    %1062 = vmatpush1.msra.mxu0 %v30
    %1063 = vmatprep.subr.mxu0 0.0
    %1064 = vmatpush1.msra.mxu0 %v31
    %1065 = vmatprep.subr.mxu0 0.0
    %1066 = vmatpush1.msra.mxu0 %v32
    %1067 = vmatprep.subr.mxu0 0.0
    %1068 = vmatpush1.msra.mxu0 %v33
    %1069 = vmatprep.subr.mxu0 0.0
    %1070 = vmatpush1.msra.mxu0 %v34
    %1071 = vmatprep.subr.mxu0 0.0
    %1072 = vmatpush1.msra.mxu0 %v35
    %1073 = vmatprep.subr.mxu0 0.0
    %1074 = vmatpush1.msra.mxu0 %v36
    %1075 = vmatprep.subr.mxu0 0.0
    %1076 = vmatpush1.msra.mxu0 %v37
    %1077 = vmatprep.subr.mxu0 0.0
    %1078 = vmatpush1.msra.mxu0 %v38
    %1079 = vmatprep.subr.mxu0 0.0
    %1080 = vmatpush1.msra.mxu0 %v39
    %1081 = vmatprep.subr.mxu0 0.0
    %1082 = vmatpush1.msra.mxu0 %v40
    %1083 = vmatprep.subr.mxu0 0.0
    %1084 = vmatpush1.msra.mxu0 %v41
    %1085 = vmatprep.subr.mxu0 0.0
    %1086 = vmatpush1.msra.mxu0 %v42
    %1087 = vmatprep.subr.mxu0 0.0
    %1088 = vmatpush1.msra.mxu0 %v43
    %1089 = vmatprep.subr.mxu0 0.0
    %1090 = vmatpush1.msra.mxu0 %v44
    %1091 = vmatprep.subr.mxu0 0.0
    %1092 = vmatpush1.msra.mxu0 %v45
    %1093 = vmatprep.subr.mxu0 0.0
    %1094 = vmatpush1.msra.mxu0 %v46
    %1095 = vmatprep.subr.mxu0 0.0
    %1096 = vmatpush1.msra.mxu0 %v47
    %1097 = vmatprep.subr.mxu0 0.0
    %1098 = vmatpush1.msra.mxu0 %v48
    %1099 = vmatprep.subr.mxu0 0.0
    %1100 = vmatpush1.msra.mxu0 %v49
    %1101 = vmatprep.subr.mxu0 0.0
    %1102 = vmatpush1.msra.mxu0 %v50
    %1103 = vmatprep.subr.mxu0 0.0
    %1104 = vmatpush1.msra.mxu0 %v51
    %1105 = vmatprep.subr.mxu0 0.0
    %1106 = vmatpush1.msra.mxu0 %v52
    %1107 = vmatprep.subr.mxu0 0.0
    %1108 = vmatpush1.msra.mxu0 %v53
    %1109 = vmatprep.subr.mxu0 0.0
    %1110 = vmatpush1.msra.mxu0 %v54
    %1111 = vmatprep.subr.mxu0 0.0
    %1112 = vmatpush1.msra.mxu0 %v55
    %1113 = vmatprep.subr.mxu0 0.0
    %1114 = vmatpush1.msra.mxu0 %v56
    %1115 = vmatprep.subr.mxu0 0.0
    %1116 = vmatpush1.msra.mxu0 %v57
    %1117 = vmatprep.subr.mxu0 0.0
    %1118 = vmatpush1.msra.mxu0 %v58
    %1119 = vmatprep.subr.mxu0 0.0
    %1120 = vmatpush1.msra.mxu0 %v59
    %1121 = vmatprep.subr.mxu0 0.0
    %1122 = vmatpush1.msra.mxu0 %v60
    %1123 = vmatprep.subr.mxu0 0.0
    %1124 = vmatpush1.msra.mxu0 %v61
    %1125 = vmatprep.mubr.f32.mxu0 %v597
    %1126 = vmatmul.mubr.f32.gmra.mrb[0].mxu0 %v565
    %v1127 = vpop.f32.mrb[0].mxu0
    %v1128 = vadd.f32 %v547, %v1127
    %v1129 = vpop.f32.mrb[0].mxu0
    %1130 = vdwg.mxu0
    %1131 = vmatprep.subr.mxu0 0.0
    %1132 = vmatpush1.msra.mxu0 %v62
    %1133 = vmatprep.subr.mxu0 0.0
    %1134 = vmatpush1.msra.mxu0 %v63
    %1135 = vmatprep.subr.mxu0 0.0
    %1136 = vmatpush1.msra.mxu0 %v64
    %1137 = vmatprep.subr.mxu0 0.0
    %1138 = vmatpush1.msra.mxu0 %v65
    %1139 = vmatprep.subr.mxu0 0.0
    %1140 = vmatpush1.msra.mxu0 %v66
    %1141 = vmatprep.subr.mxu0 0.0
    %1142 = vmatpush1.msra.mxu0 %v67
    %1143 = vmatprep.subr.mxu0 0.0
    %1144 = vmatpush1.msra.mxu0 %v68
    %1145 = vmatprep.subr.mxu0 0.0
    %1146 = vmatpush1.msra.mxu0 %v69
    %1147 = vmatprep.subr.mxu0 0.0
    %1148 = vmatpush1.msra.mxu0 %v70
    %1149 = vmatprep.subr.mxu0 0.0
    %1150 = vmatpush1.msra.mxu0 %v71
    %1151 = vmatprep.subr.mxu0 0.0
    %1152 = vmatpush1.msra.mxu0 %v72
    %1153 = vmatprep.subr.mxu0 0.0
    %1154 = vmatpush1.msra.mxu0 %v73
    %1155 = vmatprep.subr.mxu0 0.0
    %1156 = vmatpush1.msra.mxu0 %v74
    %1157 = vmatprep.subr.mxu0 0.0
    %1158 = vmatpush1.msra.mxu0 %v75
    %1159 = vmatprep.subr.mxu0 0.0
    %1160 = vmatpush1.msra.mxu0 %v76
    %1161 = vmatprep.subr.mxu0 0.0
    %1162 = vmatpush1.msra.mxu0 %v77
    %1163 = vmatprep.subr.mxu0 0.0
    %1164 = vmatpush1.msra.mxu0 %v78
    %1165 = vmatprep.subr.mxu0 0.0
    %1166 = vmatpush1.msra.mxu0 %v79
    %1167 = vmatprep.subr.mxu0 0.0
    %1168 = vmatpush1.msra.mxu0 %v80
    %1169 = vmatprep.subr.mxu0 0.0
    %1170 = vmatpush1.msra.mxu0 %v81
    %1171 = vmatprep.subr.mxu0 0.0
    %1172 = vmatpush1.msra.mxu0 %v82
    %1173 = vmatprep.subr.mxu0 0.0
    %1174 = vmatpush1.msra.mxu0 %v83
    %1175 = vmatprep.subr.mxu0 0.0
    %1176 = vmatpush1.msra.mxu0 %v84
    %1177 = vmatprep.subr.mxu0 0.0
    %1178 = vmatpush1.msra.mxu0 %v85
    %1179 = vmatprep.subr.mxu0 0.0
    %1180 = vmatpush1.msra.mxu0 %v86
    %1181 = vmatprep.subr.mxu0 0.0
    %1182 = vmatpush1.msra.mxu0 %v87
    %1183 = vmatprep.subr.mxu0 0.0
    %1184 = vmatpush1.msra.mxu0 %v88
    %1185 = vmatprep.subr.mxu0 0.0
    %1186 = vmatpush1.msra.mxu0 %v89
    %1187 = vmatprep.subr.mxu0 0.0
    %1188 = vmatpush1.msra.mxu0 %v90
    %1189 = vmatprep.subr.mxu0 0.0
    %1190 = vmatpush1.msra.mxu0 %v91
    %1191 = vmatprep.subr.mxu0 0.0
    %1192 = vmatpush1.msra.mxu0 %v92
    %1193 = vmatprep.subr.mxu0 0.0
    %1194 = vmatpush1.msra.mxu0 %v93
    %1195 = vmatprep.mubr.f32.mxu0 %v661
    %1196 = vmatmul.mubr.f32.gmra.mrb[0].mxu0 %v629
    %v1197 = vpop.f32.mrb[0].mxu0
    %v1198 = vadd.f32 %v1128, %v1197
    %v1199 = vpop.f32.mrb[0].mxu0
    %1200 = vdwg.mxu0
    %1201 = vmatprep.subr.mxu0 0.0
    %1202 = vmatpush1.msra.mxu0 %v94
    %1203 = vmatprep.subr.mxu0 0.0
    %1204 = vmatpush1.msra.mxu0 %v95
    %1205 = vmatprep.subr.mxu0 0.0
    %1206 = vmatpush1.msra.mxu0 %v96
    %1207 = vmatprep.subr.mxu0 0.0
    %1208 = vmatpush1.msra.mxu0 %v97
    %1209 = vmatprep.subr.mxu0 0.0
    %1210 = vmatpush1.msra.mxu0 %v98
    %1211 = vmatprep.subr.mxu0 0.0
    %1212 = vmatpush1.msra.mxu0 %v99
    %1213 = vmatprep.subr.mxu0 0.0
    %1214 = vmatpush1.msra.mxu0 %v100
    %1215 = vmatprep.subr.mxu0 0.0
    %1216 = vmatpush1.msra.mxu0 %v101
    %1217 = vmatprep.subr.mxu0 0.0
    %1218 = vmatpush1.msra.mxu0 %v102
    %1219 = vmatprep.subr.mxu0 0.0
    %1220 = vmatpush1.msra.mxu0 %v103
    %1221 = vmatprep.subr.mxu0 0.0
    %1222 = vmatpush1.msra.mxu0 %v104
    %1223 = vmatprep.subr.mxu0 0.0
    %1224 = vmatpush1.msra.mxu0 %v105
    %1225 = vmatprep.subr.mxu0 0.0
    %1226 = vmatpush1.msra.mxu0 %v106
    %1227 = vmatprep.subr.mxu0 0.0
    %1228 = vmatpush1.msra.mxu0 %v107
    %1229 = vmatprep.subr.mxu0 0.0
    %1230 = vmatpush1.msra.mxu0 %v108
    %1231 = vmatprep.subr.mxu0 0.0
    %1232 = vmatpush1.msra.mxu0 %v109
    %1233 = vmatprep.subr.mxu0 0.0
    %1234 = vmatpush1.msra.mxu0 %v110
    %1235 = vmatprep.subr.mxu0 0.0
    %1236 = vmatpush1.msra.mxu0 %v111
    %1237 = vmatprep.subr.mxu0 0.0
    %1238 = vmatpush1.msra.mxu0 %v112
    %1239 = vmatprep.subr.mxu0 0.0
    %1240 = vmatpush1.msra.mxu0 %v113
    %1241 = vmatprep.subr.mxu0 0.0
    %1242 = vmatpush1.msra.mxu0 %v114
    %1243 = vmatprep.subr.mxu0 0.0
    %1244 = vmatpush1.msra.mxu0 %v115
    %1245 = vmatprep.subr.mxu0 0.0
    %1246 = vmatpush1.msra.mxu0 %v116
    %1247 = vmatprep.subr.mxu0 0.0
    %1248 = vmatpush1.msra.mxu0 %v117
    %1249 = vmatprep.subr.mxu0 0.0
    %1250 = vmatpush1.msra.mxu0 %v118
    %1251 = vmatprep.subr.mxu0 0.0
    %1252 = vmatpush1.msra.mxu0 %v119
    %1253 = vmatprep.subr.mxu0 0.0
    %1254 = vmatpush1.msra.mxu0 %v120
    %1255 = vmatprep.subr.mxu0 0.0
    %1256 = vmatpush1.msra.mxu0 %v121
    %1257 = vmatprep.subr.mxu0 0.0
    %1258 = vmatpush1.msra.mxu0 %v122
    %1259 = vmatprep.subr.mxu0 0.0
    %1260 = vmatpush1.msra.mxu0 %v123
    %1261 = vmatprep.subr.mxu0 0.0
    %1262 = vmatpush1.msra.mxu0 %v124
    %1263 = vmatprep.subr.mxu0 0.0
    %1264 = vmatpush1.msra.mxu0 %v125
    %1265 = vmatprep.mubr.f32.mxu0 %v725
    %1266 = vmatmul.mubr.f32.gmra.mrb[0].mxu0 %v693
    %v1267 = vpop.f32.mrb[0].mxu0
    %v1268 = vadd.f32 %v1198, %v1267
    %v1269 = vpop.f32.mrb[0].mxu0
    %1270 = vdwg.mxu0
    %1271 = vmatprep.subr.mxu0 0.0
    %1272 = vmatpush1.msra.mxu0 %v126
    %1273 = vmatprep.subr.mxu0 0.0
    %1274 = vmatpush1.msra.mxu0 %v127
    %1275 = vmatprep.subr.mxu0 0.0
    %1276 = vmatpush1.msra.mxu0 %v128
    %1277 = vmatprep.subr.mxu0 0.0
    %1278 = vmatpush1.msra.mxu0 %v129
    %1279 = vmatprep.subr.mxu0 0.0
    %1280 = vmatpush1.msra.mxu0 %v130
    %1281 = vmatprep.subr.mxu0 0.0
    %1282 = vmatpush1.msra.mxu0 %v131
    %1283 = vmatprep.subr.mxu0 0.0
    %1284 = vmatpush1.msra.mxu0 %v132
    %1285 = vmatprep.subr.mxu0 0.0
    %1286 = vmatpush1.msra.mxu0 %v133
    %1287 = vmatprep.subr.mxu0 0.0
    %1288 = vmatpush1.msra.mxu0 %v134
    %1289 = vmatprep.subr.mxu0 0.0
    %1290 = vmatpush1.msra.mxu0 %v135
    %1291 = vmatprep.subr.mxu0 0.0
    %1292 = vmatpush1.msra.mxu0 %v136
    %1293 = vmatprep.subr.mxu0 0.0
    %1294 = vmatpush1.msra.mxu0 %v137
    %1295 = vmatprep.subr.mxu0 0.0
    %1296 = vmatpush1.msra.mxu0 %v138
    %1297 = vmatprep.subr.mxu0 0.0
    %1298 = vmatpush1.msra.mxu0 %v139
    %1299 = vmatprep.subr.mxu0 0.0
    %1300 = vmatpush1.msra.mxu0 %v140
    %1301 = vmatprep.subr.mxu0 0.0
    %1302 = vmatpush1.msra.mxu0 %v141
    %1303 = vmatprep.subr.mxu0 0.0
    %1304 = vmatpush1.msra.mxu0 %v142
    %1305 = vmatprep.subr.mxu0 0.0
    %1306 = vmatpush1.msra.mxu0 %v143
    %1307 = vmatprep.subr.mxu0 0.0
    %1308 = vmatpush1.msra.mxu0 %v144
    %1309 = vmatprep.subr.mxu0 0.0
    %1310 = vmatpush1.msra.mxu0 %v145
    %1311 = vmatprep.subr.mxu0 0.0
    %1312 = vmatpush1.msra.mxu0 %v146
    %1313 = vmatprep.subr.mxu0 0.0
    %1314 = vmatpush1.msra.mxu0 %v147
    %1315 = vmatprep.subr.mxu0 0.0
    %1316 = vmatpush1.msra.mxu0 %v148
    %1317 = vmatprep.subr.mxu0 0.0
    %1318 = vmatpush1.msra.mxu0 %v149
    %1319 = vmatprep.subr.mxu0 0.0
    %1320 = vmatpush1.msra.mxu0 %v150
    %1321 = vmatprep.subr.mxu0 0.0
    %1322 = vmatpush1.msra.mxu0 %v151
    %1323 = vmatprep.subr.mxu0 0.0
    %1324 = vmatpush1.msra.mxu0 %v152
    %1325 = vmatprep.subr.mxu0 0.0
    %1326 = vmatpush1.msra.mxu0 %v153
    %1327 = vmatprep.subr.mxu0 0.0
    %1328 = vmatpush1.msra.mxu0 %v154
    %1329 = vmatprep.subr.mxu0 0.0
    %1330 = vmatpush1.msra.mxu0 %v155
    %1331 = vmatprep.subr.mxu0 0.0
    %1332 = vmatpush1.msra.mxu0 %v156
    %1333 = vmatprep.subr.mxu0 0.0
    %1334 = vmatpush1.msra.mxu0 %v157
    %1335 = vmatprep.mubr.f32.mxu0 %v789
    %1336 = vmatmul.mubr.f32.gmra.mrb[0].mxu0 %v757
    %v1337 = vpop.f32.mrb[0].mxu0
    %v1338 = vadd.f32 %v1268, %v1337
    %v1339 = vpop.f32.mrb[0].mxu0
    %1340 = vdwg.mxu0
    %1341 = vmatprep.subr.mxu0 0.0
    %1342 = vmatpush1.msra.mxu0 %v158
    %1343 = vmatprep.subr.mxu0 0.0
    %1344 = vmatpush1.msra.mxu0 %v159
    %1345 = vmatprep.subr.mxu0 0.0
    %1346 = vmatpush1.msra.mxu0 %v160
    %1347 = vmatprep.subr.mxu0 0.0
    %1348 = vmatpush1.msra.mxu0 %v161
    %1349 = vmatprep.subr.mxu0 0.0
    %1350 = vmatpush1.msra.mxu0 %v162
    %1351 = vmatprep.subr.mxu0 0.0
    %1352 = vmatpush1.msra.mxu0 %v163
    %1353 = vmatprep.subr.mxu0 0.0
    %1354 = vmatpush1.msra.mxu0 %v164
    %1355 = vmatprep.subr.mxu0 0.0
    %1356 = vmatpush1.msra.mxu0 %v165
    %1357 = vmatprep.subr.mxu0 0.0
    %1358 = vmatpush1.msra.mxu0 %v166
    %1359 = vmatprep.subr.mxu0 0.0
    %1360 = vmatpush1.msra.mxu0 %v167
    %1361 = vmatprep.subr.mxu0 0.0
    %1362 = vmatpush1.msra.mxu0 %v168
    %1363 = vmatprep.subr.mxu0 0.0
    %1364 = vmatpush1.msra.mxu0 %v169
    %1365 = vmatprep.subr.mxu0 0.0
    %1366 = vmatpush1.msra.mxu0 %v170
    %1367 = vmatprep.subr.mxu0 0.0
    %1368 = vmatpush1.msra.mxu0 %v171
    %1369 = vmatprep.subr.mxu0 0.0
    %1370 = vmatpush1.msra.mxu0 %v172
    %1371 = vmatprep.subr.mxu0 0.0
    %1372 = vmatpush1.msra.mxu0 %v173
    %1373 = vmatprep.subr.mxu0 0.0
    %1374 = vmatpush1.msra.mxu0 %v174
    %1375 = vmatprep.subr.mxu0 0.0
    %1376 = vmatpush1.msra.mxu0 %v175
    %1377 = vmatprep.subr.mxu0 0.0
    %1378 = vmatpush1.msra.mxu0 %v176
    %1379 = vmatprep.subr.mxu0 0.0
    %1380 = vmatpush1.msra.mxu0 %v177
    %1381 = vmatprep.subr.mxu0 0.0
    %1382 = vmatpush1.msra.mxu0 %v178
    %1383 = vmatprep.subr.mxu0 0.0
    %1384 = vmatpush1.msra.mxu0 %v179
    %1385 = vmatprep.subr.mxu0 0.0
    %1386 = vmatpush1.msra.mxu0 %v180
    %1387 = vmatprep.subr.mxu0 0.0
    %1388 = vmatpush1.msra.mxu0 %v181
    %1389 = vmatprep.subr.mxu0 0.0
    %1390 = vmatpush1.msra.mxu0 %v182
    %1391 = vmatprep.subr.mxu0 0.0
    %1392 = vmatpush1.msra.mxu0 %v183
    %1393 = vmatprep.subr.mxu0 0.0
    %1394 = vmatpush1.msra.mxu0 %v184
    %1395 = vmatprep.subr.mxu0 0.0
    %1396 = vmatpush1.msra.mxu0 %v185
    %1397 = vmatprep.subr.mxu0 0.0
    %1398 = vmatpush1.msra.mxu0 %v186
    %1399 = vmatprep.subr.mxu0 0.0
    %1400 = vmatpush1.msra.mxu0 %v187
    %1401 = vmatprep.subr.mxu0 0.0
    %1402 = vmatpush1.msra.mxu0 %v188
    %1403 = vmatprep.subr.mxu0 0.0
    %1404 = vmatpush1.msra.mxu0 %v189
    %1405 = vmatprep.mubr.f32.mxu0 %v853
    %1406 = vmatmul.mubr.f32.gmra.mrb[0].mxu0 %v821
    %v1407 = vpop.f32.mrb[0].mxu0
    %v1408 = vadd.f32 %v1338, %v1407
    %v1409 = vpop.f32.mrb[0].mxu0
    %1410 = vdwg.mxu0
    %1411 = vmatprep.subr.mxu0 0.0
    %1412 = vmatpush1.msra.mxu0 %v190
    %1413 = vmatprep.subr.mxu0 0.0
    %1414 = vmatpush1.msra.mxu0 %v191
    %1415 = vmatprep.subr.mxu0 0.0
    %1416 = vmatpush1.msra.mxu0 %v192
    %1417 = vmatprep.subr.mxu0 0.0
    %1418 = vmatpush1.msra.mxu0 %v193
    %1419 = vmatprep.subr.mxu0 0.0
    %1420 = vmatpush1.msra.mxu0 %v194
    %1421 = vmatprep.subr.mxu0 0.0
    %1422 = vmatpush1.msra.mxu0 %v195
    %1423 = vmatprep.subr.mxu0 0.0
    %1424 = vmatpush1.msra.mxu0 %v196
    %1425 = vmatprep.subr.mxu0 0.0
    %1426 = vmatpush1.msra.mxu0 %v197
    %1427 = vmatprep.subr.mxu0 0.0
    %1428 = vmatpush1.msra.mxu0 %v198
    %1429 = vmatprep.subr.mxu0 0.0
    %1430 = vmatpush1.msra.mxu0 %v199
    %1431 = vmatprep.subr.mxu0 0.0
    %1432 = vmatpush1.msra.mxu0 %v200
    %1433 = vmatprep.subr.mxu0 0.0
    %1434 = vmatpush1.msra.mxu0 %v201
    %1435 = vmatprep.subr.mxu0 0.0
    %1436 = vmatpush1.msra.mxu0 %v202
    %1437 = vmatprep.subr.mxu0 0.0
    %1438 = vmatpush1.msra.mxu0 %v203
    %1439 = vmatprep.subr.mxu0 0.0
    %1440 = vmatpush1.msra.mxu0 %v204
    %1441 = vmatprep.subr.mxu0 0.0
    %1442 = vmatpush1.msra.mxu0 %v205
    %1443 = vmatprep.subr.mxu0 0.0
    %1444 = vmatpush1.msra.mxu0 %v206
    %1445 = vmatprep.subr.mxu0 0.0
    %1446 = vmatpush1.msra.mxu0 %v207
    %1447 = vmatprep.subr.mxu0 0.0
    %1448 = vmatpush1.msra.mxu0 %v208
    %1449 = vmatprep.subr.mxu0 0.0
    %1450 = vmatpush1.msra.mxu0 %v209
    %1451 = vmatprep.subr.mxu0 0.0
    %1452 = vmatpush1.msra.mxu0 %v210
    %1453 = vmatprep.subr.mxu0 0.0
    %1454 = vmatpush1.msra.mxu0 %v211
    %1455 = vmatprep.subr.mxu0 0.0
    %1456 = vmatpush1.msra.mxu0 %v212
    %1457 = vmatprep.subr.mxu0 0.0
    %1458 = vmatpush1.msra.mxu0 %v213
    %1459 = vmatprep.subr.mxu0 0.0
    %1460 = vmatpush1.msra.mxu0 %v214
    %1461 = vmatprep.subr.mxu0 0.0
    %1462 = vmatpush1.msra.mxu0 %v215
    %1463 = vmatprep.subr.mxu0 0.0
    %1464 = vmatpush1.msra.mxu0 %v216
    %1465 = vmatprep.subr.mxu0 0.0
    %1466 = vmatpush1.msra.mxu0 %v217
    %1467 = vmatprep.subr.mxu0 0.0
    %1468 = vmatpush1.msra.mxu0 %v218
    %1469 = vmatprep.subr.mxu0 0.0
    %1470 = vmatpush1.msra.mxu0 %v219
    %1471 = vmatprep.subr.mxu0 0.0
    %1472 = vmatpush1.msra.mxu0 %v220
    %1473 = vmatprep.subr.mxu0 0.0
    %1474 = vmatpush1.msra.mxu0 %v221
    %1475 = vmatprep.mubr.f32.mxu0 %v917
    %1476 = vmatmul.mubr.f32.gmra.mrb[0].mxu0 %v885
    %v1477 = vpop.f32.mrb[0].mxu0
    %v1478 = vadd.f32 %v1408, %v1477
    %v1479 = vpop.f32.mrb[0].mxu0
    %1480 = vdwg.mxu0
    %1481 = vmatprep.subr.mxu0 0.0
    %1482 = vmatpush1.msra.mxu0 %v222
    %1483 = vmatprep.subr.mxu0 0.0
    %1484 = vmatpush1.msra.mxu0 %v223
    %1485 = vmatprep.subr.mxu0 0.0
    %1486 = vmatpush1.msra.mxu0 %v224
    %1487 = vmatprep.subr.mxu0 0.0
    %1488 = vmatpush1.msra.mxu0 %v225
    %1489 = vmatprep.subr.mxu0 0.0
    %1490 = vmatpush1.msra.mxu0 %v226
    %1491 = vmatprep.subr.mxu0 0.0
    %1492 = vmatpush1.msra.mxu0 %v227
    %1493 = vmatprep.subr.mxu0 0.0
    %1494 = vmatpush1.msra.mxu0 %v228
    %1495 = vmatprep.subr.mxu0 0.0
    %1496 = vmatpush1.msra.mxu0 %v229
    %1497 = vmatprep.subr.mxu0 0.0
    %1498 = vmatpush1.msra.mxu0 %v230
    %1499 = vmatprep.subr.mxu0 0.0
    %1500 = vmatpush1.msra.mxu0 %v231
    %1501 = vmatprep.subr.mxu0 0.0
    %1502 = vmatpush1.msra.mxu0 %v232
    %1503 = vmatprep.subr.mxu0 0.0
    %1504 = vmatpush1.msra.mxu0 %v233
    %1505 = vmatprep.subr.mxu0 0.0
    %1506 = vmatpush1.msra.mxu0 %v234
    %1507 = vmatprep.subr.mxu0 0.0
    %1508 = vmatpush1.msra.mxu0 %v235
    %1509 = vmatprep.subr.mxu0 0.0
    %1510 = vmatpush1.msra.mxu0 %v236
    %1511 = vmatprep.subr.mxu0 0.0
    %1512 = vmatpush1.msra.mxu0 %v237
    %1513 = vmatprep.subr.mxu0 0.0
    %1514 = vmatpush1.msra.mxu0 %v238
    %1515 = vmatprep.subr.mxu0 0.0
    %1516 = vmatpush1.msra.mxu0 %v239
    %1517 = vmatprep.subr.mxu0 0.0
    %1518 = vmatpush1.msra.mxu0 %v240
    %1519 = vmatprep.subr.mxu0 0.0
    %1520 = vmatpush1.msra.mxu0 %v241
    %1521 = vmatprep.subr.mxu0 0.0
    %1522 = vmatpush1.msra.mxu0 %v242
    %1523 = vmatprep.subr.mxu0 0.0
    %1524 = vmatpush1.msra.mxu0 %v243
    %1525 = vmatprep.subr.mxu0 0.0
    %1526 = vmatpush1.msra.mxu0 %v244
    %1527 = vmatprep.subr.mxu0 0.0
    %1528 = vmatpush1.msra.mxu0 %v245
    %1529 = vmatprep.subr.mxu0 0.0
    %1530 = vmatpush1.msra.mxu0 %v246
    %1531 = vmatprep.subr.mxu0 0.0
    %1532 = vmatpush1.msra.mxu0 %v247
    %1533 = vmatprep.subr.mxu0 0.0
    %1534 = vmatpush1.msra.mxu0 %v248
    %1535 = vmatprep.subr.mxu0 0.0
    %1536 = vmatpush1.msra.mxu0 %v249
    %1537 = vmatprep.subr.mxu0 0.0
    %1538 = vmatpush1.msra.mxu0 %v250
    %1539 = vmatprep.subr.mxu0 0.0
    %1540 = vmatpush1.msra.mxu0 %v251
    %1541 = vmatprep.subr.mxu0 0.0
    %1542 = vmatpush1.msra.mxu0 %v252
    %1543 = vmatprep.subr.mxu0 0.0
    %1544 = vmatpush1.msra.mxu0 %v253
    %1545 = vmatprep.mubr.f32.mxu0 %v981
    %1546 = vmatmul.mubr.f32.gmra.mrb[0].mxu0 %v949
    %v1547 = vpop.f32.mrb[0].mxu0
    %v1548 = vadd.f32 %v1478, %v1547
    %v1549 = vpop.f32.mrb[0].mxu0
    %1550 = vdwg.mxu0
    %1551 = vmatprep.subr.mxu0 0.0
    %1552 = vmatpush1.msra.mxu0 %v254
    %1553 = vmatprep.subr.mxu0 0.0
    %1554 = vmatpush1.msra.mxu0 %v255
    %1555 = vmatprep.subr.mxu0 0.0
    %1556 = vmatpush1.msra.mxu0 %v256
    %1557 = vmatprep.subr.mxu0 0.0
    %1558 = vmatpush1.msra.mxu0 %v257
    %1559 = vmatprep.subr.mxu0 0.0
    %1560 = vmatpush1.msra.mxu0 %v258
    %1561 = vmatprep.subr.mxu0 0.0
    %1562 = vmatpush1.msra.mxu0 %v259
    %1563 = vmatprep.subr.mxu0 0.0
    %1564 = vmatpush1.msra.mxu0 %v260
    %1565 = vmatprep.subr.mxu0 0.0
    %1566 = vmatpush1.msra.mxu0 %v261
    %1567 = vmatprep.subr.mxu0 0.0
    %1568 = vmatpush1.msra.mxu0 %v262
    %1569 = vmatprep.subr.mxu0 0.0
    %1570 = vmatpush1.msra.mxu0 %v263
    %1571 = vmatprep.subr.mxu0 0.0
    %1572 = vmatpush1.msra.mxu0 %v264
    %1573 = vmatprep.subr.mxu0 0.0
    %1574 = vmatpush1.msra.mxu0 %v265
    %1575 = vmatprep.subr.mxu0 0.0
    %1576 = vmatpush1.msra.mxu0 %v266
    %1577 = vmatprep.subr.mxu0 0.0
    %1578 = vmatpush1.msra.mxu0 %v267
    %1579 = vmatprep.subr.mxu0 0.0
    %1580 = vmatpush1.msra.mxu0 %v268
    %1581 = vmatprep.subr.mxu0 0.0
    %1582 = vmatpush1.msra.mxu0 %v269
    %1583 = vmatprep.subr.mxu0 0.0
    %1584 = vmatpush1.msra.mxu0 %v270
    %1585 = vmatprep.subr.mxu0 0.0
    %1586 = vmatpush1.msra.mxu0 %v271
    %1587 = vmatprep.subr.mxu0 0.0
    %1588 = vmatpush1.msra.mxu0 %v272
    %1589 = vmatprep.subr.mxu0 0.0
    %1590 = vmatpush1.msra.mxu0 %v273
    %1591 = vmatprep.subr.mxu0 0.0
    %1592 = vmatpush1.msra.mxu0 %v274
    %1593 = vmatprep.subr.mxu0 0.0
    %1594 = vmatpush1.msra.mxu0 %v275
    %1595 = vmatprep.subr.mxu0 0.0
    %1596 = vmatpush1.msra.mxu0 %v276
    %1597 = vmatprep.subr.mxu0 0.0
    %1598 = vmatpush1.msra.mxu0 %v277
    %1599 = vmatprep.subr.mxu0 0.0
    %1600 = vmatpush1.msra.mxu0 %v278
    %1601 = vmatprep.subr.mxu0 0.0
    %1602 = vmatpush1.msra.mxu0 %v279
    %1603 = vmatprep.subr.mxu0 0.0
    %1604 = vmatpush1.msra.mxu0 %v280
    %1605 = vmatprep.subr.mxu0 0.0
    %1606 = vmatpush1.msra.mxu0 %v281
    %1607 = vmatprep.subr.mxu0 0.0
    %1608 = vmatpush1.msra.mxu0 %v282
    %1609 = vmatprep.subr.mxu0 0.0
    %1610 = vmatpush1.msra.mxu0 %v283
    %1611 = vmatprep.subr.mxu0 0.0
    %1612 = vmatpush1.msra.mxu0 %v284
    %1613 = vmatprep.subr.mxu0 0.0
    %1614 = vmatpush1.msra.mxu0 %v285
    %1615 = vmatprep.mubr.f32.mxu0 %v1045
    %1616 = vmatmul.mubr.f32.gmra.mrb[0].mxu0 %v1013
    %v1617 = vpop.f32.mrb[0].mxu0
    %v1618 = vadd.f32 %v1548, %v1617
    %v1619 = vpop.f32.mrb[0].mxu0
    %1620 = vdwg.mxu0
    %v1621 = vrot.slane %v1618, 4
    %v1622 = vadd.f32 %v1618, %v1621
    %v1623 = vrot.slane %v1622, 2
    %v1624 = vadd.f32 %v1622, %v1623
    %v1625 = vrot.slane %v1624, 1
    %v1626 = vadd.f32 %v1624, %v1625
    %v1627 = vrcp.pop 8.0
    %v1628 = vmul.f32 %v1626, %v1627
    %v1629 = vmul.f32 %v1618, %v1618
    %1630 = vadd.xlane.f32.xlu0 %v1629
    %v1631 = vpop.xlane.xlu0 %1630
    %v1632 = vmul.f32 %v1628, %v1628
    %1633 = vadd.xlane.f32.xlu0 %v1632
    %v1634 = vpop.xlane.xlu0 %1633
    %v1635 = vmax.f32 %v1631, 1e-24
    %v1636 = vrsqrt.pop %v1635
    %v1637 = vmul.f32 %v1618, %v1636
    %1638 = vst [vmem:[#allocation2] sm:$0xff] %v1637
    %v1639 = vmax.f32 %v1634, 1e-24
    %v1640 = vrsqrt.pop %v1639
    %v1641 = vmul.f32 %v1628, %v1640
    %1642 = vst [vmem:[#allocation4] sm:$0x1] %v1641
    %s1643 = scalar_lea.vmem %s0, 2048
    %v1644 = vld [vmem:[%s1643] sm:$0xff]
    %v1645 = vld [vmem:[%s1643 + $0x8] sm:$0xff]
    %v1646 = vld [vmem:[%s1643 + $0x10] sm:$0xff]
    %v1647 = vld [vmem:[%s1643 + $0x18] sm:$0xff]
    %v1648 = vld [vmem:[%s1643 + $0x20] sm:$0xff]
    %v1649 = vld [vmem:[%s1643 + $0x28] sm:$0xff]
    %v1650 = vld [vmem:[%s1643 + $0x30] sm:$0xff]
    %v1651 = vld [vmem:[%s1643 + $0x38] sm:$0xff]
    %v1652 = vld [vmem:[%s1643 + $0x40] sm:$0xff]
    %v1653 = vld [vmem:[%s1643 + $0x48] sm:$0xff]
    %v1654 = vld [vmem:[%s1643 + $0x50] sm:$0xff]
    %v1655 = vld [vmem:[%s1643 + $0x58] sm:$0xff]
    %v1656 = vld [vmem:[%s1643 + $0x60] sm:$0xff]
    %v1657 = vld [vmem:[%s1643 + $0x68] sm:$0xff]
    %v1658 = vld [vmem:[%s1643 + $0x70] sm:$0xff]
    %v1659 = vld [vmem:[%s1643 + $0x78] sm:$0xff]
    %v1660 = vld [vmem:[%s1643 + $0x80] sm:$0xff]
    %v1661 = vld [vmem:[%s1643 + $0x88] sm:$0xff]
    %v1662 = vld [vmem:[%s1643 + $0x90] sm:$0xff]
    %v1663 = vld [vmem:[%s1643 + $0x98] sm:$0xff]
    %v1664 = vld [vmem:[%s1643 + $0xa0] sm:$0xff]
    %v1665 = vld [vmem:[%s1643 + $0xa8] sm:$0xff]
    %v1666 = vld [vmem:[%s1643 + $0xb0] sm:$0xff]
    %v1667 = vld [vmem:[%s1643 + $0xb8] sm:$0xff]
    %v1668 = vld [vmem:[%s1643 + $0xc0] sm:$0xff]
    %v1669 = vld [vmem:[%s1643 + $0xc8] sm:$0xff]
    %v1670 = vld [vmem:[%s1643 + $0xd0] sm:$0xff]
    %v1671 = vld [vmem:[%s1643 + $0xd8] sm:$0xff]
    %v1672 = vld [vmem:[%s1643 + $0xe0] sm:$0xff]
    %v1673 = vld [vmem:[%s1643 + $0xe8] sm:$0xff]
    %v1674 = vld [vmem:[%s1643 + $0xf0] sm:$0xff]
    %v1675 = vld [vmem:[%s1643 + $0xf8] sm:$0xff]
    %v1676 = vld [vmem:[%s1643 + $0x100] sm:$0xff]
    %v1677 = vld [vmem:[%s1643 + $0x108] sm:$0xff]
    %v1678 = vld [vmem:[%s1643 + $0x110] sm:$0xff]
    %v1679 = vld [vmem:[%s1643 + $0x118] sm:$0xff]
    %v1680 = vld [vmem:[%s1643 + $0x120] sm:$0xff]
    %v1681 = vld [vmem:[%s1643 + $0x128] sm:$0xff]
    %v1682 = vld [vmem:[%s1643 + $0x130] sm:$0xff]
    %v1683 = vld [vmem:[%s1643 + $0x138] sm:$0xff]
    %v1684 = vld [vmem:[%s1643 + $0x140] sm:$0xff]
    %v1685 = vld [vmem:[%s1643 + $0x148] sm:$0xff]
    %v1686 = vld [vmem:[%s1643 + $0x150] sm:$0xff]
    %v1687 = vld [vmem:[%s1643 + $0x158] sm:$0xff]
    %v1688 = vld [vmem:[%s1643 + $0x160] sm:$0xff]
    %v1689 = vld [vmem:[%s1643 + $0x168] sm:$0xff]
    %v1690 = vld [vmem:[%s1643 + $0x170] sm:$0xff]
    %v1691 = vld [vmem:[%s1643 + $0x178] sm:$0xff]
    %v1692 = vld [vmem:[%s1643 + $0x180] sm:$0xff]
    %v1693 = vld [vmem:[%s1643 + $0x188] sm:$0xff]
    %v1694 = vld [vmem:[%s1643 + $0x190] sm:$0xff]
    %v1695 = vld [vmem:[%s1643 + $0x198] sm:$0xff]
    %v1696 = vld [vmem:[%s1643 + $0x1a0] sm:$0xff]
    %v1697 = vld [vmem:[%s1643 + $0x1a8] sm:$0xff]
    %v1698 = vld [vmem:[%s1643 + $0x1b0] sm:$0xff]
    %v1699 = vld [vmem:[%s1643 + $0x1b8] sm:$0xff]
    %v1700 = vld [vmem:[%s1643 + $0x1c0] sm:$0xff]
    %v1701 = vld [vmem:[%s1643 + $0x1c8] sm:$0xff]
    %v1702 = vld [vmem:[%s1643 + $0x1d0] sm:$0xff]
    %v1703 = vld [vmem:[%s1643 + $0x1d8] sm:$0xff]
    %v1704 = vld [vmem:[%s1643 + $0x1e0] sm:$0xff]
    %v1705 = vld [vmem:[%s1643 + $0x1e8] sm:$0xff]
    %v1706 = vld [vmem:[%s1643 + $0x1f0] sm:$0xff]
    %v1707 = vld [vmem:[%s1643 + $0x1f8] sm:$0xff]
    %v1708 = vld [vmem:[%s1643 + $0x200] sm:$0xff]
    %v1709 = vld [vmem:[%s1643 + $0x208] sm:$0xff]
    %v1710 = vld [vmem:[%s1643 + $0x210] sm:$0xff]
    %v1711 = vld [vmem:[%s1643 + $0x218] sm:$0xff]
    %v1712 = vld [vmem:[%s1643 + $0x220] sm:$0xff]
    %v1713 = vld [vmem:[%s1643 + $0x228] sm:$0xff]
    %v1714 = vld [vmem:[%s1643 + $0x230] sm:$0xff]
    %v1715 = vld [vmem:[%s1643 + $0x238] sm:$0xff]
    %v1716 = vld [vmem:[%s1643 + $0x240] sm:$0xff]
    %v1717 = vld [vmem:[%s1643 + $0x248] sm:$0xff]
    %v1718 = vld [vmem:[%s1643 + $0x250] sm:$0xff]
    %v1719 = vld [vmem:[%s1643 + $0x258] sm:$0xff]
    %v1720 = vld [vmem:[%s1643 + $0x260] sm:$0xff]
    %v1721 = vld [vmem:[%s1643 + $0x268] sm:$0xff]
    %v1722 = vld [vmem:[%s1643 + $0x270] sm:$0xff]
    %v1723 = vld [vmem:[%s1643 + $0x278] sm:$0xff]
    %v1724 = vld [vmem:[%s1643 + $0x280] sm:$0xff]
    %v1725 = vld [vmem:[%s1643 + $0x288] sm:$0xff]
    %v1726 = vld [vmem:[%s1643 + $0x290] sm:$0xff]
    %v1727 = vld [vmem:[%s1643 + $0x298] sm:$0xff]
    %v1728 = vld [vmem:[%s1643 + $0x2a0] sm:$0xff]
    %v1729 = vld [vmem:[%s1643 + $0x2a8] sm:$0xff]
    %v1730 = vld [vmem:[%s1643 + $0x2b0] sm:$0xff]
    %v1731 = vld [vmem:[%s1643 + $0x2b8] sm:$0xff]
    %v1732 = vld [vmem:[%s1643 + $0x2c0] sm:$0xff]
    %v1733 = vld [vmem:[%s1643 + $0x2c8] sm:$0xff]
    %v1734 = vld [vmem:[%s1643 + $0x2d0] sm:$0xff]
    %v1735 = vld [vmem:[%s1643 + $0x2d8] sm:$0xff]
    %v1736 = vld [vmem:[%s1643 + $0x2e0] sm:$0xff]
    %v1737 = vld [vmem:[%s1643 + $0x2e8] sm:$0xff]
    %v1738 = vld [vmem:[%s1643 + $0x2f0] sm:$0xff]
    %v1739 = vld [vmem:[%s1643 + $0x2f8] sm:$0xff]
    %v1740 = vld [vmem:[%s1643 + $0x300] sm:$0xff]
    %v1741 = vld [vmem:[%s1643 + $0x308] sm:$0xff]
    %v1742 = vld [vmem:[%s1643 + $0x310] sm:$0xff]
    %v1743 = vld [vmem:[%s1643 + $0x318] sm:$0xff]
    %v1744 = vld [vmem:[%s1643 + $0x320] sm:$0xff]
    %v1745 = vld [vmem:[%s1643 + $0x328] sm:$0xff]
    %v1746 = vld [vmem:[%s1643 + $0x330] sm:$0xff]
    %v1747 = vld [vmem:[%s1643 + $0x338] sm:$0xff]
    %v1748 = vld [vmem:[%s1643 + $0x340] sm:$0xff]
    %v1749 = vld [vmem:[%s1643 + $0x348] sm:$0xff]
    %v1750 = vld [vmem:[%s1643 + $0x350] sm:$0xff]
    %v1751 = vld [vmem:[%s1643 + $0x358] sm:$0xff]
    %v1752 = vld [vmem:[%s1643 + $0x360] sm:$0xff]
    %v1753 = vld [vmem:[%s1643 + $0x368] sm:$0xff]
    %v1754 = vld [vmem:[%s1643 + $0x370] sm:$0xff]
    %v1755 = vld [vmem:[%s1643 + $0x378] sm:$0xff]
    %v1756 = vld [vmem:[%s1643 + $0x380] sm:$0xff]
    %v1757 = vld [vmem:[%s1643 + $0x388] sm:$0xff]
    %v1758 = vld [vmem:[%s1643 + $0x390] sm:$0xff]
    %v1759 = vld [vmem:[%s1643 + $0x398] sm:$0xff]
    %v1760 = vld [vmem:[%s1643 + $0x3a0] sm:$0xff]
    %v1761 = vld [vmem:[%s1643 + $0x3a8] sm:$0xff]
    %v1762 = vld [vmem:[%s1643 + $0x3b0] sm:$0xff]
    %v1763 = vld [vmem:[%s1643 + $0x3b8] sm:$0xff]
    %v1764 = vld [vmem:[%s1643 + $0x3c0] sm:$0xff]
    %v1765 = vld [vmem:[%s1643 + $0x3c8] sm:$0xff]
    %v1766 = vld [vmem:[%s1643 + $0x3d0] sm:$0xff]
    %v1767 = vld [vmem:[%s1643 + $0x3d8] sm:$0xff]
    %v1768 = vld [vmem:[%s1643 + $0x3e0] sm:$0xff]
    %v1769 = vld [vmem:[%s1643 + $0x3e8] sm:$0xff]
    %v1770 = vld [vmem:[%s1643 + $0x3f0] sm:$0xff]
    %v1771 = vld [vmem:[%s1643 + $0x3f8] sm:$0xff]
    %v1772 = vld [vmem:[%s1643 + $0x400] sm:$0xff]
    %v1773 = vld [vmem:[%s1643 + $0x408] sm:$0xff]
    %v1774 = vld [vmem:[%s1643 + $0x410] sm:$0xff]
    %v1775 = vld [vmem:[%s1643 + $0x418] sm:$0xff]
    %v1776 = vld [vmem:[%s1643 + $0x420] sm:$0xff]
    %v1777 = vld [vmem:[%s1643 + $0x428] sm:$0xff]
    %v1778 = vld [vmem:[%s1643 + $0x430] sm:$0xff]
    %v1779 = vld [vmem:[%s1643 + $0x438] sm:$0xff]
    %v1780 = vld [vmem:[%s1643 + $0x440] sm:$0xff]
    %v1781 = vld [vmem:[%s1643 + $0x448] sm:$0xff]
    %v1782 = vld [vmem:[%s1643 + $0x450] sm:$0xff]
    %v1783 = vld [vmem:[%s1643 + $0x458] sm:$0xff]
    %v1784 = vld [vmem:[%s1643 + $0x460] sm:$0xff]
    %v1785 = vld [vmem:[%s1643 + $0x468] sm:$0xff]
    %v1786 = vld [vmem:[%s1643 + $0x470] sm:$0xff]
    %v1787 = vld [vmem:[%s1643 + $0x478] sm:$0xff]
    %v1788 = vld [vmem:[%s1643 + $0x480] sm:$0xff]
    %v1789 = vld [vmem:[%s1643 + $0x488] sm:$0xff]
    %v1790 = vld [vmem:[%s1643 + $0x490] sm:$0xff]
    %v1791 = vld [vmem:[%s1643 + $0x498] sm:$0xff]
    %v1792 = vld [vmem:[%s1643 + $0x4a0] sm:$0xff]
    %v1793 = vld [vmem:[%s1643 + $0x4a8] sm:$0xff]
    %v1794 = vld [vmem:[%s1643 + $0x4b0] sm:$0xff]
    %v1795 = vld [vmem:[%s1643 + $0x4b8] sm:$0xff]
    %v1796 = vld [vmem:[%s1643 + $0x4c0] sm:$0xff]
    %v1797 = vld [vmem:[%s1643 + $0x4c8] sm:$0xff]
    %v1798 = vld [vmem:[%s1643 + $0x4d0] sm:$0xff]
    %v1799 = vld [vmem:[%s1643 + $0x4d8] sm:$0xff]
    %v1800 = vld [vmem:[%s1643 + $0x4e0] sm:$0xff]
    %v1801 = vld [vmem:[%s1643 + $0x4e8] sm:$0xff]
    %v1802 = vld [vmem:[%s1643 + $0x4f0] sm:$0xff]
    %v1803 = vld [vmem:[%s1643 + $0x4f8] sm:$0xff]
    %v1804 = vld [vmem:[%s1643 + $0x500] sm:$0xff]
    %v1805 = vld [vmem:[%s1643 + $0x508] sm:$0xff]
    %v1806 = vld [vmem:[%s1643 + $0x510] sm:$0xff]
    %v1807 = vld [vmem:[%s1643 + $0x518] sm:$0xff]
    %v1808 = vld [vmem:[%s1643 + $0x520] sm:$0xff]
    %v1809 = vld [vmem:[%s1643 + $0x528] sm:$0xff]
    %v1810 = vld [vmem:[%s1643 + $0x530] sm:$0xff]
    %v1811 = vld [vmem:[%s1643 + $0x538] sm:$0xff]
    %v1812 = vld [vmem:[%s1643 + $0x540] sm:$0xff]
    %v1813 = vld [vmem:[%s1643 + $0x548] sm:$0xff]
    %v1814 = vld [vmem:[%s1643 + $0x550] sm:$0xff]
    %v1815 = vld [vmem:[%s1643 + $0x558] sm:$0xff]
    %v1816 = vld [vmem:[%s1643 + $0x560] sm:$0xff]
    %v1817 = vld [vmem:[%s1643 + $0x568] sm:$0xff]
    %v1818 = vld [vmem:[%s1643 + $0x570] sm:$0xff]
    %v1819 = vld [vmem:[%s1643 + $0x578] sm:$0xff]
    %v1820 = vld [vmem:[%s1643 + $0x580] sm:$0xff]
    %v1821 = vld [vmem:[%s1643 + $0x588] sm:$0xff]
    %v1822 = vld [vmem:[%s1643 + $0x590] sm:$0xff]
    %v1823 = vld [vmem:[%s1643 + $0x598] sm:$0xff]
    %v1824 = vld [vmem:[%s1643 + $0x5a0] sm:$0xff]
    %v1825 = vld [vmem:[%s1643 + $0x5a8] sm:$0xff]
    %v1826 = vld [vmem:[%s1643 + $0x5b0] sm:$0xff]
    %v1827 = vld [vmem:[%s1643 + $0x5b8] sm:$0xff]
    %v1828 = vld [vmem:[%s1643 + $0x5c0] sm:$0xff]
    %v1829 = vld [vmem:[%s1643 + $0x5c8] sm:$0xff]
    %v1830 = vld [vmem:[%s1643 + $0x5d0] sm:$0xff]
    %v1831 = vld [vmem:[%s1643 + $0x5d8] sm:$0xff]
    %v1832 = vld [vmem:[%s1643 + $0x5e0] sm:$0xff]
    %v1833 = vld [vmem:[%s1643 + $0x5e8] sm:$0xff]
    %v1834 = vld [vmem:[%s1643 + $0x5f0] sm:$0xff]
    %v1835 = vld [vmem:[%s1643 + $0x5f8] sm:$0xff]
    %v1836 = vld [vmem:[%s1643 + $0x600] sm:$0xff]
    %v1837 = vld [vmem:[%s1643 + $0x608] sm:$0xff]
    %v1838 = vld [vmem:[%s1643 + $0x610] sm:$0xff]
    %v1839 = vld [vmem:[%s1643 + $0x618] sm:$0xff]
    %v1840 = vld [vmem:[%s1643 + $0x620] sm:$0xff]
    %v1841 = vld [vmem:[%s1643 + $0x628] sm:$0xff]
    %v1842 = vld [vmem:[%s1643 + $0x630] sm:$0xff]
    %v1843 = vld [vmem:[%s1643 + $0x638] sm:$0xff]
    %v1844 = vld [vmem:[%s1643 + $0x640] sm:$0xff]
    %v1845 = vld [vmem:[%s1643 + $0x648] sm:$0xff]
    %v1846 = vld [vmem:[%s1643 + $0x650] sm:$0xff]
    %v1847 = vld [vmem:[%s1643 + $0x658] sm:$0xff]
    %v1848 = vld [vmem:[%s1643 + $0x660] sm:$0xff]
    %v1849 = vld [vmem:[%s1643 + $0x668] sm:$0xff]
    %v1850 = vld [vmem:[%s1643 + $0x670] sm:$0xff]
    %v1851 = vld [vmem:[%s1643 + $0x678] sm:$0xff]
    %v1852 = vld [vmem:[%s1643 + $0x680] sm:$0xff]
    %v1853 = vld [vmem:[%s1643 + $0x688] sm:$0xff]
    %v1854 = vld [vmem:[%s1643 + $0x690] sm:$0xff]
    %v1855 = vld [vmem:[%s1643 + $0x698] sm:$0xff]
    %v1856 = vld [vmem:[%s1643 + $0x6a0] sm:$0xff]
    %v1857 = vld [vmem:[%s1643 + $0x6a8] sm:$0xff]
    %v1858 = vld [vmem:[%s1643 + $0x6b0] sm:$0xff]
    %v1859 = vld [vmem:[%s1643 + $0x6b8] sm:$0xff]
    %v1860 = vld [vmem:[%s1643 + $0x6c0] sm:$0xff]
    %v1861 = vld [vmem:[%s1643 + $0x6c8] sm:$0xff]
    %v1862 = vld [vmem:[%s1643 + $0x6d0] sm:$0xff]
    %v1863 = vld [vmem:[%s1643 + $0x6d8] sm:$0xff]
    %v1864 = vld [vmem:[%s1643 + $0x6e0] sm:$0xff]
    %v1865 = vld [vmem:[%s1643 + $0x6e8] sm:$0xff]
    %v1866 = vld [vmem:[%s1643 + $0x6f0] sm:$0xff]
    %v1867 = vld [vmem:[%s1643 + $0x6f8] sm:$0xff]
    %v1868 = vld [vmem:[%s1643 + $0x700] sm:$0xff]
    %v1869 = vld [vmem:[%s1643 + $0x708] sm:$0xff]
    %v1870 = vld [vmem:[%s1643 + $0x710] sm:$0xff]
    %v1871 = vld [vmem:[%s1643 + $0x718] sm:$0xff]
    %v1872 = vld [vmem:[%s1643 + $0x720] sm:$0xff]
    %v1873 = vld [vmem:[%s1643 + $0x728] sm:$0xff]
    %v1874 = vld [vmem:[%s1643 + $0x730] sm:$0xff]
    %v1875 = vld [vmem:[%s1643 + $0x738] sm:$0xff]
    %v1876 = vld [vmem:[%s1643 + $0x740] sm:$0xff]
    %v1877 = vld [vmem:[%s1643 + $0x748] sm:$0xff]
    %v1878 = vld [vmem:[%s1643 + $0x750] sm:$0xff]
    %v1879 = vld [vmem:[%s1643 + $0x758] sm:$0xff]
    %v1880 = vld [vmem:[%s1643 + $0x760] sm:$0xff]
    %v1881 = vld [vmem:[%s1643 + $0x768] sm:$0xff]
    %v1882 = vld [vmem:[%s1643 + $0x770] sm:$0xff]
    %v1883 = vld [vmem:[%s1643 + $0x778] sm:$0xff]
    %v1884 = vld [vmem:[%s1643 + $0x780] sm:$0xff]
    %v1885 = vld [vmem:[%s1643 + $0x788] sm:$0xff]
    %v1886 = vld [vmem:[%s1643 + $0x790] sm:$0xff]
    %v1887 = vld [vmem:[%s1643 + $0x798] sm:$0xff]
    %v1888 = vld [vmem:[%s1643 + $0x7a0] sm:$0xff]
    %v1889 = vld [vmem:[%s1643 + $0x7a8] sm:$0xff]
    %v1890 = vld [vmem:[%s1643 + $0x7b0] sm:$0xff]
    %v1891 = vld [vmem:[%s1643 + $0x7b8] sm:$0xff]
    %v1892 = vld [vmem:[%s1643 + $0x7c0] sm:$0xff]
    %v1893 = vld [vmem:[%s1643 + $0x7c8] sm:$0xff]
    %v1894 = vld [vmem:[%s1643 + $0x7d0] sm:$0xff]
    %v1895 = vld [vmem:[%s1643 + $0x7d8] sm:$0xff]
    %v1896 = vld [vmem:[%s1643 + $0x7e0] sm:$0xff]
    %v1897 = vld [vmem:[%s1643 + $0x7e8] sm:$0xff]
    %v1898 = vld [vmem:[%s1643 + $0x7f0] sm:$0xff]
    %v1899 = vld [vmem:[%s1643 + $0x7f8] sm:$0xff]
    %1900 = vxpose.xlu0.b32.start [1/16] %v1644, 128
    %1901 = vxpose.xlu0.b32.cont [2/16] %v1645, 128
    %1902 = vxpose.xlu0.b32.cont [3/16] %v1646, 128
    %1903 = vxpose.xlu0.b32.cont [4/16] %v1647, 128
    %1904 = vxpose.xlu0.b32.cont [5/16] %v1648, 128
    %1905 = vxpose.xlu0.b32.cont [6/16] %v1649, 128
    %1906 = vxpose.xlu0.b32.cont [7/16] %v1650, 128
    %1907 = vxpose.xlu0.b32.cont [8/16] %v1651, 128
    %1908 = vxpose.xlu0.b32.cont [9/16] %v1652, 128
    %1909 = vxpose.xlu0.b32.cont [10/16] %v1653, 128
    %1910 = vxpose.xlu0.b32.cont [11/16] %v1654, 128
    %1911 = vxpose.xlu0.b32.cont [12/16] %v1655, 128
    %1912 = vxpose.xlu0.b32.cont [13/16] %v1656, 128
    %1913 = vxpose.xlu0.b32.cont [14/16] %v1657, 128
    %1914 = vxpose.xlu0.b32.cont [15/16] %v1658, 128
    %1915 = vxpose.xlu0.b32.end [16/16] %v1659, 128
    %v1916 = vpop.trf.xlu0
    %v1917 = vpop.trf.xlu0
    %v1918 = vpop.trf.xlu0
    %v1919 = vpop.trf.xlu0
    %v1920 = vpop.trf.xlu0
    %v1921 = vpop.trf.xlu0
    %v1922 = vpop.trf.xlu0
    %v1923 = vpop.trf.xlu0
    %v1924 = vpop.trf.xlu0
    %v1925 = vpop.trf.xlu0
    %v1926 = vpop.trf.xlu0
    %v1927 = vpop.trf.xlu0
    %v1928 = vpop.trf.xlu0
    %v1929 = vpop.trf.xlu0
    %v1930 = vpop.trf.xlu0
    %v1931 = vpop.trf.xlu0
    %1932 = vxpose.xlu0.b32.start [1/16] %v1660, 128
    %1933 = vxpose.xlu0.b32.cont [2/16] %v1661, 128
    %1934 = vxpose.xlu0.b32.cont [3/16] %v1662, 128
    %1935 = vxpose.xlu0.b32.cont [4/16] %v1663, 128
    %1936 = vxpose.xlu0.b32.cont [5/16] %v1664, 128
    %1937 = vxpose.xlu0.b32.cont [6/16] %v1665, 128
    %1938 = vxpose.xlu0.b32.cont [7/16] %v1666, 128
    %1939 = vxpose.xlu0.b32.cont [8/16] %v1667, 128
    %1940 = vxpose.xlu0.b32.cont [9/16] %v1668, 128
    %1941 = vxpose.xlu0.b32.cont [10/16] %v1669, 128
    %1942 = vxpose.xlu0.b32.cont [11/16] %v1670, 128
    %1943 = vxpose.xlu0.b32.cont [12/16] %v1671, 128
    %1944 = vxpose.xlu0.b32.cont [13/16] %v1672, 128
    %1945 = vxpose.xlu0.b32.cont [14/16] %v1673, 128
    %1946 = vxpose.xlu0.b32.cont [15/16] %v1674, 128
    %1947 = vxpose.xlu0.b32.end [16/16] %v1675, 128
    %v1948 = vpop.trf.xlu0
    %v1949 = vpop.trf.xlu0
    %v1950 = vpop.trf.xlu0
    %v1951 = vpop.trf.xlu0
    %v1952 = vpop.trf.xlu0
    %v1953 = vpop.trf.xlu0
    %v1954 = vpop.trf.xlu0
    %v1955 = vpop.trf.xlu0
    %v1956 = vpop.trf.xlu0
    %v1957 = vpop.trf.xlu0
    %v1958 = vpop.trf.xlu0
    %v1959 = vpop.trf.xlu0
    %v1960 = vpop.trf.xlu0
    %v1961 = vpop.trf.xlu0
    %v1962 = vpop.trf.xlu0
    %v1963 = vpop.trf.xlu0
    %1964 = vxpose.xlu0.b32.start [1/16] %v1676, 128
    %1965 = vxpose.xlu0.b32.cont [2/16] %v1677, 128
    %1966 = vxpose.xlu0.b32.cont [3/16] %v1678, 128
    %1967 = vxpose.xlu0.b32.cont [4/16] %v1679, 128
    %1968 = vxpose.xlu0.b32.cont [5/16] %v1680, 128
    %1969 = vxpose.xlu0.b32.cont [6/16] %v1681, 128
    %1970 = vxpose.xlu0.b32.cont [7/16] %v1682, 128
    %1971 = vxpose.xlu0.b32.cont [8/16] %v1683, 128
    %1972 = vxpose.xlu0.b32.cont [9/16] %v1684, 128
    %1973 = vxpose.xlu0.b32.cont [10/16] %v1685, 128
    %1974 = vxpose.xlu0.b32.cont [11/16] %v1686, 128
    %1975 = vxpose.xlu0.b32.cont [12/16] %v1687, 128
    %1976 = vxpose.xlu0.b32.cont [13/16] %v1688, 128
    %1977 = vxpose.xlu0.b32.cont [14/16] %v1689, 128
    %1978 = vxpose.xlu0.b32.cont [15/16] %v1690, 128
    %1979 = vxpose.xlu0.b32.end [16/16] %v1691, 128
    %v1980 = vpop.trf.xlu0
    %v1981 = vpop.trf.xlu0
    %v1982 = vpop.trf.xlu0
    %v1983 = vpop.trf.xlu0
    %v1984 = vpop.trf.xlu0
    %v1985 = vpop.trf.xlu0
    %v1986 = vpop.trf.xlu0
    %v1987 = vpop.trf.xlu0
    %v1988 = vpop.trf.xlu0
    %v1989 = vpop.trf.xlu0
    %v1990 = vpop.trf.xlu0
    %v1991 = vpop.trf.xlu0
    %v1992 = vpop.trf.xlu0
    %v1993 = vpop.trf.xlu0
    %v1994 = vpop.trf.xlu0
    %v1995 = vpop.trf.xlu0
    %1996 = vxpose.xlu0.b32.start [1/16] %v1692, 128
    %1997 = vxpose.xlu0.b32.cont [2/16] %v1693, 128
    %1998 = vxpose.xlu0.b32.cont [3/16] %v1694, 128
    %1999 = vxpose.xlu0.b32.cont [4/16] %v1695, 128
    %2000 = vxpose.xlu0.b32.cont [5/16] %v1696, 128
    %2001 = vxpose.xlu0.b32.cont [6/16] %v1697, 128
    %2002 = vxpose.xlu0.b32.cont [7/16] %v1698, 128
    %2003 = vxpose.xlu0.b32.cont [8/16] %v1699, 128
    %2004 = vxpose.xlu0.b32.cont [9/16] %v1700, 128
    %2005 = vxpose.xlu0.b32.cont [10/16] %v1701, 128
    %2006 = vxpose.xlu0.b32.cont [11/16] %v1702, 128
    %2007 = vxpose.xlu0.b32.cont [12/16] %v1703, 128
    %2008 = vxpose.xlu0.b32.cont [13/16] %v1704, 128
    %2009 = vxpose.xlu0.b32.cont [14/16] %v1705, 128
    %2010 = vxpose.xlu0.b32.cont [15/16] %v1706, 128
    %2011 = vxpose.xlu0.b32.end [16/16] %v1707, 128
    %v2012 = vpop.trf.xlu0
    %v2013 = vpop.trf.xlu0
    %v2014 = vpop.trf.xlu0
    %v2015 = vpop.trf.xlu0
    %v2016 = vpop.trf.xlu0
    %v2017 = vpop.trf.xlu0
    %v2018 = vpop.trf.xlu0
    %v2019 = vpop.trf.xlu0
    %v2020 = vpop.trf.xlu0
    %v2021 = vpop.trf.xlu0
    %v2022 = vpop.trf.xlu0
    %v2023 = vpop.trf.xlu0
    %v2024 = vpop.trf.xlu0
    %v2025 = vpop.trf.xlu0
    %v2026 = vpop.trf.xlu0
    %v2027 = vpop.trf.xlu0
    %2028 = vxpose.xlu0.b32.start [1/16] %v1708, 128
    %2029 = vxpose.xlu0.b32.cont [2/16] %v1709, 128
    %2030 = vxpose.xlu0.b32.cont [3/16] %v1710, 128
    %2031 = vxpose.xlu0.b32.cont [4/16] %v1711, 128
    %2032 = vxpose.xlu0.b32.cont [5/16] %v1712, 128
    %2033 = vxpose.xlu0.b32.cont [6/16] %v1713, 128
    %2034 = vxpose.xlu0.b32.cont [7/16] %v1714, 128
    %2035 = vxpose.xlu0.b32.cont [8/16] %v1715, 128
    %2036 = vxpose.xlu0.b32.cont [9/16] %v1716, 128
    %2037 = vxpose.xlu0.b32.cont [10/16] %v1717, 128
    %2038 = vxpose.xlu0.b32.cont [11/16] %v1718, 128
    %2039 = vxpose.xlu0.b32.cont [12/16] %v1719, 128
    %2040 = vxpose.xlu0.b32.cont [13/16] %v1720, 128
    %2041 = vxpose.xlu0.b32.cont [14/16] %v1721, 128
    %2042 = vxpose.xlu0.b32.cont [15/16] %v1722, 128
    %2043 = vxpose.xlu0.b32.end [16/16] %v1723, 128
    %v2044 = vpop.trf.xlu0
    %v2045 = vpop.trf.xlu0
    %v2046 = vpop.trf.xlu0
    %v2047 = vpop.trf.xlu0
    %v2048 = vpop.trf.xlu0
    %v2049 = vpop.trf.xlu0
    %v2050 = vpop.trf.xlu0
    %v2051 = vpop.trf.xlu0
    %v2052 = vpop.trf.xlu0
    %v2053 = vpop.trf.xlu0
    %v2054 = vpop.trf.xlu0
    %v2055 = vpop.trf.xlu0
    %v2056 = vpop.trf.xlu0
    %v2057 = vpop.trf.xlu0
    %v2058 = vpop.trf.xlu0
    %v2059 = vpop.trf.xlu0
    %2060 = vxpose.xlu0.b32.start [1/16] %v1724, 128
    %2061 = vxpose.xlu0.b32.cont [2/16] %v1725, 128
    %2062 = vxpose.xlu0.b32.cont [3/16] %v1726, 128
    %2063 = vxpose.xlu0.b32.cont [4/16] %v1727, 128
    %2064 = vxpose.xlu0.b32.cont [5/16] %v1728, 128
    %2065 = vxpose.xlu0.b32.cont [6/16] %v1729, 128
    %2066 = vxpose.xlu0.b32.cont [7/16] %v1730, 128
    %2067 = vxpose.xlu0.b32.cont [8/16] %v1731, 128
    %2068 = vxpose.xlu0.b32.cont [9/16] %v1732, 128
    %2069 = vxpose.xlu0.b32.cont [10/16] %v1733, 128
    %2070 = vxpose.xlu0.b32.cont [11/16] %v1734, 128
    %2071 = vxpose.xlu0.b32.cont [12/16] %v1735, 128
    %2072 = vxpose.xlu0.b32.cont [13/16] %v1736, 128
    %2073 = vxpose.xlu0.b32.cont [14/16] %v1737, 128
    %2074 = vxpose.xlu0.b32.cont [15/16] %v1738, 128
    %2075 = vxpose.xlu0.b32.end [16/16] %v1739, 128
    %v2076 = vpop.trf.xlu0
    %v2077 = vpop.trf.xlu0
    %v2078 = vpop.trf.xlu0
    %v2079 = vpop.trf.xlu0
    %v2080 = vpop.trf.xlu0
    %v2081 = vpop.trf.xlu0
    %v2082 = vpop.trf.xlu0
    %v2083 = vpop.trf.xlu0
    %v2084 = vpop.trf.xlu0
    %v2085 = vpop.trf.xlu0
    %v2086 = vpop.trf.xlu0
    %v2087 = vpop.trf.xlu0
    %v2088 = vpop.trf.xlu0
    %v2089 = vpop.trf.xlu0
    %v2090 = vpop.trf.xlu0
    %v2091 = vpop.trf.xlu0
    %2092 = vxpose.xlu0.b32.start [1/16] %v1740, 128
    %2093 = vxpose.xlu0.b32.cont [2/16] %v1741, 128
    %2094 = vxpose.xlu0.b32.cont [3/16] %v1742, 128
    %2095 = vxpose.xlu0.b32.cont [4/16] %v1743, 128
    %2096 = vxpose.xlu0.b32.cont [5/16] %v1744, 128
    %2097 = vxpose.xlu0.b32.cont [6/16] %v1745, 128
    %2098 = vxpose.xlu0.b32.cont [7/16] %v1746, 128
    %2099 = vxpose.xlu0.b32.cont [8/16] %v1747, 128
    %2100 = vxpose.xlu0.b32.cont [9/16] %v1748, 128
    %2101 = vxpose.xlu0.b32.cont [10/16] %v1749, 128
    %2102 = vxpose.xlu0.b32.cont [11/16] %v1750, 128
    %2103 = vxpose.xlu0.b32.cont [12/16] %v1751, 128
    %2104 = vxpose.xlu0.b32.cont [13/16] %v1752, 128
    %2105 = vxpose.xlu0.b32.cont [14/16] %v1753, 128
    %2106 = vxpose.xlu0.b32.cont [15/16] %v1754, 128
    %2107 = vxpose.xlu0.b32.end [16/16] %v1755, 128
    %v2108 = vpop.trf.xlu0
    %v2109 = vpop.trf.xlu0
    %v2110 = vpop.trf.xlu0
    %v2111 = vpop.trf.xlu0
    %v2112 = vpop.trf.xlu0
    %v2113 = vpop.trf.xlu0
    %v2114 = vpop.trf.xlu0
    %v2115 = vpop.trf.xlu0
    %v2116 = vpop.trf.xlu0
    %v2117 = vpop.trf.xlu0
    %v2118 = vpop.trf.xlu0
    %v2119 = vpop.trf.xlu0
    %v2120 = vpop.trf.xlu0
    %v2121 = vpop.trf.xlu0
    %v2122 = vpop.trf.xlu0
    %v2123 = vpop.trf.xlu0
    %2124 = vxpose.xlu0.b32.start [1/16] %v1756, 128
    %2125 = vxpose.xlu0.b32.cont [2/16] %v1757, 128
    %2126 = vxpose.xlu0.b32.cont [3/16] %v1758, 128
    %2127 = vxpose.xlu0.b32.cont [4/16] %v1759, 128
    %2128 = vxpose.xlu0.b32.cont [5/16] %v1760, 128
    %2129 = vxpose.xlu0.b32.cont [6/16] %v1761, 128
    %2130 = vxpose.xlu0.b32.cont [7/16] %v1762, 128
    %2131 = vxpose.xlu0.b32.cont [8/16] %v1763, 128
    %2132 = vxpose.xlu0.b32.cont [9/16] %v1764, 128
    %2133 = vxpose.xlu0.b32.cont [10/16] %v1765, 128
    %2134 = vxpose.xlu0.b32.cont [11/16] %v1766, 128
    %2135 = vxpose.xlu0.b32.cont [12/16] %v1767, 128
    %2136 = vxpose.xlu0.b32.cont [13/16] %v1768, 128
    %2137 = vxpose.xlu0.b32.cont [14/16] %v1769, 128
    %2138 = vxpose.xlu0.b32.cont [15/16] %v1770, 128
    %2139 = vxpose.xlu0.b32.end [16/16] %v1771, 128
    %v2140 = vpop.trf.xlu0
    %v2141 = vpop.trf.xlu0
    %v2142 = vpop.trf.xlu0
    %v2143 = vpop.trf.xlu0
    %v2144 = vpop.trf.xlu0
    %v2145 = vpop.trf.xlu0
    %v2146 = vpop.trf.xlu0
    %v2147 = vpop.trf.xlu0
    %v2148 = vpop.trf.xlu0
    %v2149 = vpop.trf.xlu0
    %v2150 = vpop.trf.xlu0
    %v2151 = vpop.trf.xlu0
    %v2152 = vpop.trf.xlu0
    %v2153 = vpop.trf.xlu0
    %v2154 = vpop.trf.xlu0
    %v2155 = vpop.trf.xlu0
    %2156 = vxpose.xlu0.b32.start [1/16] %v1772, 128
    %2157 = vxpose.xlu0.b32.cont [2/16] %v1773, 128
    %2158 = vxpose.xlu0.b32.cont [3/16] %v1774, 128
    %2159 = vxpose.xlu0.b32.cont [4/16] %v1775, 128
    %2160 = vxpose.xlu0.b32.cont [5/16] %v1776, 128
    %2161 = vxpose.xlu0.b32.cont [6/16] %v1777, 128
    %2162 = vxpose.xlu0.b32.cont [7/16] %v1778, 128
    %2163 = vxpose.xlu0.b32.cont [8/16] %v1779, 128
    %2164 = vxpose.xlu0.b32.cont [9/16] %v1780, 128
    %2165 = vxpose.xlu0.b32.cont [10/16] %v1781, 128
    %2166 = vxpose.xlu0.b32.cont [11/16] %v1782, 128
    %2167 = vxpose.xlu0.b32.cont [12/16] %v1783, 128
    %2168 = vxpose.xlu0.b32.cont [13/16] %v1784, 128
    %2169 = vxpose.xlu0.b32.cont [14/16] %v1785, 128
    %2170 = vxpose.xlu0.b32.cont [15/16] %v1786, 128
    %2171 = vxpose.xlu0.b32.end [16/16] %v1787, 128
    %v2172 = vpop.trf.xlu0
    %v2173 = vpop.trf.xlu0
    %v2174 = vpop.trf.xlu0
    %v2175 = vpop.trf.xlu0
    %v2176 = vpop.trf.xlu0
    %v2177 = vpop.trf.xlu0
    %v2178 = vpop.trf.xlu0
    %v2179 = vpop.trf.xlu0
    %v2180 = vpop.trf.xlu0
    %v2181 = vpop.trf.xlu0
    %v2182 = vpop.trf.xlu0
    %v2183 = vpop.trf.xlu0
    %v2184 = vpop.trf.xlu0
    %v2185 = vpop.trf.xlu0
    %v2186 = vpop.trf.xlu0
    %v2187 = vpop.trf.xlu0
    %2188 = vxpose.xlu0.b32.start [1/16] %v1788, 128
    %2189 = vxpose.xlu0.b32.cont [2/16] %v1789, 128
    %2190 = vxpose.xlu0.b32.cont [3/16] %v1790, 128
    %2191 = vxpose.xlu0.b32.cont [4/16] %v1791, 128
    %2192 = vxpose.xlu0.b32.cont [5/16] %v1792, 128
    %2193 = vxpose.xlu0.b32.cont [6/16] %v1793, 128
    %2194 = vxpose.xlu0.b32.cont [7/16] %v1794, 128
    %2195 = vxpose.xlu0.b32.cont [8/16] %v1795, 128
    %2196 = vxpose.xlu0.b32.cont [9/16] %v1796, 128
    %2197 = vxpose.xlu0.b32.cont [10/16] %v1797, 128
    %2198 = vxpose.xlu0.b32.cont [11/16] %v1798, 128
    %2199 = vxpose.xlu0.b32.cont [12/16] %v1799, 128
    %2200 = vxpose.xlu0.b32.cont [13/16] %v1800, 128
    %2201 = vxpose.xlu0.b32.cont [14/16] %v1801, 128
    %2202 = vxpose.xlu0.b32.cont [15/16] %v1802, 128
    %2203 = vxpose.xlu0.b32.end [16/16] %v1803, 128
    %v2204 = vpop.trf.xlu0
    %v2205 = vpop.trf.xlu0
    %v2206 = vpop.trf.xlu0
    %v2207 = vpop.trf.xlu0
    %v2208 = vpop.trf.xlu0
    %v2209 = vpop.trf.xlu0
    %v2210 = vpop.trf.xlu0
    %v2211 = vpop.trf.xlu0
    %v2212 = vpop.trf.xlu0
    %v2213 = vpop.trf.xlu0
    %v2214 = vpop.trf.xlu0
    %v2215 = vpop.trf.xlu0
    %v2216 = vpop.trf.xlu0
    %v2217 = vpop.trf.xlu0
    %v2218 = vpop.trf.xlu0
    %v2219 = vpop.trf.xlu0
    %2220 = vxpose.xlu0.b32.start [1/16] %v1804, 128
    %2221 = vxpose.xlu0.b32.cont [2/16] %v1805, 128
    %2222 = vxpose.xlu0.b32.cont [3/16] %v1806, 128
    %2223 = vxpose.xlu0.b32.cont [4/16] %v1807, 128
    %2224 = vxpose.xlu0.b32.cont [5/16] %v1808, 128
    %2225 = vxpose.xlu0.b32.cont [6/16] %v1809, 128
    %2226 = vxpose.xlu0.b32.cont [7/16] %v1810, 128
    %2227 = vxpose.xlu0.b32.cont [8/16] %v1811, 128
    %2228 = vxpose.xlu0.b32.cont [9/16] %v1812, 128
    %2229 = vxpose.xlu0.b32.cont [10/16] %v1813, 128
    %2230 = vxpose.xlu0.b32.cont [11/16] %v1814, 128
    %2231 = vxpose.xlu0.b32.cont [12/16] %v1815, 128
    %2232 = vxpose.xlu0.b32.cont [13/16] %v1816, 128
    %2233 = vxpose.xlu0.b32.cont [14/16] %v1817, 128
    %2234 = vxpose.xlu0.b32.cont [15/16] %v1818, 128
    %2235 = vxpose.xlu0.b32.end [16/16] %v1819, 128
    %v2236 = vpop.trf.xlu0
    %v2237 = vpop.trf.xlu0
    %v2238 = vpop.trf.xlu0
    %v2239 = vpop.trf.xlu0
    %v2240 = vpop.trf.xlu0
    %v2241 = vpop.trf.xlu0
    %v2242 = vpop.trf.xlu0
    %v2243 = vpop.trf.xlu0
    %v2244 = vpop.trf.xlu0
    %v2245 = vpop.trf.xlu0
    %v2246 = vpop.trf.xlu0
    %v2247 = vpop.trf.xlu0
    %v2248 = vpop.trf.xlu0
    %v2249 = vpop.trf.xlu0
    %v2250 = vpop.trf.xlu0
    %v2251 = vpop.trf.xlu0
    %2252 = vxpose.xlu0.b32.start [1/16] %v1820, 128
    %2253 = vxpose.xlu0.b32.cont [2/16] %v1821, 128
    %2254 = vxpose.xlu0.b32.cont [3/16] %v1822, 128
    %2255 = vxpose.xlu0.b32.cont [4/16] %v1823, 128
    %2256 = vxpose.xlu0.b32.cont [5/16] %v1824, 128
    %2257 = vxpose.xlu0.b32.cont [6/16] %v1825, 128
    %2258 = vxpose.xlu0.b32.cont [7/16] %v1826, 128
    %2259 = vxpose.xlu0.b32.cont [8/16] %v1827, 128
    %2260 = vxpose.xlu0.b32.cont [9/16] %v1828, 128
    %2261 = vxpose.xlu0.b32.cont [10/16] %v1829, 128
    %2262 = vxpose.xlu0.b32.cont [11/16] %v1830, 128
    %2263 = vxpose.xlu0.b32.cont [12/16] %v1831, 128
    %2264 = vxpose.xlu0.b32.cont [13/16] %v1832, 128
    %2265 = vxpose.xlu0.b32.cont [14/16] %v1833, 128
    %2266 = vxpose.xlu0.b32.cont [15/16] %v1834, 128
    %2267 = vxpose.xlu0.b32.end [16/16] %v1835, 128
    %v2268 = vpop.trf.xlu0
    %v2269 = vpop.trf.xlu0
    %v2270 = vpop.trf.xlu0
    %v2271 = vpop.trf.xlu0
    %v2272 = vpop.trf.xlu0
    %v2273 = vpop.trf.xlu0
    %v2274 = vpop.trf.xlu0
    %v2275 = vpop.trf.xlu0
    %v2276 = vpop.trf.xlu0
    %v2277 = vpop.trf.xlu0
    %v2278 = vpop.trf.xlu0
    %v2279 = vpop.trf.xlu0
    %v2280 = vpop.trf.xlu0
    %v2281 = vpop.trf.xlu0
    %v2282 = vpop.trf.xlu0
    %v2283 = vpop.trf.xlu0
    %2284 = vxpose.xlu0.b32.start [1/16] %v1836, 128
    %2285 = vxpose.xlu0.b32.cont [2/16] %v1837, 128
    %2286 = vxpose.xlu0.b32.cont [3/16] %v1838, 128
    %2287 = vxpose.xlu0.b32.cont [4/16] %v1839, 128
    %2288 = vxpose.xlu0.b32.cont [5/16] %v1840, 128
    %2289 = vxpose.xlu0.b32.cont [6/16] %v1841, 128
    %2290 = vxpose.xlu0.b32.cont [7/16] %v1842, 128
    %2291 = vxpose.xlu0.b32.cont [8/16] %v1843, 128
    %2292 = vxpose.xlu0.b32.cont [9/16] %v1844, 128
    %2293 = vxpose.xlu0.b32.cont [10/16] %v1845, 128
    %2294 = vxpose.xlu0.b32.cont [11/16] %v1846, 128
    %2295 = vxpose.xlu0.b32.cont [12/16] %v1847, 128
    %2296 = vxpose.xlu0.b32.cont [13/16] %v1848, 128
    %2297 = vxpose.xlu0.b32.cont [14/16] %v1849, 128
    %2298 = vxpose.xlu0.b32.cont [15/16] %v1850, 128
    %2299 = vxpose.xlu0.b32.end [16/16] %v1851, 128
    %v2300 = vpop.trf.xlu0
    %v2301 = vpop.trf.xlu0
    %v2302 = vpop.trf.xlu0
    %v2303 = vpop.trf.xlu0
    %v2304 = vpop.trf.xlu0
    %v2305 = vpop.trf.xlu0
    %v2306 = vpop.trf.xlu0
    %v2307 = vpop.trf.xlu0
    %v2308 = vpop.trf.xlu0
    %v2309 = vpop.trf.xlu0
    %v2310 = vpop.trf.xlu0
    %v2311 = vpop.trf.xlu0
    %v2312 = vpop.trf.xlu0
    %v2313 = vpop.trf.xlu0
    %v2314 = vpop.trf.xlu0
    %v2315 = vpop.trf.xlu0
    %2316 = vxpose.xlu0.b32.start [1/16] %v1852, 128
    %2317 = vxpose.xlu0.b32.cont [2/16] %v1853, 128
    %2318 = vxpose.xlu0.b32.cont [3/16] %v1854, 128
    %2319 = vxpose.xlu0.b32.cont [4/16] %v1855, 128
    %2320 = vxpose.xlu0.b32.cont [5/16] %v1856, 128
    %2321 = vxpose.xlu0.b32.cont [6/16] %v1857, 128
    %2322 = vxpose.xlu0.b32.cont [7/16] %v1858, 128
    %2323 = vxpose.xlu0.b32.cont [8/16] %v1859, 128
    %2324 = vxpose.xlu0.b32.cont [9/16] %v1860, 128
    %2325 = vxpose.xlu0.b32.cont [10/16] %v1861, 128
    %2326 = vxpose.xlu0.b32.cont [11/16] %v1862, 128
    %2327 = vxpose.xlu0.b32.cont [12/16] %v1863, 128
    %2328 = vxpose.xlu0.b32.cont [13/16] %v1864, 128
    %2329 = vxpose.xlu0.b32.cont [14/16] %v1865, 128
    %2330 = vxpose.xlu0.b32.cont [15/16] %v1866, 128
    %2331 = vxpose.xlu0.b32.end [16/16] %v1867, 128
    %v2332 = vpop.trf.xlu0
    %v2333 = vpop.trf.xlu0
    %v2334 = vpop.trf.xlu0
    %v2335 = vpop.trf.xlu0
    %v2336 = vpop.trf.xlu0
    %v2337 = vpop.trf.xlu0
    %v2338 = vpop.trf.xlu0
    %v2339 = vpop.trf.xlu0
    %v2340 = vpop.trf.xlu0
    %v2341 = vpop.trf.xlu0
    %v2342 = vpop.trf.xlu0
    %v2343 = vpop.trf.xlu0
    %v2344 = vpop.trf.xlu0
    %v2345 = vpop.trf.xlu0
    %v2346 = vpop.trf.xlu0
    %v2347 = vpop.trf.xlu0
    %2348 = vxpose.xlu0.b32.start [1/16] %v1868, 128
    %2349 = vxpose.xlu0.b32.cont [2/16] %v1869, 128
    %2350 = vxpose.xlu0.b32.cont [3/16] %v1870, 128
    %2351 = vxpose.xlu0.b32.cont [4/16] %v1871, 128
    %2352 = vxpose.xlu0.b32.cont [5/16] %v1872, 128
    %2353 = vxpose.xlu0.b32.cont [6/16] %v1873, 128
    %2354 = vxpose.xlu0.b32.cont [7/16] %v1874, 128
    %2355 = vxpose.xlu0.b32.cont [8/16] %v1875, 128
    %2356 = vxpose.xlu0.b32.cont [9/16] %v1876, 128
    %2357 = vxpose.xlu0.b32.cont [10/16] %v1877, 128
    %2358 = vxpose.xlu0.b32.cont [11/16] %v1878, 128
    %2359 = vxpose.xlu0.b32.cont [12/16] %v1879, 128
    %2360 = vxpose.xlu0.b32.cont [13/16] %v1880, 128
    %2361 = vxpose.xlu0.b32.cont [14/16] %v1881, 128
    %2362 = vxpose.xlu0.b32.cont [15/16] %v1882, 128
    %2363 = vxpose.xlu0.b32.end [16/16] %v1883, 128
    %v2364 = vpop.trf.xlu0
    %v2365 = vpop.trf.xlu0
    %v2366 = vpop.trf.xlu0
    %v2367 = vpop.trf.xlu0
    %v2368 = vpop.trf.xlu0
    %v2369 = vpop.trf.xlu0
    %v2370 = vpop.trf.xlu0
    %v2371 = vpop.trf.xlu0
    %v2372 = vpop.trf.xlu0
    %v2373 = vpop.trf.xlu0
    %v2374 = vpop.trf.xlu0
    %v2375 = vpop.trf.xlu0
    %v2376 = vpop.trf.xlu0
    %v2377 = vpop.trf.xlu0
    %v2378 = vpop.trf.xlu0
    %v2379 = vpop.trf.xlu0
    %2380 = vxpose.xlu0.b32.start [1/16] %v1884, 128
    %2381 = vxpose.xlu0.b32.cont [2/16] %v1885, 128
    %2382 = vxpose.xlu0.b32.cont [3/16] %v1886, 128
    %2383 = vxpose.xlu0.b32.cont [4/16] %v1887, 128
    %2384 = vxpose.xlu0.b32.cont [5/16] %v1888, 128
    %2385 = vxpose.xlu0.b32.cont [6/16] %v1889, 128
    %2386 = vxpose.xlu0.b32.cont [7/16] %v1890, 128
    %2387 = vxpose.xlu0.b32.cont [8/16] %v1891, 128
    %2388 = vxpose.xlu0.b32.cont [9/16] %v1892, 128
    %2389 = vxpose.xlu0.b32.cont [10/16] %v1893, 128
    %2390 = vxpose.xlu0.b32.cont [11/16] %v1894, 128
    %2391 = vxpose.xlu0.b32.cont [12/16] %v1895, 128
    %2392 = vxpose.xlu0.b32.cont [13/16] %v1896, 128
    %2393 = vxpose.xlu0.b32.cont [14/16] %v1897, 128
    %2394 = vxpose.xlu0.b32.cont [15/16] %v1898, 128
    %2395 = vxpose.xlu0.b32.end [16/16] %v1899, 128
    %v2396 = vpop.trf.xlu0
    %v2397 = vpop.trf.xlu0
    %v2398 = vpop.trf.xlu0
    %v2399 = vpop.trf.xlu0
    %v2400 = vpop.trf.xlu0
    %v2401 = vpop.trf.xlu0
    %v2402 = vpop.trf.xlu0
    %v2403 = vpop.trf.xlu0
    %v2404 = vpop.trf.xlu0
    %v2405 = vpop.trf.xlu0
    %v2406 = vpop.trf.xlu0
    %v2407 = vpop.trf.xlu0
    %v2408 = vpop.trf.xlu0
    %v2409 = vpop.trf.xlu0
    %v2410 = vpop.trf.xlu0
    %v2411 = vpop.trf.xlu0
    %2412 = vmatprep.subr.mxu0 0.0
    %2413 = vmatpush1.msra.mxu0 %v30
    %2414 = vmatprep.subr.mxu0 0.0
    %2415 = vmatpush1.msra.mxu0 %v31
    %2416 = vmatprep.subr.mxu0 0.0
    %2417 = vmatpush1.msra.mxu0 %v32
    %2418 = vmatprep.subr.mxu0 0.0
    %2419 = vmatpush1.msra.mxu0 %v33
    %2420 = vmatprep.subr.mxu0 0.0
    %2421 = vmatpush1.msra.mxu0 %v34
    %2422 = vmatprep.subr.mxu0 0.0
    %2423 = vmatpush1.msra.mxu0 %v35
    %2424 = vmatprep.subr.mxu0 0.0
    %2425 = vmatpush1.msra.mxu0 %v36
    %2426 = vmatprep.subr.mxu0 0.0
    %2427 = vmatpush1.msra.mxu0 %v37
    %2428 = vmatprep.subr.mxu0 0.0
    %2429 = vmatpush1.msra.mxu0 %v38
    %2430 = vmatprep.subr.mxu0 0.0
    %2431 = vmatpush1.msra.mxu0 %v39
    %2432 = vmatprep.subr.mxu0 0.0
    %2433 = vmatpush1.msra.mxu0 %v40
    %2434 = vmatprep.subr.mxu0 0.0
    %2435 = vmatpush1.msra.mxu0 %v41
    %2436 = vmatprep.subr.mxu0 0.0
    %2437 = vmatpush1.msra.mxu0 %v42
    %2438 = vmatprep.subr.mxu0 0.0
    %2439 = vmatpush1.msra.mxu0 %v43
    %2440 = vmatprep.subr.mxu0 0.0
    %2441 = vmatpush1.msra.mxu0 %v44
    %2442 = vmatprep.subr.mxu0 0.0
    %2443 = vmatpush1.msra.mxu0 %v45
    %2444 = vmatprep.subr.mxu0 0.0
    %2445 = vmatpush1.msra.mxu0 %v46
    %2446 = vmatprep.subr.mxu0 0.0
    %2447 = vmatpush1.msra.mxu0 %v47
    %2448 = vmatprep.subr.mxu0 0.0
    %2449 = vmatpush1.msra.mxu0 %v48
    %2450 = vmatprep.subr.mxu0 0.0
    %2451 = vmatpush1.msra.mxu0 %v49
    %2452 = vmatprep.subr.mxu0 0.0
    %2453 = vmatpush1.msra.mxu0 %v50
    %2454 = vmatprep.subr.mxu0 0.0
    %2455 = vmatpush1.msra.mxu0 %v51
    %2456 = vmatprep.subr.mxu0 0.0
    %2457 = vmatpush1.msra.mxu0 %v52
    %2458 = vmatprep.subr.mxu0 0.0
    %2459 = vmatpush1.msra.mxu0 %v53
    %2460 = vmatprep.subr.mxu0 0.0
    %2461 = vmatpush1.msra.mxu0 %v54
    %2462 = vmatprep.subr.mxu0 0.0
    %2463 = vmatpush1.msra.mxu0 %v55
    %2464 = vmatprep.subr.mxu0 0.0
    %2465 = vmatpush1.msra.mxu0 %v56
    %2466 = vmatprep.subr.mxu0 0.0
    %2467 = vmatpush1.msra.mxu0 %v57
    %2468 = vmatprep.subr.mxu0 0.0
    %2469 = vmatpush1.msra.mxu0 %v58
    %2470 = vmatprep.subr.mxu0 0.0
    %2471 = vmatpush1.msra.mxu0 %v59
    %2472 = vmatprep.subr.mxu0 0.0
    %2473 = vmatpush1.msra.mxu0 %v60
    %2474 = vmatprep.subr.mxu0 0.0
    %2475 = vmatpush1.msra.mxu0 %v61
    %2476 = vmatprep.mubr.f32.mxu0 %v1948
    %2477 = vmatmul.mubr.f32.gmra.mrb[0].mxu0 %v1916
    %v2478 = vpop.f32.mrb[0].mxu0
    %v2479 = vadd.f32 %v547, %v2478
    %v2480 = vpop.f32.mrb[0].mxu0
    %2481 = vdwg.mxu0
    %2482 = vmatprep.subr.mxu0 0.0
    %2483 = vmatpush1.msra.mxu0 %v62
    %2484 = vmatprep.subr.mxu0 0.0
    %2485 = vmatpush1.msra.mxu0 %v63
    %2486 = vmatprep.subr.mxu0 0.0
    %2487 = vmatpush1.msra.mxu0 %v64
    %2488 = vmatprep.subr.mxu0 0.0
    %2489 = vmatpush1.msra.mxu0 %v65
    %2490 = vmatprep.subr.mxu0 0.0
    %2491 = vmatpush1.msra.mxu0 %v66
    %2492 = vmatprep.subr.mxu0 0.0
    %2493 = vmatpush1.msra.mxu0 %v67
    %2494 = vmatprep.subr.mxu0 0.0
    %2495 = vmatpush1.msra.mxu0 %v68
    %2496 = vmatprep.subr.mxu0 0.0
    %2497 = vmatpush1.msra.mxu0 %v69
    %2498 = vmatprep.subr.mxu0 0.0
    %2499 = vmatpush1.msra.mxu0 %v70
    %2500 = vmatprep.subr.mxu0 0.0
    %2501 = vmatpush1.msra.mxu0 %v71
    %2502 = vmatprep.subr.mxu0 0.0
    %2503 = vmatpush1.msra.mxu0 %v72
    %2504 = vmatprep.subr.mxu0 0.0
    %2505 = vmatpush1.msra.mxu0 %v73
    %2506 = vmatprep.subr.mxu0 0.0
    %2507 = vmatpush1.msra.mxu0 %v74
    %2508 = vmatprep.subr.mxu0 0.0
    %2509 = vmatpush1.msra.mxu0 %v75
    %2510 = vmatprep.subr.mxu0 0.0
    %2511 = vmatpush1.msra.mxu0 %v76
    %2512 = vmatprep.subr.mxu0 0.0
    %2513 = vmatpush1.msra.mxu0 %v77
    %2514 = vmatprep.subr.mxu0 0.0
    %2515 = vmatpush1.msra.mxu0 %v78
    %2516 = vmatprep.subr.mxu0 0.0
    %2517 = vmatpush1.msra.mxu0 %v79
    %2518 = vmatprep.subr.mxu0 0.0
    %2519 = vmatpush1.msra.mxu0 %v80
    %2520 = vmatprep.subr.mxu0 0.0
    %2521 = vmatpush1.msra.mxu0 %v81
    %2522 = vmatprep.subr.mxu0 0.0
    %2523 = vmatpush1.msra.mxu0 %v82
    %2524 = vmatprep.subr.mxu0 0.0
    %2525 = vmatpush1.msra.mxu0 %v83
    %2526 = vmatprep.subr.mxu0 0.0
    %2527 = vmatpush1.msra.mxu0 %v84
    %2528 = vmatprep.subr.mxu0 0.0
    %2529 = vmatpush1.msra.mxu0 %v85
    %2530 = vmatprep.subr.mxu0 0.0
    %2531 = vmatpush1.msra.mxu0 %v86
    %2532 = vmatprep.subr.mxu0 0.0
    %2533 = vmatpush1.msra.mxu0 %v87
    %2534 = vmatprep.subr.mxu0 0.0
    %2535 = vmatpush1.msra.mxu0 %v88
    %2536 = vmatprep.subr.mxu0 0.0
    %2537 = vmatpush1.msra.mxu0 %v89
    %2538 = vmatprep.subr.mxu0 0.0
    %2539 = vmatpush1.msra.mxu0 %v90
    %2540 = vmatprep.subr.mxu0 0.0
    %2541 = vmatpush1.msra.mxu0 %v91
    %2542 = vmatprep.subr.mxu0 0.0
    %2543 = vmatpush1.msra.mxu0 %v92
    %2544 = vmatprep.subr.mxu0 0.0
    %2545 = vmatpush1.msra.mxu0 %v93
    %2546 = vmatprep.mubr.f32.mxu0 %v2012
    %2547 = vmatmul.mubr.f32.gmra.mrb[0].mxu0 %v1980
    %v2548 = vpop.f32.mrb[0].mxu0
    %v2549 = vadd.f32 %v2479, %v2548
    %v2550 = vpop.f32.mrb[0].mxu0
    %2551 = vdwg.mxu0
    %2552 = vmatprep.subr.mxu0 0.0
    %2553 = vmatpush1.msra.mxu0 %v94
    %2554 = vmatprep.subr.mxu0 0.0
    %2555 = vmatpush1.msra.mxu0 %v95
    %2556 = vmatprep.subr.mxu0 0.0
    %2557 = vmatpush1.msra.mxu0 %v96
    %2558 = vmatprep.subr.mxu0 0.0
    %2559 = vmatpush1.msra.mxu0 %v97
    %2560 = vmatprep.subr.mxu0 0.0
    %2561 = vmatpush1.msra.mxu0 %v98
    %2562 = vmatprep.subr.mxu0 0.0
    %2563 = vmatpush1.msra.mxu0 %v99
    %2564 = vmatprep.subr.mxu0 0.0
    %2565 = vmatpush1.msra.mxu0 %v100
    %2566 = vmatprep.subr.mxu0 0.0
    %2567 = vmatpush1.msra.mxu0 %v101
    %2568 = vmatprep.subr.mxu0 0.0
    %2569 = vmatpush1.msra.mxu0 %v102
    %2570 = vmatprep.subr.mxu0 0.0
    %2571 = vmatpush1.msra.mxu0 %v103
    %2572 = vmatprep.subr.mxu0 0.0
    %2573 = vmatpush1.msra.mxu0 %v104
    %2574 = vmatprep.subr.mxu0 0.0
    %2575 = vmatpush1.msra.mxu0 %v105
    %2576 = vmatprep.subr.mxu0 0.0
    %2577 = vmatpush1.msra.mxu0 %v106
    %2578 = vmatprep.subr.mxu0 0.0
    %2579 = vmatpush1.msra.mxu0 %v107
    %2580 = vmatprep.subr.mxu0 0.0
    %2581 = vmatpush1.msra.mxu0 %v108
    %2582 = vmatprep.subr.mxu0 0.0
    %2583 = vmatpush1.msra.mxu0 %v109
    %2584 = vmatprep.subr.mxu0 0.0
    %2585 = vmatpush1.msra.mxu0 %v110
    %2586 = vmatprep.subr.mxu0 0.0
    %2587 = vmatpush1.msra.mxu0 %v111
    %2588 = vmatprep.subr.mxu0 0.0
    %2589 = vmatpush1.msra.mxu0 %v112
    %2590 = vmatprep.subr.mxu0 0.0
    %2591 = vmatpush1.msra.mxu0 %v113
    %2592 = vmatprep.subr.mxu0 0.0
    %2593 = vmatpush1.msra.mxu0 %v114
    %2594 = vmatprep.subr.mxu0 0.0
    %2595 = vmatpush1.msra.mxu0 %v115
    %2596 = vmatprep.subr.mxu0 0.0
    %2597 = vmatpush1.msra.mxu0 %v116
    %2598 = vmatprep.subr.mxu0 0.0
    %2599 = vmatpush1.msra.mxu0 %v117
    %2600 = vmatprep.subr.mxu0 0.0
    %2601 = vmatpush1.msra.mxu0 %v118
    %2602 = vmatprep.subr.mxu0 0.0
    %2603 = vmatpush1.msra.mxu0 %v119
    %2604 = vmatprep.subr.mxu0 0.0
    %2605 = vmatpush1.msra.mxu0 %v120
    %2606 = vmatprep.subr.mxu0 0.0
    %2607 = vmatpush1.msra.mxu0 %v121
    %2608 = vmatprep.subr.mxu0 0.0
    %2609 = vmatpush1.msra.mxu0 %v122
    %2610 = vmatprep.subr.mxu0 0.0
    %2611 = vmatpush1.msra.mxu0 %v123
    %2612 = vmatprep.subr.mxu0 0.0
    %2613 = vmatpush1.msra.mxu0 %v124
    %2614 = vmatprep.subr.mxu0 0.0
    %2615 = vmatpush1.msra.mxu0 %v125
    %2616 = vmatprep.mubr.f32.mxu0 %v2076
    %2617 = vmatmul.mubr.f32.gmra.mrb[0].mxu0 %v2044
    %v2618 = vpop.f32.mrb[0].mxu0
    %v2619 = vadd.f32 %v2549, %v2618
    %v2620 = vpop.f32.mrb[0].mxu0
    %2621 = vdwg.mxu0
    %2622 = vmatprep.subr.mxu0 0.0
    %2623 = vmatpush1.msra.mxu0 %v126
    %2624 = vmatprep.subr.mxu0 0.0
    %2625 = vmatpush1.msra.mxu0 %v127
    %2626 = vmatprep.subr.mxu0 0.0
    %2627 = vmatpush1.msra.mxu0 %v128
    %2628 = vmatprep.subr.mxu0 0.0
    %2629 = vmatpush1.msra.mxu0 %v129
    %2630 = vmatprep.subr.mxu0 0.0
    %2631 = vmatpush1.msra.mxu0 %v130
    %2632 = vmatprep.subr.mxu0 0.0
    %2633 = vmatpush1.msra.mxu0 %v131
    %2634 = vmatprep.subr.mxu0 0.0
    %2635 = vmatpush1.msra.mxu0 %v132
    %2636 = vmatprep.subr.mxu0 0.0
    %2637 = vmatpush1.msra.mxu0 %v133
    %2638 = vmatprep.subr.mxu0 0.0
    %2639 = vmatpush1.msra.mxu0 %v134
    %2640 = vmatprep.subr.mxu0 0.0
    %2641 = vmatpush1.msra.mxu0 %v135
    %2642 = vmatprep.subr.mxu0 0.0
    %2643 = vmatpush1.msra.mxu0 %v136
    %2644 = vmatprep.subr.mxu0 0.0
    %2645 = vmatpush1.msra.mxu0 %v137
    %2646 = vmatprep.subr.mxu0 0.0
    %2647 = vmatpush1.msra.mxu0 %v138
    %2648 = vmatprep.subr.mxu0 0.0
    %2649 = vmatpush1.msra.mxu0 %v139
    %2650 = vmatprep.subr.mxu0 0.0
    %2651 = vmatpush1.msra.mxu0 %v140
    %2652 = vmatprep.subr.mxu0 0.0
    %2653 = vmatpush1.msra.mxu0 %v141
    %2654 = vmatprep.subr.mxu0 0.0
    %2655 = vmatpush1.msra.mxu0 %v142
    %2656 = vmatprep.subr.mxu0 0.0
    %2657 = vmatpush1.msra.mxu0 %v143
    %2658 = vmatprep.subr.mxu0 0.0
    %2659 = vmatpush1.msra.mxu0 %v144
    %2660 = vmatprep.subr.mxu0 0.0
    %2661 = vmatpush1.msra.mxu0 %v145
    %2662 = vmatprep.subr.mxu0 0.0
    %2663 = vmatpush1.msra.mxu0 %v146
    %2664 = vmatprep.subr.mxu0 0.0
    %2665 = vmatpush1.msra.mxu0 %v147
    %2666 = vmatprep.subr.mxu0 0.0
    %2667 = vmatpush1.msra.mxu0 %v148
    %2668 = vmatprep.subr.mxu0 0.0
    %2669 = vmatpush1.msra.mxu0 %v149
    %2670 = vmatprep.subr.mxu0 0.0
    %2671 = vmatpush1.msra.mxu0 %v150
    %2672 = vmatprep.subr.mxu0 0.0
    %2673 = vmatpush1.msra.mxu0 %v151
    %2674 = vmatprep.subr.mxu0 0.0
    %2675 = vmatpush1.msra.mxu0 %v152
    %2676 = vmatprep.subr.mxu0 0.0
    %2677 = vmatpush1.msra.mxu0 %v153
    %2678 = vmatprep.subr.mxu0 0.0
    %2679 = vmatpush1.msra.mxu0 %v154
    %2680 = vmatprep.subr.mxu0 0.0
    %2681 = vmatpush1.msra.mxu0 %v155
    %2682 = vmatprep.subr.mxu0 0.0
    %2683 = vmatpush1.msra.mxu0 %v156
    %2684 = vmatprep.subr.mxu0 0.0
    %2685 = vmatpush1.msra.mxu0 %v157
    %2686 = vmatprep.mubr.f32.mxu0 %v2140
    %2687 = vmatmul.mubr.f32.gmra.mrb[0].mxu0 %v2108
    %v2688 = vpop.f32.mrb[0].mxu0
    %v2689 = vadd.f32 %v2619, %v2688
    %v2690 = vpop.f32.mrb[0].mxu0
    %2691 = vdwg.mxu0
    %2692 = vmatprep.subr.mxu0 0.0
    %2693 = vmatpush1.msra.mxu0 %v158
    %2694 = vmatprep.subr.mxu0 0.0
    %2695 = vmatpush1.msra.mxu0 %v159
    %2696 = vmatprep.subr.mxu0 0.0
    %2697 = vmatpush1.msra.mxu0 %v160
    %2698 = vmatprep.subr.mxu0 0.0
    %2699 = vmatpush1.msra.mxu0 %v161
    %2700 = vmatprep.subr.mxu0 0.0
    %2701 = vmatpush1.msra.mxu0 %v162
    %2702 = vmatprep.subr.mxu0 0.0
    %2703 = vmatpush1.msra.mxu0 %v163
    %2704 = vmatprep.subr.mxu0 0.0
    %2705 = vmatpush1.msra.mxu0 %v164
    %2706 = vmatprep.subr.mxu0 0.0
    %2707 = vmatpush1.msra.mxu0 %v165
    %2708 = vmatprep.subr.mxu0 0.0
    %2709 = vmatpush1.msra.mxu0 %v166
    %2710 = vmatprep.subr.mxu0 0.0
    %2711 = vmatpush1.msra.mxu0 %v167
    %2712 = vmatprep.subr.mxu0 0.0
    %2713 = vmatpush1.msra.mxu0 %v168
    %2714 = vmatprep.subr.mxu0 0.0
    %2715 = vmatpush1.msra.mxu0 %v169
    %2716 = vmatprep.subr.mxu0 0.0
    %2717 = vmatpush1.msra.mxu0 %v170
    %2718 = vmatprep.subr.mxu0 0.0
    %2719 = vmatpush1.msra.mxu0 %v171
    %2720 = vmatprep.subr.mxu0 0.0
    %2721 = vmatpush1.msra.mxu0 %v172
    %2722 = vmatprep.subr.mxu0 0.0
    %2723 = vmatpush1.msra.mxu0 %v173
    %2724 = vmatprep.subr.mxu0 0.0
    %2725 = vmatpush1.msra.mxu0 %v174
    %2726 = vmatprep.subr.mxu0 0.0
    %2727 = vmatpush1.msra.mxu0 %v175
    %2728 = vmatprep.subr.mxu0 0.0
    %2729 = vmatpush1.msra.mxu0 %v176
    %2730 = vmatprep.subr.mxu0 0.0
    %2731 = vmatpush1.msra.mxu0 %v177
    %2732 = vmatprep.subr.mxu0 0.0
    %2733 = vmatpush1.msra.mxu0 %v178
    %2734 = vmatprep.subr.mxu0 0.0
    %2735 = vmatpush1.msra.mxu0 %v179
    %2736 = vmatprep.subr.mxu0 0.0
    %2737 = vmatpush1.msra.mxu0 %v180
    %2738 = vmatprep.subr.mxu0 0.0
    %2739 = vmatpush1.msra.mxu0 %v181
    %2740 = vmatprep.subr.mxu0 0.0
    %2741 = vmatpush1.msra.mxu0 %v182
    %2742 = vmatprep.subr.mxu0 0.0
    %2743 = vmatpush1.msra.mxu0 %v183
    %2744 = vmatprep.subr.mxu0 0.0
    %2745 = vmatpush1.msra.mxu0 %v184
    %2746 = vmatprep.subr.mxu0 0.0
    %2747 = vmatpush1.msra.mxu0 %v185
    %2748 = vmatprep.subr.mxu0 0.0
    %2749 = vmatpush1.msra.mxu0 %v186
    %2750 = vmatprep.subr.mxu0 0.0
    %2751 = vmatpush1.msra.mxu0 %v187
    %2752 = vmatprep.subr.mxu0 0.0
    %2753 = vmatpush1.msra.mxu0 %v188
    %2754 = vmatprep.subr.mxu0 0.0
    %2755 = vmatpush1.msra.mxu0 %v189
    %2756 = vmatprep.mubr.f32.mxu0 %v2204
    %2757 = vmatmul.mubr.f32.gmra.mrb[0].mxu0 %v2172
    %v2758 = vpop.f32.mrb[0].mxu0
    %v2759 = vadd.f32 %v2689, %v2758
    %v2760 = vpop.f32.mrb[0].mxu0
    %2761 = vdwg.mxu0
    %2762 = vmatprep.subr.mxu0 0.0
    %2763 = vmatpush1.msra.mxu0 %v190
    %2764 = vmatprep.subr.mxu0 0.0
    %2765 = vmatpush1.msra.mxu0 %v191
    %2766 = vmatprep.subr.mxu0 0.0
    %2767 = vmatpush1.msra.mxu0 %v192
    %2768 = vmatprep.subr.mxu0 0.0
    %2769 = vmatpush1.msra.mxu0 %v193
    %2770 = vmatprep.subr.mxu0 0.0
    %2771 = vmatpush1.msra.mxu0 %v194
    %2772 = vmatprep.subr.mxu0 0.0
    %2773 = vmatpush1.msra.mxu0 %v195
    %2774 = vmatprep.subr.mxu0 0.0
    %2775 = vmatpush1.msra.mxu0 %v196
    %2776 = vmatprep.subr.mxu0 0.0
    %2777 = vmatpush1.msra.mxu0 %v197
    %2778 = vmatprep.subr.mxu0 0.0
    %2779 = vmatpush1.msra.mxu0 %v198
    %2780 = vmatprep.subr.mxu0 0.0
    %2781 = vmatpush1.msra.mxu0 %v199
    %2782 = vmatprep.subr.mxu0 0.0
    %2783 = vmatpush1.msra.mxu0 %v200
    %2784 = vmatprep.subr.mxu0 0.0
    %2785 = vmatpush1.msra.mxu0 %v201
    %2786 = vmatprep.subr.mxu0 0.0
    %2787 = vmatpush1.msra.mxu0 %v202
    %2788 = vmatprep.subr.mxu0 0.0
    %2789 = vmatpush1.msra.mxu0 %v203
    %2790 = vmatprep.subr.mxu0 0.0
    %2791 = vmatpush1.msra.mxu0 %v204
    %2792 = vmatprep.subr.mxu0 0.0
    %2793 = vmatpush1.msra.mxu0 %v205
    %2794 = vmatprep.subr.mxu0 0.0
    %2795 = vmatpush1.msra.mxu0 %v206
    %2796 = vmatprep.subr.mxu0 0.0
    %2797 = vmatpush1.msra.mxu0 %v207
    %2798 = vmatprep.subr.mxu0 0.0
    %2799 = vmatpush1.msra.mxu0 %v208
    %2800 = vmatprep.subr.mxu0 0.0
    %2801 = vmatpush1.msra.mxu0 %v209
    %2802 = vmatprep.subr.mxu0 0.0
    %2803 = vmatpush1.msra.mxu0 %v210
    %2804 = vmatprep.subr.mxu0 0.0
    %2805 = vmatpush1.msra.mxu0 %v211
    %2806 = vmatprep.subr.mxu0 0.0
    %2807 = vmatpush1.msra.mxu0 %v212
    %2808 = vmatprep.subr.mxu0 0.0
    %2809 = vmatpush1.msra.mxu0 %v213
    %2810 = vmatprep.subr.mxu0 0.0
    %2811 = vmatpush1.msra.mxu0 %v214
    %2812 = vmatprep.subr.mxu0 0.0
    %2813 = vmatpush1.msra.mxu0 %v215
    %2814 = vmatprep.subr.mxu0 0.0
    %2815 = vmatpush1.msra.mxu0 %v216
    %2816 = vmatprep.subr.mxu0 0.0
    %2817 = vmatpush1.msra.mxu0 %v217
    %2818 = vmatprep.subr.mxu0 0.0
    %2819 = vmatpush1.msra.mxu0 %v218
    %2820 = vmatprep.subr.mxu0 0.0
    %2821 = vmatpush1.msra.mxu0 %v219
    %2822 = vmatprep.subr.mxu0 0.0
    %2823 = vmatpush1.msra.mxu0 %v220
    %2824 = vmatprep.subr.mxu0 0.0
    %2825 = vmatpush1.msra.mxu0 %v221
    %2826 = vmatprep.mubr.f32.mxu0 %v2268
    %2827 = vmatmul.mubr.f32.gmra.mrb[0].mxu0 %v2236
    %v2828 = vpop.f32.mrb[0].mxu0
    %v2829 = vadd.f32 %v2759, %v2828
    %v2830 = vpop.f32.mrb[0].mxu0
    %2831 = vdwg.mxu0
    %2832 = vmatprep.subr.mxu0 0.0
    %2833 = vmatpush1.msra.mxu0 %v222
    %2834 = vmatprep.subr.mxu0 0.0
    %2835 = vmatpush1.msra.mxu0 %v223
    %2836 = vmatprep.subr.mxu0 0.0
    %2837 = vmatpush1.msra.mxu0 %v224
    %2838 = vmatprep.subr.mxu0 0.0
    %2839 = vmatpush1.msra.mxu0 %v225
    %2840 = vmatprep.subr.mxu0 0.0
    %2841 = vmatpush1.msra.mxu0 %v226
    %2842 = vmatprep.subr.mxu0 0.0
    %2843 = vmatpush1.msra.mxu0 %v227
    %2844 = vmatprep.subr.mxu0 0.0
    %2845 = vmatpush1.msra.mxu0 %v228
    %2846 = vmatprep.subr.mxu0 0.0
    %2847 = vmatpush1.msra.mxu0 %v229
    %2848 = vmatprep.subr.mxu0 0.0
    %2849 = vmatpush1.msra.mxu0 %v230
    %2850 = vmatprep.subr.mxu0 0.0
    %2851 = vmatpush1.msra.mxu0 %v231
    %2852 = vmatprep.subr.mxu0 0.0
    %2853 = vmatpush1.msra.mxu0 %v232
    %2854 = vmatprep.subr.mxu0 0.0
    %2855 = vmatpush1.msra.mxu0 %v233
    %2856 = vmatprep.subr.mxu0 0.0
    %2857 = vmatpush1.msra.mxu0 %v234
    %2858 = vmatprep.subr.mxu0 0.0
    %2859 = vmatpush1.msra.mxu0 %v235
    %2860 = vmatprep.subr.mxu0 0.0
    %2861 = vmatpush1.msra.mxu0 %v236
    %2862 = vmatprep.subr.mxu0 0.0
    %2863 = vmatpush1.msra.mxu0 %v237
    %2864 = vmatprep.subr.mxu0 0.0
    %2865 = vmatpush1.msra.mxu0 %v238
    %2866 = vmatprep.subr.mxu0 0.0
    %2867 = vmatpush1.msra.mxu0 %v239
    %2868 = vmatprep.subr.mxu0 0.0
    %2869 = vmatpush1.msra.mxu0 %v240
    %2870 = vmatprep.subr.mxu0 0.0
    %2871 = vmatpush1.msra.mxu0 %v241
    %2872 = vmatprep.subr.mxu0 0.0
    %2873 = vmatpush1.msra.mxu0 %v242
    %2874 = vmatprep.subr.mxu0 0.0
    %2875 = vmatpush1.msra.mxu0 %v243
    %2876 = vmatprep.subr.mxu0 0.0
    %2877 = vmatpush1.msra.mxu0 %v244
    %2878 = vmatprep.subr.mxu0 0.0
    %2879 = vmatpush1.msra.mxu0 %v245
    %2880 = vmatprep.subr.mxu0 0.0
    %2881 = vmatpush1.msra.mxu0 %v246
    %2882 = vmatprep.subr.mxu0 0.0
    %2883 = vmatpush1.msra.mxu0 %v247
    %2884 = vmatprep.subr.mxu0 0.0
    %2885 = vmatpush1.msra.mxu0 %v248
    %2886 = vmatprep.subr.mxu0 0.0
    %2887 = vmatpush1.msra.mxu0 %v249
    %2888 = vmatprep.subr.mxu0 0.0
    %2889 = vmatpush1.msra.mxu0 %v250
    %2890 = vmatprep.subr.mxu0 0.0
    %2891 = vmatpush1.msra.mxu0 %v251
    %2892 = vmatprep.subr.mxu0 0.0
    %2893 = vmatpush1.msra.mxu0 %v252
    %2894 = vmatprep.subr.mxu0 0.0
    %2895 = vmatpush1.msra.mxu0 %v253
    %2896 = vmatprep.mubr.f32.mxu0 %v2332
    %2897 = vmatmul.mubr.f32.gmra.mrb[0].mxu0 %v2300
    %v2898 = vpop.f32.mrb[0].mxu0
    %v2899 = vadd.f32 %v2829, %v2898
    %v2900 = vpop.f32.mrb[0].mxu0
    %2901 = vdwg.mxu0
    %2902 = vmatprep.subr.mxu0 0.0
    %2903 = vmatpush1.msra.mxu0 %v254
    %2904 = vmatprep.subr.mxu0 0.0
    %2905 = vmatpush1.msra.mxu0 %v255
    %2906 = vmatprep.subr.mxu0 0.0
    %2907 = vmatpush1.msra.mxu0 %v256
    %2908 = vmatprep.subr.mxu0 0.0
    %2909 = vmatpush1.msra.mxu0 %v257
    %2910 = vmatprep.subr.mxu0 0.0
    %2911 = vmatpush1.msra.mxu0 %v258
    %2912 = vmatprep.subr.mxu0 0.0
    %2913 = vmatpush1.msra.mxu0 %v259
    %2914 = vmatprep.subr.mxu0 0.0
    %2915 = vmatpush1.msra.mxu0 %v260
    %2916 = vmatprep.subr.mxu0 0.0
    %2917 = vmatpush1.msra.mxu0 %v261
    %2918 = vmatprep.subr.mxu0 0.0
    %2919 = vmatpush1.msra.mxu0 %v262
    %2920 = vmatprep.subr.mxu0 0.0
    %2921 = vmatpush1.msra.mxu0 %v263
    %2922 = vmatprep.subr.mxu0 0.0
    %2923 = vmatpush1.msra.mxu0 %v264
    %2924 = vmatprep.subr.mxu0 0.0
    %2925 = vmatpush1.msra.mxu0 %v265
    %2926 = vmatprep.subr.mxu0 0.0
    %2927 = vmatpush1.msra.mxu0 %v266
    %2928 = vmatprep.subr.mxu0 0.0
    %2929 = vmatpush1.msra.mxu0 %v267
    %2930 = vmatprep.subr.mxu0 0.0
    %2931 = vmatpush1.msra.mxu0 %v268
    %2932 = vmatprep.subr.mxu0 0.0
    %2933 = vmatpush1.msra.mxu0 %v269
    %2934 = vmatprep.subr.mxu0 0.0
    %2935 = vmatpush1.msra.mxu0 %v270
    %2936 = vmatprep.subr.mxu0 0.0
    %2937 = vmatpush1.msra.mxu0 %v271
    %2938 = vmatprep.subr.mxu0 0.0
    %2939 = vmatpush1.msra.mxu0 %v272
    %2940 = vmatprep.subr.mxu0 0.0
    %2941 = vmatpush1.msra.mxu0 %v273
    %2942 = vmatprep.subr.mxu0 0.0
    %2943 = vmatpush1.msra.mxu0 %v274
    %2944 = vmatprep.subr.mxu0 0.0
    %2945 = vmatpush1.msra.mxu0 %v275
    %2946 = vmatprep.subr.mxu0 0.0
    %2947 = vmatpush1.msra.mxu0 %v276
    %2948 = vmatprep.subr.mxu0 0.0
    %2949 = vmatpush1.msra.mxu0 %v277
    %2950 = vmatprep.subr.mxu0 0.0
    %2951 = vmatpush1.msra.mxu0 %v278
    %2952 = vmatprep.subr.mxu0 0.0
    %2953 = vmatpush1.msra.mxu0 %v279
    %2954 = vmatprep.subr.mxu0 0.0
    %2955 = vmatpush1.msra.mxu0 %v280
    %2956 = vmatprep.subr.mxu0 0.0
    %2957 = vmatpush1.msra.mxu0 %v281
    %2958 = vmatprep.subr.mxu0 0.0
    %2959 = vmatpush1.msra.mxu0 %v282
    %2960 = vmatprep.subr.mxu0 0.0
    %2961 = vmatpush1.msra.mxu0 %v283
    %2962 = vmatprep.subr.mxu0 0.0
    %2963 = vmatpush1.msra.mxu0 %v284
    %2964 = vmatprep.subr.mxu0 0.0
    %2965 = vmatpush1.msra.mxu0 %v285
    %2966 = vmatprep.mubr.f32.mxu0 %v2396
    %2967 = vmatmul.mubr.f32.gmra.mrb[0].mxu0 %v2364
    %v2968 = vpop.f32.mrb[0].mxu0
    %v2969 = vadd.f32 %v2899, %v2968
    %v2970 = vpop.f32.mrb[0].mxu0
    %2971 = vdwg.mxu0
    %v2972 = vrot.slane %v2969, 4
    %v2973 = vadd.f32 %v2969, %v2972
    %v2974 = vrot.slane %v2973, 2
    %v2975 = vadd.f32 %v2973, %v2974
    %v2976 = vrot.slane %v2975, 1
    %v2977 = vadd.f32 %v2975, %v2976
    %v2978 = vmul.f32 %v2977, %v1627
    %v2979 = vmul.f32 %v2969, %v2969
    %2980 = vadd.xlane.f32.xlu0 %v2979
    %v2981 = vpop.xlane.xlu0 %2980
    %v2982 = vmul.f32 %v2978, %v2978
    %2983 = vadd.xlane.f32.xlu0 %v2982
    %v2984 = vpop.xlane.xlu0 %2983
    %v2985 = vmax.f32 %v2981, 1e-24
    %v2986 = vrsqrt.pop %v2985
    %v2987 = vmul.f32 %v2969, %v2986
    %s2988 = scalar_lea.vmem [#allocation2], 8
    %2989 = vst [vmem:[%s2988] sm:$0xff] %v2987
    %v2990 = vmax.f32 %v2984, 1e-24
    %v2991 = vrsqrt.pop %v2990
    %v2992 = vmul.f32 %v2978, %v2991
    %s2993 = scalar_lea.vmem [#allocation4], 1
    %2994 = vst [vmem:[%s2993] sm:$0x1] %v2992
    %v2995 = vld [vmem:[%s4] sm:$0xff]
    %v2996 = vld [vmem:[%s4 + $0x8] sm:$0xff]
    %v2997 = vld [vmem:[%s4 + $0x10] sm:$0xff]
    %v2998 = vld [vmem:[%s4 + $0x18] sm:$0xff]
    %v2999 = vld [vmem:[%s4 + $0x20] sm:$0xff]
    %v3000 = vld [vmem:[%s4 + $0x28] sm:$0xff]
    %v3001 = vld [vmem:[%s4 + $0x30] sm:$0xff]
    %v3002 = vld [vmem:[%s4 + $0x38] sm:$0xff]
    %v3003 = vld [vmem:[%s4 + $0x40] sm:$0xff]
    %v3004 = vld [vmem:[%s4 + $0x48] sm:$0xff]
    %v3005 = vld [vmem:[%s4 + $0x50] sm:$0xff]
    %v3006 = vld [vmem:[%s4 + $0x58] sm:$0xff]
    %v3007 = vld [vmem:[%s4 + $0x60] sm:$0xff]
    %v3008 = vld [vmem:[%s4 + $0x68] sm:$0xff]
    %v3009 = vld [vmem:[%s4 + $0x70] sm:$0xff]
    %v3010 = vld [vmem:[%s4 + $0x78] sm:$0xff]
    %v3011 = vld [vmem:[%s4 + $0x80] sm:$0xff]
    %v3012 = vld [vmem:[%s4 + $0x88] sm:$0xff]
    %v3013 = vld [vmem:[%s4 + $0x90] sm:$0xff]
    %v3014 = vld [vmem:[%s4 + $0x98] sm:$0xff]
    %v3015 = vld [vmem:[%s4 + $0xa0] sm:$0xff]
    %v3016 = vld [vmem:[%s4 + $0xa8] sm:$0xff]
    %v3017 = vld [vmem:[%s4 + $0xb0] sm:$0xff]
    %v3018 = vld [vmem:[%s4 + $0xb8] sm:$0xff]
    %v3019 = vld [vmem:[%s4 + $0xc0] sm:$0xff]
    %v3020 = vld [vmem:[%s4 + $0xc8] sm:$0xff]
    %v3021 = vld [vmem:[%s4 + $0xd0] sm:$0xff]
    %v3022 = vld [vmem:[%s4 + $0xd8] sm:$0xff]
    %v3023 = vld [vmem:[%s4 + $0xe0] sm:$0xff]
    %v3024 = vld [vmem:[%s4 + $0xe8] sm:$0xff]
    %v3025 = vld [vmem:[%s4 + $0xf0] sm:$0xff]
    %v3026 = vld [vmem:[%s4 + $0xf8] sm:$0xff]
    %v3027 = vld [vmem:[%s4 + $0x100] sm:$0xff]
    %v3028 = vld [vmem:[%s4 + $0x108] sm:$0xff]
    %v3029 = vld [vmem:[%s4 + $0x110] sm:$0xff]
    %v3030 = vld [vmem:[%s4 + $0x118] sm:$0xff]
    %v3031 = vld [vmem:[%s4 + $0x120] sm:$0xff]
    %v3032 = vld [vmem:[%s4 + $0x128] sm:$0xff]
    %v3033 = vld [vmem:[%s4 + $0x130] sm:$0xff]
    %v3034 = vld [vmem:[%s4 + $0x138] sm:$0xff]
    %v3035 = vld [vmem:[%s4 + $0x140] sm:$0xff]
    %v3036 = vld [vmem:[%s4 + $0x148] sm:$0xff]
    %v3037 = vld [vmem:[%s4 + $0x150] sm:$0xff]
    %v3038 = vld [vmem:[%s4 + $0x158] sm:$0xff]
    %v3039 = vld [vmem:[%s4 + $0x160] sm:$0xff]
    %v3040 = vld [vmem:[%s4 + $0x168] sm:$0xff]
    %v3041 = vld [vmem:[%s4 + $0x170] sm:$0xff]
    %v3042 = vld [vmem:[%s4 + $0x178] sm:$0xff]
    %v3043 = vld [vmem:[%s4 + $0x180] sm:$0xff]
    %v3044 = vld [vmem:[%s4 + $0x188] sm:$0xff]
    %v3045 = vld [vmem:[%s4 + $0x190] sm:$0xff]
    %v3046 = vld [vmem:[%s4 + $0x198] sm:$0xff]
    %v3047 = vld [vmem:[%s4 + $0x1a0] sm:$0xff]
    %v3048 = vld [vmem:[%s4 + $0x1a8] sm:$0xff]
    %v3049 = vld [vmem:[%s4 + $0x1b0] sm:$0xff]
    %v3050 = vld [vmem:[%s4 + $0x1b8] sm:$0xff]
    %v3051 = vld [vmem:[%s4 + $0x1c0] sm:$0xff]
    %v3052 = vld [vmem:[%s4 + $0x1c8] sm:$0xff]
    %v3053 = vld [vmem:[%s4 + $0x1d0] sm:$0xff]
    %v3054 = vld [vmem:[%s4 + $0x1d8] sm:$0xff]
    %v3055 = vld [vmem:[%s4 + $0x1e0] sm:$0xff]
    %v3056 = vld [vmem:[%s4 + $0x1e8] sm:$0xff]
    %v3057 = vld [vmem:[%s4 + $0x1f0] sm:$0xff]
    %v3058 = vld [vmem:[%s4 + $0x1f8] sm:$0xff]
    %v3059 = vld [vmem:[%s4 + $0x200] sm:$0xff]
    %v3060 = vld [vmem:[%s4 + $0x208] sm:$0xff]
    %v3061 = vld [vmem:[%s4 + $0x210] sm:$0xff]
    %v3062 = vld [vmem:[%s4 + $0x218] sm:$0xff]
    %v3063 = vld [vmem:[%s4 + $0x220] sm:$0xff]
    %v3064 = vld [vmem:[%s4 + $0x228] sm:$0xff]
    %v3065 = vld [vmem:[%s4 + $0x230] sm:$0xff]
    %v3066 = vld [vmem:[%s4 + $0x238] sm:$0xff]
    %v3067 = vld [vmem:[%s4 + $0x240] sm:$0xff]
    %v3068 = vld [vmem:[%s4 + $0x248] sm:$0xff]
    %v3069 = vld [vmem:[%s4 + $0x250] sm:$0xff]
    %v3070 = vld [vmem:[%s4 + $0x258] sm:$0xff]
    %v3071 = vld [vmem:[%s4 + $0x260] sm:$0xff]
    %v3072 = vld [vmem:[%s4 + $0x268] sm:$0xff]
    %v3073 = vld [vmem:[%s4 + $0x270] sm:$0xff]
    %v3074 = vld [vmem:[%s4 + $0x278] sm:$0xff]
    %v3075 = vld [vmem:[%s4 + $0x280] sm:$0xff]
    %v3076 = vld [vmem:[%s4 + $0x288] sm:$0xff]
    %v3077 = vld [vmem:[%s4 + $0x290] sm:$0xff]
    %v3078 = vld [vmem:[%s4 + $0x298] sm:$0xff]
    %v3079 = vld [vmem:[%s4 + $0x2a0] sm:$0xff]
    %v3080 = vld [vmem:[%s4 + $0x2a8] sm:$0xff]
    %v3081 = vld [vmem:[%s4 + $0x2b0] sm:$0xff]
    %v3082 = vld [vmem:[%s4 + $0x2b8] sm:$0xff]
    %v3083 = vld [vmem:[%s4 + $0x2c0] sm:$0xff]
    %v3084 = vld [vmem:[%s4 + $0x2c8] sm:$0xff]
    %v3085 = vld [vmem:[%s4 + $0x2d0] sm:$0xff]
    %v3086 = vld [vmem:[%s4 + $0x2d8] sm:$0xff]
    %v3087 = vld [vmem:[%s4 + $0x2e0] sm:$0xff]
    %v3088 = vld [vmem:[%s4 + $0x2e8] sm:$0xff]
    %v3089 = vld [vmem:[%s4 + $0x2f0] sm:$0xff]
    %v3090 = vld [vmem:[%s4 + $0x2f8] sm:$0xff]
    %v3091 = vld [vmem:[%s4 + $0x300] sm:$0xff]
    %v3092 = vld [vmem:[%s4 + $0x308] sm:$0xff]
    %v3093 = vld [vmem:[%s4 + $0x310] sm:$0xff]
    %v3094 = vld [vmem:[%s4 + $0x318] sm:$0xff]
    %v3095 = vld [vmem:[%s4 + $0x320] sm:$0xff]
    %v3096 = vld [vmem:[%s4 + $0x328] sm:$0xff]
    %v3097 = vld [vmem:[%s4 + $0x330] sm:$0xff]
    %v3098 = vld [vmem:[%s4 + $0x338] sm:$0xff]
    %v3099 = vld [vmem:[%s4 + $0x340] sm:$0xff]
    %v3100 = vld [vmem:[%s4 + $0x348] sm:$0xff]
    %v3101 = vld [vmem:[%s4 + $0x350] sm:$0xff]
    %v3102 = vld [vmem:[%s4 + $0x358] sm:$0xff]
    %v3103 = vld [vmem:[%s4 + $0x360] sm:$0xff]
    %v3104 = vld [vmem:[%s4 + $0x368] sm:$0xff]
    %v3105 = vld [vmem:[%s4 + $0x370] sm:$0xff]
    %v3106 = vld [vmem:[%s4 + $0x378] sm:$0xff]
    %v3107 = vld [vmem:[%s4 + $0x380] sm:$0xff]
    %v3108 = vld [vmem:[%s4 + $0x388] sm:$0xff]
    %v3109 = vld [vmem:[%s4 + $0x390] sm:$0xff]
    %v3110 = vld [vmem:[%s4 + $0x398] sm:$0xff]
    %v3111 = vld [vmem:[%s4 + $0x3a0] sm:$0xff]
    %v3112 = vld [vmem:[%s4 + $0x3a8] sm:$0xff]
    %v3113 = vld [vmem:[%s4 + $0x3b0] sm:$0xff]
    %v3114 = vld [vmem:[%s4 + $0x3b8] sm:$0xff]
    %v3115 = vld [vmem:[%s4 + $0x3c0] sm:$0xff]
    %v3116 = vld [vmem:[%s4 + $0x3c8] sm:$0xff]
    %v3117 = vld [vmem:[%s4 + $0x3d0] sm:$0xff]
    %v3118 = vld [vmem:[%s4 + $0x3d8] sm:$0xff]
    %v3119 = vld [vmem:[%s4 + $0x3e0] sm:$0xff]
    %v3120 = vld [vmem:[%s4 + $0x3e8] sm:$0xff]
    %v3121 = vld [vmem:[%s4 + $0x3f0] sm:$0xff]
    %v3122 = vld [vmem:[%s4 + $0x3f8] sm:$0xff]
    %v3123 = vld [vmem:[%s4 + $0x400] sm:$0xff]
    %v3124 = vld [vmem:[%s4 + $0x408] sm:$0xff]
    %v3125 = vld [vmem:[%s4 + $0x410] sm:$0xff]
    %v3126 = vld [vmem:[%s4 + $0x418] sm:$0xff]
    %v3127 = vld [vmem:[%s4 + $0x420] sm:$0xff]
    %v3128 = vld [vmem:[%s4 + $0x428] sm:$0xff]
    %v3129 = vld [vmem:[%s4 + $0x430] sm:$0xff]
    %v3130 = vld [vmem:[%s4 + $0x438] sm:$0xff]
    %v3131 = vld [vmem:[%s4 + $0x440] sm:$0xff]
    %v3132 = vld [vmem:[%s4 + $0x448] sm:$0xff]
    %v3133 = vld [vmem:[%s4 + $0x450] sm:$0xff]
    %v3134 = vld [vmem:[%s4 + $0x458] sm:$0xff]
    %v3135 = vld [vmem:[%s4 + $0x460] sm:$0xff]
    %v3136 = vld [vmem:[%s4 + $0x468] sm:$0xff]
    %v3137 = vld [vmem:[%s4 + $0x470] sm:$0xff]
    %v3138 = vld [vmem:[%s4 + $0x478] sm:$0xff]
    %v3139 = vld [vmem:[%s4 + $0x480] sm:$0xff]
    %v3140 = vld [vmem:[%s4 + $0x488] sm:$0xff]
    %v3141 = vld [vmem:[%s4 + $0x490] sm:$0xff]
    %v3142 = vld [vmem:[%s4 + $0x498] sm:$0xff]
    %v3143 = vld [vmem:[%s4 + $0x4a0] sm:$0xff]
    %v3144 = vld [vmem:[%s4 + $0x4a8] sm:$0xff]
    %v3145 = vld [vmem:[%s4 + $0x4b0] sm:$0xff]
    %v3146 = vld [vmem:[%s4 + $0x4b8] sm:$0xff]
    %v3147 = vld [vmem:[%s4 + $0x4c0] sm:$0xff]
    %v3148 = vld [vmem:[%s4 + $0x4c8] sm:$0xff]
    %v3149 = vld [vmem:[%s4 + $0x4d0] sm:$0xff]
    %v3150 = vld [vmem:[%s4 + $0x4d8] sm:$0xff]
    %v3151 = vld [vmem:[%s4 + $0x4e0] sm:$0xff]
    %v3152 = vld [vmem:[%s4 + $0x4e8] sm:$0xff]
    %v3153 = vld [vmem:[%s4 + $0x4f0] sm:$0xff]
    %v3154 = vld [vmem:[%s4 + $0x4f8] sm:$0xff]
    %v3155 = vld [vmem:[%s4 + $0x500] sm:$0xff]
    %v3156 = vld [vmem:[%s4 + $0x508] sm:$0xff]
    %v3157 = vld [vmem:[%s4 + $0x510] sm:$0xff]
    %v3158 = vld [vmem:[%s4 + $0x518] sm:$0xff]
    %v3159 = vld [vmem:[%s4 + $0x520] sm:$0xff]
    %v3160 = vld [vmem:[%s4 + $0x528] sm:$0xff]
    %v3161 = vld [vmem:[%s4 + $0x530] sm:$0xff]
    %v3162 = vld [vmem:[%s4 + $0x538] sm:$0xff]
    %v3163 = vld [vmem:[%s4 + $0x540] sm:$0xff]
    %v3164 = vld [vmem:[%s4 + $0x548] sm:$0xff]
    %v3165 = vld [vmem:[%s4 + $0x550] sm:$0xff]
    %v3166 = vld [vmem:[%s4 + $0x558] sm:$0xff]
    %v3167 = vld [vmem:[%s4 + $0x560] sm:$0xff]
    %v3168 = vld [vmem:[%s4 + $0x568] sm:$0xff]
    %v3169 = vld [vmem:[%s4 + $0x570] sm:$0xff]
    %v3170 = vld [vmem:[%s4 + $0x578] sm:$0xff]
    %v3171 = vld [vmem:[%s4 + $0x580] sm:$0xff]
    %v3172 = vld [vmem:[%s4 + $0x588] sm:$0xff]
    %v3173 = vld [vmem:[%s4 + $0x590] sm:$0xff]
    %v3174 = vld [vmem:[%s4 + $0x598] sm:$0xff]
    %v3175 = vld [vmem:[%s4 + $0x5a0] sm:$0xff]
    %v3176 = vld [vmem:[%s4 + $0x5a8] sm:$0xff]
    %v3177 = vld [vmem:[%s4 + $0x5b0] sm:$0xff]
    %v3178 = vld [vmem:[%s4 + $0x5b8] sm:$0xff]
    %v3179 = vld [vmem:[%s4 + $0x5c0] sm:$0xff]
    %v3180 = vld [vmem:[%s4 + $0x5c8] sm:$0xff]
    %v3181 = vld [vmem:[%s4 + $0x5d0] sm:$0xff]
    %v3182 = vld [vmem:[%s4 + $0x5d8] sm:$0xff]
    %v3183 = vld [vmem:[%s4 + $0x5e0] sm:$0xff]
    %v3184 = vld [vmem:[%s4 + $0x5e8] sm:$0xff]
    %v3185 = vld [vmem:[%s4 + $0x5f0] sm:$0xff]
    %v3186 = vld [vmem:[%s4 + $0x5f8] sm:$0xff]
    %v3187 = vld [vmem:[%s4 + $0x600] sm:$0xff]
    %v3188 = vld [vmem:[%s4 + $0x608] sm:$0xff]
    %v3189 = vld [vmem:[%s4 + $0x610] sm:$0xff]
    %v3190 = vld [vmem:[%s4 + $0x618] sm:$0xff]
    %v3191 = vld [vmem:[%s4 + $0x620] sm:$0xff]
    %v3192 = vld [vmem:[%s4 + $0x628] sm:$0xff]
    %v3193 = vld [vmem:[%s4 + $0x630] sm:$0xff]
    %v3194 = vld [vmem:[%s4 + $0x638] sm:$0xff]
    %v3195 = vld [vmem:[%s4 + $0x640] sm:$0xff]
    %v3196 = vld [vmem:[%s4 + $0x648] sm:$0xff]
    %v3197 = vld [vmem:[%s4 + $0x650] sm:$0xff]
    %v3198 = vld [vmem:[%s4 + $0x658] sm:$0xff]
    %v3199 = vld [vmem:[%s4 + $0x660] sm:$0xff]
    %v3200 = vld [vmem:[%s4 + $0x668] sm:$0xff]
    %v3201 = vld [vmem:[%s4 + $0x670] sm:$0xff]
    %v3202 = vld [vmem:[%s4 + $0x678] sm:$0xff]
    %v3203 = vld [vmem:[%s4 + $0x680] sm:$0xff]
    %v3204 = vld [vmem:[%s4 + $0x688] sm:$0xff]
    %v3205 = vld [vmem:[%s4 + $0x690] sm:$0xff]
    %v3206 = vld [vmem:[%s4 + $0x698] sm:$0xff]
    %v3207 = vld [vmem:[%s4 + $0x6a0] sm:$0xff]
    %v3208 = vld [vmem:[%s4 + $0x6a8] sm:$0xff]
    %v3209 = vld [vmem:[%s4 + $0x6b0] sm:$0xff]
    %v3210 = vld [vmem:[%s4 + $0x6b8] sm:$0xff]
    %v3211 = vld [vmem:[%s4 + $0x6c0] sm:$0xff]
    %v3212 = vld [vmem:[%s4 + $0x6c8] sm:$0xff]
    %v3213 = vld [vmem:[%s4 + $0x6d0] sm:$0xff]
    %v3214 = vld [vmem:[%s4 + $0x6d8] sm:$0xff]
    %v3215 = vld [vmem:[%s4 + $0x6e0] sm:$0xff]
    %v3216 = vld [vmem:[%s4 + $0x6e8] sm:$0xff]
    %v3217 = vld [vmem:[%s4 + $0x6f0] sm:$0xff]
    %v3218 = vld [vmem:[%s4 + $0x6f8] sm:$0xff]
    %v3219 = vld [vmem:[%s4 + $0x700] sm:$0xff]
    %v3220 = vld [vmem:[%s4 + $0x708] sm:$0xff]
    %v3221 = vld [vmem:[%s4 + $0x710] sm:$0xff]
    %v3222 = vld [vmem:[%s4 + $0x718] sm:$0xff]
    %v3223 = vld [vmem:[%s4 + $0x720] sm:$0xff]
    %v3224 = vld [vmem:[%s4 + $0x728] sm:$0xff]
    %v3225 = vld [vmem:[%s4 + $0x730] sm:$0xff]
    %v3226 = vld [vmem:[%s4 + $0x738] sm:$0xff]
    %v3227 = vld [vmem:[%s4 + $0x740] sm:$0xff]
    %v3228 = vld [vmem:[%s4 + $0x748] sm:$0xff]
    %v3229 = vld [vmem:[%s4 + $0x750] sm:$0xff]
    %v3230 = vld [vmem:[%s4 + $0x758] sm:$0xff]
    %v3231 = vld [vmem:[%s4 + $0x760] sm:$0xff]
    %v3232 = vld [vmem:[%s4 + $0x768] sm:$0xff]
    %v3233 = vld [vmem:[%s4 + $0x770] sm:$0xff]
    %v3234 = vld [vmem:[%s4 + $0x778] sm:$0xff]
    %v3235 = vld [vmem:[%s4 + $0x780] sm:$0xff]
    %v3236 = vld [vmem:[%s4 + $0x788] sm:$0xff]
    %v3237 = vld [vmem:[%s4 + $0x790] sm:$0xff]
    %v3238 = vld [vmem:[%s4 + $0x798] sm:$0xff]
    %v3239 = vld [vmem:[%s4 + $0x7a0] sm:$0xff]
    %v3240 = vld [vmem:[%s4 + $0x7a8] sm:$0xff]
    %v3241 = vld [vmem:[%s4 + $0x7b0] sm:$0xff]
    %v3242 = vld [vmem:[%s4 + $0x7b8] sm:$0xff]
    %v3243 = vld [vmem:[%s4 + $0x7c0] sm:$0xff]
    %v3244 = vld [vmem:[%s4 + $0x7c8] sm:$0xff]
    %v3245 = vld [vmem:[%s4 + $0x7d0] sm:$0xff]
    %v3246 = vld [vmem:[%s4 + $0x7d8] sm:$0xff]
    %v3247 = vld [vmem:[%s4 + $0x7e0] sm:$0xff]
    %v3248 = vld [vmem:[%s4 + $0x7e8] sm:$0xff]
    %v3249 = vld [vmem:[%s4 + $0x7f0] sm:$0xff]
    %v3250 = vld [vmem:[%s4 + $0x7f8] sm:$0xff]
    %v3251 = vld [vmem:[%s5] sm:$0x1]
    %v3252 = vld [vmem:[%s1] sm:$0xff]
    %v3253 = vld [vmem:[%s1 + $0x8] sm:$0xff]
    %v3254 = vld [vmem:[%s1 + $0x10] sm:$0xff]
    %v3255 = vld [vmem:[%s1 + $0x18] sm:$0xff]
    %v3256 = vld [vmem:[%s1 + $0x20] sm:$0xff]
    %v3257 = vld [vmem:[%s1 + $0x28] sm:$0xff]
    %v3258 = vld [vmem:[%s1 + $0x30] sm:$0xff]
    %v3259 = vld [vmem:[%s1 + $0x38] sm:$0xff]
    %v3260 = vld [vmem:[%s1 + $0x40] sm:$0xff]
    %v3261 = vld [vmem:[%s1 + $0x48] sm:$0xff]
    %v3262 = vld [vmem:[%s1 + $0x50] sm:$0xff]
    %v3263 = vld [vmem:[%s1 + $0x58] sm:$0xff]
    %v3264 = vld [vmem:[%s1 + $0x60] sm:$0xff]
    %v3265 = vld [vmem:[%s1 + $0x68] sm:$0xff]
    %v3266 = vld [vmem:[%s1 + $0x70] sm:$0xff]
    %v3267 = vld [vmem:[%s1 + $0x78] sm:$0xff]
    %v3268 = vld [vmem:[%s1 + $0x80] sm:$0xff]
    %v3269 = vld [vmem:[%s1 + $0x88] sm:$0xff]
    %v3270 = vld [vmem:[%s1 + $0x90] sm:$0xff]
    %v3271 = vld [vmem:[%s1 + $0x98] sm:$0xff]
    %v3272 = vld [vmem:[%s1 + $0xa0] sm:$0xff]
    %v3273 = vld [vmem:[%s1 + $0xa8] sm:$0xff]
    %v3274 = vld [vmem:[%s1 + $0xb0] sm:$0xff]
    %v3275 = vld [vmem:[%s1 + $0xb8] sm:$0xff]
    %v3276 = vld [vmem:[%s1 + $0xc0] sm:$0xff]
    %v3277 = vld [vmem:[%s1 + $0xc8] sm:$0xff]
    %v3278 = vld [vmem:[%s1 + $0xd0] sm:$0xff]
    %v3279 = vld [vmem:[%s1 + $0xd8] sm:$0xff]
    %v3280 = vld [vmem:[%s1 + $0xe0] sm:$0xff]
    %v3281 = vld [vmem:[%s1 + $0xe8] sm:$0xff]
    %v3282 = vld [vmem:[%s1 + $0xf0] sm:$0xff]
    %v3283 = vld [vmem:[%s1 + $0xf8] sm:$0xff]
    %v3284 = vld [vmem:[%s1 + $0x100] sm:$0xff]
    %v3285 = vld [vmem:[%s1 + $0x108] sm:$0xff]
    %v3286 = vld [vmem:[%s1 + $0x110] sm:$0xff]
    %v3287 = vld [vmem:[%s1 + $0x118] sm:$0xff]
    %v3288 = vld [vmem:[%s1 + $0x120] sm:$0xff]
    %v3289 = vld [vmem:[%s1 + $0x128] sm:$0xff]
    %v3290 = vld [vmem:[%s1 + $0x130] sm:$0xff]
    %v3291 = vld [vmem:[%s1 + $0x138] sm:$0xff]
    %v3292 = vld [vmem:[%s1 + $0x140] sm:$0xff]
    %v3293 = vld [vmem:[%s1 + $0x148] sm:$0xff]
    %v3294 = vld [vmem:[%s1 + $0x150] sm:$0xff]
    %v3295 = vld [vmem:[%s1 + $0x158] sm:$0xff]
    %v3296 = vld [vmem:[%s1 + $0x160] sm:$0xff]
    %v3297 = vld [vmem:[%s1 + $0x168] sm:$0xff]
    %v3298 = vld [vmem:[%s1 + $0x170] sm:$0xff]
    %v3299 = vld [vmem:[%s1 + $0x178] sm:$0xff]
    %v3300 = vld [vmem:[%s1 + $0x180] sm:$0xff]
    %v3301 = vld [vmem:[%s1 + $0x188] sm:$0xff]
    %v3302 = vld [vmem:[%s1 + $0x190] sm:$0xff]
    %v3303 = vld [vmem:[%s1 + $0x198] sm:$0xff]
    %v3304 = vld [vmem:[%s1 + $0x1a0] sm:$0xff]
    %v3305 = vld [vmem:[%s1 + $0x1a8] sm:$0xff]
    %v3306 = vld [vmem:[%s1 + $0x1b0] sm:$0xff]
    %v3307 = vld [vmem:[%s1 + $0x1b8] sm:$0xff]
    %v3308 = vld [vmem:[%s1 + $0x1c0] sm:$0xff]
    %v3309 = vld [vmem:[%s1 + $0x1c8] sm:$0xff]
    %v3310 = vld [vmem:[%s1 + $0x1d0] sm:$0xff]
    %v3311 = vld [vmem:[%s1 + $0x1d8] sm:$0xff]
    %v3312 = vld [vmem:[%s1 + $0x1e0] sm:$0xff]
    %v3313 = vld [vmem:[%s1 + $0x1e8] sm:$0xff]
    %v3314 = vld [vmem:[%s1 + $0x1f0] sm:$0xff]
    %v3315 = vld [vmem:[%s1 + $0x1f8] sm:$0xff]
    %v3316 = vld [vmem:[%s1 + $0x200] sm:$0xff]
    %v3317 = vld [vmem:[%s1 + $0x208] sm:$0xff]
    %v3318 = vld [vmem:[%s1 + $0x210] sm:$0xff]
    %v3319 = vld [vmem:[%s1 + $0x218] sm:$0xff]
    %v3320 = vld [vmem:[%s1 + $0x220] sm:$0xff]
    %v3321 = vld [vmem:[%s1 + $0x228] sm:$0xff]
    %v3322 = vld [vmem:[%s1 + $0x230] sm:$0xff]
    %v3323 = vld [vmem:[%s1 + $0x238] sm:$0xff]
    %v3324 = vld [vmem:[%s1 + $0x240] sm:$0xff]
    %v3325 = vld [vmem:[%s1 + $0x248] sm:$0xff]
    %v3326 = vld [vmem:[%s1 + $0x250] sm:$0xff]
    %v3327 = vld [vmem:[%s1 + $0x258] sm:$0xff]
    %v3328 = vld [vmem:[%s1 + $0x260] sm:$0xff]
    %v3329 = vld [vmem:[%s1 + $0x268] sm:$0xff]
    %v3330 = vld [vmem:[%s1 + $0x270] sm:$0xff]
    %v3331 = vld [vmem:[%s1 + $0x278] sm:$0xff]
    %v3332 = vld [vmem:[%s1 + $0x280] sm:$0xff]
    %v3333 = vld [vmem:[%s1 + $0x288] sm:$0xff]
    %v3334 = vld [vmem:[%s1 + $0x290] sm:$0xff]
    %v3335 = vld [vmem:[%s1 + $0x298] sm:$0xff]
    %v3336 = vld [vmem:[%s1 + $0x2a0] sm:$0xff]
    %v3337 = vld [vmem:[%s1 + $0x2a8] sm:$0xff]
    %v3338 = vld [vmem:[%s1 + $0x2b0] sm:$0xff]
    %v3339 = vld [vmem:[%s1 + $0x2b8] sm:$0xff]
    %v3340 = vld [vmem:[%s1 + $0x2c0] sm:$0xff]
    %v3341 = vld [vmem:[%s1 + $0x2c8] sm:$0xff]
    %v3342 = vld [vmem:[%s1 + $0x2d0] sm:$0xff]
    %v3343 = vld [vmem:[%s1 + $0x2d8] sm:$0xff]
    %v3344 = vld [vmem:[%s1 + $0x2e0] sm:$0xff]
    %v3345 = vld [vmem:[%s1 + $0x2e8] sm:$0xff]
    %v3346 = vld [vmem:[%s1 + $0x2f0] sm:$0xff]
    %v3347 = vld [vmem:[%s1 + $0x2f8] sm:$0xff]
    %v3348 = vld [vmem:[%s1 + $0x300] sm:$0xff]
    %v3349 = vld [vmem:[%s1 + $0x308] sm:$0xff]
    %v3350 = vld [vmem:[%s1 + $0x310] sm:$0xff]
    %v3351 = vld [vmem:[%s1 + $0x318] sm:$0xff]
    %v3352 = vld [vmem:[%s1 + $0x320] sm:$0xff]
    %v3353 = vld [vmem:[%s1 + $0x328] sm:$0xff]
    %v3354 = vld [vmem:[%s1 + $0x330] sm:$0xff]
    %v3355 = vld [vmem:[%s1 + $0x338] sm:$0xff]
    %v3356 = vld [vmem:[%s1 + $0x340] sm:$0xff]
    %v3357 = vld [vmem:[%s1 + $0x348] sm:$0xff]
    %v3358 = vld [vmem:[%s1 + $0x350] sm:$0xff]
    %v3359 = vld [vmem:[%s1 + $0x358] sm:$0xff]
    %v3360 = vld [vmem:[%s1 + $0x360] sm:$0xff]
    %v3361 = vld [vmem:[%s1 + $0x368] sm:$0xff]
    %v3362 = vld [vmem:[%s1 + $0x370] sm:$0xff]
    %v3363 = vld [vmem:[%s1 + $0x378] sm:$0xff]
    %v3364 = vld [vmem:[%s1 + $0x380] sm:$0xff]
    %v3365 = vld [vmem:[%s1 + $0x388] sm:$0xff]
    %v3366 = vld [vmem:[%s1 + $0x390] sm:$0xff]
    %v3367 = vld [vmem:[%s1 + $0x398] sm:$0xff]
    %v3368 = vld [vmem:[%s1 + $0x3a0] sm:$0xff]
    %v3369 = vld [vmem:[%s1 + $0x3a8] sm:$0xff]
    %v3370 = vld [vmem:[%s1 + $0x3b0] sm:$0xff]
    %v3371 = vld [vmem:[%s1 + $0x3b8] sm:$0xff]
    %v3372 = vld [vmem:[%s1 + $0x3c0] sm:$0xff]
    %v3373 = vld [vmem:[%s1 + $0x3c8] sm:$0xff]
    %v3374 = vld [vmem:[%s1 + $0x3d0] sm:$0xff]
    %v3375 = vld [vmem:[%s1 + $0x3d8] sm:$0xff]
    %v3376 = vld [vmem:[%s1 + $0x3e0] sm:$0xff]
    %v3377 = vld [vmem:[%s1 + $0x3e8] sm:$0xff]
    %v3378 = vld [vmem:[%s1 + $0x3f0] sm:$0xff]
    %v3379 = vld [vmem:[%s1 + $0x3f8] sm:$0xff]
    %v3380 = vld [vmem:[%s1 + $0x400] sm:$0xff]
    %v3381 = vld [vmem:[%s1 + $0x408] sm:$0xff]
    %v3382 = vld [vmem:[%s1 + $0x410] sm:$0xff]
    %v3383 = vld [vmem:[%s1 + $0x418] sm:$0xff]
    %v3384 = vld [vmem:[%s1 + $0x420] sm:$0xff]
    %v3385 = vld [vmem:[%s1 + $0x428] sm:$0xff]
    %v3386 = vld [vmem:[%s1 + $0x430] sm:$0xff]
    %v3387 = vld [vmem:[%s1 + $0x438] sm:$0xff]
    %v3388 = vld [vmem:[%s1 + $0x440] sm:$0xff]
    %v3389 = vld [vmem:[%s1 + $0x448] sm:$0xff]
    %v3390 = vld [vmem:[%s1 + $0x450] sm:$0xff]
    %v3391 = vld [vmem:[%s1 + $0x458] sm:$0xff]
    %v3392 = vld [vmem:[%s1 + $0x460] sm:$0xff]
    %v3393 = vld [vmem:[%s1 + $0x468] sm:$0xff]
    %v3394 = vld [vmem:[%s1 + $0x470] sm:$0xff]
    %v3395 = vld [vmem:[%s1 + $0x478] sm:$0xff]
    %v3396 = vld [vmem:[%s1 + $0x480] sm:$0xff]
    %v3397 = vld [vmem:[%s1 + $0x488] sm:$0xff]
    %v3398 = vld [vmem:[%s1 + $0x490] sm:$0xff]
    %v3399 = vld [vmem:[%s1 + $0x498] sm:$0xff]
    %v3400 = vld [vmem:[%s1 + $0x4a0] sm:$0xff]
    %v3401 = vld [vmem:[%s1 + $0x4a8] sm:$0xff]
    %v3402 = vld [vmem:[%s1 + $0x4b0] sm:$0xff]
    %v3403 = vld [vmem:[%s1 + $0x4b8] sm:$0xff]
    %v3404 = vld [vmem:[%s1 + $0x4c0] sm:$0xff]
    %v3405 = vld [vmem:[%s1 + $0x4c8] sm:$0xff]
    %v3406 = vld [vmem:[%s1 + $0x4d0] sm:$0xff]
    %v3407 = vld [vmem:[%s1 + $0x4d8] sm:$0xff]
    %v3408 = vld [vmem:[%s1 + $0x4e0] sm:$0xff]
    %v3409 = vld [vmem:[%s1 + $0x4e8] sm:$0xff]
    %v3410 = vld [vmem:[%s1 + $0x4f0] sm:$0xff]
    %v3411 = vld [vmem:[%s1 + $0x4f8] sm:$0xff]
    %v3412 = vld [vmem:[%s1 + $0x500] sm:$0xff]
    %v3413 = vld [vmem:[%s1 + $0x508] sm:$0xff]
    %v3414 = vld [vmem:[%s1 + $0x510] sm:$0xff]
    %v3415 = vld [vmem:[%s1 + $0x518] sm:$0xff]
    %v3416 = vld [vmem:[%s1 + $0x520] sm:$0xff]
    %v3417 = vld [vmem:[%s1 + $0x528] sm:$0xff]
    %v3418 = vld [vmem:[%s1 + $0x530] sm:$0xff]
    %v3419 = vld [vmem:[%s1 + $0x538] sm:$0xff]
    %v3420 = vld [vmem:[%s1 + $0x540] sm:$0xff]
    %v3421 = vld [vmem:[%s1 + $0x548] sm:$0xff]
    %v3422 = vld [vmem:[%s1 + $0x550] sm:$0xff]
    %v3423 = vld [vmem:[%s1 + $0x558] sm:$0xff]
    %v3424 = vld [vmem:[%s1 + $0x560] sm:$0xff]
    %v3425 = vld [vmem:[%s1 + $0x568] sm:$0xff]
    %v3426 = vld [vmem:[%s1 + $0x570] sm:$0xff]
    %v3427 = vld [vmem:[%s1 + $0x578] sm:$0xff]
    %v3428 = vld [vmem:[%s1 + $0x580] sm:$0xff]
    %v3429 = vld [vmem:[%s1 + $0x588] sm:$0xff]
    %v3430 = vld [vmem:[%s1 + $0x590] sm:$0xff]
    %v3431 = vld [vmem:[%s1 + $0x598] sm:$0xff]
    %v3432 = vld [vmem:[%s1 + $0x5a0] sm:$0xff]
    %v3433 = vld [vmem:[%s1 + $0x5a8] sm:$0xff]
    %v3434 = vld [vmem:[%s1 + $0x5b0] sm:$0xff]
    %v3435 = vld [vmem:[%s1 + $0x5b8] sm:$0xff]
    %v3436 = vld [vmem:[%s1 + $0x5c0] sm:$0xff]
    %v3437 = vld [vmem:[%s1 + $0x5c8] sm:$0xff]
    %v3438 = vld [vmem:[%s1 + $0x5d0] sm:$0xff]
    %v3439 = vld [vmem:[%s1 + $0x5d8] sm:$0xff]
    %v3440 = vld [vmem:[%s1 + $0x5e0] sm:$0xff]
    %v3441 = vld [vmem:[%s1 + $0x5e8] sm:$0xff]
    %v3442 = vld [vmem:[%s1 + $0x5f0] sm:$0xff]
    %v3443 = vld [vmem:[%s1 + $0x5f8] sm:$0xff]
    %v3444 = vld [vmem:[%s1 + $0x600] sm:$0xff]
    %v3445 = vld [vmem:[%s1 + $0x608] sm:$0xff]
    %v3446 = vld [vmem:[%s1 + $0x610] sm:$0xff]
    %v3447 = vld [vmem:[%s1 + $0x618] sm:$0xff]
    %v3448 = vld [vmem:[%s1 + $0x620] sm:$0xff]
    %v3449 = vld [vmem:[%s1 + $0x628] sm:$0xff]
    %v3450 = vld [vmem:[%s1 + $0x630] sm:$0xff]
    %v3451 = vld [vmem:[%s1 + $0x638] sm:$0xff]
    %v3452 = vld [vmem:[%s1 + $0x640] sm:$0xff]
    %v3453 = vld [vmem:[%s1 + $0x648] sm:$0xff]
    %v3454 = vld [vmem:[%s1 + $0x650] sm:$0xff]
    %v3455 = vld [vmem:[%s1 + $0x658] sm:$0xff]
    %v3456 = vld [vmem:[%s1 + $0x660] sm:$0xff]
    %v3457 = vld [vmem:[%s1 + $0x668] sm:$0xff]
    %v3458 = vld [vmem:[%s1 + $0x670] sm:$0xff]
    %v3459 = vld [vmem:[%s1 + $0x678] sm:$0xff]
    %v3460 = vld [vmem:[%s1 + $0x680] sm:$0xff]
    %v3461 = vld [vmem:[%s1 + $0x688] sm:$0xff]
    %v3462 = vld [vmem:[%s1 + $0x690] sm:$0xff]
    %v3463 = vld [vmem:[%s1 + $0x698] sm:$0xff]
    %v3464 = vld [vmem:[%s1 + $0x6a0] sm:$0xff]
    %v3465 = vld [vmem:[%s1 + $0x6a8] sm:$0xff]
    %v3466 = vld [vmem:[%s1 + $0x6b0] sm:$0xff]
    %v3467 = vld [vmem:[%s1 + $0x6b8] sm:$0xff]
    %v3468 = vld [vmem:[%s1 + $0x6c0] sm:$0xff]
    %v3469 = vld [vmem:[%s1 + $0x6c8] sm:$0xff]
    %v3470 = vld [vmem:[%s1 + $0x6d0] sm:$0xff]
    %v3471 = vld [vmem:[%s1 + $0x6d8] sm:$0xff]
    %v3472 = vld [vmem:[%s1 + $0x6e0] sm:$0xff]
    %v3473 = vld [vmem:[%s1 + $0x6e8] sm:$0xff]
    %v3474 = vld [vmem:[%s1 + $0x6f0] sm:$0xff]
    %v3475 = vld [vmem:[%s1 + $0x6f8] sm:$0xff]
    %v3476 = vld [vmem:[%s1 + $0x700] sm:$0xff]
    %v3477 = vld [vmem:[%s1 + $0x708] sm:$0xff]
    %v3478 = vld [vmem:[%s1 + $0x710] sm:$0xff]
    %v3479 = vld [vmem:[%s1 + $0x718] sm:$0xff]
    %v3480 = vld [vmem:[%s1 + $0x720] sm:$0xff]
    %v3481 = vld [vmem:[%s1 + $0x728] sm:$0xff]
    %v3482 = vld [vmem:[%s1 + $0x730] sm:$0xff]
    %v3483 = vld [vmem:[%s1 + $0x738] sm:$0xff]
    %v3484 = vld [vmem:[%s1 + $0x740] sm:$0xff]
    %v3485 = vld [vmem:[%s1 + $0x748] sm:$0xff]
    %v3486 = vld [vmem:[%s1 + $0x750] sm:$0xff]
    %v3487 = vld [vmem:[%s1 + $0x758] sm:$0xff]
    %v3488 = vld [vmem:[%s1 + $0x760] sm:$0xff]
    %v3489 = vld [vmem:[%s1 + $0x768] sm:$0xff]
    %v3490 = vld [vmem:[%s1 + $0x770] sm:$0xff]
    %v3491 = vld [vmem:[%s1 + $0x778] sm:$0xff]
    %v3492 = vld [vmem:[%s1 + $0x780] sm:$0xff]
    %v3493 = vld [vmem:[%s1 + $0x788] sm:$0xff]
    %v3494 = vld [vmem:[%s1 + $0x790] sm:$0xff]
    %v3495 = vld [vmem:[%s1 + $0x798] sm:$0xff]
    %v3496 = vld [vmem:[%s1 + $0x7a0] sm:$0xff]
    %v3497 = vld [vmem:[%s1 + $0x7a8] sm:$0xff]
    %v3498 = vld [vmem:[%s1 + $0x7b0] sm:$0xff]
    %v3499 = vld [vmem:[%s1 + $0x7b8] sm:$0xff]
    %v3500 = vld [vmem:[%s1 + $0x7c0] sm:$0xff]
    %v3501 = vld [vmem:[%s1 + $0x7c8] sm:$0xff]
    %v3502 = vld [vmem:[%s1 + $0x7d0] sm:$0xff]
    %v3503 = vld [vmem:[%s1 + $0x7d8] sm:$0xff]
    %v3504 = vld [vmem:[%s1 + $0x7e0] sm:$0xff]
    %v3505 = vld [vmem:[%s1 + $0x7e8] sm:$0xff]
    %v3506 = vld [vmem:[%s1 + $0x7f0] sm:$0xff]
    %v3507 = vld [vmem:[%s1 + $0x7f8] sm:$0xff]
    %v3509 = vlaneseq
    %v3510 = vshrl.u32 %v3509, 7
    %v3511 = vsub.s32 0, %v3510
    %v3512 = vrot.slane %v3251, %v3511
    %3514 = vxpose.xlu0.b32.start [1/16] %v3252, 128
    %3515 = vxpose.xlu0.b32.cont [2/16] %v3253, 128
    %3516 = vxpose.xlu0.b32.cont [3/16] %v3254, 128
    %3517 = vxpose.xlu0.b32.cont [4/16] %v3255, 128
    %3518 = vxpose.xlu0.b32.cont [5/16] %v3256, 128
    %3519 = vxpose.xlu0.b32.cont [6/16] %v3257, 128
    %3520 = vxpose.xlu0.b32.cont [7/16] %v3258, 128
    %3521 = vxpose.xlu0.b32.cont [8/16] %v3259, 128
    %3522 = vxpose.xlu0.b32.cont [9/16] %v3260, 128
    %3523 = vxpose.xlu0.b32.cont [10/16] %v3261, 128
    %3524 = vxpose.xlu0.b32.cont [11/16] %v3262, 128
    %3525 = vxpose.xlu0.b32.cont [12/16] %v3263, 128
    %3526 = vxpose.xlu0.b32.cont [13/16] %v3264, 128
    %3527 = vxpose.xlu0.b32.cont [14/16] %v3265, 128
    %3528 = vxpose.xlu0.b32.cont [15/16] %v3266, 128
    %3529 = vxpose.xlu0.b32.end [16/16] %v3267, 128
    %v3530 = vpop.trf.xlu0
    %v3531 = vpop.trf.xlu0
    %v3532 = vpop.trf.xlu0
    %v3533 = vpop.trf.xlu0
    %v3534 = vpop.trf.xlu0
    %v3535 = vpop.trf.xlu0
    %v3536 = vpop.trf.xlu0
    %v3537 = vpop.trf.xlu0
    %v3538 = vpop.trf.xlu0
    %v3539 = vpop.trf.xlu0
    %v3540 = vpop.trf.xlu0
    %v3541 = vpop.trf.xlu0
    %v3542 = vpop.trf.xlu0
    %v3543 = vpop.trf.xlu0
    %v3544 = vpop.trf.xlu0
    %v3545 = vpop.trf.xlu0
    %3546 = vxpose.xlu0.b32.start [1/16] %v3268, 128
    %3547 = vxpose.xlu0.b32.cont [2/16] %v3269, 128
    %3548 = vxpose.xlu0.b32.cont [3/16] %v3270, 128
    %3549 = vxpose.xlu0.b32.cont [4/16] %v3271, 128
    %3550 = vxpose.xlu0.b32.cont [5/16] %v3272, 128
    %3551 = vxpose.xlu0.b32.cont [6/16] %v3273, 128
    %3552 = vxpose.xlu0.b32.cont [7/16] %v3274, 128
    %3553 = vxpose.xlu0.b32.cont [8/16] %v3275, 128
    %3554 = vxpose.xlu0.b32.cont [9/16] %v3276, 128
    %3555 = vxpose.xlu0.b32.cont [10/16] %v3277, 128
    %3556 = vxpose.xlu0.b32.cont [11/16] %v3278, 128
    %3557 = vxpose.xlu0.b32.cont [12/16] %v3279, 128
    %3558 = vxpose.xlu0.b32.cont [13/16] %v3280, 128
    %3559 = vxpose.xlu0.b32.cont [14/16] %v3281, 128
    %3560 = vxpose.xlu0.b32.cont [15/16] %v3282, 128
    %3561 = vxpose.xlu0.b32.end [16/16] %v3283, 128
    %v3562 = vpop.trf.xlu0
    %v3563 = vpop.trf.xlu0
    %v3564 = vpop.trf.xlu0
    %v3565 = vpop.trf.xlu0
    %v3566 = vpop.trf.xlu0
    %v3567 = vpop.trf.xlu0
    %v3568 = vpop.trf.xlu0
    %v3569 = vpop.trf.xlu0
    %v3570 = vpop.trf.xlu0
    %v3571 = vpop.trf.xlu0
    %v3572 = vpop.trf.xlu0
    %v3573 = vpop.trf.xlu0
    %v3574 = vpop.trf.xlu0
    %v3575 = vpop.trf.xlu0
    %v3576 = vpop.trf.xlu0
    %v3577 = vpop.trf.xlu0
    %3578 = vxpose.xlu0.b32.start [1/16] %v3284, 128
    %3579 = vxpose.xlu0.b32.cont [2/16] %v3285, 128
    %3580 = vxpose.xlu0.b32.cont [3/16] %v3286, 128
    %3581 = vxpose.xlu0.b32.cont [4/16] %v3287, 128
    %3582 = vxpose.xlu0.b32.cont [5/16] %v3288, 128
    %3583 = vxpose.xlu0.b32.cont [6/16] %v3289, 128
    %3584 = vxpose.xlu0.b32.cont [7/16] %v3290, 128
    %3585 = vxpose.xlu0.b32.cont [8/16] %v3291, 128
    %3586 = vxpose.xlu0.b32.cont [9/16] %v3292, 128
    %3587 = vxpose.xlu0.b32.cont [10/16] %v3293, 128
    %3588 = vxpose.xlu0.b32.cont [11/16] %v3294, 128
    %3589 = vxpose.xlu0.b32.cont [12/16] %v3295, 128
    %3590 = vxpose.xlu0.b32.cont [13/16] %v3296, 128
    %3591 = vxpose.xlu0.b32.cont [14/16] %v3297, 128
    %3592 = vxpose.xlu0.b32.cont [15/16] %v3298, 128
    %3593 = vxpose.xlu0.b32.end [16/16] %v3299, 128
    %v3594 = vpop.trf.xlu0
    %v3595 = vpop.trf.xlu0
    %v3596 = vpop.trf.xlu0
    %v3597 = vpop.trf.xlu0
    %v3598 = vpop.trf.xlu0
    %v3599 = vpop.trf.xlu0
    %v3600 = vpop.trf.xlu0
    %v3601 = vpop.trf.xlu0
    %v3602 = vpop.trf.xlu0
    %v3603 = vpop.trf.xlu0
    %v3604 = vpop.trf.xlu0
    %v3605 = vpop.trf.xlu0
    %v3606 = vpop.trf.xlu0
    %v3607 = vpop.trf.xlu0
    %v3608 = vpop.trf.xlu0
    %v3609 = vpop.trf.xlu0
    %3610 = vxpose.xlu0.b32.start [1/16] %v3300, 128
    %3611 = vxpose.xlu0.b32.cont [2/16] %v3301, 128
    %3612 = vxpose.xlu0.b32.cont [3/16] %v3302, 128
    %3613 = vxpose.xlu0.b32.cont [4/16] %v3303, 128
    %3614 = vxpose.xlu0.b32.cont [5/16] %v3304, 128
    %3615 = vxpose.xlu0.b32.cont [6/16] %v3305, 128
    %3616 = vxpose.xlu0.b32.cont [7/16] %v3306, 128
    %3617 = vxpose.xlu0.b32.cont [8/16] %v3307, 128
    %3618 = vxpose.xlu0.b32.cont [9/16] %v3308, 128
    %3619 = vxpose.xlu0.b32.cont [10/16] %v3309, 128
    %3620 = vxpose.xlu0.b32.cont [11/16] %v3310, 128
    %3621 = vxpose.xlu0.b32.cont [12/16] %v3311, 128
    %3622 = vxpose.xlu0.b32.cont [13/16] %v3312, 128
    %3623 = vxpose.xlu0.b32.cont [14/16] %v3313, 128
    %3624 = vxpose.xlu0.b32.cont [15/16] %v3314, 128
    %3625 = vxpose.xlu0.b32.end [16/16] %v3315, 128
    %v3626 = vpop.trf.xlu0
    %v3627 = vpop.trf.xlu0
    %v3628 = vpop.trf.xlu0
    %v3629 = vpop.trf.xlu0
    %v3630 = vpop.trf.xlu0
    %v3631 = vpop.trf.xlu0
    %v3632 = vpop.trf.xlu0
    %v3633 = vpop.trf.xlu0
    %v3634 = vpop.trf.xlu0
    %v3635 = vpop.trf.xlu0
    %v3636 = vpop.trf.xlu0
    %v3637 = vpop.trf.xlu0
    %v3638 = vpop.trf.xlu0
    %v3639 = vpop.trf.xlu0
    %v3640 = vpop.trf.xlu0
    %v3641 = vpop.trf.xlu0
    %3642 = vxpose.xlu0.b32.start [1/16] %v3316, 128
    %3643 = vxpose.xlu0.b32.cont [2/16] %v3317, 128
    %3644 = vxpose.xlu0.b32.cont [3/16] %v3318, 128
    %3645 = vxpose.xlu0.b32.cont [4/16] %v3319, 128
    %3646 = vxpose.xlu0.b32.cont [5/16] %v3320, 128
    %3647 = vxpose.xlu0.b32.cont [6/16] %v3321, 128
    %3648 = vxpose.xlu0.b32.cont [7/16] %v3322, 128
    %3649 = vxpose.xlu0.b32.cont [8/16] %v3323, 128
    %3650 = vxpose.xlu0.b32.cont [9/16] %v3324, 128
    %3651 = vxpose.xlu0.b32.cont [10/16] %v3325, 128
    %3652 = vxpose.xlu0.b32.cont [11/16] %v3326, 128
    %3653 = vxpose.xlu0.b32.cont [12/16] %v3327, 128
    %3654 = vxpose.xlu0.b32.cont [13/16] %v3328, 128
    %3655 = vxpose.xlu0.b32.cont [14/16] %v3329, 128
    %3656 = vxpose.xlu0.b32.cont [15/16] %v3330, 128
    %3657 = vxpose.xlu0.b32.end [16/16] %v3331, 128
    %v3658 = vpop.trf.xlu0
    %v3659 = vpop.trf.xlu0
    %v3660 = vpop.trf.xlu0
    %v3661 = vpop.trf.xlu0
    %v3662 = vpop.trf.xlu0
    %v3663 = vpop.trf.xlu0
    %v3664 = vpop.trf.xlu0
    %v3665 = vpop.trf.xlu0
    %v3666 = vpop.trf.xlu0
    %v3667 = vpop.trf.xlu0
    %v3668 = vpop.trf.xlu0
    %v3669 = vpop.trf.xlu0
    %v3670 = vpop.trf.xlu0
    %v3671 = vpop.trf.xlu0
    %v3672 = vpop.trf.xlu0
    %v3673 = vpop.trf.xlu0
    %3674 = vxpose.xlu0.b32.start [1/16] %v3332, 128
    %3675 = vxpose.xlu0.b32.cont [2/16] %v3333, 128
    %3676 = vxpose.xlu0.b32.cont [3/16] %v3334, 128
    %3677 = vxpose.xlu0.b32.cont [4/16] %v3335, 128
    %3678 = vxpose.xlu0.b32.cont [5/16] %v3336, 128
    %3679 = vxpose.xlu0.b32.cont [6/16] %v3337, 128
    %3680 = vxpose.xlu0.b32.cont [7/16] %v3338, 128
    %3681 = vxpose.xlu0.b32.cont [8/16] %v3339, 128
    %3682 = vxpose.xlu0.b32.cont [9/16] %v3340, 128
    %3683 = vxpose.xlu0.b32.cont [10/16] %v3341, 128
    %3684 = vxpose.xlu0.b32.cont [11/16] %v3342, 128
    %3685 = vxpose.xlu0.b32.cont [12/16] %v3343, 128
    %3686 = vxpose.xlu0.b32.cont [13/16] %v3344, 128
    %3687 = vxpose.xlu0.b32.cont [14/16] %v3345, 128
    %3688 = vxpose.xlu0.b32.cont [15/16] %v3346, 128
    %3689 = vxpose.xlu0.b32.end [16/16] %v3347, 128
    %v3690 = vpop.trf.xlu0
    %v3691 = vpop.trf.xlu0
    %v3692 = vpop.trf.xlu0
    %v3693 = vpop.trf.xlu0
    %v3694 = vpop.trf.xlu0
    %v3695 = vpop.trf.xlu0
    %v3696 = vpop.trf.xlu0
    %v3697 = vpop.trf.xlu0
    %v3698 = vpop.trf.xlu0
    %v3699 = vpop.trf.xlu0
    %v3700 = vpop.trf.xlu0
    %v3701 = vpop.trf.xlu0
    %v3702 = vpop.trf.xlu0
    %v3703 = vpop.trf.xlu0
    %v3704 = vpop.trf.xlu0
    %v3705 = vpop.trf.xlu0
    %3706 = vxpose.xlu0.b32.start [1/16] %v3348, 128
    %3707 = vxpose.xlu0.b32.cont [2/16] %v3349, 128
    %3708 = vxpose.xlu0.b32.cont [3/16] %v3350, 128
    %3709 = vxpose.xlu0.b32.cont [4/16] %v3351, 128
    %3710 = vxpose.xlu0.b32.cont [5/16] %v3352, 128
    %3711 = vxpose.xlu0.b32.cont [6/16] %v3353, 128
    %3712 = vxpose.xlu0.b32.cont [7/16] %v3354, 128
    %3713 = vxpose.xlu0.b32.cont [8/16] %v3355, 128
    %3714 = vxpose.xlu0.b32.cont [9/16] %v3356, 128
    %3715 = vxpose.xlu0.b32.cont [10/16] %v3357, 128
    %3716 = vxpose.xlu0.b32.cont [11/16] %v3358, 128
    %3717 = vxpose.xlu0.b32.cont [12/16] %v3359, 128
    %3718 = vxpose.xlu0.b32.cont [13/16] %v3360, 128
    %3719 = vxpose.xlu0.b32.cont [14/16] %v3361, 128
    %3720 = vxpose.xlu0.b32.cont [15/16] %v3362, 128
    %3721 = vxpose.xlu0.b32.end [16/16] %v3363, 128
    %v3722 = vpop.trf.xlu0
    %v3723 = vpop.trf.xlu0
    %v3724 = vpop.trf.xlu0
    %v3725 = vpop.trf.xlu0
    %v3726 = vpop.trf.xlu0
    %v3727 = vpop.trf.xlu0
    %v3728 = vpop.trf.xlu0
    %v3729 = vpop.trf.xlu0
    %v3730 = vpop.trf.xlu0
    %v3731 = vpop.trf.xlu0
    %v3732 = vpop.trf.xlu0
    %v3733 = vpop.trf.xlu0
    %v3734 = vpop.trf.xlu0
    %v3735 = vpop.trf.xlu0
    %v3736 = vpop.trf.xlu0
    %v3737 = vpop.trf.xlu0
    %3738 = vxpose.xlu0.b32.start [1/16] %v3364, 128
    %3739 = vxpose.xlu0.b32.cont [2/16] %v3365, 128
    %3740 = vxpose.xlu0.b32.cont [3/16] %v3366, 128
    %3741 = vxpose.xlu0.b32.cont [4/16] %v3367, 128
    %3742 = vxpose.xlu0.b32.cont [5/16] %v3368, 128
    %3743 = vxpose.xlu0.b32.cont [6/16] %v3369, 128
    %3744 = vxpose.xlu0.b32.cont [7/16] %v3370, 128
    %3745 = vxpose.xlu0.b32.cont [8/16] %v3371, 128
    %3746 = vxpose.xlu0.b32.cont [9/16] %v3372, 128
    %3747 = vxpose.xlu0.b32.cont [10/16] %v3373, 128
    %3748 = vxpose.xlu0.b32.cont [11/16] %v3374, 128
    %3749 = vxpose.xlu0.b32.cont [12/16] %v3375, 128
    %3750 = vxpose.xlu0.b32.cont [13/16] %v3376, 128
    %3751 = vxpose.xlu0.b32.cont [14/16] %v3377, 128
    %3752 = vxpose.xlu0.b32.cont [15/16] %v3378, 128
    %3753 = vxpose.xlu0.b32.end [16/16] %v3379, 128
    %v3754 = vpop.trf.xlu0
    %v3755 = vpop.trf.xlu0
    %v3756 = vpop.trf.xlu0
    %v3757 = vpop.trf.xlu0
    %v3758 = vpop.trf.xlu0
    %v3759 = vpop.trf.xlu0
    %v3760 = vpop.trf.xlu0
    %v3761 = vpop.trf.xlu0
    %v3762 = vpop.trf.xlu0
    %v3763 = vpop.trf.xlu0
    %v3764 = vpop.trf.xlu0
    %v3765 = vpop.trf.xlu0
    %v3766 = vpop.trf.xlu0
    %v3767 = vpop.trf.xlu0
    %v3768 = vpop.trf.xlu0
    %v3769 = vpop.trf.xlu0
    %3770 = vxpose.xlu0.b32.start [1/16] %v3380, 128
    %3771 = vxpose.xlu0.b32.cont [2/16] %v3381, 128
    %3772 = vxpose.xlu0.b32.cont [3/16] %v3382, 128
    %3773 = vxpose.xlu0.b32.cont [4/16] %v3383, 128
    %3774 = vxpose.xlu0.b32.cont [5/16] %v3384, 128
    %3775 = vxpose.xlu0.b32.cont [6/16] %v3385, 128
    %3776 = vxpose.xlu0.b32.cont [7/16] %v3386, 128
    %3777 = vxpose.xlu0.b32.cont [8/16] %v3387, 128
    %3778 = vxpose.xlu0.b32.cont [9/16] %v3388, 128
    %3779 = vxpose.xlu0.b32.cont [10/16] %v3389, 128
    %3780 = vxpose.xlu0.b32.cont [11/16] %v3390, 128
    %3781 = vxpose.xlu0.b32.cont [12/16] %v3391, 128
    %3782 = vxpose.xlu0.b32.cont [13/16] %v3392, 128
    %3783 = vxpose.xlu0.b32.cont [14/16] %v3393, 128
    %3784 = vxpose.xlu0.b32.cont [15/16] %v3394, 128
    %3785 = vxpose.xlu0.b32.end [16/16] %v3395, 128
    %v3786 = vpop.trf.xlu0
    %v3787 = vpop.trf.xlu0
    %v3788 = vpop.trf.xlu0
    %v3789 = vpop.trf.xlu0
    %v3790 = vpop.trf.xlu0
    %v3791 = vpop.trf.xlu0
    %v3792 = vpop.trf.xlu0
    %v3793 = vpop.trf.xlu0
    %v3794 = vpop.trf.xlu0
    %v3795 = vpop.trf.xlu0
    %v3796 = vpop.trf.xlu0
    %v3797 = vpop.trf.xlu0
    %v3798 = vpop.trf.xlu0
    %v3799 = vpop.trf.xlu0
    %v3800 = vpop.trf.xlu0
    %v3801 = vpop.trf.xlu0
    %3802 = vxpose.xlu0.b32.start [1/16] %v3396, 128
    %3803 = vxpose.xlu0.b32.cont [2/16] %v3397, 128
    %3804 = vxpose.xlu0.b32.cont [3/16] %v3398, 128
    %3805 = vxpose.xlu0.b32.cont [4/16] %v3399, 128
    %3806 = vxpose.xlu0.b32.cont [5/16] %v3400, 128
    %3807 = vxpose.xlu0.b32.cont [6/16] %v3401, 128
    %3808 = vxpose.xlu0.b32.cont [7/16] %v3402, 128
    %3809 = vxpose.xlu0.b32.cont [8/16] %v3403, 128
    %3810 = vxpose.xlu0.b32.cont [9/16] %v3404, 128
    %3811 = vxpose.xlu0.b32.cont [10/16] %v3405, 128
    %3812 = vxpose.xlu0.b32.cont [11/16] %v3406, 128
    %3813 = vxpose.xlu0.b32.cont [12/16] %v3407, 128
    %3814 = vxpose.xlu0.b32.cont [13/16] %v3408, 128
    %3815 = vxpose.xlu0.b32.cont [14/16] %v3409, 128
    %3816 = vxpose.xlu0.b32.cont [15/16] %v3410, 128
    %3817 = vxpose.xlu0.b32.end [16/16] %v3411, 128
    %v3818 = vpop.trf.xlu0
    %v3819 = vpop.trf.xlu0
    %v3820 = vpop.trf.xlu0
    %v3821 = vpop.trf.xlu0
    %v3822 = vpop.trf.xlu0
    %v3823 = vpop.trf.xlu0
    %v3824 = vpop.trf.xlu0
    %v3825 = vpop.trf.xlu0
    %v3826 = vpop.trf.xlu0
    %v3827 = vpop.trf.xlu0
    %v3828 = vpop.trf.xlu0
    %v3829 = vpop.trf.xlu0
    %v3830 = vpop.trf.xlu0
    %v3831 = vpop.trf.xlu0
    %v3832 = vpop.trf.xlu0
    %v3833 = vpop.trf.xlu0
    %3834 = vxpose.xlu0.b32.start [1/16] %v3412, 128
    %3835 = vxpose.xlu0.b32.cont [2/16] %v3413, 128
    %3836 = vxpose.xlu0.b32.cont [3/16] %v3414, 128
    %3837 = vxpose.xlu0.b32.cont [4/16] %v3415, 128
    %3838 = vxpose.xlu0.b32.cont [5/16] %v3416, 128
    %3839 = vxpose.xlu0.b32.cont [6/16] %v3417, 128
    %3840 = vxpose.xlu0.b32.cont [7/16] %v3418, 128
    %3841 = vxpose.xlu0.b32.cont [8/16] %v3419, 128
    %3842 = vxpose.xlu0.b32.cont [9/16] %v3420, 128
    %3843 = vxpose.xlu0.b32.cont [10/16] %v3421, 128
    %3844 = vxpose.xlu0.b32.cont [11/16] %v3422, 128
    %3845 = vxpose.xlu0.b32.cont [12/16] %v3423, 128
    %3846 = vxpose.xlu0.b32.cont [13/16] %v3424, 128
    %3847 = vxpose.xlu0.b32.cont [14/16] %v3425, 128
    %3848 = vxpose.xlu0.b32.cont [15/16] %v3426, 128
    %3849 = vxpose.xlu0.b32.end [16/16] %v3427, 128
    %v3850 = vpop.trf.xlu0
    %v3851 = vpop.trf.xlu0
    %v3852 = vpop.trf.xlu0
    %v3853 = vpop.trf.xlu0
    %v3854 = vpop.trf.xlu0
    %v3855 = vpop.trf.xlu0
    %v3856 = vpop.trf.xlu0
    %v3857 = vpop.trf.xlu0
    %v3858 = vpop.trf.xlu0
    %v3859 = vpop.trf.xlu0
    %v3860 = vpop.trf.xlu0
    %v3861 = vpop.trf.xlu0
    %v3862 = vpop.trf.xlu0
    %v3863 = vpop.trf.xlu0
    %v3864 = vpop.trf.xlu0
    %v3865 = vpop.trf.xlu0
    %3866 = vxpose.xlu0.b32.start [1/16] %v3428, 128
    %3867 = vxpose.xlu0.b32.cont [2/16] %v3429, 128
    %3868 = vxpose.xlu0.b32.cont [3/16] %v3430, 128
    %3869 = vxpose.xlu0.b32.cont [4/16] %v3431, 128
    %3870 = vxpose.xlu0.b32.cont [5/16] %v3432, 128
    %3871 = vxpose.xlu0.b32.cont [6/16] %v3433, 128
    %3872 = vxpose.xlu0.b32.cont [7/16] %v3434, 128
    %3873 = vxpose.xlu0.b32.cont [8/16] %v3435, 128
    %3874 = vxpose.xlu0.b32.cont [9/16] %v3436, 128
    %3875 = vxpose.xlu0.b32.cont [10/16] %v3437, 128
    %3876 = vxpose.xlu0.b32.cont [11/16] %v3438, 128
    %3877 = vxpose.xlu0.b32.cont [12/16] %v3439, 128
    %3878 = vxpose.xlu0.b32.cont [13/16] %v3440, 128
    %3879 = vxpose.xlu0.b32.cont [14/16] %v3441, 128
    %3880 = vxpose.xlu0.b32.cont [15/16] %v3442, 128
    %3881 = vxpose.xlu0.b32.end [16/16] %v3443, 128
    %v3882 = vpop.trf.xlu0
    %v3883 = vpop.trf.xlu0
    %v3884 = vpop.trf.xlu0
    %v3885 = vpop.trf.xlu0
    %v3886 = vpop.trf.xlu0
    %v3887 = vpop.trf.xlu0
    %v3888 = vpop.trf.xlu0
    %v3889 = vpop.trf.xlu0
    %v3890 = vpop.trf.xlu0
    %v3891 = vpop.trf.xlu0
    %v3892 = vpop.trf.xlu0
    %v3893 = vpop.trf.xlu0
    %v3894 = vpop.trf.xlu0
    %v3895 = vpop.trf.xlu0
    %v3896 = vpop.trf.xlu0
    %v3897 = vpop.trf.xlu0
    %3898 = vxpose.xlu0.b32.start [1/16] %v3444, 128
    %3899 = vxpose.xlu0.b32.cont [2/16] %v3445, 128
    %3900 = vxpose.xlu0.b32.cont [3/16] %v3446, 128
    %3901 = vxpose.xlu0.b32.cont [4/16] %v3447, 128
    %3902 = vxpose.xlu0.b32.cont [5/16] %v3448, 128
    %3903 = vxpose.xlu0.b32.cont [6/16] %v3449, 128
    %3904 = vxpose.xlu0.b32.cont [7/16] %v3450, 128
    %3905 = vxpose.xlu0.b32.cont [8/16] %v3451, 128
    %3906 = vxpose.xlu0.b32.cont [9/16] %v3452, 128
    %3907 = vxpose.xlu0.b32.cont [10/16] %v3453, 128
    %3908 = vxpose.xlu0.b32.cont [11/16] %v3454, 128
    %3909 = vxpose.xlu0.b32.cont [12/16] %v3455, 128
    %3910 = vxpose.xlu0.b32.cont [13/16] %v3456, 128
    %3911 = vxpose.xlu0.b32.cont [14/16] %v3457, 128
    %3912 = vxpose.xlu0.b32.cont [15/16] %v3458, 128
    %3913 = vxpose.xlu0.b32.end [16/16] %v3459, 128
    %v3914 = vpop.trf.xlu0
    %v3915 = vpop.trf.xlu0
    %v3916 = vpop.trf.xlu0
    %v3917 = vpop.trf.xlu0
    %v3918 = vpop.trf.xlu0
    %v3919 = vpop.trf.xlu0
    %v3920 = vpop.trf.xlu0
    %v3921 = vpop.trf.xlu0
    %v3922 = vpop.trf.xlu0
    %v3923 = vpop.trf.xlu0
    %v3924 = vpop.trf.xlu0
    %v3925 = vpop.trf.xlu0
    %v3926 = vpop.trf.xlu0
    %v3927 = vpop.trf.xlu0
    %v3928 = vpop.trf.xlu0
    %v3929 = vpop.trf.xlu0
    %3930 = vxpose.xlu0.b32.start [1/16] %v3460, 128
    %3931 = vxpose.xlu0.b32.cont [2/16] %v3461, 128
    %3932 = vxpose.xlu0.b32.cont [3/16] %v3462, 128
    %3933 = vxpose.xlu0.b32.cont [4/16] %v3463, 128
    %3934 = vxpose.xlu0.b32.cont [5/16] %v3464, 128
    %3935 = vxpose.xlu0.b32.cont [6/16] %v3465, 128
    %3936 = vxpose.xlu0.b32.cont [7/16] %v3466, 128
    %3937 = vxpose.xlu0.b32.cont [8/16] %v3467, 128
    %3938 = vxpose.xlu0.b32.cont [9/16] %v3468, 128
    %3939 = vxpose.xlu0.b32.cont [10/16] %v3469, 128
    %3940 = vxpose.xlu0.b32.cont [11/16] %v3470, 128
    %3941 = vxpose.xlu0.b32.cont [12/16] %v3471, 128
    %3942 = vxpose.xlu0.b32.cont [13/16] %v3472, 128
    %3943 = vxpose.xlu0.b32.cont [14/16] %v3473, 128
    %3944 = vxpose.xlu0.b32.cont [15/16] %v3474, 128
    %3945 = vxpose.xlu0.b32.end [16/16] %v3475, 128
    %v3946 = vpop.trf.xlu0
    %v3947 = vpop.trf.xlu0
    %v3948 = vpop.trf.xlu0
    %v3949 = vpop.trf.xlu0
    %v3950 = vpop.trf.xlu0
    %v3951 = vpop.trf.xlu0
    %v3952 = vpop.trf.xlu0
    %v3953 = vpop.trf.xlu0
    %v3954 = vpop.trf.xlu0
    %v3955 = vpop.trf.xlu0
    %v3956 = vpop.trf.xlu0
    %v3957 = vpop.trf.xlu0
    %v3958 = vpop.trf.xlu0
    %v3959 = vpop.trf.xlu0
    %v3960 = vpop.trf.xlu0
    %v3961 = vpop.trf.xlu0
    %3962 = vxpose.xlu0.b32.start [1/16] %v3476, 128
    %3963 = vxpose.xlu0.b32.cont [2/16] %v3477, 128
    %3964 = vxpose.xlu0.b32.cont [3/16] %v3478, 128
    %3965 = vxpose.xlu0.b32.cont [4/16] %v3479, 128
    %3966 = vxpose.xlu0.b32.cont [5/16] %v3480, 128
    %3967 = vxpose.xlu0.b32.cont [6/16] %v3481, 128
    %3968 = vxpose.xlu0.b32.cont [7/16] %v3482, 128
    %3969 = vxpose.xlu0.b32.cont [8/16] %v3483, 128
    %3970 = vxpose.xlu0.b32.cont [9/16] %v3484, 128
    %3971 = vxpose.xlu0.b32.cont [10/16] %v3485, 128
    %3972 = vxpose.xlu0.b32.cont [11/16] %v3486, 128
    %3973 = vxpose.xlu0.b32.cont [12/16] %v3487, 128
    %3974 = vxpose.xlu0.b32.cont [13/16] %v3488, 128
    %3975 = vxpose.xlu0.b32.cont [14/16] %v3489, 128
    %3976 = vxpose.xlu0.b32.cont [15/16] %v3490, 128
    %3977 = vxpose.xlu0.b32.end [16/16] %v3491, 128
    %v3978 = vpop.trf.xlu0
    %v3979 = vpop.trf.xlu0
    %v3980 = vpop.trf.xlu0
    %v3981 = vpop.trf.xlu0
    %v3982 = vpop.trf.xlu0
    %v3983 = vpop.trf.xlu0
    %v3984 = vpop.trf.xlu0
    %v3985 = vpop.trf.xlu0
    %v3986 = vpop.trf.xlu0
    %v3987 = vpop.trf.xlu0
    %v3988 = vpop.trf.xlu0
    %v3989 = vpop.trf.xlu0
    %v3990 = vpop.trf.xlu0
    %v3991 = vpop.trf.xlu0
    %v3992 = vpop.trf.xlu0
    %v3993 = vpop.trf.xlu0
    %3994 = vxpose.xlu0.b32.start [1/16] %v3492, 128
    %3995 = vxpose.xlu0.b32.cont [2/16] %v3493, 128
    %3996 = vxpose.xlu0.b32.cont [3/16] %v3494, 128
    %3997 = vxpose.xlu0.b32.cont [4/16] %v3495, 128
    %3998 = vxpose.xlu0.b32.cont [5/16] %v3496, 128
    %3999 = vxpose.xlu0.b32.cont [6/16] %v3497, 128
    %4000 = vxpose.xlu0.b32.cont [7/16] %v3498, 128
    %4001 = vxpose.xlu0.b32.cont [8/16] %v3499, 128
    %4002 = vxpose.xlu0.b32.cont [9/16] %v3500, 128
    %4003 = vxpose.xlu0.b32.cont [10/16] %v3501, 128
    %4004 = vxpose.xlu0.b32.cont [11/16] %v3502, 128
    %4005 = vxpose.xlu0.b32.cont [12/16] %v3503, 128
    %4006 = vxpose.xlu0.b32.cont [13/16] %v3504, 128
    %4007 = vxpose.xlu0.b32.cont [14/16] %v3505, 128
    %4008 = vxpose.xlu0.b32.cont [15/16] %v3506, 128
    %4009 = vxpose.xlu0.b32.end [16/16] %v3507, 128
    %v4010 = vpop.trf.xlu0
    %v4011 = vpop.trf.xlu0
    %v4012 = vpop.trf.xlu0
    %v4013 = vpop.trf.xlu0
    %v4014 = vpop.trf.xlu0
    %v4015 = vpop.trf.xlu0
    %v4016 = vpop.trf.xlu0
    %v4017 = vpop.trf.xlu0
    %v4018 = vpop.trf.xlu0
    %v4019 = vpop.trf.xlu0
    %v4020 = vpop.trf.xlu0
    %v4021 = vpop.trf.xlu0
    %v4022 = vpop.trf.xlu0
    %v4023 = vpop.trf.xlu0
    %v4024 = vpop.trf.xlu0
    %v4025 = vpop.trf.xlu0
    %4026 = vmatprep.subr.mxu0 0.0
    %4027 = vmatpush1.msra.mxu0 %v2995
    %4028 = vmatprep.subr.mxu0 0.0
    %4029 = vmatpush1.msra.mxu0 %v2996
    %4030 = vmatprep.subr.mxu0 0.0
    %4031 = vmatpush1.msra.mxu0 %v2997
    %4032 = vmatprep.subr.mxu0 0.0
    %4033 = vmatpush1.msra.mxu0 %v2998
    %4034 = vmatprep.subr.mxu0 0.0
    %4035 = vmatpush1.msra.mxu0 %v2999
    %4036 = vmatprep.subr.mxu0 0.0
    %4037 = vmatpush1.msra.mxu0 %v3000
    %4038 = vmatprep.subr.mxu0 0.0
    %4039 = vmatpush1.msra.mxu0 %v3001
    %4040 = vmatprep.subr.mxu0 0.0
    %4041 = vmatpush1.msra.mxu0 %v3002
    %4042 = vmatprep.subr.mxu0 0.0
    %4043 = vmatpush1.msra.mxu0 %v3003
    %4044 = vmatprep.subr.mxu0 0.0
    %4045 = vmatpush1.msra.mxu0 %v3004
    %4046 = vmatprep.subr.mxu0 0.0
    %4047 = vmatpush1.msra.mxu0 %v3005
    %4048 = vmatprep.subr.mxu0 0.0
    %4049 = vmatpush1.msra.mxu0 %v3006
    %4050 = vmatprep.subr.mxu0 0.0
    %4051 = vmatpush1.msra.mxu0 %v3007
    %4052 = vmatprep.subr.mxu0 0.0
    %4053 = vmatpush1.msra.mxu0 %v3008
    %4054 = vmatprep.subr.mxu0 0.0
    %4055 = vmatpush1.msra.mxu0 %v3009
    %4056 = vmatprep.subr.mxu0 0.0
    %4057 = vmatpush1.msra.mxu0 %v3010
    %4058 = vmatprep.subr.mxu0 0.0
    %4059 = vmatpush1.msra.mxu0 %v3011
    %4060 = vmatprep.subr.mxu0 0.0
    %4061 = vmatpush1.msra.mxu0 %v3012
    %4062 = vmatprep.subr.mxu0 0.0
    %4063 = vmatpush1.msra.mxu0 %v3013
    %4064 = vmatprep.subr.mxu0 0.0
    %4065 = vmatpush1.msra.mxu0 %v3014
    %4066 = vmatprep.subr.mxu0 0.0
    %4067 = vmatpush1.msra.mxu0 %v3015
    %4068 = vmatprep.subr.mxu0 0.0
    %4069 = vmatpush1.msra.mxu0 %v3016
    %4070 = vmatprep.subr.mxu0 0.0
    %4071 = vmatpush1.msra.mxu0 %v3017
    %4072 = vmatprep.subr.mxu0 0.0
    %4073 = vmatpush1.msra.mxu0 %v3018
    %4074 = vmatprep.subr.mxu0 0.0
    %4075 = vmatpush1.msra.mxu0 %v3019
    %4076 = vmatprep.subr.mxu0 0.0
    %4077 = vmatpush1.msra.mxu0 %v3020
    %4078 = vmatprep.subr.mxu0 0.0
    %4079 = vmatpush1.msra.mxu0 %v3021
    %4080 = vmatprep.subr.mxu0 0.0
    %4081 = vmatpush1.msra.mxu0 %v3022
    %4082 = vmatprep.subr.mxu0 0.0
    %4083 = vmatpush1.msra.mxu0 %v3023
    %4084 = vmatprep.subr.mxu0 0.0
    %4085 = vmatpush1.msra.mxu0 %v3024
    %4086 = vmatprep.subr.mxu0 0.0
    %4087 = vmatpush1.msra.mxu0 %v3025
    %4088 = vmatprep.subr.mxu0 0.0
    %4089 = vmatpush1.msra.mxu0 %v3026
    %4090 = vmatprep.mubr.f32.mxu0 %v3562
    %4091 = vmatmul.mubr.f32.gmra.mrb[0].mxu0 %v3530
    %v4092 = vpop.f32.mrb[0].mxu0
    %v4093 = vadd.f32 %v3512, %v4092
    %v4094 = vpop.f32.mrb[0].mxu0
    %4095 = vmatprep.mubr.f32.mxu0 %v3563
    %4096 = vmatmul.mubr.f32.gmra.mrb[0].mxu0 %v3531
    %v4097 = vpop.f32.mrb[0].mxu0
    %v4098 = vadd.f32 %v3512, %v4097
    %v4099 = vpop.f32.mrb[0].mxu0
    %4100 = vdwg.mxu0
    %4101 = vmatprep.subr.mxu0 0.0
    %4102 = vmatpush1.msra.mxu0 %v3027
    %4103 = vmatprep.subr.mxu0 0.0
    %4104 = vmatpush1.msra.mxu0 %v3028
    %4105 = vmatprep.subr.mxu0 0.0
    %4106 = vmatpush1.msra.mxu0 %v3029
    %4107 = vmatprep.subr.mxu0 0.0
    %4108 = vmatpush1.msra.mxu0 %v3030
    %4109 = vmatprep.subr.mxu0 0.0
    %4110 = vmatpush1.msra.mxu0 %v3031
    %4111 = vmatprep.subr.mxu0 0.0
    %4112 = vmatpush1.msra.mxu0 %v3032
    %4113 = vmatprep.subr.mxu0 0.0
    %4114 = vmatpush1.msra.mxu0 %v3033
    %4115 = vmatprep.subr.mxu0 0.0
    %4116 = vmatpush1.msra.mxu0 %v3034
    %4117 = vmatprep.subr.mxu0 0.0
    %4118 = vmatpush1.msra.mxu0 %v3035
    %4119 = vmatprep.subr.mxu0 0.0
    %4120 = vmatpush1.msra.mxu0 %v3036
    %4121 = vmatprep.subr.mxu0 0.0
    %4122 = vmatpush1.msra.mxu0 %v3037
    %4123 = vmatprep.subr.mxu0 0.0
    %4124 = vmatpush1.msra.mxu0 %v3038
    %4125 = vmatprep.subr.mxu0 0.0
    %4126 = vmatpush1.msra.mxu0 %v3039
    %4127 = vmatprep.subr.mxu0 0.0
    %4128 = vmatpush1.msra.mxu0 %v3040
    %4129 = vmatprep.subr.mxu0 0.0
    %4130 = vmatpush1.msra.mxu0 %v3041
    %4131 = vmatprep.subr.mxu0 0.0
    %4132 = vmatpush1.msra.mxu0 %v3042
    %4133 = vmatprep.subr.mxu0 0.0
    %4134 = vmatpush1.msra.mxu0 %v3043
    %4135 = vmatprep.subr.mxu0 0.0
    %4136 = vmatpush1.msra.mxu0 %v3044
    %4137 = vmatprep.subr.mxu0 0.0
    %4138 = vmatpush1.msra.mxu0 %v3045
    %4139 = vmatprep.subr.mxu0 0.0
    %4140 = vmatpush1.msra.mxu0 %v3046
    %4141 = vmatprep.subr.mxu0 0.0
    %4142 = vmatpush1.msra.mxu0 %v3047
    %4143 = vmatprep.subr.mxu0 0.0
    %4144 = vmatpush1.msra.mxu0 %v3048
    %4145 = vmatprep.subr.mxu0 0.0
    %4146 = vmatpush1.msra.mxu0 %v3049
    %4147 = vmatprep.subr.mxu0 0.0
    %4148 = vmatpush1.msra.mxu0 %v3050
    %4149 = vmatprep.subr.mxu0 0.0
    %4150 = vmatpush1.msra.mxu0 %v3051
    %4151 = vmatprep.subr.mxu0 0.0
    %4152 = vmatpush1.msra.mxu0 %v3052
    %4153 = vmatprep.subr.mxu0 0.0
    %4154 = vmatpush1.msra.mxu0 %v3053
    %4155 = vmatprep.subr.mxu0 0.0
    %4156 = vmatpush1.msra.mxu0 %v3054
    %4157 = vmatprep.subr.mxu0 0.0
    %4158 = vmatpush1.msra.mxu0 %v3055
    %4159 = vmatprep.subr.mxu0 0.0
    %4160 = vmatpush1.msra.mxu0 %v3056
    %4161 = vmatprep.subr.mxu0 0.0
    %4162 = vmatpush1.msra.mxu0 %v3057
    %4163 = vmatprep.subr.mxu0 0.0
    %4164 = vmatpush1.msra.mxu0 %v3058
    %4165 = vmatprep.mubr.f32.mxu0 %v3626
    %4166 = vmatmul.mubr.f32.gmra.mrb[0].mxu0 %v3594
    %v4167 = vpop.f32.mrb[0].mxu0
    %v4168 = vadd.f32 %v4093, %v4167
    %v4169 = vpop.f32.mrb[0].mxu0
    %4170 = vmatprep.mubr.f32.mxu0 %v3627
    %4171 = vmatmul.mubr.f32.gmra.mrb[0].mxu0 %v3595
    %v4172 = vpop.f32.mrb[0].mxu0
    %v4173 = vadd.f32 %v4098, %v4172
    %v4174 = vpop.f32.mrb[0].mxu0
    %4175 = vdwg.mxu0
    %4176 = vmatprep.subr.mxu0 0.0
    %4177 = vmatpush1.msra.mxu0 %v3059
    %4178 = vmatprep.subr.mxu0 0.0
    %4179 = vmatpush1.msra.mxu0 %v3060
    %4180 = vmatprep.subr.mxu0 0.0
    %4181 = vmatpush1.msra.mxu0 %v3061
    %4182 = vmatprep.subr.mxu0 0.0
    %4183 = vmatpush1.msra.mxu0 %v3062
    %4184 = vmatprep.subr.mxu0 0.0
    %4185 = vmatpush1.msra.mxu0 %v3063
    %4186 = vmatprep.subr.mxu0 0.0
    %4187 = vmatpush1.msra.mxu0 %v3064
    %4188 = vmatprep.subr.mxu0 0.0
    %4189 = vmatpush1.msra.mxu0 %v3065
    %4190 = vmatprep.subr.mxu0 0.0
    %4191 = vmatpush1.msra.mxu0 %v3066
    %4192 = vmatprep.subr.mxu0 0.0
    %4193 = vmatpush1.msra.mxu0 %v3067
    %4194 = vmatprep.subr.mxu0 0.0
    %4195 = vmatpush1.msra.mxu0 %v3068
    %4196 = vmatprep.subr.mxu0 0.0
    %4197 = vmatpush1.msra.mxu0 %v3069
    %4198 = vmatprep.subr.mxu0 0.0
    %4199 = vmatpush1.msra.mxu0 %v3070
    %4200 = vmatprep.subr.mxu0 0.0
    %4201 = vmatpush1.msra.mxu0 %v3071
    %4202 = vmatprep.subr.mxu0 0.0
    %4203 = vmatpush1.msra.mxu0 %v3072
    %4204 = vmatprep.subr.mxu0 0.0
    %4205 = vmatpush1.msra.mxu0 %v3073
    %4206 = vmatprep.subr.mxu0 0.0
    %4207 = vmatpush1.msra.mxu0 %v3074
    %4208 = vmatprep.subr.mxu0 0.0
    %4209 = vmatpush1.msra.mxu0 %v3075
    %4210 = vmatprep.subr.mxu0 0.0
    %4211 = vmatpush1.msra.mxu0 %v3076
    %4212 = vmatprep.subr.mxu0 0.0
    %4213 = vmatpush1.msra.mxu0 %v3077
    %4214 = vmatprep.subr.mxu0 0.0
    %4215 = vmatpush1.msra.mxu0 %v3078
    %4216 = vmatprep.subr.mxu0 0.0
    %4217 = vmatpush1.msra.mxu0 %v3079
    %4218 = vmatprep.subr.mxu0 0.0
    %4219 = vmatpush1.msra.mxu0 %v3080
    %4220 = vmatprep.subr.mxu0 0.0
    %4221 = vmatpush1.msra.mxu0 %v3081
    %4222 = vmatprep.subr.mxu0 0.0
    %4223 = vmatpush1.msra.mxu0 %v3082
    %4224 = vmatprep.subr.mxu0 0.0
    %4225 = vmatpush1.msra.mxu0 %v3083
    %4226 = vmatprep.subr.mxu0 0.0
    %4227 = vmatpush1.msra.mxu0 %v3084
    %4228 = vmatprep.subr.mxu0 0.0
    %4229 = vmatpush1.msra.mxu0 %v3085
    %4230 = vmatprep.subr.mxu0 0.0
    %4231 = vmatpush1.msra.mxu0 %v3086
    %4232 = vmatprep.subr.mxu0 0.0
    %4233 = vmatpush1.msra.mxu0 %v3087
    %4234 = vmatprep.subr.mxu0 0.0
    %4235 = vmatpush1.msra.mxu0 %v3088
    %4236 = vmatprep.subr.mxu0 0.0
    %4237 = vmatpush1.msra.mxu0 %v3089
    %4238 = vmatprep.subr.mxu0 0.0
    %4239 = vmatpush1.msra.mxu0 %v3090
    %4240 = vmatprep.mubr.f32.mxu0 %v3690
    %4241 = vmatmul.mubr.f32.gmra.mrb[0].mxu0 %v3658
    %v4242 = vpop.f32.mrb[0].mxu0
    %v4243 = vadd.f32 %v4168, %v4242
    %v4244 = vpop.f32.mrb[0].mxu0
    %4245 = vmatprep.mubr.f32.mxu0 %v3691
    %4246 = vmatmul.mubr.f32.gmra.mrb[0].mxu0 %v3659
    %v4247 = vpop.f32.mrb[0].mxu0
    %v4248 = vadd.f32 %v4173, %v4247
    %v4249 = vpop.f32.mrb[0].mxu0
    %4250 = vdwg.mxu0
    %4251 = vmatprep.subr.mxu0 0.0
    %4252 = vmatpush1.msra.mxu0 %v3091
    %4253 = vmatprep.subr.mxu0 0.0
    %4254 = vmatpush1.msra.mxu0 %v3092
    %4255 = vmatprep.subr.mxu0 0.0
    %4256 = vmatpush1.msra.mxu0 %v3093
    %4257 = vmatprep.subr.mxu0 0.0
    %4258 = vmatpush1.msra.mxu0 %v3094
    %4259 = vmatprep.subr.mxu0 0.0
    %4260 = vmatpush1.msra.mxu0 %v3095
    %4261 = vmatprep.subr.mxu0 0.0
    %4262 = vmatpush1.msra.mxu0 %v3096
    %4263 = vmatprep.subr.mxu0 0.0
    %4264 = vmatpush1.msra.mxu0 %v3097
    %4265 = vmatprep.subr.mxu0 0.0
    %4266 = vmatpush1.msra.mxu0 %v3098
    %4267 = vmatprep.subr.mxu0 0.0
    %4268 = vmatpush1.msra.mxu0 %v3099
    %4269 = vmatprep.subr.mxu0 0.0
    %4270 = vmatpush1.msra.mxu0 %v3100
    %4271 = vmatprep.subr.mxu0 0.0
    %4272 = vmatpush1.msra.mxu0 %v3101
    %4273 = vmatprep.subr.mxu0 0.0
    %4274 = vmatpush1.msra.mxu0 %v3102
    %4275 = vmatprep.subr.mxu0 0.0
    %4276 = vmatpush1.msra.mxu0 %v3103
    %4277 = vmatprep.subr.mxu0 0.0
    %4278 = vmatpush1.msra.mxu0 %v3104
    %4279 = vmatprep.subr.mxu0 0.0
    %4280 = vmatpush1.msra.mxu0 %v3105
    %4281 = vmatprep.subr.mxu0 0.0
    %4282 = vmatpush1.msra.mxu0 %v3106
    %4283 = vmatprep.subr.mxu0 0.0
    %4284 = vmatpush1.msra.mxu0 %v3107
    %4285 = vmatprep.subr.mxu0 0.0
    %4286 = vmatpush1.msra.mxu0 %v3108
    %4287 = vmatprep.subr.mxu0 0.0
    %4288 = vmatpush1.msra.mxu0 %v3109
    %4289 = vmatprep.subr.mxu0 0.0
    %4290 = vmatpush1.msra.mxu0 %v3110
    %4291 = vmatprep.subr.mxu0 0.0
    %4292 = vmatpush1.msra.mxu0 %v3111
    %4293 = vmatprep.subr.mxu0 0.0
    %4294 = vmatpush1.msra.mxu0 %v3112
    %4295 = vmatprep.subr.mxu0 0.0
    %4296 = vmatpush1.msra.mxu0 %v3113
    %4297 = vmatprep.subr.mxu0 0.0
    %4298 = vmatpush1.msra.mxu0 %v3114
    %4299 = vmatprep.subr.mxu0 0.0
    %4300 = vmatpush1.msra.mxu0 %v3115
    %4301 = vmatprep.subr.mxu0 0.0
    %4302 = vmatpush1.msra.mxu0 %v3116
    %4303 = vmatprep.subr.mxu0 0.0
    %4304 = vmatpush1.msra.mxu0 %v3117
    %4305 = vmatprep.subr.mxu0 0.0
    %4306 = vmatpush1.msra.mxu0 %v3118
    %4307 = vmatprep.subr.mxu0 0.0
    %4308 = vmatpush1.msra.mxu0 %v3119
    %4309 = vmatprep.subr.mxu0 0.0
    %4310 = vmatpush1.msra.mxu0 %v3120
    %4311 = vmatprep.subr.mxu0 0.0
    %4312 = vmatpush1.msra.mxu0 %v3121
    %4313 = vmatprep.subr.mxu0 0.0
    %4314 = vmatpush1.msra.mxu0 %v3122
    %4315 = vmatprep.mubr.f32.mxu0 %v3754
    %4316 = vmatmul.mubr.f32.gmra.mrb[0].mxu0 %v3722
    %v4317 = vpop.f32.mrb[0].mxu0
    %v4318 = vadd.f32 %v4243, %v4317
    %v4319 = vpop.f32.mrb[0].mxu0
    %4320 = vmatprep.mubr.f32.mxu0 %v3755
    %4321 = vmatmul.mubr.f32.gmra.mrb[0].mxu0 %v3723
    %v4322 = vpop.f32.mrb[0].mxu0
    %v4323 = vadd.f32 %v4248, %v4322
    %v4324 = vpop.f32.mrb[0].mxu0
    %4325 = vdwg.mxu0
    %4326 = vmatprep.subr.mxu0 0.0
    %4327 = vmatpush1.msra.mxu0 %v3123
    %4328 = vmatprep.subr.mxu0 0.0
    %4329 = vmatpush1.msra.mxu0 %v3124
    %4330 = vmatprep.subr.mxu0 0.0
    %4331 = vmatpush1.msra.mxu0 %v3125
    %4332 = vmatprep.subr.mxu0 0.0
    %4333 = vmatpush1.msra.mxu0 %v3126
    %4334 = vmatprep.subr.mxu0 0.0
    %4335 = vmatpush1.msra.mxu0 %v3127
    %4336 = vmatprep.subr.mxu0 0.0
    %4337 = vmatpush1.msra.mxu0 %v3128
    %4338 = vmatprep.subr.mxu0 0.0
    %4339 = vmatpush1.msra.mxu0 %v3129
    %4340 = vmatprep.subr.mxu0 0.0
    %4341 = vmatpush1.msra.mxu0 %v3130
    %4342 = vmatprep.subr.mxu0 0.0
    %4343 = vmatpush1.msra.mxu0 %v3131
    %4344 = vmatprep.subr.mxu0 0.0
    %4345 = vmatpush1.msra.mxu0 %v3132
    %4346 = vmatprep.subr.mxu0 0.0
    %4347 = vmatpush1.msra.mxu0 %v3133
    %4348 = vmatprep.subr.mxu0 0.0
    %4349 = vmatpush1.msra.mxu0 %v3134
    %4350 = vmatprep.subr.mxu0 0.0
    %4351 = vmatpush1.msra.mxu0 %v3135
    %4352 = vmatprep.subr.mxu0 0.0
    %4353 = vmatpush1.msra.mxu0 %v3136
    %4354 = vmatprep.subr.mxu0 0.0
    %4355 = vmatpush1.msra.mxu0 %v3137
    %4356 = vmatprep.subr.mxu0 0.0
    %4357 = vmatpush1.msra.mxu0 %v3138
    %4358 = vmatprep.subr.mxu0 0.0
    %4359 = vmatpush1.msra.mxu0 %v3139
    %4360 = vmatprep.subr.mxu0 0.0
    %4361 = vmatpush1.msra.mxu0 %v3140
    %4362 = vmatprep.subr.mxu0 0.0
    %4363 = vmatpush1.msra.mxu0 %v3141
    %4364 = vmatprep.subr.mxu0 0.0
    %4365 = vmatpush1.msra.mxu0 %v3142
    %4366 = vmatprep.subr.mxu0 0.0
    %4367 = vmatpush1.msra.mxu0 %v3143
    %4368 = vmatprep.subr.mxu0 0.0
    %4369 = vmatpush1.msra.mxu0 %v3144
    %4370 = vmatprep.subr.mxu0 0.0
    %4371 = vmatpush1.msra.mxu0 %v3145
    %4372 = vmatprep.subr.mxu0 0.0
    %4373 = vmatpush1.msra.mxu0 %v3146
    %4374 = vmatprep.subr.mxu0 0.0
    %4375 = vmatpush1.msra.mxu0 %v3147
    %4376 = vmatprep.subr.mxu0 0.0
    %4377 = vmatpush1.msra.mxu0 %v3148
    %4378 = vmatprep.subr.mxu0 0.0
    %4379 = vmatpush1.msra.mxu0 %v3149
    %4380 = vmatprep.subr.mxu0 0.0
    %4381 = vmatpush1.msra.mxu0 %v3150
    %4382 = vmatprep.subr.mxu0 0.0
    %4383 = vmatpush1.msra.mxu0 %v3151
    %4384 = vmatprep.subr.mxu0 0.0
    %4385 = vmatpush1.msra.mxu0 %v3152
    %4386 = vmatprep.subr.mxu0 0.0
    %4387 = vmatpush1.msra.mxu0 %v3153
    %4388 = vmatprep.subr.mxu0 0.0
    %4389 = vmatpush1.msra.mxu0 %v3154
    %4390 = vmatprep.mubr.f32.mxu0 %v3818
    %4391 = vmatmul.mubr.f32.gmra.mrb[0].mxu0 %v3786
    %v4392 = vpop.f32.mrb[0].mxu0
    %v4393 = vadd.f32 %v4318, %v4392
    %v4394 = vpop.f32.mrb[0].mxu0
    %4395 = vmatprep.mubr.f32.mxu0 %v3819
    %4396 = vmatmul.mubr.f32.gmra.mrb[0].mxu0 %v3787
    %v4397 = vpop.f32.mrb[0].mxu0
    %v4398 = vadd.f32 %v4323, %v4397
    %v4399 = vpop.f32.mrb[0].mxu0
    %4400 = vdwg.mxu0
    %4401 = vmatprep.subr.mxu0 0.0
    %4402 = vmatpush1.msra.mxu0 %v3155
    %4403 = vmatprep.subr.mxu0 0.0
    %4404 = vmatpush1.msra.mxu0 %v3156
    %4405 = vmatprep.subr.mxu0 0.0
    %4406 = vmatpush1.msra.mxu0 %v3157
    %4407 = vmatprep.subr.mxu0 0.0
    %4408 = vmatpush1.msra.mxu0 %v3158
    %4409 = vmatprep.subr.mxu0 0.0
    %4410 = vmatpush1.msra.mxu0 %v3159
    %4411 = vmatprep.subr.mxu0 0.0
    %4412 = vmatpush1.msra.mxu0 %v3160
    %4413 = vmatprep.subr.mxu0 0.0
    %4414 = vmatpush1.msra.mxu0 %v3161
    %4415 = vmatprep.subr.mxu0 0.0
    %4416 = vmatpush1.msra.mxu0 %v3162
    %4417 = vmatprep.subr.mxu0 0.0
    %4418 = vmatpush1.msra.mxu0 %v3163
    %4419 = vmatprep.subr.mxu0 0.0
    %4420 = vmatpush1.msra.mxu0 %v3164
    %4421 = vmatprep.subr.mxu0 0.0
    %4422 = vmatpush1.msra.mxu0 %v3165
    %4423 = vmatprep.subr.mxu0 0.0
    %4424 = vmatpush1.msra.mxu0 %v3166
    %4425 = vmatprep.subr.mxu0 0.0
    %4426 = vmatpush1.msra.mxu0 %v3167
    %4427 = vmatprep.subr.mxu0 0.0
    %4428 = vmatpush1.msra.mxu0 %v3168
    %4429 = vmatprep.subr.mxu0 0.0
    %4430 = vmatpush1.msra.mxu0 %v3169
    %4431 = vmatprep.subr.mxu0 0.0
    %4432 = vmatpush1.msra.mxu0 %v3170
    %4433 = vmatprep.subr.mxu0 0.0
    %4434 = vmatpush1.msra.mxu0 %v3171
    %4435 = vmatprep.subr.mxu0 0.0
    %4436 = vmatpush1.msra.mxu0 %v3172
    %4437 = vmatprep.subr.mxu0 0.0
    %4438 = vmatpush1.msra.mxu0 %v3173
    %4439 = vmatprep.subr.mxu0 0.0
    %4440 = vmatpush1.msra.mxu0 %v3174
    %4441 = vmatprep.subr.mxu0 0.0
    %4442 = vmatpush1.msra.mxu0 %v3175
    %4443 = vmatprep.subr.mxu0 0.0
    %4444 = vmatpush1.msra.mxu0 %v3176
    %4445 = vmatprep.subr.mxu0 0.0
    %4446 = vmatpush1.msra.mxu0 %v3177
    %4447 = vmatprep.subr.mxu0 0.0
    %4448 = vmatpush1.msra.mxu0 %v3178
    %4449 = vmatprep.subr.mxu0 0.0
    %4450 = vmatpush1.msra.mxu0 %v3179
    %4451 = vmatprep.subr.mxu0 0.0
    %4452 = vmatpush1.msra.mxu0 %v3180
    %4453 = vmatprep.subr.mxu0 0.0
    %4454 = vmatpush1.msra.mxu0 %v3181
    %4455 = vmatprep.subr.mxu0 0.0
    %4456 = vmatpush1.msra.mxu0 %v3182
    %4457 = vmatprep.subr.mxu0 0.0
    %4458 = vmatpush1.msra.mxu0 %v3183
    %4459 = vmatprep.subr.mxu0 0.0
    %4460 = vmatpush1.msra.mxu0 %v3184
    %4461 = vmatprep.subr.mxu0 0.0
    %4462 = vmatpush1.msra.mxu0 %v3185
    %4463 = vmatprep.subr.mxu0 0.0
    %4464 = vmatpush1.msra.mxu0 %v3186
    %4465 = vmatprep.mubr.f32.mxu0 %v3882
    %4466 = vmatmul.mubr.f32.gmra.mrb[0].mxu0 %v3850
    %v4467 = vpop.f32.mrb[0].mxu0
    %v4468 = vadd.f32 %v4393, %v4467
    %v4469 = vpop.f32.mrb[0].mxu0
    %4470 = vmatprep.mubr.f32.mxu0 %v3883
    %4471 = vmatmul.mubr.f32.gmra.mrb[0].mxu0 %v3851
    %v4472 = vpop.f32.mrb[0].mxu0
    %v4473 = vadd.f32 %v4398, %v4472
    %v4474 = vpop.f32.mrb[0].mxu0
    %4475 = vdwg.mxu0
    %4476 = vmatprep.subr.mxu0 0.0
    %4477 = vmatpush1.msra.mxu0 %v3187
    %4478 = vmatprep.subr.mxu0 0.0
    %4479 = vmatpush1.msra.mxu0 %v3188
    %4480 = vmatprep.subr.mxu0 0.0
    %4481 = vmatpush1.msra.mxu0 %v3189
    %4482 = vmatprep.subr.mxu0 0.0
    %4483 = vmatpush1.msra.mxu0 %v3190
    %4484 = vmatprep.subr.mxu0 0.0
    %4485 = vmatpush1.msra.mxu0 %v3191
    %4486 = vmatprep.subr.mxu0 0.0
    %4487 = vmatpush1.msra.mxu0 %v3192
    %4488 = vmatprep.subr.mxu0 0.0
    %4489 = vmatpush1.msra.mxu0 %v3193
    %4490 = vmatprep.subr.mxu0 0.0
    %4491 = vmatpush1.msra.mxu0 %v3194
    %4492 = vmatprep.subr.mxu0 0.0
    %4493 = vmatpush1.msra.mxu0 %v3195
    %4494 = vmatprep.subr.mxu0 0.0
    %4495 = vmatpush1.msra.mxu0 %v3196
    %4496 = vmatprep.subr.mxu0 0.0
    %4497 = vmatpush1.msra.mxu0 %v3197
    %4498 = vmatprep.subr.mxu0 0.0
    %4499 = vmatpush1.msra.mxu0 %v3198
    %4500 = vmatprep.subr.mxu0 0.0
    %4501 = vmatpush1.msra.mxu0 %v3199
    %4502 = vmatprep.subr.mxu0 0.0
    %4503 = vmatpush1.msra.mxu0 %v3200
    %4504 = vmatprep.subr.mxu0 0.0
    %4505 = vmatpush1.msra.mxu0 %v3201
    %4506 = vmatprep.subr.mxu0 0.0
    %4507 = vmatpush1.msra.mxu0 %v3202
    %4508 = vmatprep.subr.mxu0 0.0
    %4509 = vmatpush1.msra.mxu0 %v3203
    %4510 = vmatprep.subr.mxu0 0.0
    %4511 = vmatpush1.msra.mxu0 %v3204
    %4512 = vmatprep.subr.mxu0 0.0
    %4513 = vmatpush1.msra.mxu0 %v3205
    %4514 = vmatprep.subr.mxu0 0.0
    %4515 = vmatpush1.msra.mxu0 %v3206
    %4516 = vmatprep.subr.mxu0 0.0
    %4517 = vmatpush1.msra.mxu0 %v3207
    %4518 = vmatprep.subr.mxu0 0.0
    %4519 = vmatpush1.msra.mxu0 %v3208
    %4520 = vmatprep.subr.mxu0 0.0
    %4521 = vmatpush1.msra.mxu0 %v3209
    %4522 = vmatprep.subr.mxu0 0.0
    %4523 = vmatpush1.msra.mxu0 %v3210
    %4524 = vmatprep.subr.mxu0 0.0
    %4525 = vmatpush1.msra.mxu0 %v3211
    %4526 = vmatprep.subr.mxu0 0.0
    %4527 = vmatpush1.msra.mxu0 %v3212
    %4528 = vmatprep.subr.mxu0 0.0
    %4529 = vmatpush1.msra.mxu0 %v3213
    %4530 = vmatprep.subr.mxu0 0.0
    %4531 = vmatpush1.msra.mxu0 %v3214
    %4532 = vmatprep.subr.mxu0 0.0
    %4533 = vmatpush1.msra.mxu0 %v3215
    %4534 = vmatprep.subr.mxu0 0.0
    %4535 = vmatpush1.msra.mxu0 %v3216
    %4536 = vmatprep.subr.mxu0 0.0
    %4537 = vmatpush1.msra.mxu0 %v3217
    %4538 = vmatprep.subr.mxu0 0.0
    %4539 = vmatpush1.msra.mxu0 %v3218
    %4540 = vmatprep.mubr.f32.mxu0 %v3946
    %4541 = vmatmul.mubr.f32.gmra.mrb[0].mxu0 %v3914
    %v4542 = vpop.f32.mrb[0].mxu0
    %v4543 = vadd.f32 %v4468, %v4542
    %v4544 = vpop.f32.mrb[0].mxu0
    %4545 = vmatprep.mubr.f32.mxu0 %v3947
    %4546 = vmatmul.mubr.f32.gmra.mrb[0].mxu0 %v3915
    %v4547 = vpop.f32.mrb[0].mxu0
    %v4548 = vadd.f32 %v4473, %v4547
    %v4549 = vpop.f32.mrb[0].mxu0
    %4550 = vdwg.mxu0
    %4551 = vmatprep.subr.mxu0 0.0
    %4552 = vmatpush1.msra.mxu0 %v3219
    %4553 = vmatprep.subr.mxu0 0.0
    %4554 = vmatpush1.msra.mxu0 %v3220
    %4555 = vmatprep.subr.mxu0 0.0
    %4556 = vmatpush1.msra.mxu0 %v3221
    %4557 = vmatprep.subr.mxu0 0.0
    %4558 = vmatpush1.msra.mxu0 %v3222
    %4559 = vmatprep.subr.mxu0 0.0
    %4560 = vmatpush1.msra.mxu0 %v3223
    %4561 = vmatprep.subr.mxu0 0.0
    %4562 = vmatpush1.msra.mxu0 %v3224
    %4563 = vmatprep.subr.mxu0 0.0
    %4564 = vmatpush1.msra.mxu0 %v3225
    %4565 = vmatprep.subr.mxu0 0.0
    %4566 = vmatpush1.msra.mxu0 %v3226
    %4567 = vmatprep.subr.mxu0 0.0
    %4568 = vmatpush1.msra.mxu0 %v3227
    %4569 = vmatprep.subr.mxu0 0.0
    %4570 = vmatpush1.msra.mxu0 %v3228
    %4571 = vmatprep.subr.mxu0 0.0
    %4572 = vmatpush1.msra.mxu0 %v3229
    %4573 = vmatprep.subr.mxu0 0.0
    %4574 = vmatpush1.msra.mxu0 %v3230
    %4575 = vmatprep.subr.mxu0 0.0
    %4576 = vmatpush1.msra.mxu0 %v3231
    %4577 = vmatprep.subr.mxu0 0.0
    %4578 = vmatpush1.msra.mxu0 %v3232
    %4579 = vmatprep.subr.mxu0 0.0
    %4580 = vmatpush1.msra.mxu0 %v3233
    %4581 = vmatprep.subr.mxu0 0.0
    %4582 = vmatpush1.msra.mxu0 %v3234
    %4583 = vmatprep.subr.mxu0 0.0
    %4584 = vmatpush1.msra.mxu0 %v3235
    %4585 = vmatprep.subr.mxu0 0.0
    %4586 = vmatpush1.msra.mxu0 %v3236
    %4587 = vmatprep.subr.mxu0 0.0
    %4588 = vmatpush1.msra.mxu0 %v3237
    %4589 = vmatprep.subr.mxu0 0.0
    %4590 = vmatpush1.msra.mxu0 %v3238
    %4591 = vmatprep.subr.mxu0 0.0
    %4592 = vmatpush1.msra.mxu0 %v3239
    %4593 = vmatprep.subr.mxu0 0.0
    %4594 = vmatpush1.msra.mxu0 %v3240
    %4595 = vmatprep.subr.mxu0 0.0
    %4596 = vmatpush1.msra.mxu0 %v3241
    %4597 = vmatprep.subr.mxu0 0.0
    %4598 = vmatpush1.msra.mxu0 %v3242
    %4599 = vmatprep.subr.mxu0 0.0
    %4600 = vmatpush1.msra.mxu0 %v3243
    %4601 = vmatprep.subr.mxu0 0.0
    %4602 = vmatpush1.msra.mxu0 %v3244
    %4603 = vmatprep.subr.mxu0 0.0
    %4604 = vmatpush1.msra.mxu0 %v3245
    %4605 = vmatprep.subr.mxu0 0.0
    %4606 = vmatpush1.msra.mxu0 %v3246
    %4607 = vmatprep.subr.mxu0 0.0
    %4608 = vmatpush1.msra.mxu0 %v3247
    %4609 = vmatprep.subr.mxu0 0.0
    %4610 = vmatpush1.msra.mxu0 %v3248
    %4611 = vmatprep.subr.mxu0 0.0
    %4612 = vmatpush1.msra.mxu0 %v3249
    %4613 = vmatprep.subr.mxu0 0.0
    %4614 = vmatpush1.msra.mxu0 %v3250
    %4615 = vmatprep.mubr.f32.mxu0 %v4010
    %4616 = vmatmul.mubr.f32.gmra.mrb[0].mxu0 %v3978
    %v4617 = vpop.f32.mrb[0].mxu0
    %v4618 = vadd.f32 %v4543, %v4617
    %v4619 = vpop.f32.mrb[0].mxu0
    %4620 = vmatprep.mubr.f32.mxu0 %v4011
    %4621 = vmatmul.mubr.f32.gmra.mrb[0].mxu0 %v3979
    %v4622 = vpop.f32.mrb[0].mxu0
    %v4623 = vadd.f32 %v4548, %v4622
    %v4624 = vpop.f32.mrb[0].mxu0
    %4625 = vdwg.mxu0
    %v4626 = vadd.f32 %v4618, %v4623
    %v4627 = vrot.slane %v4626, 4
    %v4628 = vadd.f32 %v4626, %v4627
    %v4629 = vrot.slane %v4628, 2
    %v4630 = vadd.f32 %v4628, %v4629
    %v4631 = vrot.slane %v4630, 1
    %v4632 = vadd.f32 %v4630, %v4631
    %v4633 = vrcp.pop 16.0
    %v4634 = vmul.f32 %v4632, %v4633
    %v4635 = vmul.f32 %v4618, %v4618
    %v4636 = vmul.f32 %v4623, %v4623
    %4637 = vadd.xlane.f32.xlu0 %v4635
    %v4638 = vpop.xlane.xlu0 %4637
    %4639 = vadd.xlane.f32.xlu0 %v4636
    %v4640 = vpop.xlane.xlu0 %4639
    %v4641 = vmul.f32 %v4634, %v4634
    %4642 = vadd.xlane.f32.xlu0 %v4641
    %v4643 = vpop.xlane.xlu0 %4642
    %v4644 = vmax.f32 %v4638, 1e-24
    %v4645 = vmax.f32 %v4640, 1e-24
    %v4646 = vrsqrt.pop %v4644
    %v4647 = vrsqrt.pop %v4645
    %v4648 = vmul.f32 %v4618, %v4646
    %v4649 = vmul.f32 %v4623, %v4647
    %4650 = vst [vmem:[#allocation6] sm:$0xff] %v4648
    %4651 = vst [vmem:[#allocation6 + $0x8] sm:$0xff] %v4649
    %v4652 = vmax.f32 %v4643, 1e-24
    %v4653 = vrsqrt.pop %v4652
    %v4654 = vmul.f32 %v4634, %v4653
    %4655 = vst [vmem:[#allocation7] sm:$0x1] %v4654
    %s4656 = scalar_lea.vmem %s1, 2048
    %v4657 = vld [vmem:[%s4656] sm:$0xff]
    %v4658 = vld [vmem:[%s4656 + $0x8] sm:$0xff]
    %v4659 = vld [vmem:[%s4656 + $0x10] sm:$0xff]
    %v4660 = vld [vmem:[%s4656 + $0x18] sm:$0xff]
    %v4661 = vld [vmem:[%s4656 + $0x20] sm:$0xff]
    %v4662 = vld [vmem:[%s4656 + $0x28] sm:$0xff]
    %v4663 = vld [vmem:[%s4656 + $0x30] sm:$0xff]
    %v4664 = vld [vmem:[%s4656 + $0x38] sm:$0xff]
    %v4665 = vld [vmem:[%s4656 + $0x40] sm:$0xff]
    %v4666 = vld [vmem:[%s4656 + $0x48] sm:$0xff]
    %v4667 = vld [vmem:[%s4656 + $0x50] sm:$0xff]
    %v4668 = vld [vmem:[%s4656 + $0x58] sm:$0xff]
    %v4669 = vld [vmem:[%s4656 + $0x60] sm:$0xff]
    %v4670 = vld [vmem:[%s4656 + $0x68] sm:$0xff]
    %v4671 = vld [vmem:[%s4656 + $0x70] sm:$0xff]
    %v4672 = vld [vmem:[%s4656 + $0x78] sm:$0xff]
    %v4673 = vld [vmem:[%s4656 + $0x80] sm:$0xff]
    %v4674 = vld [vmem:[%s4656 + $0x88] sm:$0xff]
    %v4675 = vld [vmem:[%s4656 + $0x90] sm:$0xff]
    %v4676 = vld [vmem:[%s4656 + $0x98] sm:$0xff]
    %v4677 = vld [vmem:[%s4656 + $0xa0] sm:$0xff]
    %v4678 = vld [vmem:[%s4656 + $0xa8] sm:$0xff]
    %v4679 = vld [vmem:[%s4656 + $0xb0] sm:$0xff]
    %v4680 = vld [vmem:[%s4656 + $0xb8] sm:$0xff]
    %v4681 = vld [vmem:[%s4656 + $0xc0] sm:$0xff]
    %v4682 = vld [vmem:[%s4656 + $0xc8] sm:$0xff]
    %v4683 = vld [vmem:[%s4656 + $0xd0] sm:$0xff]
    %v4684 = vld [vmem:[%s4656 + $0xd8] sm:$0xff]
    %v4685 = vld [vmem:[%s4656 + $0xe0] sm:$0xff]
    %v4686 = vld [vmem:[%s4656 + $0xe8] sm:$0xff]
    %v4687 = vld [vmem:[%s4656 + $0xf0] sm:$0xff]
    %v4688 = vld [vmem:[%s4656 + $0xf8] sm:$0xff]
    %v4689 = vld [vmem:[%s4656 + $0x100] sm:$0xff]
    %v4690 = vld [vmem:[%s4656 + $0x108] sm:$0xff]
    %v4691 = vld [vmem:[%s4656 + $0x110] sm:$0xff]
    %v4692 = vld [vmem:[%s4656 + $0x118] sm:$0xff]
    %v4693 = vld [vmem:[%s4656 + $0x120] sm:$0xff]
    %v4694 = vld [vmem:[%s4656 + $0x128] sm:$0xff]
    %v4695 = vld [vmem:[%s4656 + $0x130] sm:$0xff]
    %v4696 = vld [vmem:[%s4656 + $0x138] sm:$0xff]
    %v4697 = vld [vmem:[%s4656 + $0x140] sm:$0xff]
    %v4698 = vld [vmem:[%s4656 + $0x148] sm:$0xff]
    %v4699 = vld [vmem:[%s4656 + $0x150] sm:$0xff]
    %v4700 = vld [vmem:[%s4656 + $0x158] sm:$0xff]
    %v4701 = vld [vmem:[%s4656 + $0x160] sm:$0xff]
    %v4702 = vld [vmem:[%s4656 + $0x168] sm:$0xff]
    %v4703 = vld [vmem:[%s4656 + $0x170] sm:$0xff]
    %v4704 = vld [vmem:[%s4656 + $0x178] sm:$0xff]
    %v4705 = vld [vmem:[%s4656 + $0x180] sm:$0xff]
    %v4706 = vld [vmem:[%s4656 + $0x188] sm:$0xff]
    %v4707 = vld [vmem:[%s4656 + $0x190] sm:$0xff]
    %v4708 = vld [vmem:[%s4656 + $0x198] sm:$0xff]
    %v4709 = vld [vmem:[%s4656 + $0x1a0] sm:$0xff]
    %v4710 = vld [vmem:[%s4656 + $0x1a8] sm:$0xff]
    %v4711 = vld [vmem:[%s4656 + $0x1b0] sm:$0xff]
    %v4712 = vld [vmem:[%s4656 + $0x1b8] sm:$0xff]
    %v4713 = vld [vmem:[%s4656 + $0x1c0] sm:$0xff]
    %v4714 = vld [vmem:[%s4656 + $0x1c8] sm:$0xff]
    %v4715 = vld [vmem:[%s4656 + $0x1d0] sm:$0xff]
    %v4716 = vld [vmem:[%s4656 + $0x1d8] sm:$0xff]
    %v4717 = vld [vmem:[%s4656 + $0x1e0] sm:$0xff]
    %v4718 = vld [vmem:[%s4656 + $0x1e8] sm:$0xff]
    %v4719 = vld [vmem:[%s4656 + $0x1f0] sm:$0xff]
    %v4720 = vld [vmem:[%s4656 + $0x1f8] sm:$0xff]
    %v4721 = vld [vmem:[%s4656 + $0x200] sm:$0xff]
    %v4722 = vld [vmem:[%s4656 + $0x208] sm:$0xff]
    %v4723 = vld [vmem:[%s4656 + $0x210] sm:$0xff]
    %v4724 = vld [vmem:[%s4656 + $0x218] sm:$0xff]
    %v4725 = vld [vmem:[%s4656 + $0x220] sm:$0xff]
    %v4726 = vld [vmem:[%s4656 + $0x228] sm:$0xff]
    %v4727 = vld [vmem:[%s4656 + $0x230] sm:$0xff]
    %v4728 = vld [vmem:[%s4656 + $0x238] sm:$0xff]
    %v4729 = vld [vmem:[%s4656 + $0x240] sm:$0xff]
    %v4730 = vld [vmem:[%s4656 + $0x248] sm:$0xff]
    %v4731 = vld [vmem:[%s4656 + $0x250] sm:$0xff]
    %v4732 = vld [vmem:[%s4656 + $0x258] sm:$0xff]
    %v4733 = vld [vmem:[%s4656 + $0x260] sm:$0xff]
    %v4734 = vld [vmem:[%s4656 + $0x268] sm:$0xff]
    %v4735 = vld [vmem:[%s4656 + $0x270] sm:$0xff]
    %v4736 = vld [vmem:[%s4656 + $0x278] sm:$0xff]
    %v4737 = vld [vmem:[%s4656 + $0x280] sm:$0xff]
    %v4738 = vld [vmem:[%s4656 + $0x288] sm:$0xff]
    %v4739 = vld [vmem:[%s4656 + $0x290] sm:$0xff]
    %v4740 = vld [vmem:[%s4656 + $0x298] sm:$0xff]
    %v4741 = vld [vmem:[%s4656 + $0x2a0] sm:$0xff]
    %v4742 = vld [vmem:[%s4656 + $0x2a8] sm:$0xff]
    %v4743 = vld [vmem:[%s4656 + $0x2b0] sm:$0xff]
    %v4744 = vld [vmem:[%s4656 + $0x2b8] sm:$0xff]
    %v4745 = vld [vmem:[%s4656 + $0x2c0] sm:$0xff]
    %v4746 = vld [vmem:[%s4656 + $0x2c8] sm:$0xff]
    %v4747 = vld [vmem:[%s4656 + $0x2d0] sm:$0xff]
    %v4748 = vld [vmem:[%s4656 + $0x2d8] sm:$0xff]
    %v4749 = vld [vmem:[%s4656 + $0x2e0] sm:$0xff]
    %v4750 = vld [vmem:[%s4656 + $0x2e8] sm:$0xff]
    %v4751 = vld [vmem:[%s4656 + $0x2f0] sm:$0xff]
    %v4752 = vld [vmem:[%s4656 + $0x2f8] sm:$0xff]
    %v4753 = vld [vmem:[%s4656 + $0x300] sm:$0xff]
    %v4754 = vld [vmem:[%s4656 + $0x308] sm:$0xff]
    %v4755 = vld [vmem:[%s4656 + $0x310] sm:$0xff]
    %v4756 = vld [vmem:[%s4656 + $0x318] sm:$0xff]
    %v4757 = vld [vmem:[%s4656 + $0x320] sm:$0xff]
    %v4758 = vld [vmem:[%s4656 + $0x328] sm:$0xff]
    %v4759 = vld [vmem:[%s4656 + $0x330] sm:$0xff]
    %v4760 = vld [vmem:[%s4656 + $0x338] sm:$0xff]
    %v4761 = vld [vmem:[%s4656 + $0x340] sm:$0xff]
    %v4762 = vld [vmem:[%s4656 + $0x348] sm:$0xff]
    %v4763 = vld [vmem:[%s4656 + $0x350] sm:$0xff]
    %v4764 = vld [vmem:[%s4656 + $0x358] sm:$0xff]
    %v4765 = vld [vmem:[%s4656 + $0x360] sm:$0xff]
    %v4766 = vld [vmem:[%s4656 + $0x368] sm:$0xff]
    %v4767 = vld [vmem:[%s4656 + $0x370] sm:$0xff]
    %v4768 = vld [vmem:[%s4656 + $0x378] sm:$0xff]
    %v4769 = vld [vmem:[%s4656 + $0x380] sm:$0xff]
    %v4770 = vld [vmem:[%s4656 + $0x388] sm:$0xff]
    %v4771 = vld [vmem:[%s4656 + $0x390] sm:$0xff]
    %v4772 = vld [vmem:[%s4656 + $0x398] sm:$0xff]
    %v4773 = vld [vmem:[%s4656 + $0x3a0] sm:$0xff]
    %v4774 = vld [vmem:[%s4656 + $0x3a8] sm:$0xff]
    %v4775 = vld [vmem:[%s4656 + $0x3b0] sm:$0xff]
    %v4776 = vld [vmem:[%s4656 + $0x3b8] sm:$0xff]
    %v4777 = vld [vmem:[%s4656 + $0x3c0] sm:$0xff]
    %v4778 = vld [vmem:[%s4656 + $0x3c8] sm:$0xff]
    %v4779 = vld [vmem:[%s4656 + $0x3d0] sm:$0xff]
    %v4780 = vld [vmem:[%s4656 + $0x3d8] sm:$0xff]
    %v4781 = vld [vmem:[%s4656 + $0x3e0] sm:$0xff]
    %v4782 = vld [vmem:[%s4656 + $0x3e8] sm:$0xff]
    %v4783 = vld [vmem:[%s4656 + $0x3f0] sm:$0xff]
    %v4784 = vld [vmem:[%s4656 + $0x3f8] sm:$0xff]
    %v4785 = vld [vmem:[%s4656 + $0x400] sm:$0xff]
    %v4786 = vld [vmem:[%s4656 + $0x408] sm:$0xff]
    %v4787 = vld [vmem:[%s4656 + $0x410] sm:$0xff]
    %v4788 = vld [vmem:[%s4656 + $0x418] sm:$0xff]
    %v4789 = vld [vmem:[%s4656 + $0x420] sm:$0xff]
    %v4790 = vld [vmem:[%s4656 + $0x428] sm:$0xff]
    %v4791 = vld [vmem:[%s4656 + $0x430] sm:$0xff]
    %v4792 = vld [vmem:[%s4656 + $0x438] sm:$0xff]
    %v4793 = vld [vmem:[%s4656 + $0x440] sm:$0xff]
    %v4794 = vld [vmem:[%s4656 + $0x448] sm:$0xff]
    %v4795 = vld [vmem:[%s4656 + $0x450] sm:$0xff]
    %v4796 = vld [vmem:[%s4656 + $0x458] sm:$0xff]
    %v4797 = vld [vmem:[%s4656 + $0x460] sm:$0xff]
    %v4798 = vld [vmem:[%s4656 + $0x468] sm:$0xff]
    %v4799 = vld [vmem:[%s4656 + $0x470] sm:$0xff]
    %v4800 = vld [vmem:[%s4656 + $0x478] sm:$0xff]
    %v4801 = vld [vmem:[%s4656 + $0x480] sm:$0xff]
    %v4802 = vld [vmem:[%s4656 + $0x488] sm:$0xff]
    %v4803 = vld [vmem:[%s4656 + $0x490] sm:$0xff]
    %v4804 = vld [vmem:[%s4656 + $0x498] sm:$0xff]
    %v4805 = vld [vmem:[%s4656 + $0x4a0] sm:$0xff]
    %v4806 = vld [vmem:[%s4656 + $0x4a8] sm:$0xff]
    %v4807 = vld [vmem:[%s4656 + $0x4b0] sm:$0xff]
    %v4808 = vld [vmem:[%s4656 + $0x4b8] sm:$0xff]
    %v4809 = vld [vmem:[%s4656 + $0x4c0] sm:$0xff]
    %v4810 = vld [vmem:[%s4656 + $0x4c8] sm:$0xff]
    %v4811 = vld [vmem:[%s4656 + $0x4d0] sm:$0xff]
    %v4812 = vld [vmem:[%s4656 + $0x4d8] sm:$0xff]
    %v4813 = vld [vmem:[%s4656 + $0x4e0] sm:$0xff]
    %v4814 = vld [vmem:[%s4656 + $0x4e8] sm:$0xff]
    %v4815 = vld [vmem:[%s4656 + $0x4f0] sm:$0xff]
    %v4816 = vld [vmem:[%s4656 + $0x4f8] sm:$0xff]
    %v4817 = vld [vmem:[%s4656 + $0x500] sm:$0xff]
    %v4818 = vld [vmem:[%s4656 + $0x508] sm:$0xff]
    %v4819 = vld [vmem:[%s4656 + $0x510] sm:$0xff]
    %v4820 = vld [vmem:[%s4656 + $0x518] sm:$0xff]
    %v4821 = vld [vmem:[%s4656 + $0x520] sm:$0xff]
    %v4822 = vld [vmem:[%s4656 + $0x528] sm:$0xff]
    %v4823 = vld [vmem:[%s4656 + $0x530] sm:$0xff]
    %v4824 = vld [vmem:[%s4656 + $0x538] sm:$0xff]
    %v4825 = vld [vmem:[%s4656 + $0x540] sm:$0xff]
    %v4826 = vld [vmem:[%s4656 + $0x548] sm:$0xff]
    %v4827 = vld [vmem:[%s4656 + $0x550] sm:$0xff]
    %v4828 = vld [vmem:[%s4656 + $0x558] sm:$0xff]
    %v4829 = vld [vmem:[%s4656 + $0x560] sm:$0xff]
    %v4830 = vld [vmem:[%s4656 + $0x568] sm:$0xff]
    %v4831 = vld [vmem:[%s4656 + $0x570] sm:$0xff]
    %v4832 = vld [vmem:[%s4656 + $0x578] sm:$0xff]
    %v4833 = vld [vmem:[%s4656 + $0x580] sm:$0xff]
    %v4834 = vld [vmem:[%s4656 + $0x588] sm:$0xff]
    %v4835 = vld [vmem:[%s4656 + $0x590] sm:$0xff]
    %v4836 = vld [vmem:[%s4656 + $0x598] sm:$0xff]
    %v4837 = vld [vmem:[%s4656 + $0x5a0] sm:$0xff]
    %v4838 = vld [vmem:[%s4656 + $0x5a8] sm:$0xff]
    %v4839 = vld [vmem:[%s4656 + $0x5b0] sm:$0xff]
    %v4840 = vld [vmem:[%s4656 + $0x5b8] sm:$0xff]
    %v4841 = vld [vmem:[%s4656 + $0x5c0] sm:$0xff]
    %v4842 = vld [vmem:[%s4656 + $0x5c8] sm:$0xff]
    %v4843 = vld [vmem:[%s4656 + $0x5d0] sm:$0xff]
    %v4844 = vld [vmem:[%s4656 + $0x5d8] sm:$0xff]
    %v4845 = vld [vmem:[%s4656 + $0x5e0] sm:$0xff]
    %v4846 = vld [vmem:[%s4656 + $0x5e8] sm:$0xff]
    %v4847 = vld [vmem:[%s4656 + $0x5f0] sm:$0xff]
    %v4848 = vld [vmem:[%s4656 + $0x5f8] sm:$0xff]
    %v4849 = vld [vmem:[%s4656 + $0x600] sm:$0xff]
    %v4850 = vld [vmem:[%s4656 + $0x608] sm:$0xff]
    %v4851 = vld [vmem:[%s4656 + $0x610] sm:$0xff]
    %v4852 = vld [vmem:[%s4656 + $0x618] sm:$0xff]
    %v4853 = vld [vmem:[%s4656 + $0x620] sm:$0xff]
    %v4854 = vld [vmem:[%s4656 + $0x628] sm:$0xff]
    %v4855 = vld [vmem:[%s4656 + $0x630] sm:$0xff]
    %v4856 = vld [vmem:[%s4656 + $0x638] sm:$0xff]
    %v4857 = vld [vmem:[%s4656 + $0x640] sm:$0xff]
    %v4858 = vld [vmem:[%s4656 + $0x648] sm:$0xff]
    %v4859 = vld [vmem:[%s4656 + $0x650] sm:$0xff]
    %v4860 = vld [vmem:[%s4656 + $0x658] sm:$0xff]
    %v4861 = vld [vmem:[%s4656 + $0x660] sm:$0xff]
    %v4862 = vld [vmem:[%s4656 + $0x668] sm:$0xff]
    %v4863 = vld [vmem:[%s4656 + $0x670] sm:$0xff]
    %v4864 = vld [vmem:[%s4656 + $0x678] sm:$0xff]
    %v4865 = vld [vmem:[%s4656 + $0x680] sm:$0xff]
    %v4866 = vld [vmem:[%s4656 + $0x688] sm:$0xff]
    %v4867 = vld [vmem:[%s4656 + $0x690] sm:$0xff]
    %v4868 = vld [vmem:[%s4656 + $0x698] sm:$0xff]
    %v4869 = vld [vmem:[%s4656 + $0x6a0] sm:$0xff]
    %v4870 = vld [vmem:[%s4656 + $0x6a8] sm:$0xff]
    %v4871 = vld [vmem:[%s4656 + $0x6b0] sm:$0xff]
    %v4872 = vld [vmem:[%s4656 + $0x6b8] sm:$0xff]
    %v4873 = vld [vmem:[%s4656 + $0x6c0] sm:$0xff]
    %v4874 = vld [vmem:[%s4656 + $0x6c8] sm:$0xff]
    %v4875 = vld [vmem:[%s4656 + $0x6d0] sm:$0xff]
    %v4876 = vld [vmem:[%s4656 + $0x6d8] sm:$0xff]
    %v4877 = vld [vmem:[%s4656 + $0x6e0] sm:$0xff]
    %v4878 = vld [vmem:[%s4656 + $0x6e8] sm:$0xff]
    %v4879 = vld [vmem:[%s4656 + $0x6f0] sm:$0xff]
    %v4880 = vld [vmem:[%s4656 + $0x6f8] sm:$0xff]
    %v4881 = vld [vmem:[%s4656 + $0x700] sm:$0xff]
    %v4882 = vld [vmem:[%s4656 + $0x708] sm:$0xff]
    %v4883 = vld [vmem:[%s4656 + $0x710] sm:$0xff]
    %v4884 = vld [vmem:[%s4656 + $0x718] sm:$0xff]
    %v4885 = vld [vmem:[%s4656 + $0x720] sm:$0xff]
    %v4886 = vld [vmem:[%s4656 + $0x728] sm:$0xff]
    %v4887 = vld [vmem:[%s4656 + $0x730] sm:$0xff]
    %v4888 = vld [vmem:[%s4656 + $0x738] sm:$0xff]
    %v4889 = vld [vmem:[%s4656 + $0x740] sm:$0xff]
    %v4890 = vld [vmem:[%s4656 + $0x748] sm:$0xff]
    %v4891 = vld [vmem:[%s4656 + $0x750] sm:$0xff]
    %v4892 = vld [vmem:[%s4656 + $0x758] sm:$0xff]
    %v4893 = vld [vmem:[%s4656 + $0x760] sm:$0xff]
    %v4894 = vld [vmem:[%s4656 + $0x768] sm:$0xff]
    %v4895 = vld [vmem:[%s4656 + $0x770] sm:$0xff]
    %v4896 = vld [vmem:[%s4656 + $0x778] sm:$0xff]
    %v4897 = vld [vmem:[%s4656 + $0x780] sm:$0xff]
    %v4898 = vld [vmem:[%s4656 + $0x788] sm:$0xff]
    %v4899 = vld [vmem:[%s4656 + $0x790] sm:$0xff]
    %v4900 = vld [vmem:[%s4656 + $0x798] sm:$0xff]
    %v4901 = vld [vmem:[%s4656 + $0x7a0] sm:$0xff]
    %v4902 = vld [vmem:[%s4656 + $0x7a8] sm:$0xff]
    %v4903 = vld [vmem:[%s4656 + $0x7b0] sm:$0xff]
    %v4904 = vld [vmem:[%s4656 + $0x7b8] sm:$0xff]
    %v4905 = vld [vmem:[%s4656 + $0x7c0] sm:$0xff]
    %v4906 = vld [vmem:[%s4656 + $0x7c8] sm:$0xff]
    %v4907 = vld [vmem:[%s4656 + $0x7d0] sm:$0xff]
    %v4908 = vld [vmem:[%s4656 + $0x7d8] sm:$0xff]
    %v4909 = vld [vmem:[%s4656 + $0x7e0] sm:$0xff]
    %v4910 = vld [vmem:[%s4656 + $0x7e8] sm:$0xff]
    %v4911 = vld [vmem:[%s4656 + $0x7f0] sm:$0xff]
    %v4912 = vld [vmem:[%s4656 + $0x7f8] sm:$0xff]
    %4913 = vxpose.xlu0.b32.start [1/16] %v4657, 128
    %4914 = vxpose.xlu0.b32.cont [2/16] %v4658, 128
    %4915 = vxpose.xlu0.b32.cont [3/16] %v4659, 128
    %4916 = vxpose.xlu0.b32.cont [4/16] %v4660, 128
    %4917 = vxpose.xlu0.b32.cont [5/16] %v4661, 128
    %4918 = vxpose.xlu0.b32.cont [6/16] %v4662, 128
    %4919 = vxpose.xlu0.b32.cont [7/16] %v4663, 128
    %4920 = vxpose.xlu0.b32.cont [8/16] %v4664, 128
    %4921 = vxpose.xlu0.b32.cont [9/16] %v4665, 128
    %4922 = vxpose.xlu0.b32.cont [10/16] %v4666, 128
    %4923 = vxpose.xlu0.b32.cont [11/16] %v4667, 128
    %4924 = vxpose.xlu0.b32.cont [12/16] %v4668, 128
    %4925 = vxpose.xlu0.b32.cont [13/16] %v4669, 128
    %4926 = vxpose.xlu0.b32.cont [14/16] %v4670, 128
    %4927 = vxpose.xlu0.b32.cont [15/16] %v4671, 128
    %4928 = vxpose.xlu0.b32.end [16/16] %v4672, 128
    %v4929 = vpop.trf.xlu0
    %v4930 = vpop.trf.xlu0
    %v4931 = vpop.trf.xlu0
    %v4932 = vpop.trf.xlu0
    %v4933 = vpop.trf.xlu0
    %v4934 = vpop.trf.xlu0
    %v4935 = vpop.trf.xlu0
    %v4936 = vpop.trf.xlu0
    %v4937 = vpop.trf.xlu0
    %v4938 = vpop.trf.xlu0
    %v4939 = vpop.trf.xlu0
    %v4940 = vpop.trf.xlu0
    %v4941 = vpop.trf.xlu0
    %v4942 = vpop.trf.xlu0
    %v4943 = vpop.trf.xlu0
    %v4944 = vpop.trf.xlu0
    %4945 = vxpose.xlu0.b32.start [1/16] %v4673, 128
    %4946 = vxpose.xlu0.b32.cont [2/16] %v4674, 128
    %4947 = vxpose.xlu0.b32.cont [3/16] %v4675, 128
    %4948 = vxpose.xlu0.b32.cont [4/16] %v4676, 128
    %4949 = vxpose.xlu0.b32.cont [5/16] %v4677, 128
    %4950 = vxpose.xlu0.b32.cont [6/16] %v4678, 128
    %4951 = vxpose.xlu0.b32.cont [7/16] %v4679, 128
    %4952 = vxpose.xlu0.b32.cont [8/16] %v4680, 128
    %4953 = vxpose.xlu0.b32.cont [9/16] %v4681, 128
    %4954 = vxpose.xlu0.b32.cont [10/16] %v4682, 128
    %4955 = vxpose.xlu0.b32.cont [11/16] %v4683, 128
    %4956 = vxpose.xlu0.b32.cont [12/16] %v4684, 128
    %4957 = vxpose.xlu0.b32.cont [13/16] %v4685, 128
    %4958 = vxpose.xlu0.b32.cont [14/16] %v4686, 128
    %4959 = vxpose.xlu0.b32.cont [15/16] %v4687, 128
    %4960 = vxpose.xlu0.b32.end [16/16] %v4688, 128
    %v4961 = vpop.trf.xlu0
    %v4962 = vpop.trf.xlu0
    %v4963 = vpop.trf.xlu0
    %v4964 = vpop.trf.xlu0
    %v4965 = vpop.trf.xlu0
    %v4966 = vpop.trf.xlu0
    %v4967 = vpop.trf.xlu0
    %v4968 = vpop.trf.xlu0
    %v4969 = vpop.trf.xlu0
    %v4970 = vpop.trf.xlu0
    %v4971 = vpop.trf.xlu0
    %v4972 = vpop.trf.xlu0
    %v4973 = vpop.trf.xlu0
    %v4974 = vpop.trf.xlu0
    %v4975 = vpop.trf.xlu0
    %v4976 = vpop.trf.xlu0
    %4977 = vxpose.xlu0.b32.start [1/16] %v4689, 128
    %4978 = vxpose.xlu0.b32.cont [2/16] %v4690, 128
    %4979 = vxpose.xlu0.b32.cont [3/16] %v4691, 128
    %4980 = vxpose.xlu0.b32.cont [4/16] %v4692, 128
    %4981 = vxpose.xlu0.b32.cont [5/16] %v4693, 128
    %4982 = vxpose.xlu0.b32.cont [6/16] %v4694, 128
    %4983 = vxpose.xlu0.b32.cont [7/16] %v4695, 128
    %4984 = vxpose.xlu0.b32.cont [8/16] %v4696, 128
    %4985 = vxpose.xlu0.b32.cont [9/16] %v4697, 128
    %4986 = vxpose.xlu0.b32.cont [10/16] %v4698, 128
    %4987 = vxpose.xlu0.b32.cont [11/16] %v4699, 128
    %4988 = vxpose.xlu0.b32.cont [12/16] %v4700, 128
    %4989 = vxpose.xlu0.b32.cont [13/16] %v4701, 128
    %4990 = vxpose.xlu0.b32.cont [14/16] %v4702, 128
    %4991 = vxpose.xlu0.b32.cont [15/16] %v4703, 128
    %4992 = vxpose.xlu0.b32.end [16/16] %v4704, 128
    %v4993 = vpop.trf.xlu0
    %v4994 = vpop.trf.xlu0
    %v4995 = vpop.trf.xlu0
    %v4996 = vpop.trf.xlu0
    %v4997 = vpop.trf.xlu0
    %v4998 = vpop.trf.xlu0
    %v4999 = vpop.trf.xlu0
    %v5000 = vpop.trf.xlu0
    %v5001 = vpop.trf.xlu0
    %v5002 = vpop.trf.xlu0
    %v5003 = vpop.trf.xlu0
    %v5004 = vpop.trf.xlu0
    %v5005 = vpop.trf.xlu0
    %v5006 = vpop.trf.xlu0
    %v5007 = vpop.trf.xlu0
    %v5008 = vpop.trf.xlu0
    %5009 = vxpose.xlu0.b32.start [1/16] %v4705, 128
    %5010 = vxpose.xlu0.b32.cont [2/16] %v4706, 128
    %5011 = vxpose.xlu0.b32.cont [3/16] %v4707, 128
    %5012 = vxpose.xlu0.b32.cont [4/16] %v4708, 128
    %5013 = vxpose.xlu0.b32.cont [5/16] %v4709, 128
    %5014 = vxpose.xlu0.b32.cont [6/16] %v4710, 128
    %5015 = vxpose.xlu0.b32.cont [7/16] %v4711, 128
    %5016 = vxpose.xlu0.b32.cont [8/16] %v4712, 128
    %5017 = vxpose.xlu0.b32.cont [9/16] %v4713, 128
    %5018 = vxpose.xlu0.b32.cont [10/16] %v4714, 128
    %5019 = vxpose.xlu0.b32.cont [11/16] %v4715, 128
    %5020 = vxpose.xlu0.b32.cont [12/16] %v4716, 128
    %5021 = vxpose.xlu0.b32.cont [13/16] %v4717, 128
    %5022 = vxpose.xlu0.b32.cont [14/16] %v4718, 128
    %5023 = vxpose.xlu0.b32.cont [15/16] %v4719, 128
    %5024 = vxpose.xlu0.b32.end [16/16] %v4720, 128
    %v5025 = vpop.trf.xlu0
    %v5026 = vpop.trf.xlu0
    %v5027 = vpop.trf.xlu0
    %v5028 = vpop.trf.xlu0
    %v5029 = vpop.trf.xlu0
    %v5030 = vpop.trf.xlu0
    %v5031 = vpop.trf.xlu0
    %v5032 = vpop.trf.xlu0
    %v5033 = vpop.trf.xlu0
    %v5034 = vpop.trf.xlu0
    %v5035 = vpop.trf.xlu0
    %v5036 = vpop.trf.xlu0
    %v5037 = vpop.trf.xlu0
    %v5038 = vpop.trf.xlu0
    %v5039 = vpop.trf.xlu0
    %v5040 = vpop.trf.xlu0
    %5041 = vxpose.xlu0.b32.start [1/16] %v4721, 128
    %5042 = vxpose.xlu0.b32.cont [2/16] %v4722, 128
    %5043 = vxpose.xlu0.b32.cont [3/16] %v4723, 128
    %5044 = vxpose.xlu0.b32.cont [4/16] %v4724, 128
    %5045 = vxpose.xlu0.b32.cont [5/16] %v4725, 128
    %5046 = vxpose.xlu0.b32.cont [6/16] %v4726, 128
    %5047 = vxpose.xlu0.b32.cont [7/16] %v4727, 128
    %5048 = vxpose.xlu0.b32.cont [8/16] %v4728, 128
    %5049 = vxpose.xlu0.b32.cont [9/16] %v4729, 128
    %5050 = vxpose.xlu0.b32.cont [10/16] %v4730, 128
    %5051 = vxpose.xlu0.b32.cont [11/16] %v4731, 128
    %5052 = vxpose.xlu0.b32.cont [12/16] %v4732, 128
    %5053 = vxpose.xlu0.b32.cont [13/16] %v4733, 128
    %5054 = vxpose.xlu0.b32.cont [14/16] %v4734, 128
    %5055 = vxpose.xlu0.b32.cont [15/16] %v4735, 128
    %5056 = vxpose.xlu0.b32.end [16/16] %v4736, 128
    %v5057 = vpop.trf.xlu0
    %v5058 = vpop.trf.xlu0
    %v5059 = vpop.trf.xlu0
    %v5060 = vpop.trf.xlu0
    %v5061 = vpop.trf.xlu0
    %v5062 = vpop.trf.xlu0
    %v5063 = vpop.trf.xlu0
    %v5064 = vpop.trf.xlu0
    %v5065 = vpop.trf.xlu0
    %v5066 = vpop.trf.xlu0
    %v5067 = vpop.trf.xlu0
    %v5068 = vpop.trf.xlu0
    %v5069 = vpop.trf.xlu0
    %v5070 = vpop.trf.xlu0
    %v5071 = vpop.trf.xlu0
    %v5072 = vpop.trf.xlu0
    %5073 = vxpose.xlu0.b32.start [1/16] %v4737, 128
    %5074 = vxpose.xlu0.b32.cont [2/16] %v4738, 128
    %5075 = vxpose.xlu0.b32.cont [3/16] %v4739, 128
    %5076 = vxpose.xlu0.b32.cont [4/16] %v4740, 128
    %5077 = vxpose.xlu0.b32.cont [5/16] %v4741, 128
    %5078 = vxpose.xlu0.b32.cont [6/16] %v4742, 128
    %5079 = vxpose.xlu0.b32.cont [7/16] %v4743, 128
    %5080 = vxpose.xlu0.b32.cont [8/16] %v4744, 128
    %5081 = vxpose.xlu0.b32.cont [9/16] %v4745, 128
    %5082 = vxpose.xlu0.b32.cont [10/16] %v4746, 128
    %5083 = vxpose.xlu0.b32.cont [11/16] %v4747, 128
    %5084 = vxpose.xlu0.b32.cont [12/16] %v4748, 128
    %5085 = vxpose.xlu0.b32.cont [13/16] %v4749, 128
    %5086 = vxpose.xlu0.b32.cont [14/16] %v4750, 128
    %5087 = vxpose.xlu0.b32.cont [15/16] %v4751, 128
    %5088 = vxpose.xlu0.b32.end [16/16] %v4752, 128
    %v5089 = vpop.trf.xlu0
    %v5090 = vpop.trf.xlu0
    %v5091 = vpop.trf.xlu0
    %v5092 = vpop.trf.xlu0
    %v5093 = vpop.trf.xlu0
    %v5094 = vpop.trf.xlu0
    %v5095 = vpop.trf.xlu0
    %v5096 = vpop.trf.xlu0
    %v5097 = vpop.trf.xlu0
    %v5098 = vpop.trf.xlu0
    %v5099 = vpop.trf.xlu0
    %v5100 = vpop.trf.xlu0
    %v5101 = vpop.trf.xlu0
    %v5102 = vpop.trf.xlu0
    %v5103 = vpop.trf.xlu0
    %v5104 = vpop.trf.xlu0
    %5105 = vxpose.xlu0.b32.start [1/16] %v4753, 128
    %5106 = vxpose.xlu0.b32.cont [2/16] %v4754, 128
    %5107 = vxpose.xlu0.b32.cont [3/16] %v4755, 128
    %5108 = vxpose.xlu0.b32.cont [4/16] %v4756, 128
    %5109 = vxpose.xlu0.b32.cont [5/16] %v4757, 128
    %5110 = vxpose.xlu0.b32.cont [6/16] %v4758, 128
    %5111 = vxpose.xlu0.b32.cont [7/16] %v4759, 128
    %5112 = vxpose.xlu0.b32.cont [8/16] %v4760, 128
    %5113 = vxpose.xlu0.b32.cont [9/16] %v4761, 128
    %5114 = vxpose.xlu0.b32.cont [10/16] %v4762, 128
    %5115 = vxpose.xlu0.b32.cont [11/16] %v4763, 128
    %5116 = vxpose.xlu0.b32.cont [12/16] %v4764, 128
    %5117 = vxpose.xlu0.b32.cont [13/16] %v4765, 128
    %5118 = vxpose.xlu0.b32.cont [14/16] %v4766, 128
    %5119 = vxpose.xlu0.b32.cont [15/16] %v4767, 128
    %5120 = vxpose.xlu0.b32.end [16/16] %v4768, 128
    %v5121 = vpop.trf.xlu0
    %v5122 = vpop.trf.xlu0
    %v5123 = vpop.trf.xlu0
    %v5124 = vpop.trf.xlu0
    %v5125 = vpop.trf.xlu0
    %v5126 = vpop.trf.xlu0
    %v5127 = vpop.trf.xlu0
    %v5128 = vpop.trf.xlu0
    %v5129 = vpop.trf.xlu0
    %v5130 = vpop.trf.xlu0
    %v5131 = vpop.trf.xlu0
    %v5132 = vpop.trf.xlu0
    %v5133 = vpop.trf.xlu0
    %v5134 = vpop.trf.xlu0
    %v5135 = vpop.trf.xlu0
    %v5136 = vpop.trf.xlu0
    %5137 = vxpose.xlu0.b32.start [1/16] %v4769, 128
    %5138 = vxpose.xlu0.b32.cont [2/16] %v4770, 128
    %5139 = vxpose.xlu0.b32.cont [3/16] %v4771, 128
    %5140 = vxpose.xlu0.b32.cont [4/16] %v4772, 128
    %5141 = vxpose.xlu0.b32.cont [5/16] %v4773, 128
    %5142 = vxpose.xlu0.b32.cont [6/16] %v4774, 128
    %5143 = vxpose.xlu0.b32.cont [7/16] %v4775, 128
    %5144 = vxpose.xlu0.b32.cont [8/16] %v4776, 128
    %5145 = vxpose.xlu0.b32.cont [9/16] %v4777, 128
    %5146 = vxpose.xlu0.b32.cont [10/16] %v4778, 128
    %5147 = vxpose.xlu0.b32.cont [11/16] %v4779, 128
    %5148 = vxpose.xlu0.b32.cont [12/16] %v4780, 128
    %5149 = vxpose.xlu0.b32.cont [13/16] %v4781, 128
    %5150 = vxpose.xlu0.b32.cont [14/16] %v4782, 128
    %5151 = vxpose.xlu0.b32.cont [15/16] %v4783, 128
    %5152 = vxpose.xlu0.b32.end [16/16] %v4784, 128
    %v5153 = vpop.trf.xlu0
    %v5154 = vpop.trf.xlu0
    %v5155 = vpop.trf.xlu0
    %v5156 = vpop.trf.xlu0
    %v5157 = vpop.trf.xlu0
    %v5158 = vpop.trf.xlu0
    %v5159 = vpop.trf.xlu0
    %v5160 = vpop.trf.xlu0
    %v5161 = vpop.trf.xlu0
    %v5162 = vpop.trf.xlu0
    %v5163 = vpop.trf.xlu0
    %v5164 = vpop.trf.xlu0
    %v5165 = vpop.trf.xlu0
    %v5166 = vpop.trf.xlu0
    %v5167 = vpop.trf.xlu0
    %v5168 = vpop.trf.xlu0
    %5169 = vxpose.xlu0.b32.start [1/16] %v4785, 128
    %5170 = vxpose.xlu0.b32.cont [2/16] %v4786, 128
    %5171 = vxpose.xlu0.b32.cont [3/16] %v4787, 128
    %5172 = vxpose.xlu0.b32.cont [4/16] %v4788, 128
    %5173 = vxpose.xlu0.b32.cont [5/16] %v4789, 128
    %5174 = vxpose.xlu0.b32.cont [6/16] %v4790, 128
    %5175 = vxpose.xlu0.b32.cont [7/16] %v4791, 128
    %5176 = vxpose.xlu0.b32.cont [8/16] %v4792, 128
    %5177 = vxpose.xlu0.b32.cont [9/16] %v4793, 128
    %5178 = vxpose.xlu0.b32.cont [10/16] %v4794, 128
    %5179 = vxpose.xlu0.b32.cont [11/16] %v4795, 128
    %5180 = vxpose.xlu0.b32.cont [12/16] %v4796, 128
    %5181 = vxpose.xlu0.b32.cont [13/16] %v4797, 128
    %5182 = vxpose.xlu0.b32.cont [14/16] %v4798, 128
    %5183 = vxpose.xlu0.b32.cont [15/16] %v4799, 128
    %5184 = vxpose.xlu0.b32.end [16/16] %v4800, 128
    %v5185 = vpop.trf.xlu0
    %v5186 = vpop.trf.xlu0
    %v5187 = vpop.trf.xlu0
    %v5188 = vpop.trf.xlu0
    %v5189 = vpop.trf.xlu0
    %v5190 = vpop.trf.xlu0
    %v5191 = vpop.trf.xlu0
    %v5192 = vpop.trf.xlu0
    %v5193 = vpop.trf.xlu0
    %v5194 = vpop.trf.xlu0
    %v5195 = vpop.trf.xlu0
    %v5196 = vpop.trf.xlu0
    %v5197 = vpop.trf.xlu0
    %v5198 = vpop.trf.xlu0
    %v5199 = vpop.trf.xlu0
    %v5200 = vpop.trf.xlu0
    %5201 = vxpose.xlu0.b32.start [1/16] %v4801, 128
    %5202 = vxpose.xlu0.b32.cont [2/16] %v4802, 128
    %5203 = vxpose.xlu0.b32.cont [3/16] %v4803, 128
    %5204 = vxpose.xlu0.b32.cont [4/16] %v4804, 128
    %5205 = vxpose.xlu0.b32.cont [5/16] %v4805, 128
    %5206 = vxpose.xlu0.b32.cont [6/16] %v4806, 128
    %5207 = vxpose.xlu0.b32.cont [7/16] %v4807, 128
    %5208 = vxpose.xlu0.b32.cont [8/16] %v4808, 128
    %5209 = vxpose.xlu0.b32.cont [9/16] %v4809, 128
    %5210 = vxpose.xlu0.b32.cont [10/16] %v4810, 128
    %5211 = vxpose.xlu0.b32.cont [11/16] %v4811, 128
    %5212 = vxpose.xlu0.b32.cont [12/16] %v4812, 128
    %5213 = vxpose.xlu0.b32.cont [13/16] %v4813, 128
    %5214 = vxpose.xlu0.b32.cont [14/16] %v4814, 128
    %5215 = vxpose.xlu0.b32.cont [15/16] %v4815, 128
    %5216 = vxpose.xlu0.b32.end [16/16] %v4816, 128
    %v5217 = vpop.trf.xlu0
    %v5218 = vpop.trf.xlu0
    %v5219 = vpop.trf.xlu0
    %v5220 = vpop.trf.xlu0
    %v5221 = vpop.trf.xlu0
    %v5222 = vpop.trf.xlu0
    %v5223 = vpop.trf.xlu0
    %v5224 = vpop.trf.xlu0
    %v5225 = vpop.trf.xlu0
    %v5226 = vpop.trf.xlu0
    %v5227 = vpop.trf.xlu0
    %v5228 = vpop.trf.xlu0
    %v5229 = vpop.trf.xlu0
    %v5230 = vpop.trf.xlu0
    %v5231 = vpop.trf.xlu0
    %v5232 = vpop.trf.xlu0
    %5233 = vxpose.xlu0.b32.start [1/16] %v4817, 128
    %5234 = vxpose.xlu0.b32.cont [2/16] %v4818, 128
    %5235 = vxpose.xlu0.b32.cont [3/16] %v4819, 128
    %5236 = vxpose.xlu0.b32.cont [4/16] %v4820, 128
    %5237 = vxpose.xlu0.b32.cont [5/16] %v4821, 128
    %5238 = vxpose.xlu0.b32.cont [6/16] %v4822, 128
    %5239 = vxpose.xlu0.b32.cont [7/16] %v4823, 128
    %5240 = vxpose.xlu0.b32.cont [8/16] %v4824, 128
    %5241 = vxpose.xlu0.b32.cont [9/16] %v4825, 128
    %5242 = vxpose.xlu0.b32.cont [10/16] %v4826, 128
    %5243 = vxpose.xlu0.b32.cont [11/16] %v4827, 128
    %5244 = vxpose.xlu0.b32.cont [12/16] %v4828, 128
    %5245 = vxpose.xlu0.b32.cont [13/16] %v4829, 128
    %5246 = vxpose.xlu0.b32.cont [14/16] %v4830, 128
    %5247 = vxpose.xlu0.b32.cont [15/16] %v4831, 128
    %5248 = vxpose.xlu0.b32.end [16/16] %v4832, 128
    %v5249 = vpop.trf.xlu0
    %v5250 = vpop.trf.xlu0
    %v5251 = vpop.trf.xlu0
    %v5252 = vpop.trf.xlu0
    %v5253 = vpop.trf.xlu0
    %v5254 = vpop.trf.xlu0
    %v5255 = vpop.trf.xlu0
    %v5256 = vpop.trf.xlu0
    %v5257 = vpop.trf.xlu0
    %v5258 = vpop.trf.xlu0
    %v5259 = vpop.trf.xlu0
    %v5260 = vpop.trf.xlu0
    %v5261 = vpop.trf.xlu0
    %v5262 = vpop.trf.xlu0
    %v5263 = vpop.trf.xlu0
    %v5264 = vpop.trf.xlu0
    %5265 = vxpose.xlu0.b32.start [1/16] %v4833, 128
    %5266 = vxpose.xlu0.b32.cont [2/16] %v4834, 128
    %5267 = vxpose.xlu0.b32.cont [3/16] %v4835, 128
    %5268 = vxpose.xlu0.b32.cont [4/16] %v4836, 128
    %5269 = vxpose.xlu0.b32.cont [5/16] %v4837, 128
    %5270 = vxpose.xlu0.b32.cont [6/16] %v4838, 128
    %5271 = vxpose.xlu0.b32.cont [7/16] %v4839, 128
    %5272 = vxpose.xlu0.b32.cont [8/16] %v4840, 128
    %5273 = vxpose.xlu0.b32.cont [9/16] %v4841, 128
    %5274 = vxpose.xlu0.b32.cont [10/16] %v4842, 128
    %5275 = vxpose.xlu0.b32.cont [11/16] %v4843, 128
    %5276 = vxpose.xlu0.b32.cont [12/16] %v4844, 128
    %5277 = vxpose.xlu0.b32.cont [13/16] %v4845, 128
    %5278 = vxpose.xlu0.b32.cont [14/16] %v4846, 128
    %5279 = vxpose.xlu0.b32.cont [15/16] %v4847, 128
    %5280 = vxpose.xlu0.b32.end [16/16] %v4848, 128
    %v5281 = vpop.trf.xlu0
    %v5282 = vpop.trf.xlu0
    %v5283 = vpop.trf.xlu0
    %v5284 = vpop.trf.xlu0
    %v5285 = vpop.trf.xlu0
    %v5286 = vpop.trf.xlu0
    %v5287 = vpop.trf.xlu0
    %v5288 = vpop.trf.xlu0
    %v5289 = vpop.trf.xlu0
    %v5290 = vpop.trf.xlu0
    %v5291 = vpop.trf.xlu0
    %v5292 = vpop.trf.xlu0
    %v5293 = vpop.trf.xlu0
    %v5294 = vpop.trf.xlu0
    %v5295 = vpop.trf.xlu0
    %v5296 = vpop.trf.xlu0
    %5297 = vxpose.xlu0.b32.start [1/16] %v4849, 128
    %5298 = vxpose.xlu0.b32.cont [2/16] %v4850, 128
    %5299 = vxpose.xlu0.b32.cont [3/16] %v4851, 128
    %5300 = vxpose.xlu0.b32.cont [4/16] %v4852, 128
    %5301 = vxpose.xlu0.b32.cont [5/16] %v4853, 128
    %5302 = vxpose.xlu0.b32.cont [6/16] %v4854, 128
    %5303 = vxpose.xlu0.b32.cont [7/16] %v4855, 128
    %5304 = vxpose.xlu0.b32.cont [8/16] %v4856, 128
    %5305 = vxpose.xlu0.b32.cont [9/16] %v4857, 128
    %5306 = vxpose.xlu0.b32.cont [10/16] %v4858, 128
    %5307 = vxpose.xlu0.b32.cont [11/16] %v4859, 128
    %5308 = vxpose.xlu0.b32.cont [12/16] %v4860, 128
    %5309 = vxpose.xlu0.b32.cont [13/16] %v4861, 128
    %5310 = vxpose.xlu0.b32.cont [14/16] %v4862, 128
    %5311 = vxpose.xlu0.b32.cont [15/16] %v4863, 128
    %5312 = vxpose.xlu0.b32.end [16/16] %v4864, 128
    %v5313 = vpop.trf.xlu0
    %v5314 = vpop.trf.xlu0
    %v5315 = vpop.trf.xlu0
    %v5316 = vpop.trf.xlu0
    %v5317 = vpop.trf.xlu0
    %v5318 = vpop.trf.xlu0
    %v5319 = vpop.trf.xlu0
    %v5320 = vpop.trf.xlu0
    %v5321 = vpop.trf.xlu0
    %v5322 = vpop.trf.xlu0
    %v5323 = vpop.trf.xlu0
    %v5324 = vpop.trf.xlu0
    %v5325 = vpop.trf.xlu0
    %v5326 = vpop.trf.xlu0
    %v5327 = vpop.trf.xlu0
    %v5328 = vpop.trf.xlu0
    %5329 = vxpose.xlu0.b32.start [1/16] %v4865, 128
    %5330 = vxpose.xlu0.b32.cont [2/16] %v4866, 128
    %5331 = vxpose.xlu0.b32.cont [3/16] %v4867, 128
    %5332 = vxpose.xlu0.b32.cont [4/16] %v4868, 128
    %5333 = vxpose.xlu0.b32.cont [5/16] %v4869, 128
    %5334 = vxpose.xlu0.b32.cont [6/16] %v4870, 128
    %5335 = vxpose.xlu0.b32.cont [7/16] %v4871, 128
    %5336 = vxpose.xlu0.b32.cont [8/16] %v4872, 128
    %5337 = vxpose.xlu0.b32.cont [9/16] %v4873, 128
    %5338 = vxpose.xlu0.b32.cont [10/16] %v4874, 128
    %5339 = vxpose.xlu0.b32.cont [11/16] %v4875, 128
    %5340 = vxpose.xlu0.b32.cont [12/16] %v4876, 128
    %5341 = vxpose.xlu0.b32.cont [13/16] %v4877, 128
    %5342 = vxpose.xlu0.b32.cont [14/16] %v4878, 128
    %5343 = vxpose.xlu0.b32.cont [15/16] %v4879, 128
    %5344 = vxpose.xlu0.b32.end [16/16] %v4880, 128
    %v5345 = vpop.trf.xlu0
    %v5346 = vpop.trf.xlu0
    %v5347 = vpop.trf.xlu0
    %v5348 = vpop.trf.xlu0
    %v5349 = vpop.trf.xlu0
    %v5350 = vpop.trf.xlu0
    %v5351 = vpop.trf.xlu0
    %v5352 = vpop.trf.xlu0
    %v5353 = vpop.trf.xlu0
    %v5354 = vpop.trf.xlu0
    %v5355 = vpop.trf.xlu0
    %v5356 = vpop.trf.xlu0
    %v5357 = vpop.trf.xlu0
    %v5358 = vpop.trf.xlu0
    %v5359 = vpop.trf.xlu0
    %v5360 = vpop.trf.xlu0
    %5361 = vxpose.xlu0.b32.start [1/16] %v4881, 128
    %5362 = vxpose.xlu0.b32.cont [2/16] %v4882, 128
    %5363 = vxpose.xlu0.b32.cont [3/16] %v4883, 128
    %5364 = vxpose.xlu0.b32.cont [4/16] %v4884, 128
    %5365 = vxpose.xlu0.b32.cont [5/16] %v4885, 128
    %5366 = vxpose.xlu0.b32.cont [6/16] %v4886, 128
    %5367 = vxpose.xlu0.b32.cont [7/16] %v4887, 128
    %5368 = vxpose.xlu0.b32.cont [8/16] %v4888, 128
    %5369 = vxpose.xlu0.b32.cont [9/16] %v4889, 128
    %5370 = vxpose.xlu0.b32.cont [10/16] %v4890, 128
    %5371 = vxpose.xlu0.b32.cont [11/16] %v4891, 128
    %5372 = vxpose.xlu0.b32.cont [12/16] %v4892, 128
    %5373 = vxpose.xlu0.b32.cont [13/16] %v4893, 128
    %5374 = vxpose.xlu0.b32.cont [14/16] %v4894, 128
    %5375 = vxpose.xlu0.b32.cont [15/16] %v4895, 128
    %5376 = vxpose.xlu0.b32.end [16/16] %v4896, 128
    %v5377 = vpop.trf.xlu0
    %v5378 = vpop.trf.xlu0
    %v5379 = vpop.trf.xlu0
    %v5380 = vpop.trf.xlu0
    %v5381 = vpop.trf.xlu0
    %v5382 = vpop.trf.xlu0
    %v5383 = vpop.trf.xlu0
    %v5384 = vpop.trf.xlu0
    %v5385 = vpop.trf.xlu0
    %v5386 = vpop.trf.xlu0
    %v5387 = vpop.trf.xlu0
    %v5388 = vpop.trf.xlu0
    %v5389 = vpop.trf.xlu0
    %v5390 = vpop.trf.xlu0
    %v5391 = vpop.trf.xlu0
    %v5392 = vpop.trf.xlu0
    %5393 = vxpose.xlu0.b32.start [1/16] %v4897, 128
    %5394 = vxpose.xlu0.b32.cont [2/16] %v4898, 128
    %5395 = vxpose.xlu0.b32.cont [3/16] %v4899, 128
    %5396 = vxpose.xlu0.b32.cont [4/16] %v4900, 128
    %5397 = vxpose.xlu0.b32.cont [5/16] %v4901, 128
    %5398 = vxpose.xlu0.b32.cont [6/16] %v4902, 128
    %5399 = vxpose.xlu0.b32.cont [7/16] %v4903, 128
    %5400 = vxpose.xlu0.b32.cont [8/16] %v4904, 128
    %5401 = vxpose.xlu0.b32.cont [9/16] %v4905, 128
    %5402 = vxpose.xlu0.b32.cont [10/16] %v4906, 128
    %5403 = vxpose.xlu0.b32.cont [11/16] %v4907, 128
    %5404 = vxpose.xlu0.b32.cont [12/16] %v4908, 128
    %5405 = vxpose.xlu0.b32.cont [13/16] %v4909, 128
    %5406 = vxpose.xlu0.b32.cont [14/16] %v4910, 128
    %5407 = vxpose.xlu0.b32.cont [15/16] %v4911, 128
    %5408 = vxpose.xlu0.b32.end [16/16] %v4912, 128
    %v5409 = vpop.trf.xlu0
    %v5410 = vpop.trf.xlu0
    %v5411 = vpop.trf.xlu0
    %v5412 = vpop.trf.xlu0
    %v5413 = vpop.trf.xlu0
    %v5414 = vpop.trf.xlu0
    %v5415 = vpop.trf.xlu0
    %v5416 = vpop.trf.xlu0
    %v5417 = vpop.trf.xlu0
    %v5418 = vpop.trf.xlu0
    %v5419 = vpop.trf.xlu0
    %v5420 = vpop.trf.xlu0
    %v5421 = vpop.trf.xlu0
    %v5422 = vpop.trf.xlu0
    %v5423 = vpop.trf.xlu0
    %v5424 = vpop.trf.xlu0
    %5425 = vmatprep.subr.mxu0 0.0
    %5426 = vmatpush1.msra.mxu0 %v2995
    %5427 = vmatprep.subr.mxu0 0.0
    %5428 = vmatpush1.msra.mxu0 %v2996
    %5429 = vmatprep.subr.mxu0 0.0
    %5430 = vmatpush1.msra.mxu0 %v2997
    %5431 = vmatprep.subr.mxu0 0.0
    %5432 = vmatpush1.msra.mxu0 %v2998
    %5433 = vmatprep.subr.mxu0 0.0
    %5434 = vmatpush1.msra.mxu0 %v2999
    %5435 = vmatprep.subr.mxu0 0.0
    %5436 = vmatpush1.msra.mxu0 %v3000
    %5437 = vmatprep.subr.mxu0 0.0
    %5438 = vmatpush1.msra.mxu0 %v3001
    %5439 = vmatprep.subr.mxu0 0.0
    %5440 = vmatpush1.msra.mxu0 %v3002
    %5441 = vmatprep.subr.mxu0 0.0
    %5442 = vmatpush1.msra.mxu0 %v3003
    %5443 = vmatprep.subr.mxu0 0.0
    %5444 = vmatpush1.msra.mxu0 %v3004
    %5445 = vmatprep.subr.mxu0 0.0
    %5446 = vmatpush1.msra.mxu0 %v3005
    %5447 = vmatprep.subr.mxu0 0.0
    %5448 = vmatpush1.msra.mxu0 %v3006
    %5449 = vmatprep.subr.mxu0 0.0
    %5450 = vmatpush1.msra.mxu0 %v3007
    %5451 = vmatprep.subr.mxu0 0.0
    %5452 = vmatpush1.msra.mxu0 %v3008
    %5453 = vmatprep.subr.mxu0 0.0
    %5454 = vmatpush1.msra.mxu0 %v3009
    %5455 = vmatprep.subr.mxu0 0.0
    %5456 = vmatpush1.msra.mxu0 %v3010
    %5457 = vmatprep.subr.mxu0 0.0
    %5458 = vmatpush1.msra.mxu0 %v3011
    %5459 = vmatprep.subr.mxu0 0.0
    %5460 = vmatpush1.msra.mxu0 %v3012
    %5461 = vmatprep.subr.mxu0 0.0
    %5462 = vmatpush1.msra.mxu0 %v3013
    %5463 = vmatprep.subr.mxu0 0.0
    %5464 = vmatpush1.msra.mxu0 %v3014
    %5465 = vmatprep.subr.mxu0 0.0
    %5466 = vmatpush1.msra.mxu0 %v3015
    %5467 = vmatprep.subr.mxu0 0.0
    %5468 = vmatpush1.msra.mxu0 %v3016
    %5469 = vmatprep.subr.mxu0 0.0
    %5470 = vmatpush1.msra.mxu0 %v3017
    %5471 = vmatprep.subr.mxu0 0.0
    %5472 = vmatpush1.msra.mxu0 %v3018
    %5473 = vmatprep.subr.mxu0 0.0
    %5474 = vmatpush1.msra.mxu0 %v3019
    %5475 = vmatprep.subr.mxu0 0.0
    %5476 = vmatpush1.msra.mxu0 %v3020
    %5477 = vmatprep.subr.mxu0 0.0
    %5478 = vmatpush1.msra.mxu0 %v3021
    %5479 = vmatprep.subr.mxu0 0.0
    %5480 = vmatpush1.msra.mxu0 %v3022
    %5481 = vmatprep.subr.mxu0 0.0
    %5482 = vmatpush1.msra.mxu0 %v3023
    %5483 = vmatprep.subr.mxu0 0.0
    %5484 = vmatpush1.msra.mxu0 %v3024
    %5485 = vmatprep.subr.mxu0 0.0
    %5486 = vmatpush1.msra.mxu0 %v3025
    %5487 = vmatprep.subr.mxu0 0.0
    %5488 = vmatpush1.msra.mxu0 %v3026
    %5489 = vmatprep.mubr.f32.mxu0 %v4961
    %5490 = vmatmul.mubr.f32.gmra.mrb[0].mxu0 %v4929
    %v5491 = vpop.f32.mrb[0].mxu0
    %v5492 = vadd.f32 %v3512, %v5491
    %v5493 = vpop.f32.mrb[0].mxu0
    %5494 = vmatprep.mubr.f32.mxu0 %v4962
    %5495 = vmatmul.mubr.f32.gmra.mrb[0].mxu0 %v4930
    %v5496 = vpop.f32.mrb[0].mxu0
    %v5497 = vadd.f32 %v3512, %v5496
    %v5498 = vpop.f32.mrb[0].mxu0
    %5499 = vdwg.mxu0
    %5500 = vmatprep.subr.mxu0 0.0
    %5501 = vmatpush1.msra.mxu0 %v3027
    %5502 = vmatprep.subr.mxu0 0.0
    %5503 = vmatpush1.msra.mxu0 %v3028
    %5504 = vmatprep.subr.mxu0 0.0
    %5505 = vmatpush1.msra.mxu0 %v3029
    %5506 = vmatprep.subr.mxu0 0.0
    %5507 = vmatpush1.msra.mxu0 %v3030
    %5508 = vmatprep.subr.mxu0 0.0
    %5509 = vmatpush1.msra.mxu0 %v3031
    %5510 = vmatprep.subr.mxu0 0.0
    %5511 = vmatpush1.msra.mxu0 %v3032
    %5512 = vmatprep.subr.mxu0 0.0
    %5513 = vmatpush1.msra.mxu0 %v3033
    %5514 = vmatprep.subr.mxu0 0.0
    %5515 = vmatpush1.msra.mxu0 %v3034
    %5516 = vmatprep.subr.mxu0 0.0
    %5517 = vmatpush1.msra.mxu0 %v3035
    %5518 = vmatprep.subr.mxu0 0.0
    %5519 = vmatpush1.msra.mxu0 %v3036
    %5520 = vmatprep.subr.mxu0 0.0
    %5521 = vmatpush1.msra.mxu0 %v3037
    %5522 = vmatprep.subr.mxu0 0.0
    %5523 = vmatpush1.msra.mxu0 %v3038
    %5524 = vmatprep.subr.mxu0 0.0
    %5525 = vmatpush1.msra.mxu0 %v3039
    %5526 = vmatprep.subr.mxu0 0.0
    %5527 = vmatpush1.msra.mxu0 %v3040
    %5528 = vmatprep.subr.mxu0 0.0
    %5529 = vmatpush1.msra.mxu0 %v3041
    %5530 = vmatprep.subr.mxu0 0.0
    %5531 = vmatpush1.msra.mxu0 %v3042
    %5532 = vmatprep.subr.mxu0 0.0
    %5533 = vmatpush1.msra.mxu0 %v3043
    %5534 = vmatprep.subr.mxu0 0.0
    %5535 = vmatpush1.msra.mxu0 %v3044
    %5536 = vmatprep.subr.mxu0 0.0
    %5537 = vmatpush1.msra.mxu0 %v3045
    %5538 = vmatprep.subr.mxu0 0.0
    %5539 = vmatpush1.msra.mxu0 %v3046
    %5540 = vmatprep.subr.mxu0 0.0
    %5541 = vmatpush1.msra.mxu0 %v3047
    %5542 = vmatprep.subr.mxu0 0.0
    %5543 = vmatpush1.msra.mxu0 %v3048
    %5544 = vmatprep.subr.mxu0 0.0
    %5545 = vmatpush1.msra.mxu0 %v3049
    %5546 = vmatprep.subr.mxu0 0.0
    %5547 = vmatpush1.msra.mxu0 %v3050
    %5548 = vmatprep.subr.mxu0 0.0
    %5549 = vmatpush1.msra.mxu0 %v3051
    %5550 = vmatprep.subr.mxu0 0.0
    %5551 = vmatpush1.msra.mxu0 %v3052
    %5552 = vmatprep.subr.mxu0 0.0
    %5553 = vmatpush1.msra.mxu0 %v3053
    %5554 = vmatprep.subr.mxu0 0.0
    %5555 = vmatpush1.msra.mxu0 %v3054
    %5556 = vmatprep.subr.mxu0 0.0
    %5557 = vmatpush1.msra.mxu0 %v3055
    %5558 = vmatprep.subr.mxu0 0.0
    %5559 = vmatpush1.msra.mxu0 %v3056
    %5560 = vmatprep.subr.mxu0 0.0
    %5561 = vmatpush1.msra.mxu0 %v3057
    %5562 = vmatprep.subr.mxu0 0.0
    %5563 = vmatpush1.msra.mxu0 %v3058
    %5564 = vmatprep.mubr.f32.mxu0 %v5025
    %5565 = vmatmul.mubr.f32.gmra.mrb[0].mxu0 %v4993
    %v5566 = vpop.f32.mrb[0].mxu0
    %v5567 = vadd.f32 %v5492, %v5566
    %v5568 = vpop.f32.mrb[0].mxu0
    %5569 = vmatprep.mubr.f32.mxu0 %v5026
    %5570 = vmatmul.mubr.f32.gmra.mrb[0].mxu0 %v4994
    %v5571 = vpop.f32.mrb[0].mxu0
    %v5572 = vadd.f32 %v5497, %v5571
    %v5573 = vpop.f32.mrb[0].mxu0
    %5574 = vdwg.mxu0
    %5575 = vmatprep.subr.mxu0 0.0
    %5576 = vmatpush1.msra.mxu0 %v3059
    %5577 = vmatprep.subr.mxu0 0.0
    %5578 = vmatpush1.msra.mxu0 %v3060
    %5579 = vmatprep.subr.mxu0 0.0
    %5580 = vmatpush1.msra.mxu0 %v3061
    %5581 = vmatprep.subr.mxu0 0.0
    %5582 = vmatpush1.msra.mxu0 %v3062
    %5583 = vmatprep.subr.mxu0 0.0
    %5584 = vmatpush1.msra.mxu0 %v3063
    %5585 = vmatprep.subr.mxu0 0.0
    %5586 = vmatpush1.msra.mxu0 %v3064
    %5587 = vmatprep.subr.mxu0 0.0
    %5588 = vmatpush1.msra.mxu0 %v3065
    %5589 = vmatprep.subr.mxu0 0.0
    %5590 = vmatpush1.msra.mxu0 %v3066
    %5591 = vmatprep.subr.mxu0 0.0
    %5592 = vmatpush1.msra.mxu0 %v3067
    %5593 = vmatprep.subr.mxu0 0.0
    %5594 = vmatpush1.msra.mxu0 %v3068
    %5595 = vmatprep.subr.mxu0 0.0
    %5596 = vmatpush1.msra.mxu0 %v3069
    %5597 = vmatprep.subr.mxu0 0.0
    %5598 = vmatpush1.msra.mxu0 %v3070
    %5599 = vmatprep.subr.mxu0 0.0
    %5600 = vmatpush1.msra.mxu0 %v3071
    %5601 = vmatprep.subr.mxu0 0.0
    %5602 = vmatpush1.msra.mxu0 %v3072
    %5603 = vmatprep.subr.mxu0 0.0
    %5604 = vmatpush1.msra.mxu0 %v3073
    %5605 = vmatprep.subr.mxu0 0.0
    %5606 = vmatpush1.msra.mxu0 %v3074
    %5607 = vmatprep.subr.mxu0 0.0
    %5608 = vmatpush1.msra.mxu0 %v3075
    %5609 = vmatprep.subr.mxu0 0.0
    %5610 = vmatpush1.msra.mxu0 %v3076
    %5611 = vmatprep.subr.mxu0 0.0
    %5612 = vmatpush1.msra.mxu0 %v3077
    %5613 = vmatprep.subr.mxu0 0.0
    %5614 = vmatpush1.msra.mxu0 %v3078
    %5615 = vmatprep.subr.mxu0 0.0
    %5616 = vmatpush1.msra.mxu0 %v3079
    %5617 = vmatprep.subr.mxu0 0.0
    %5618 = vmatpush1.msra.mxu0 %v3080
    %5619 = vmatprep.subr.mxu0 0.0
    %5620 = vmatpush1.msra.mxu0 %v3081
    %5621 = vmatprep.subr.mxu0 0.0
    %5622 = vmatpush1.msra.mxu0 %v3082
    %5623 = vmatprep.subr.mxu0 0.0
    %5624 = vmatpush1.msra.mxu0 %v3083
    %5625 = vmatprep.subr.mxu0 0.0
    %5626 = vmatpush1.msra.mxu0 %v3084
    %5627 = vmatprep.subr.mxu0 0.0
    %5628 = vmatpush1.msra.mxu0 %v3085
    %5629 = vmatprep.subr.mxu0 0.0
    %5630 = vmatpush1.msra.mxu0 %v3086
    %5631 = vmatprep.subr.mxu0 0.0
    %5632 = vmatpush1.msra.mxu0 %v3087
    %5633 = vmatprep.subr.mxu0 0.0
    %5634 = vmatpush1.msra.mxu0 %v3088
    %5635 = vmatprep.subr.mxu0 0.0
    %5636 = vmatpush1.msra.mxu0 %v3089
    %5637 = vmatprep.subr.mxu0 0.0
    %5638 = vmatpush1.msra.mxu0 %v3090
    %5639 = vmatprep.mubr.f32.mxu0 %v5089
    %5640 = vmatmul.mubr.f32.gmra.mrb[0].mxu0 %v5057
    %v5641 = vpop.f32.mrb[0].mxu0
    %v5642 = vadd.f32 %v5567, %v5641
    %v5643 = vpop.f32.mrb[0].mxu0
    %5644 = vmatprep.mubr.f32.mxu0 %v5090
    %5645 = vmatmul.mubr.f32.gmra.mrb[0].mxu0 %v5058
    %v5646 = vpop.f32.mrb[0].mxu0
    %v5647 = vadd.f32 %v5572, %v5646
    %v5648 = vpop.f32.mrb[0].mxu0
    %5649 = vdwg.mxu0
    %5650 = vmatprep.subr.mxu0 0.0
    %5651 = vmatpush1.msra.mxu0 %v3091
    %5652 = vmatprep.subr.mxu0 0.0
    %5653 = vmatpush1.msra.mxu0 %v3092
    %5654 = vmatprep.subr.mxu0 0.0
    %5655 = vmatpush1.msra.mxu0 %v3093
    %5656 = vmatprep.subr.mxu0 0.0
    %5657 = vmatpush1.msra.mxu0 %v3094
    %5658 = vmatprep.subr.mxu0 0.0
    %5659 = vmatpush1.msra.mxu0 %v3095
    %5660 = vmatprep.subr.mxu0 0.0
    %5661 = vmatpush1.msra.mxu0 %v3096
    %5662 = vmatprep.subr.mxu0 0.0
    %5663 = vmatpush1.msra.mxu0 %v3097
    %5664 = vmatprep.subr.mxu0 0.0
    %5665 = vmatpush1.msra.mxu0 %v3098
    %5666 = vmatprep.subr.mxu0 0.0
    %5667 = vmatpush1.msra.mxu0 %v3099
    %5668 = vmatprep.subr.mxu0 0.0
    %5669 = vmatpush1.msra.mxu0 %v3100
    %5670 = vmatprep.subr.mxu0 0.0
    %5671 = vmatpush1.msra.mxu0 %v3101
    %5672 = vmatprep.subr.mxu0 0.0
    %5673 = vmatpush1.msra.mxu0 %v3102
    %5674 = vmatprep.subr.mxu0 0.0
    %5675 = vmatpush1.msra.mxu0 %v3103
    %5676 = vmatprep.subr.mxu0 0.0
    %5677 = vmatpush1.msra.mxu0 %v3104
    %5678 = vmatprep.subr.mxu0 0.0
    %5679 = vmatpush1.msra.mxu0 %v3105
    %5680 = vmatprep.subr.mxu0 0.0
    %5681 = vmatpush1.msra.mxu0 %v3106
    %5682 = vmatprep.subr.mxu0 0.0
    %5683 = vmatpush1.msra.mxu0 %v3107
    %5684 = vmatprep.subr.mxu0 0.0
    %5685 = vmatpush1.msra.mxu0 %v3108
    %5686 = vmatprep.subr.mxu0 0.0
    %5687 = vmatpush1.msra.mxu0 %v3109
    %5688 = vmatprep.subr.mxu0 0.0
    %5689 = vmatpush1.msra.mxu0 %v3110
    %5690 = vmatprep.subr.mxu0 0.0
    %5691 = vmatpush1.msra.mxu0 %v3111
    %5692 = vmatprep.subr.mxu0 0.0
    %5693 = vmatpush1.msra.mxu0 %v3112
    %5694 = vmatprep.subr.mxu0 0.0
    %5695 = vmatpush1.msra.mxu0 %v3113
    %5696 = vmatprep.subr.mxu0 0.0
    %5697 = vmatpush1.msra.mxu0 %v3114
    %5698 = vmatprep.subr.mxu0 0.0
    %5699 = vmatpush1.msra.mxu0 %v3115
    %5700 = vmatprep.subr.mxu0 0.0
    %5701 = vmatpush1.msra.mxu0 %v3116
    %5702 = vmatprep.subr.mxu0 0.0
    %5703 = vmatpush1.msra.mxu0 %v3117
    %5704 = vmatprep.subr.mxu0 0.0
    %5705 = vmatpush1.msra.mxu0 %v3118
    %5706 = vmatprep.subr.mxu0 0.0
    %5707 = vmatpush1.msra.mxu0 %v3119
    %5708 = vmatprep.subr.mxu0 0.0
    %5709 = vmatpush1.msra.mxu0 %v3120
    %5710 = vmatprep.subr.mxu0 0.0
    %5711 = vmatpush1.msra.mxu0 %v3121
    %5712 = vmatprep.subr.mxu0 0.0
    %5713 = vmatpush1.msra.mxu0 %v3122
    %5714 = vmatprep.mubr.f32.mxu0 %v5153
    %5715 = vmatmul.mubr.f32.gmra.mrb[0].mxu0 %v5121
    %v5716 = vpop.f32.mrb[0].mxu0
    %v5717 = vadd.f32 %v5642, %v5716
    %v5718 = vpop.f32.mrb[0].mxu0
    %5719 = vmatprep.mubr.f32.mxu0 %v5154
    %5720 = vmatmul.mubr.f32.gmra.mrb[0].mxu0 %v5122
    %v5721 = vpop.f32.mrb[0].mxu0
    %v5722 = vadd.f32 %v5647, %v5721
    %v5723 = vpop.f32.mrb[0].mxu0
    %5724 = vdwg.mxu0
    %5725 = vmatprep.subr.mxu0 0.0
    %5726 = vmatpush1.msra.mxu0 %v3123
    %5727 = vmatprep.subr.mxu0 0.0
    %5728 = vmatpush1.msra.mxu0 %v3124
    %5729 = vmatprep.subr.mxu0 0.0
    %5730 = vmatpush1.msra.mxu0 %v3125
    %5731 = vmatprep.subr.mxu0 0.0
    %5732 = vmatpush1.msra.mxu0 %v3126
    %5733 = vmatprep.subr.mxu0 0.0
    %5734 = vmatpush1.msra.mxu0 %v3127
    %5735 = vmatprep.subr.mxu0 0.0
    %5736 = vmatpush1.msra.mxu0 %v3128
    %5737 = vmatprep.subr.mxu0 0.0
    %5738 = vmatpush1.msra.mxu0 %v3129
    %5739 = vmatprep.subr.mxu0 0.0
    %5740 = vmatpush1.msra.mxu0 %v3130
    %5741 = vmatprep.subr.mxu0 0.0
    %5742 = vmatpush1.msra.mxu0 %v3131
    %5743 = vmatprep.subr.mxu0 0.0
    %5744 = vmatpush1.msra.mxu0 %v3132
    %5745 = vmatprep.subr.mxu0 0.0
    %5746 = vmatpush1.msra.mxu0 %v3133
    %5747 = vmatprep.subr.mxu0 0.0
    %5748 = vmatpush1.msra.mxu0 %v3134
    %5749 = vmatprep.subr.mxu0 0.0
    %5750 = vmatpush1.msra.mxu0 %v3135
    %5751 = vmatprep.subr.mxu0 0.0
    %5752 = vmatpush1.msra.mxu0 %v3136
    %5753 = vmatprep.subr.mxu0 0.0
    %5754 = vmatpush1.msra.mxu0 %v3137
    %5755 = vmatprep.subr.mxu0 0.0
    %5756 = vmatpush1.msra.mxu0 %v3138
    %5757 = vmatprep.subr.mxu0 0.0
    %5758 = vmatpush1.msra.mxu0 %v3139
    %5759 = vmatprep.subr.mxu0 0.0
    %5760 = vmatpush1.msra.mxu0 %v3140
    %5761 = vmatprep.subr.mxu0 0.0
    %5762 = vmatpush1.msra.mxu0 %v3141
    %5763 = vmatprep.subr.mxu0 0.0
    %5764 = vmatpush1.msra.mxu0 %v3142
    %5765 = vmatprep.subr.mxu0 0.0
    %5766 = vmatpush1.msra.mxu0 %v3143
    %5767 = vmatprep.subr.mxu0 0.0
    %5768 = vmatpush1.msra.mxu0 %v3144
    %5769 = vmatprep.subr.mxu0 0.0
    %5770 = vmatpush1.msra.mxu0 %v3145
    %5771 = vmatprep.subr.mxu0 0.0
    %5772 = vmatpush1.msra.mxu0 %v3146
    %5773 = vmatprep.subr.mxu0 0.0
    %5774 = vmatpush1.msra.mxu0 %v3147
    %5775 = vmatprep.subr.mxu0 0.0
    %5776 = vmatpush1.msra.mxu0 %v3148
    %5777 = vmatprep.subr.mxu0 0.0
    %5778 = vmatpush1.msra.mxu0 %v3149
    %5779 = vmatprep.subr.mxu0 0.0
    %5780 = vmatpush1.msra.mxu0 %v3150
    %5781 = vmatprep.subr.mxu0 0.0
    %5782 = vmatpush1.msra.mxu0 %v3151
    %5783 = vmatprep.subr.mxu0 0.0
    %5784 = vmatpush1.msra.mxu0 %v3152
    %5785 = vmatprep.subr.mxu0 0.0
    %5786 = vmatpush1.msra.mxu0 %v3153
    %5787 = vmatprep.subr.mxu0 0.0
    %5788 = vmatpush1.msra.mxu0 %v3154
    %5789 = vmatprep.mubr.f32.mxu0 %v5217
    %5790 = vmatmul.mubr.f32.gmra.mrb[0].mxu0 %v5185
    %v5791 = vpop.f32.mrb[0].mxu0
    %v5792 = vadd.f32 %v5717, %v5791
    %v5793 = vpop.f32.mrb[0].mxu0
    %5794 = vmatprep.mubr.f32.mxu0 %v5218
    %5795 = vmatmul.mubr.f32.gmra.mrb[0].mxu0 %v5186
    %v5796 = vpop.f32.mrb[0].mxu0
    %v5797 = vadd.f32 %v5722, %v5796
    %v5798 = vpop.f32.mrb[0].mxu0
    %5799 = vdwg.mxu0
    %5800 = vmatprep.subr.mxu0 0.0
    %5801 = vmatpush1.msra.mxu0 %v3155
    %5802 = vmatprep.subr.mxu0 0.0
    %5803 = vmatpush1.msra.mxu0 %v3156
    %5804 = vmatprep.subr.mxu0 0.0
    %5805 = vmatpush1.msra.mxu0 %v3157
    %5806 = vmatprep.subr.mxu0 0.0
    %5807 = vmatpush1.msra.mxu0 %v3158
    %5808 = vmatprep.subr.mxu0 0.0
    %5809 = vmatpush1.msra.mxu0 %v3159
    %5810 = vmatprep.subr.mxu0 0.0
    %5811 = vmatpush1.msra.mxu0 %v3160
    %5812 = vmatprep.subr.mxu0 0.0
    %5813 = vmatpush1.msra.mxu0 %v3161
    %5814 = vmatprep.subr.mxu0 0.0
    %5815 = vmatpush1.msra.mxu0 %v3162
    %5816 = vmatprep.subr.mxu0 0.0
    %5817 = vmatpush1.msra.mxu0 %v3163
    %5818 = vmatprep.subr.mxu0 0.0
    %5819 = vmatpush1.msra.mxu0 %v3164
    %5820 = vmatprep.subr.mxu0 0.0
    %5821 = vmatpush1.msra.mxu0 %v3165
    %5822 = vmatprep.subr.mxu0 0.0
    %5823 = vmatpush1.msra.mxu0 %v3166
    %5824 = vmatprep.subr.mxu0 0.0
    %5825 = vmatpush1.msra.mxu0 %v3167
    %5826 = vmatprep.subr.mxu0 0.0
    %5827 = vmatpush1.msra.mxu0 %v3168
    %5828 = vmatprep.subr.mxu0 0.0
    %5829 = vmatpush1.msra.mxu0 %v3169
    %5830 = vmatprep.subr.mxu0 0.0
    %5831 = vmatpush1.msra.mxu0 %v3170
    %5832 = vmatprep.subr.mxu0 0.0
    %5833 = vmatpush1.msra.mxu0 %v3171
    %5834 = vmatprep.subr.mxu0 0.0
    %5835 = vmatpush1.msra.mxu0 %v3172
    %5836 = vmatprep.subr.mxu0 0.0
    %5837 = vmatpush1.msra.mxu0 %v3173
    %5838 = vmatprep.subr.mxu0 0.0
    %5839 = vmatpush1.msra.mxu0 %v3174
    %5840 = vmatprep.subr.mxu0 0.0
    %5841 = vmatpush1.msra.mxu0 %v3175
    %5842 = vmatprep.subr.mxu0 0.0
    %5843 = vmatpush1.msra.mxu0 %v3176
    %5844 = vmatprep.subr.mxu0 0.0
    %5845 = vmatpush1.msra.mxu0 %v3177
    %5846 = vmatprep.subr.mxu0 0.0
    %5847 = vmatpush1.msra.mxu0 %v3178
    %5848 = vmatprep.subr.mxu0 0.0
    %5849 = vmatpush1.msra.mxu0 %v3179
    %5850 = vmatprep.subr.mxu0 0.0
    %5851 = vmatpush1.msra.mxu0 %v3180
    %5852 = vmatprep.subr.mxu0 0.0
    %5853 = vmatpush1.msra.mxu0 %v3181
    %5854 = vmatprep.subr.mxu0 0.0
    %5855 = vmatpush1.msra.mxu0 %v3182
    %5856 = vmatprep.subr.mxu0 0.0
    %5857 = vmatpush1.msra.mxu0 %v3183
    %5858 = vmatprep.subr.mxu0 0.0
    %5859 = vmatpush1.msra.mxu0 %v3184
    %5860 = vmatprep.subr.mxu0 0.0
    %5861 = vmatpush1.msra.mxu0 %v3185
    %5862 = vmatprep.subr.mxu0 0.0
    %5863 = vmatpush1.msra.mxu0 %v3186
    %5864 = vmatprep.mubr.f32.mxu0 %v5281
    %5865 = vmatmul.mubr.f32.gmra.mrb[0].mxu0 %v5249
    %v5866 = vpop.f32.mrb[0].mxu0
    %v5867 = vadd.f32 %v5792, %v5866
    %v5868 = vpop.f32.mrb[0].mxu0
    %5869 = vmatprep.mubr.f32.mxu0 %v5282
    %5870 = vmatmul.mubr.f32.gmra.mrb[0].mxu0 %v5250
    %v5871 = vpop.f32.mrb[0].mxu0
    %v5872 = vadd.f32 %v5797, %v5871
    %v5873 = vpop.f32.mrb[0].mxu0
    %5874 = vdwg.mxu0
    %5875 = vmatprep.subr.mxu0 0.0
    %5876 = vmatpush1.msra.mxu0 %v3187
    %5877 = vmatprep.subr.mxu0 0.0
    %5878 = vmatpush1.msra.mxu0 %v3188
    %5879 = vmatprep.subr.mxu0 0.0
    %5880 = vmatpush1.msra.mxu0 %v3189
    %5881 = vmatprep.subr.mxu0 0.0
    %5882 = vmatpush1.msra.mxu0 %v3190
    %5883 = vmatprep.subr.mxu0 0.0
    %5884 = vmatpush1.msra.mxu0 %v3191
    %5885 = vmatprep.subr.mxu0 0.0
    %5886 = vmatpush1.msra.mxu0 %v3192
    %5887 = vmatprep.subr.mxu0 0.0
    %5888 = vmatpush1.msra.mxu0 %v3193
    %5889 = vmatprep.subr.mxu0 0.0
    %5890 = vmatpush1.msra.mxu0 %v3194
    %5891 = vmatprep.subr.mxu0 0.0
    %5892 = vmatpush1.msra.mxu0 %v3195
    %5893 = vmatprep.subr.mxu0 0.0
    %5894 = vmatpush1.msra.mxu0 %v3196
    %5895 = vmatprep.subr.mxu0 0.0
    %5896 = vmatpush1.msra.mxu0 %v3197
    %5897 = vmatprep.subr.mxu0 0.0
    %5898 = vmatpush1.msra.mxu0 %v3198
    %5899 = vmatprep.subr.mxu0 0.0
    %5900 = vmatpush1.msra.mxu0 %v3199
    %5901 = vmatprep.subr.mxu0 0.0
    %5902 = vmatpush1.msra.mxu0 %v3200
    %5903 = vmatprep.subr.mxu0 0.0
    %5904 = vmatpush1.msra.mxu0 %v3201
    %5905 = vmatprep.subr.mxu0 0.0
    %5906 = vmatpush1.msra.mxu0 %v3202
    %5907 = vmatprep.subr.mxu0 0.0
    %5908 = vmatpush1.msra.mxu0 %v3203
    %5909 = vmatprep.subr.mxu0 0.0
    %5910 = vmatpush1.msra.mxu0 %v3204
    %5911 = vmatprep.subr.mxu0 0.0
    %5912 = vmatpush1.msra.mxu0 %v3205
    %5913 = vmatprep.subr.mxu0 0.0
    %5914 = vmatpush1.msra.mxu0 %v3206
    %5915 = vmatprep.subr.mxu0 0.0
    %5916 = vmatpush1.msra.mxu0 %v3207
    %5917 = vmatprep.subr.mxu0 0.0
    %5918 = vmatpush1.msra.mxu0 %v3208
    %5919 = vmatprep.subr.mxu0 0.0
    %5920 = vmatpush1.msra.mxu0 %v3209
    %5921 = vmatprep.subr.mxu0 0.0
    %5922 = vmatpush1.msra.mxu0 %v3210
    %5923 = vmatprep.subr.mxu0 0.0
    %5924 = vmatpush1.msra.mxu0 %v3211
    %5925 = vmatprep.subr.mxu0 0.0
    %5926 = vmatpush1.msra.mxu0 %v3212
    %5927 = vmatprep.subr.mxu0 0.0
    %5928 = vmatpush1.msra.mxu0 %v3213
    %5929 = vmatprep.subr.mxu0 0.0
    %5930 = vmatpush1.msra.mxu0 %v3214
    %5931 = vmatprep.subr.mxu0 0.0
    %5932 = vmatpush1.msra.mxu0 %v3215
    %5933 = vmatprep.subr.mxu0 0.0
    %5934 = vmatpush1.msra.mxu0 %v3216
    %5935 = vmatprep.subr.mxu0 0.0
    %5936 = vmatpush1.msra.mxu0 %v3217
    %5937 = vmatprep.subr.mxu0 0.0
    %5938 = vmatpush1.msra.mxu0 %v3218
    %5939 = vmatprep.mubr.f32.mxu0 %v5345
    %5940 = vmatmul.mubr.f32.gmra.mrb[0].mxu0 %v5313
    %v5941 = vpop.f32.mrb[0].mxu0
    %v5942 = vadd.f32 %v5867, %v5941
    %v5943 = vpop.f32.mrb[0].mxu0
    %5944 = vmatprep.mubr.f32.mxu0 %v5346
    %5945 = vmatmul.mubr.f32.gmra.mrb[0].mxu0 %v5314
    %v5946 = vpop.f32.mrb[0].mxu0
    %v5947 = vadd.f32 %v5872, %v5946
    %v5948 = vpop.f32.mrb[0].mxu0
    %5949 = vdwg.mxu0
    %5950 = vmatprep.subr.mxu0 0.0
    %5951 = vmatpush1.msra.mxu0 %v3219
    %5952 = vmatprep.subr.mxu0 0.0
    %5953 = vmatpush1.msra.mxu0 %v3220
    %5954 = vmatprep.subr.mxu0 0.0
    %5955 = vmatpush1.msra.mxu0 %v3221
    %5956 = vmatprep.subr.mxu0 0.0
    %5957 = vmatpush1.msra.mxu0 %v3222
    %5958 = vmatprep.subr.mxu0 0.0
    %5959 = vmatpush1.msra.mxu0 %v3223
    %5960 = vmatprep.subr.mxu0 0.0
    %5961 = vmatpush1.msra.mxu0 %v3224
    %5962 = vmatprep.subr.mxu0 0.0
    %5963 = vmatpush1.msra.mxu0 %v3225
    %5964 = vmatprep.subr.mxu0 0.0
    %5965 = vmatpush1.msra.mxu0 %v3226
    %5966 = vmatprep.subr.mxu0 0.0
    %5967 = vmatpush1.msra.mxu0 %v3227
    %5968 = vmatprep.subr.mxu0 0.0
    %5969 = vmatpush1.msra.mxu0 %v3228
    %5970 = vmatprep.subr.mxu0 0.0
    %5971 = vmatpush1.msra.mxu0 %v3229
    %5972 = vmatprep.subr.mxu0 0.0
    %5973 = vmatpush1.msra.mxu0 %v3230
    %5974 = vmatprep.subr.mxu0 0.0
    %5975 = vmatpush1.msra.mxu0 %v3231
    %5976 = vmatprep.subr.mxu0 0.0
    %5977 = vmatpush1.msra.mxu0 %v3232
    %5978 = vmatprep.subr.mxu0 0.0
    %5979 = vmatpush1.msra.mxu0 %v3233
    %5980 = vmatprep.subr.mxu0 0.0
    %5981 = vmatpush1.msra.mxu0 %v3234
    %5982 = vmatprep.subr.mxu0 0.0
    %5983 = vmatpush1.msra.mxu0 %v3235
    %5984 = vmatprep.subr.mxu0 0.0
    %5985 = vmatpush1.msra.mxu0 %v3236
    %5986 = vmatprep.subr.mxu0 0.0
    %5987 = vmatpush1.msra.mxu0 %v3237
    %5988 = vmatprep.subr.mxu0 0.0
    %5989 = vmatpush1.msra.mxu0 %v3238
    %5990 = vmatprep.subr.mxu0 0.0
    %5991 = vmatpush1.msra.mxu0 %v3239
    %5992 = vmatprep.subr.mxu0 0.0
    %5993 = vmatpush1.msra.mxu0 %v3240
    %5994 = vmatprep.subr.mxu0 0.0
    %5995 = vmatpush1.msra.mxu0 %v3241
    %5996 = vmatprep.subr.mxu0 0.0
    %5997 = vmatpush1.msra.mxu0 %v3242
    %5998 = vmatprep.subr.mxu0 0.0
    %5999 = vmatpush1.msra.mxu0 %v3243
    %6000 = vmatprep.subr.mxu0 0.0
    %6001 = vmatpush1.msra.mxu0 %v3244
    %6002 = vmatprep.subr.mxu0 0.0
    %6003 = vmatpush1.msra.mxu0 %v3245
    %6004 = vmatprep.subr.mxu0 0.0
    %6005 = vmatpush1.msra.mxu0 %v3246
    %6006 = vmatprep.subr.mxu0 0.0
    %6007 = vmatpush1.msra.mxu0 %v3247
    %6008 = vmatprep.subr.mxu0 0.0
    %6009 = vmatpush1.msra.mxu0 %v3248
    %6010 = vmatprep.subr.mxu0 0.0
    %6011 = vmatpush1.msra.mxu0 %v3249
    %6012 = vmatprep.subr.mxu0 0.0
    %6013 = vmatpush1.msra.mxu0 %v3250
    %6014 = vmatprep.mubr.f32.mxu0 %v5409
    %6015 = vmatmul.mubr.f32.gmra.mrb[0].mxu0 %v5377
    %v6016 = vpop.f32.mrb[0].mxu0
    %v6017 = vadd.f32 %v5942, %v6016
    %v6018 = vpop.f32.mrb[0].mxu0
    %6019 = vmatprep.mubr.f32.mxu0 %v5410
    %6020 = vmatmul.mubr.f32.gmra.mrb[0].mxu0 %v5378
    %v6021 = vpop.f32.mrb[0].mxu0
    %v6022 = vadd.f32 %v5947, %v6021
    %v6023 = vpop.f32.mrb[0].mxu0
    %6024 = vdwg.mxu0
    %v6025 = vadd.f32 %v6017, %v6022
    %v6026 = vrot.slane %v6025, 4
    %v6027 = vadd.f32 %v6025, %v6026
    %v6028 = vrot.slane %v6027, 2
    %v6029 = vadd.f32 %v6027, %v6028
    %v6030 = vrot.slane %v6029, 1
    %v6031 = vadd.f32 %v6029, %v6030
    %v6032 = vmul.f32 %v6031, %v4633
    %v6033 = vmul.f32 %v6017, %v6017
    %v6034 = vmul.f32 %v6022, %v6022
    %6035 = vadd.xlane.f32.xlu0 %v6033
    %v6036 = vpop.xlane.xlu0 %6035
    %6037 = vadd.xlane.f32.xlu0 %v6034
    %v6038 = vpop.xlane.xlu0 %6037
    %v6039 = vmul.f32 %v6032, %v6032
    %6040 = vadd.xlane.f32.xlu0 %v6039
    %v6041 = vpop.xlane.xlu0 %6040
    %v6042 = vmax.f32 %v6036, 1e-24
    %v6043 = vmax.f32 %v6038, 1e-24
    %v6044 = vrsqrt.pop %v6042
    %v6045 = vrsqrt.pop %v6043
    %v6046 = vmul.f32 %v6017, %v6044
    %v6047 = vmul.f32 %v6022, %v6045
    %s6048 = scalar_lea.vmem [#allocation6], 16
    %6049 = vst [vmem:[%s6048] sm:$0xff] %v6046
    %6050 = vst [vmem:[%s6048 + $0x8] sm:$0xff] %v6047
    %v6051 = vmax.f32 %v6041, 1e-24
    %v6052 = vrsqrt.pop %v6051
    %v6053 = vmul.f32 %v6032, %v6052
    %s6054 = scalar_lea.vmem [#allocation7], 1
    %6055 = vst [vmem:[%s6054] sm:$0x1] %v6053
    // Predicated region
    $region26: #{clip_video_spec_temporal_forward.1} parent=1 // pred_check
      _
    $region27: #{clip_video_spec_temporal_forward.1} parent=1 // pred_check_branch
      %6057 = sbr.rel (0) target = $region29
    $region28: #{clip_video_spec_temporal_forward.1} parent=1 // pred_region
      %s6059 = ssub.s32 256, 256
      %6060 = vsyncadd [#allocation3], %s6059
      %s6061 = sshll.u32 [#allocation2], 4
      %s6062 = int_to_ptr.vmem [resolvable:$true] %s6061
      %6067 = dma.vmem_to_hbm [thread:$0]  %s6062, 256, %s6, [#allocation3], 128, 128, 8
    $region29: #{clip_video_spec_temporal_forward.1} parent=1 // pred_fallthru
      _
    // Predicated region
    $region30: #{clip_video_spec_temporal_forward.1} parent=1 // pred_check
      _
    $region31: #{clip_video_spec_temporal_forward.1} parent=1 // pred_check_branch
      %6069 = sbr.rel (0) target = $region33
    $region32: #{clip_video_spec_temporal_forward.1} parent=1 // pred_region
      %s6071 = ssub.s32 32, 32
      %6072 = vsyncadd [#allocation5], %s6071
      %s6073 = sshll.u32 [#allocation4], 4
      %s6074 = int_to_ptr.vmem [resolvable:$true] %s6073
      %6079 = dma.vmem_to_hbm [thread:$0]  %s6074, 32, %s7, [#allocation5], 16, 16, 1
    $region33: #{clip_video_spec_temporal_forward.1} parent=1 // pred_fallthru
      _
    // Predicated region
    $region34: #{clip_video_spec_temporal_forward.1} parent=1 // pred_check
      _
    $region35: #{clip_video_spec_temporal_forward.1} parent=1 // pred_check_branch
      %6081 = sbr.rel (0) target = $region37
    $region36: #{clip_video_spec_temporal_forward.1} parent=1 // pred_region
      %s6083 = ssub.s32 512, 512
      %6084 = vsyncadd [#allocation5], %s6083
      %s6085 = sshll.u32 [#allocation6], 4
      %s6086 = int_to_ptr.vmem [resolvable:$true] %s6085
      %6091 = dma.vmem_to_hbm [thread:$0]  %s6086, 512, %s8, [#allocation5], 128, 128, 8
    $region37: #{clip_video_spec_temporal_forward.1} parent=1 // pred_fallthru
      _
    // Predicated region
    $region38: #{clip_video_spec_temporal_forward.1} parent=1 // pred_check
      _
    $region39: #{clip_video_spec_temporal_forward.1} parent=1 // pred_check_branch
      %6093 = sbr.rel (0) target = $region41
    $region40: #{clip_video_spec_temporal_forward.1} parent=1 // pred_region
      %s6095 = ssub.s32 32, 32
      %6096 = vsyncadd [#allocation8], %s6095
      %s6097 = sshll.u32 [#allocation7], 4
      %s6098 = int_to_ptr.vmem [resolvable:$true] %s6097
      %6103 = dma.vmem_to_hbm [thread:$0]  %s6098, 32, %s9, [#allocation8], 16, 16, 1
    $region41: #{clip_video_spec_temporal_forward.1} parent=1 // pred_fallthru
      _
    // Predicated region
    $region42: #{clip_video_spec_temporal_forward.1} parent=1 // pred_check
      _
    $region43: #{clip_video_spec_temporal_forward.1} parent=1 // pred_check_branch
      %6105 = sbr.rel (0) target = $region45
    $region44: #{clip_video_spec_temporal_forward.1} parent=1 // pred_region
      %6106 = dma.done [#allocation3], 256
    $region45: #{clip_video_spec_temporal_forward.1} parent=1 // pred_fallthru
      _
    // Predicated region
    $region46: #{clip_video_spec_temporal_forward.1} parent=1 // pred_check
      _
    $region47: #{clip_video_spec_temporal_forward.1} parent=1 // pred_check_branch
      %6108 = sbr.rel (0) target = $region49
    $region48: #{clip_video_spec_temporal_forward.1} parent=1 // pred_region
      %6109 = dma.done [#allocation5], 32
    $region49: #{clip_video_spec_temporal_forward.1} parent=1 // pred_fallthru
      _
    // Predicated region
    $region50: #{clip_video_spec_temporal_forward.1} parent=1 // pred_check
      _
    $region51: #{clip_video_spec_temporal_forward.1} parent=1 // pred_check_branch
      %6111 = sbr.rel (0) target = $region53
    $region52: #{clip_video_spec_temporal_forward.1} parent=1 // pred_region
      %6112 = dma.done [#allocation5], 512
    $region53: #{clip_video_spec_temporal_forward.1} parent=1 // pred_fallthru
      _
    // Predicated region
    $region54: #{clip_video_spec_temporal_forward.1} parent=1 // pred_check
      _
    $region55: #{clip_video_spec_temporal_forward.1} parent=1 // pred_check_branch
      %6114 = sbr.rel (0) target = $region57
    $region56: #{clip_video_spec_temporal_forward.1} parent=1 // pred_region
      %6115 = dma.done [#allocation8], 32
    $region57: #{clip_video_spec_temporal_forward.1} parent=1 // pred_fallthru
      _
    %6116 = vsyncpa [#allocation3], 1
    %6117 = vsyncpa [#allocation5], 1
    %6118 = vsyncpa [#allocation8], 1

</llo_original>
